<compile_context>
chip_gen: v6e
topology: v6e:2x2x1
jax: 0.10.0
libtpu: 0.0.40
codegen_flags: <defaults>
</compile_context>

<pallas_src>
import math
import functools

import jax
import jax.numpy as jnp
from jax import lax
from jax.experimental import pallas as pl
from jax.experimental.pallas import tpu as pltpu


# ----------------------------------------------------------------------------
# Fused whole-forward Pallas kernel (one grid step == one batch element)
# ----------------------------------------------------------------------------

def _dot_bf16(x, w):
    """MXU matmul with bf16 operands and f32 accumulation."""
    return lax.dot_general(
        x.astype(jnp.bfloat16), w.astype(jnp.bfloat16),
        dimension_numbers=(((1,), (0,)), ((), ())),
        preferred_element_type=jnp.float32)


def _transformer_kernel(
    # per-batch activations & additive masks
    src_ref, trg_ref, em_ref, dm_ref, cm_ref,
    # encoder params (stacked over layers, VMEM-resident across grid steps)
    e_wqkv_ref, e_bqkv_ref, e_wo_ref, e_bo_ref,
    e_w1_ref, e_b1_ref, e_w2_ref, e_b2_ref, e_ln_ref,
    # decoder params
    d_wqkv_s_ref, d_bqkv_s_ref, d_wo_s_ref, d_bo_s_ref,
    d_wqkv_c_ref, d_bqkv_c_ref, d_wo_c_ref, d_bo_c_ref,
    d_w1_ref, d_b1_ref, d_w2_ref, d_b2_ref, d_ln_ref,
    # head
    hw_ref, hb_ref,
    # outputs
    enc_out_ref, logp_ref,
    *, D, H, dh, n_enc, n_dec, eps):

    inv_sqrt_dh = 1.0 / math.sqrt(dh)

    # Per-head lane masks, computed once and reused by every attention
    # sublayer.  (1, D) f32, ones on lanes [h*dh, (h+1)*dh).
    lane = lax.broadcasted_iota(jnp.int32, (1, D), 1)
    head_masks = [((lane >= h * dh) & (lane < (h + 1) * dh)).astype(jnp.float32)
                  for h in range(H)]

    def layernorm(y, g, b):
        mu = jnp.mean(y, axis=-1, keepdims=True)
        var = jnp.mean(jnp.square(y - mu), axis=-1, keepdims=True)
        return (y - mu) * lax.rsqrt(var + eps) * g + b

    def attention(q, k, v, add_mask):
        """Head-masked full-D attention (valid while D <= MXU contraction
        depth; at larger D switch to a dh-deep batched-head contraction).
        q: (Sq, D) f32, k/v: (Sk, D) f32, add_mask: (Sq, Sk) additive f32."""
        kb = k.astype(jnp.bfloat16)                   # hoisted: cast K once
        acc = jnp.zeros(q.shape, jnp.float32)
        for h in range(H):
            hm = head_masks[h]
            # scores_h = (q ⊙ hm) · kᵀ  -> full-D contraction on the MXU
            s = lax.dot_general(
                (q * hm).astype(jnp.bfloat16), kb,
                dimension_numbers=(((1,), (1,)), ((), ())),
                preferred_element_type=jnp.float32) * inv_sqrt_dh
            s = s + add_mask
            s = s - jnp.max(s, axis=-1, keepdims=True)
            p = jnp.exp(s)
            p = p * pl.reciprocal(jnp.sum(p, axis=-1, keepdims=True),
                                  approx=True)
            # out_h lands only on head-h lanes -> accumulate across heads
            acc = acc + lax.dot_general(
                p.astype(jnp.bfloat16), (v * hm).astype(jnp.bfloat16),
                dimension_numbers=(((1,), (0,)), ((), ())),
                preferred_element_type=jnp.float32)
        return acc

    def self_mha(x, wqkv_ref, bqkv_ref, wo_ref, bo_ref, l, add_mask):
        # Fused Q|K|V projection: one MXU launch, lane-dense (3D-wide) output.
        qkv = _dot_bf16(x, wqkv_ref[l]) + bqkv_ref[l]
        q = qkv[:, 0:D]
        k = qkv[:, D:2 * D]
        v = qkv[:, 2 * D:3 * D]
        a = attention(q, k, v, add_mask)
        return _dot_bf16(a, wo_ref[l]) + bo_ref[l]

    def cross_mha(xq, kv_src, wqkv_ref, bqkv_ref, wo_ref, bo_ref, l, add_mask):
        w = wqkv_ref[l]                               # (D, 3D) bf16
        b = bqkv_ref[l]                               # (1, 3D) f32
        q = _dot_bf16(xq, w[:, 0:D]) + b[:, 0:D]
        kv = _dot_bf16(kv_src, w[:, D:3 * D]) + b[:, D:3 * D]   # (Sk, 2D)
        k = kv[:, 0:D]
        v = kv[:, D:2 * D]
        a = attention(q, k, v, add_mask)
        return _dot_bf16(a, wo_ref[l]) + bo_ref[l]

    em = em_ref[0]                                    # (Ss, Ss) additive
    dm = dm_ref[0]                                    # (St, St)
    cm = cm_ref[0]                                    # (St, Ss)

    # ------------------------------ encoder ------------------------------
    enc = src_ref[0]                                  # (Ss, D) f32
    for l in range(n_enc):
        a = self_mha(enc, e_wqkv_ref, e_bqkv_ref, e_wo_ref, e_bo_ref, l, em)
        enc = layernorm(enc + a, e_ln_ref[l, 0:1, :], e_ln_ref[l, 1:2, :])
        h1 = jnp.maximum(_dot_bf16(enc, e_w1_ref[l]) + e_b1_ref[l], 0.0)
        f = _dot_bf16(h1, e_w2_ref[l]) + e_b2_ref[l]
        enc = layernorm(enc + f, e_ln_ref[l, 2:3, :], e_ln_ref[l, 3:4, :])
    enc_out_ref[0] = enc

    # ------------------------------ decoder ------------------------------
    dec = trg_ref[0]                                  # (St, D) f32
    for l in range(n_dec):
        a = self_mha(dec, d_wqkv_s_ref, d_bqkv_s_ref, d_wo_s_ref, d_bo_s_ref,
                     l, dm)
        dec = layernorm(dec + a, d_ln_ref[l, 0:1, :], d_ln_ref[l, 1:2, :])
        c = cross_mha(dec, enc, d_wqkv_c_ref, d_bqkv_c_ref, d_wo_c_ref,
                      d_bo_c_ref, l, cm)
        dec = layernorm(dec + c, d_ln_ref[l, 2:3, :], d_ln_ref[l, 3:4, :])
        h1 = jnp.maximum(_dot_bf16(dec, d_w1_ref[l]) + d_b1_ref[l], 0.0)
        f = _dot_bf16(h1, d_w2_ref[l]) + d_b2_ref[l]
        dec = layernorm(dec + f, d_ln_ref[l, 4:5, :], d_ln_ref[l, 5:6, :])

    # --------------- head + log_softmax (lane-dense, padded V) -----------
    logits = _dot_bf16(dec, hw_ref[...]) + hb_ref[...]        # (St, Vp)
    m = jnp.max(logits, axis=-1, keepdims=True)
    s = logits - m
    logp_ref[0] = s - jnp.log(jnp.sum(jnp.exp(s), axis=-1, keepdims=True))


# ----------------------------------------------------------------------------
# pallas_call wrapper: grid over batch, weights resident via constant index_map
# ----------------------------------------------------------------------------

def _fused_forward(packed, src, trg, em, dm, cm, *, dim, n_heads):
    B, Ss, _ = src.shape
    St = trg.shape[1]
    n_enc = packed["e_wqkv"].shape[0]
    n_dec = packed["d_wqkv_s"].shape[0]
    dh = dim // n_heads
    Vp = packed["head_w"].shape[1]
    pw = packed["e_w1"].shape[2]

    inputs = [
        src, trg, em, dm, cm,
        packed["e_wqkv"], packed["e_bqkv"], packed["e_wo"], packed["e_bo"],
        packed["e_w1"], packed["e_b1"], packed["e_w2"], packed["e_b2"],
        packed["e_ln"],
        packed["d_wqkv_s"], packed["d_bqkv_s"], packed["d_wo_s"],
        packed["d_bo_s"],
        packed["d_wqkv_c"], packed["d_bqkv_c"], packed["d_wo_c"],
        packed["d_bo_c"],
        packed["d_w1"], packed["d_b1"], packed["d_w2"], packed["d_b2"],
        packed["d_ln"],
        packed["head_w"], packed["head_b"],
    ]

    def batched_spec(shape):
        nrest = len(shape) - 1
        return pl.BlockSpec((1,) + tuple(shape[1:]),
                            lambda b, _n=nrest: (b,) + (0,) * _n)

    def resident_spec(shape):
        return pl.BlockSpec(tuple(shape),
                            lambda b, _n=len(shape): (0,) * _n)

    in_specs = ([batched_spec(a.shape) for a in inputs[:5]]
                + [resident_spec(a.shape) for a in inputs[5:]])

    kern = functools.partial(
        _transformer_kernel, D=dim, H=n_heads, dh=dh,
        n_enc=n_enc, n_dec=n_dec, eps=1e-5)

    out_shape = (jax.ShapeDtypeStruct((B, Ss, dim), jnp.float32),
                 jax.ShapeDtypeStruct((B, St, Vp), jnp.float32))
    out_specs = (batched_spec((B, Ss, dim)), batched_spec((B, St, Vp)))

    # Advisory cost estimate (per-batch work x B).
    def mha_flops(sq, sk):
        return (2 * sq * dim * 3 * dim           # fused QKV projection
                + 2 * n_heads * sq * sk * dim * 2  # scores + P·V (full-D trick)
                + 2 * sq * dim * dim)            # output projection
    flops_b = (n_enc * (mha_flops(Ss, Ss) + 4 * Ss * dim * pw)
               + n_dec * (mha_flops(St, St) + mha_flops(St, Ss)
                          + 4 * St * dim * pw)
               + 2 * St * dim * Vp)
    transc_b = (n_enc * n_heads * Ss * Ss
                + n_dec * n_heads * (St * St + St * Ss) + St * Vp)
    bytes_acc = (sum(int(a.size) * a.dtype.itemsize for a in inputs)
                 + B * Ss * dim * 4 + B * St * Vp * 4)
    cost = pl.CostEstimate(flops=int(B * flops_b),
                           transcendentals=int(B * transc_b),
                           bytes_accessed=int(bytes_acc))

    # TODO(synk): at production shapes add a layer grid axis (stream weights)
    # and a vocab tile axis; set vmem_limit_bytes if more state is kept
    # resident than the default scoped limit allows.
    return pl.pallas_call(
        kern,
        out_shape=out_shape,
        grid=(B,),
        in_specs=in_specs,
        out_specs=out_specs,
        compiler_params=pltpu.CompilerParams(
            dimension_semantics=("parallel",)),
        cost_estimate=cost,
    )(*inputs)


# ----------------------------------------------------------------------------
# Model glue (embedding gather, PE table, mask prep) — tiny XLA ops under jit
# ----------------------------------------------------------------------------

def _to_add_mask(mask, B, Sq, Sk):
    """{0,1} mask broadcastable to (B,1,Sq,Sk) -> additive (B,Sq,Sk) f32."""
    if mask is None:
        return jnp.zeros((B, Sq, Sk), jnp.float32)
    m = jnp.broadcast_to(mask, (B, 1, Sq, Sk))[:, 0]
    return jnp.where(m.astype(bool), 0.0, -1e9).astype(jnp.float32)


@functools.partial(jax.jit, static_argnames=("dim", "n_heads", "vocab_out"))
def transformer_forward(packed, src_idx, trg_idx, src_mask, trg_mask, *,
                        dim, n_heads, vocab_out):
    B, Ss = src_idx.shape
    St = trg_idx.shape[1]
    scale = math.sqrt(dim)

    # Embedding(x) * sqrt(D) + PositionalEncoding  (dropout == identity)
    src = jnp.take(packed["src_emb"], src_idx, axis=0) * scale + packed["pe"][None, :Ss]
    trg = jnp.take(packed["trg_emb"], trg_idx, axis=0) * scale + packed["pe"][None, :St]

    em = _to_add_mask(src_mask, B, Ss, Ss)
    dm = _to_add_mask(trg_mask, B, St, St)
    cm = _to_add_mask(src_mask, B, St, Ss)

    enc_out, logp = _fused_forward(packed, src, trg, em, dm, cm,
                                   dim=dim, n_heads=n_heads)
    return enc_out, logp[:, :, :vocab_out]


def _positional_encoding(seq_len, dim):
    pos = jnp.arange(seq_len, dtype=jnp.float32)[:, None]
    i = jnp.arange(0, dim, 2, dtype=jnp.float32)
    div = jnp.exp(-jnp.log(10000.0) * i / dim)
    pe = jnp.zeros((seq_len, dim), jnp.float32)
    pe = pe.at[:, 0::2].set(jnp.sin(pos * div))
    pe = pe.at[:, 1::2].set(jnp.cos(pos * div))
    return pe


# ----------------------------------------------------------------------------
# Parameter init (xavier_uniform_ on every >1-D param, like init_params())
# and packing into stacked per-layer tensors for the fused kernel
# ----------------------------------------------------------------------------

class _KeyGen:
    def __init__(self, key):
        self._key = key
        self._i = 0

    def __call__(self):
        self._i += 1
        return jax.random.fold_in(self._key, self._i)


def _xavier(key, shape):
    bound = math.sqrt(6.0 / (shape[0] + shape[1]))
    return jax.random.uniform(key, shape, jnp.float32, -bound, bound)


def _init_mha(kg, dim):
    return {
        "wq": _xavier(kg(), (dim, dim)), "bq": jnp.zeros((1, dim), jnp.float32),
        "wk": _xavier(kg(), (dim, dim)), "bk": jnp.zeros((1, dim), jnp.float32),
        "wv": _xavier(kg(), (dim, dim)), "bv": jnp.zeros((1, dim), jnp.float32),
        "wo": _xavier(kg(), (dim, dim)), "bo": jnp.zeros((1, dim), jnp.float32),
    }


def _init_ffn(kg, dim, pw_dim):
    return {
        "w1": _xavier(kg(), (dim, pw_dim)), "b1": jnp.zeros((1, pw_dim), jnp.float32),
        "w2": _xavier(kg(), (pw_dim, dim)), "b2": jnp.zeros((1, dim), jnp.float32),
    }


def _init_ln(dim):
    return jnp.ones((1, dim), jnp.float32), jnp.zeros((1, dim), jnp.float32)


def init_params(key, seq_len, src_vocab, trg_vocab, dim, pw_dim, n_enc, n_dec):
    kg = _KeyGen(key)
    params = {
        "src_emb": _xavier(kg(), (src_vocab, dim)),
        "trg_emb": _xavier(kg(), (trg_vocab, dim)),
        "pe": _positional_encoding(seq_len, dim),
        "encoder": [],
        "decoder": [],
        "head_w": _xavier(kg(), (dim, trg_vocab)),
        "head_b": jnp.zeros((1, trg_vocab), jnp.float32),
    }
    for _ in range(n_enc):
        g1, b1 = _init_ln(dim)
        g2, b2 = _init_ln(dim)
        params["encoder"].append({
            "mha": _init_mha(kg, dim), "ffn": _init_ffn(kg, dim, pw_dim),
            "ln1_g": g1, "ln1_b": b1, "ln2_g": g2, "ln2_b": b2,
        })
    for _ in range(n_dec):
        g1, b1 = _init_ln(dim)
        g2, b2 = _init_ln(dim)
        g3, b3 = _init_ln(dim)
        params["decoder"].append({
            "self_mha": _init_mha(kg, dim), "cross_mha": _init_mha(kg, dim),
            "ffn": _init_ffn(kg, dim, pw_dim),
            "ln1_g": g1, "ln1_b": b1, "ln2_g": g2, "ln2_b": b2,
            "ln3_g": g3, "ln3_b": b3,
        })
    return params


def pack_params(params):
    """Stack per-layer params into a handful of tensors.  Q|K|V weights fused
    into one (D, 3D) matrix per sublayer; weights -> bf16 (MXU operands),
    biases/LN -> f32; head padded to a lane-dense 128-multiple vocab."""
    bf16 = jnp.bfloat16
    enc, dec = params["encoder"], params["decoder"]

    def st(blocks, fn, dtype=jnp.float32):
        return jnp.stack([fn(b) for b in blocks], axis=0).astype(dtype)

    def qkv_w(m):   # (D, 3D)  [wq | wk | wv]
        return jnp.concatenate([m["wq"], m["wk"], m["wv"]], axis=1)

    def qkv_b(m):   # (1, 3D)  [bq | bk | bv]
        return jnp.concatenate([m["bq"], m["bk"], m["bv"]], axis=1)

    dim = params["head_w"].shape[0]
    V = params["head_w"].shape[1]
    Vp = max(128, ((V + 127) // 128) * 128)
    head_w = jnp.zeros((dim, Vp), jnp.float32).at[:, :V].set(params["head_w"])
    head_b = jnp.full((1, Vp), -1e9, jnp.float32).at[:, :V].set(params["head_b"])

    return {
        "src_emb": params["src_emb"], "trg_emb": params["trg_emb"],
        "pe": params["pe"],
        # encoder
        "e_wqkv": st(enc, lambda b: qkv_w(b["mha"]), bf16),
        "e_bqkv": st(enc, lambda b: qkv_b(b["mha"])),
        "e_wo":   st(enc, lambda b: b["mha"]["wo"], bf16),
        "e_bo":   st(enc, lambda b: b["mha"]["bo"]),
        "e_w1":   st(enc, lambda b: b["ffn"]["w1"], bf16),
        "e_b1":   st(enc, lambda b: b["ffn"]["b1"]),
        "e_w2":   st(enc, lambda b: b["ffn"]["w2"], bf16),
        "e_b2":   st(enc, lambda b: b["ffn"]["b2"]),
        "e_ln":   st(enc, lambda b: jnp.concatenate(
            [b["ln1_g"], b["ln1_b"], b["ln2_g"], b["ln2_b"]], 0)),
        # decoder
        "d_wqkv_s": st(dec, lambda b: qkv_w(b["self_mha"]), bf16),
        "d_bqkv_s": st(dec, lambda b: qkv_b(b["self_mha"])),
        "d_wo_s":   st(dec, lambda b: b["self_mha"]["wo"], bf16),
        "d_bo_s":   st(dec, lambda b: b["self_mha"]["bo"]),
        "d_wqkv_c": st(dec, lambda b: qkv_w(b["cross_mha"]), bf16),
        "d_bqkv_c": st(dec, lambda b: qkv_b(b["cross_mha"])),
        "d_wo_c":   st(dec, lambda b: b["cross_mha"]["wo"], bf16),
        "d_bo_c":   st(dec, lambda b: b["cross_mha"]["bo"]),
        "d_w1":     st(dec, lambda b: b["ffn"]["w1"], bf16),
        "d_b1":     st(dec, lambda b: b["ffn"]["b1"]),
        "d_w2":     st(dec, lambda b: b["ffn"]["w2"], bf16),
        "d_b2":     st(dec, lambda b: b["ffn"]["b2"]),
        "d_ln":     st(dec, lambda b: jnp.concatenate(
            [b["ln1_g"], b["ln1_b"], b["ln2_g"], b["ln2_b"],
             b["ln3_g"], b["ln3_b"]], 0)),
        # head (zero-padded weight, -1e9-padded bias -> lane-dense log_softmax)
        "head_w": head_w.astype(bf16),
        "head_b": head_b,
    }


# ----------------------------------------------------------------------------
# Main
# ----------------------------------------------------------------------------

if __name__ == "__main__":
    B, S = 2, 8                      # batch, seq_len
    src_vocab, trg_vocab = 50, 60
    dim, n_heads, pw_dim = 32, 4, 64
    n_enc, n_dec = 2, 2

    key = jax.random.PRNGKey(0)
    pkey, skey, tkey = jax.random.split(key, 3)

    params = init_params(pkey, S, src_vocab, trg_vocab, dim, pw_dim, n_enc, n_dec)
    packed = pack_params(params)

    src_seq_indices = jax.random.randint(skey, (B, S), 0, src_vocab, dtype=jnp.int32)
    trg_seq_indices = jax.random.randint(tkey, (B, S), 0, trg_vocab, dtype=jnp.int32)
    src_mask = jnp.ones((B, 1, 1, S), jnp.float32)                       # all visible
    trg_mask = jnp.broadcast_to(                                         # causal mask
        jnp.tril(jnp.ones((S, S), jnp.float32))[None, None], (B, 1, S, S))

    enc_out, log_probs = transformer_forward(
        packed, src_seq_indices, trg_seq_indices, src_mask, trg_mask,
        dim=dim, n_heads=n_heads, vocab_out=trg_vocab)
    jax.block_until_ready((enc_out, log_probs))

    assert enc_out.shape == (B, S, dim)
    assert log_probs.shape == (B, S, trg_vocab)
    assert bool(jnp.isfinite(enc_out).all()) and bool(jnp.isfinite(log_probs).all())
    # log_softmax sanity: rows sum to 1 in prob space
    assert bool(jnp.allclose(jnp.exp(log_probs).sum(-1), 1.0, atol=1e-4))

    print("KERNEL_OK")
</pallas_src>

<mosaic_0001>
module attributes {stable_mosaic.version = 11 : i64} {
  func.func @_transformer_kernel(%arg0: i32, %arg1: memref<1x8x32xf32, #tpu.memory_space<vmem>>, %arg2: memref<1x8x32xf32, #tpu.memory_space<vmem>>, %arg3: memref<1x8x8xf32, #tpu.memory_space<vmem>>, %arg4: memref<1x8x8xf32, #tpu.memory_space<vmem>>, %arg5: memref<1x8x8xf32, #tpu.memory_space<vmem>>, %arg6: memref<2x32x96xbf16, #tpu.memory_space<vmem>>, %arg7: memref<2x1x96xf32, #tpu.memory_space<vmem>>, %arg8: memref<2x32x32xbf16, #tpu.memory_space<vmem>>, %arg9: memref<2x1x32xf32, #tpu.memory_space<vmem>>, %arg10: memref<2x32x64xbf16, #tpu.memory_space<vmem>>, %arg11: memref<2x1x64xf32, #tpu.memory_space<vmem>>, %arg12: memref<2x64x32xbf16, #tpu.memory_space<vmem>>, %arg13: memref<2x1x32xf32, #tpu.memory_space<vmem>>, %arg14: memref<2x4x32xf32, #tpu.memory_space<vmem>>, %arg15: memref<2x32x96xbf16, #tpu.memory_space<vmem>>, %arg16: memref<2x1x96xf32, #tpu.memory_space<vmem>>, %arg17: memref<2x32x32xbf16, #tpu.memory_space<vmem>>, %arg18: memref<2x1x32xf32, #tpu.memory_space<vmem>>, %arg19: memref<2x32x96xbf16, #tpu.memory_space<vmem>>, %arg20: memref<2x1x96xf32, #tpu.memory_space<vmem>>, %arg21: memref<2x32x32xbf16, #tpu.memory_space<vmem>>, %arg22: memref<2x1x32xf32, #tpu.memory_space<vmem>>, %arg23: memref<2x32x64xbf16, #tpu.memory_space<vmem>>, %arg24: memref<2x1x64xf32, #tpu.memory_space<vmem>>, %arg25: memref<2x64x32xbf16, #tpu.memory_space<vmem>>, %arg26: memref<2x1x32xf32, #tpu.memory_space<vmem>>, %arg27: memref<2x6x32xf32, #tpu.memory_space<vmem>>, %arg28: memref<32x128xbf16, #tpu.memory_space<vmem>>, %arg29: memref<1x128xf32, #tpu.memory_space<vmem>>, %arg30: memref<1x8x32xf32, #tpu.memory_space<vmem>>, %arg31: memref<1x8x128xf32, #tpu.memory_space<vmem>>) attributes {dimension_semantics = [#tpu.dimension_semantics<parallel>], iteration_bounds = array<i64: 2>, scalar_prefetch = 0 : i64, scratch_operands = 0 : i64, tpu.core_type = #tpu.core_type<tc>, window_params = [{transform_indices = @transform_0, window_bounds = array<i64: 1, 8, 32>}, {transform_indices = @transform_1, window_bounds = array<i64: 1, 8, 32>}, {transform_indices = @transform_2, window_bounds = array<i64: 1, 8, 8>}, {transform_indices = @transform_3, window_bounds = array<i64: 1, 8, 8>}, {transform_indices = @transform_4, window_bounds = array<i64: 1, 8, 8>}, {pipeline_mode = #tpu.pipeline_mode<synchronous>, transform_indices = @transform_5, window_bounds = array<i64: 2, 32, 96>}, {pipeline_mode = #tpu.pipeline_mode<synchronous>, transform_indices = @transform_6, window_bounds = array<i64: 2, 1, 96>}, {pipeline_mode = #tpu.pipeline_mode<synchronous>, transform_indices = @transform_7, window_bounds = array<i64: 2, 32, 32>}, {pipeline_mode = #tpu.pipeline_mode<synchronous>, transform_indices = @transform_8, window_bounds = array<i64: 2, 1, 32>}, {pipeline_mode = #tpu.pipeline_mode<synchronous>, transform_indices = @transform_9, window_bounds = array<i64: 2, 32, 64>}, {pipeline_mode = #tpu.pipeline_mode<synchronous>, transform_indices = @transform_10, window_bounds = array<i64: 2, 1, 64>}, {pipeline_mode = #tpu.pipeline_mode<synchronous>, transform_indices = @transform_11, window_bounds = array<i64: 2, 64, 32>}, {pipeline_mode = #tpu.pipeline_mode<synchronous>, transform_indices = @transform_12, window_bounds = array<i64: 2, 1, 32>}, {pipeline_mode = #tpu.pipeline_mode<synchronous>, transform_indices = @transform_13, window_bounds = array<i64: 2, 4, 32>}, {pipeline_mode = #tpu.pipeline_mode<synchronous>, transform_indices = @transform_14, window_bounds = array<i64: 2, 32, 96>}, {pipeline_mode = #tpu.pipeline_mode<synchronous>, transform_indices = @transform_15, window_bounds = array<i64: 2, 1, 96>}, {pipeline_mode = #tpu.pipeline_mode<synchronous>, transform_indices = @transform_16, window_bounds = array<i64: 2, 32, 32>}, {pipeline_mode = #tpu.pipeline_mode<synchronous>, transform_indices = @transform_17, window_bounds = array<i64: 2, 1, 32>}, {pipeline_mode = #tpu.pipeline_mode<synchronous>, transform_indices = @transform_18, window_bounds = array<i64: 2, 32, 96>}, {pipeline_mode = #tpu.pipeline_mode<synchronous>, transform_indices = @transform_19, window_bounds = array<i64: 2, 1, 96>}, {pipeline_mode = #tpu.pipeline_mode<synchronous>, transform_indices = @transform_20, window_bounds = array<i64: 2, 32, 32>}, {pipeline_mode = #tpu.pipeline_mode<synchronous>, transform_indices = @transform_21, window_bounds = array<i64: 2, 1, 32>}, {pipeline_mode = #tpu.pipeline_mode<synchronous>, transform_indices = @transform_22, window_bounds = array<i64: 2, 32, 64>}, {pipeline_mode = #tpu.pipeline_mode<synchronous>, transform_indices = @transform_23, window_bounds = array<i64: 2, 1, 64>}, {pipeline_mode = #tpu.pipeline_mode<synchronous>, transform_indices = @transform_24, window_bounds = array<i64: 2, 64, 32>}, {pipeline_mode = #tpu.pipeline_mode<synchronous>, transform_indices = @transform_25, window_bounds = array<i64: 2, 1, 32>}, {pipeline_mode = #tpu.pipeline_mode<synchronous>, transform_indices = @transform_26, window_bounds = array<i64: 2, 6, 32>}, {pipeline_mode = #tpu.pipeline_mode<synchronous>, transform_indices = @transform_27, window_bounds = array<i64: 32, 128>}, {pipeline_mode = #tpu.pipeline_mode<synchronous>, transform_indices = @transform_28, window_bounds = array<i64: 1, 128>}, {transform_indices = @transform_29, window_bounds = array<i64: 1, 8, 32>}, {transform_indices = @transform_30, window_bounds = array<i64: 1, 8, 128>}]} {
    %0 = tpu.iota {dimensions = array<i32: 1>} : vector<1x32xi32>
    %c0_i32 = arith.constant 0 : i32
    %1 = vector.broadcast %c0_i32 : i32 to vector<1x32xi32>
    %2 = arith.cmpi sge, %0, %1 : vector<1x32xi32>
    %c8_i32 = arith.constant 8 : i32
    %3 = vector.broadcast %c8_i32 : i32 to vector<1x32xi32>
    %4 = arith.cmpi slt, %0, %3 : vector<1x32xi32>
    %5 = arith.andi %2, %4 : vector<1x32xi1>
    %6 = arith.extui %5 : vector<1x32xi1> to vector<1x32xi32>
    %7 = arith.sitofp %6 : vector<1x32xi32> to vector<1x32xf32>
    %c8_i32_0 = arith.constant 8 : i32
    %8 = vector.broadcast %c8_i32_0 : i32 to vector<1x32xi32>
    %9 = arith.cmpi sge, %0, %8 : vector<1x32xi32>
    %c16_i32 = arith.constant 16 : i32
    %10 = vector.broadcast %c16_i32 : i32 to vector<1x32xi32>
    %11 = arith.cmpi slt, %0, %10 : vector<1x32xi32>
    %12 = arith.andi %9, %11 : vector<1x32xi1>
    %13 = arith.extui %12 : vector<1x32xi1> to vector<1x32xi32>
    %14 = arith.sitofp %13 : vector<1x32xi32> to vector<1x32xf32>
    %c16_i32_1 = arith.constant 16 : i32
    %15 = vector.broadcast %c16_i32_1 : i32 to vector<1x32xi32>
    %16 = arith.cmpi sge, %0, %15 : vector<1x32xi32>
    %c24_i32 = arith.constant 24 : i32
    %17 = vector.broadcast %c24_i32 : i32 to vector<1x32xi32>
    %18 = arith.cmpi slt, %0, %17 : vector<1x32xi32>
    %19 = arith.andi %16, %18 : vector<1x32xi1>
    %20 = arith.extui %19 : vector<1x32xi1> to vector<1x32xi32>
    %21 = arith.sitofp %20 : vector<1x32xi32> to vector<1x32xf32>
    %c24_i32_2 = arith.constant 24 : i32
    %22 = vector.broadcast %c24_i32_2 : i32 to vector<1x32xi32>
    %23 = arith.cmpi sge, %0, %22 : vector<1x32xi32>
    %c32_i32 = arith.constant 32 : i32
    %24 = vector.broadcast %c32_i32 : i32 to vector<1x32xi32>
    %25 = arith.cmpi slt, %0, %24 : vector<1x32xi32>
    %26 = arith.andi %23, %25 : vector<1x32xi1>
    %27 = arith.extui %26 : vector<1x32xi1> to vector<1x32xi32>
    %28 = arith.sitofp %27 : vector<1x32xi32> to vector<1x32xf32>
    %c0 = arith.constant 0 : index
    %c0_3 = arith.constant 0 : index
    %c0_4 = arith.constant 0 : index
    %29 = vector.load %arg3[%c0, %c0_3, %c0_4] : memref<1x8x8xf32, #tpu.memory_space<vmem>>, vector<1x8x8xf32>
    %30 = vector.shape_cast %29 : vector<1x8x8xf32> to vector<8x8xf32>
    %c0_5 = arith.constant 0 : index
    %c0_6 = arith.constant 0 : index
    %c0_7 = arith.constant 0 : index
    %31 = vector.load %arg4[%c0_5, %c0_6, %c0_7] : memref<1x8x8xf32, #tpu.memory_space<vmem>>, vector<1x8x8xf32>
    %32 = vector.shape_cast %31 : vector<1x8x8xf32> to vector<8x8xf32>
    %c0_8 = arith.constant 0 : index
    %c0_9 = arith.constant 0 : index
    %c0_10 = arith.constant 0 : index
    %33 = vector.load %arg5[%c0_8, %c0_9, %c0_10] : memref<1x8x8xf32, #tpu.memory_space<vmem>>, vector<1x8x8xf32>
    %34 = vector.shape_cast %33 : vector<1x8x8xf32> to vector<8x8xf32>
    %c0_11 = arith.constant 0 : index
    %c0_12 = arith.constant 0 : index
    %c0_13 = arith.constant 0 : index
    %35 = vector.load %arg1[%c0_11, %c0_12, %c0_13] : memref<1x8x32xf32, #tpu.memory_space<vmem>>, vector<1x8x32xf32>
    %36 = vector.shape_cast %35 : vector<1x8x32xf32> to vector<8x32xf32>
    %c0_14 = arith.constant 0 : index
    %c0_15 = arith.constant 0 : index
    %c0_16 = arith.constant 0 : index
    %37 = vector.load %arg6[%c0_14, %c0_15, %c0_16] : memref<2x32x96xbf16, #tpu.memory_space<vmem>>, vector<1x32x96xbf16>
    %38 = vector.shape_cast %37 : vector<1x32x96xbf16> to vector<32x96xbf16>
    %39 = arith.truncf %36 : vector<8x32xf32> to vector<8x32xbf16>
    %cst = arith.constant dense<0.000000e+00> : vector<8x96xf32>
    %40 = tpu.matmul %39, %38, %cst {dimension_numbers = #tpu.dot_dimension_numbers<[1], [0], [0], [1], [0, 0, 1, 1], [], []>} : vector<8x32xbf16>, vector<32x96xbf16>, vector<8x96xf32> -> vector<8x96xf32>
    %c0_17 = arith.constant 0 : index
    %c0_18 = arith.constant 0 : index
    %c0_19 = arith.constant 0 : index
    %41 = vector.load %arg7[%c0_17, %c0_18, %c0_19] : memref<2x1x96xf32, #tpu.memory_space<vmem>>, vector<1x1x96xf32>
    %42 = vector.shape_cast %41 : vector<1x1x96xf32> to vector<1x96xf32>
    %43 = vector.broadcast %42 : vector<1x96xf32> to vector<8x96xf32>
    %44 = arith.addf %40, %43 : vector<8x96xf32>
    %45 = vector.extract_strided_slice %44 {offsets = [0, 0], sizes = [8, 32], strides = [1, 1]} : vector<8x96xf32> to vector<8x32xf32>
    %46 = vector.extract_strided_slice %44 {offsets = [0, 32], sizes = [8, 32], strides = [1, 1]} : vector<8x96xf32> to vector<8x32xf32>
    %47 = vector.extract_strided_slice %44 {offsets = [0, 64], sizes = [8, 32], strides = [1, 1]} : vector<8x96xf32> to vector<8x32xf32>
    %48 = arith.truncf %46 : vector<8x32xf32> to vector<8x32xbf16>
    %cst_20 = arith.constant 0.000000e+00 : f32
    %49 = vector.broadcast %cst_20 : f32 to vector<8x32xf32>
    %50 = vector.broadcast %7 : vector<1x32xf32> to vector<8x32xf32>
    %51 = arith.mulf %45, %50 : vector<8x32xf32>
    %52 = arith.truncf %51 : vector<8x32xf32> to vector<8x32xbf16>
    %cst_21 = arith.constant dense<0.000000e+00> : vector<8x8xf32>
    %53 = tpu.matmul %52, %48, %cst_21 {dimension_numbers = #tpu.dot_dimension_numbers<[1], [1], [0], [0], [0, 0, 1, 0], [], []>} : vector<8x32xbf16>, vector<8x32xbf16>, vector<8x8xf32> -> vector<8x8xf32>
    %cst_22 = arith.constant 0.353553385 : f32
    %54 = vector.broadcast %cst_22 : f32 to vector<8x8xf32>
    %55 = arith.mulf %53, %54 : vector<8x8xf32>
    %56 = arith.addf %55, %30 : vector<8x8xf32>
    %cst_23 = arith.constant dense<0xFF800000> : vector<8xf32>
    %57 = vector.multi_reduction <maximumf>, %56, %cst_23 [1] : vector<8x8xf32> to vector<8xf32>
    %58 = vector.shape_cast %57 : vector<8xf32> to vector<8x1xf32>
    %59 = vector.broadcast %58 : vector<8x1xf32> to vector<8x8xf32>
    %60 = arith.subf %56, %59 : vector<8x8xf32>
    %61 = math.exp %60 : vector<8x8xf32>
    %cst_24 = arith.constant dense<0.000000e+00> : vector<8xf32>
    %62 = vector.multi_reduction <add>, %61, %cst_24 [1] : vector<8x8xf32> to vector<8xf32>
    %63 = vector.shape_cast %62 : vector<8xf32> to vector<8x1xf32>
    %64 = tpu.reciprocal %63 {approx = true} : vector<8x1xf32> -> vector<8x1xf32>
    %65 = vector.broadcast %64 : vector<8x1xf32> to vector<8x8xf32>
    %66 = arith.mulf %61, %65 : vector<8x8xf32>
    %67 = arith.truncf %66 : vector<8x8xf32> to vector<8x8xbf16>
    %68 = vector.broadcast %7 : vector<1x32xf32> to vector<8x32xf32>
    %69 = arith.mulf %47, %68 : vector<8x32xf32>
    %70 = arith.truncf %69 : vector<8x32xf32> to vector<8x32xbf16>
    %cst_25 = arith.constant dense<0.000000e+00> : vector<8x32xf32>
    %71 = tpu.matmul %67, %70, %cst_25 {dimension_numbers = #tpu.dot_dimension_numbers<[1], [0], [0], [1], [0, 0, 1, 1], [], []>} : vector<8x8xbf16>, vector<8x32xbf16>, vector<8x32xf32> -> vector<8x32xf32>
    %72 = arith.addf %49, %71 : vector<8x32xf32>
    %73 = vector.broadcast %14 : vector<1x32xf32> to vector<8x32xf32>
    %74 = arith.mulf %45, %73 : vector<8x32xf32>
    %75 = arith.truncf %74 : vector<8x32xf32> to vector<8x32xbf16>
    %cst_26 = arith.constant dense<0.000000e+00> : vector<8x8xf32>
    %76 = tpu.matmul %75, %48, %cst_26 {dimension_numbers = #tpu.dot_dimension_numbers<[1], [1], [0], [0], [0, 0, 1, 0], [], []>} : vector<8x32xbf16>, vector<8x32xbf16>, vector<8x8xf32> -> vector<8x8xf32>
    %cst_27 = arith.constant 0.353553385 : f32
    %77 = vector.broadcast %cst_27 : f32 to vector<8x8xf32>
    %78 = arith.mulf %76, %77 : vector<8x8xf32>
    %79 = arith.addf %78, %30 : vector<8x8xf32>
    %cst_28 = arith.constant dense<0xFF800000> : vector<8xf32>
    %80 = vector.multi_reduction <maximumf>, %79, %cst_28 [1] : vector<8x8xf32> to vector<8xf32>
    %81 = vector.shape_cast %80 : vector<8xf32> to vector<8x1xf32>
    %82 = vector.broadcast %81 : vector<8x1xf32> to vector<8x8xf32>
    %83 = arith.subf %79, %82 : vector<8x8xf32>
    %84 = math.exp %83 : vector<8x8xf32>
    %cst_29 = arith.constant dense<0.000000e+00> : vector<8xf32>
    %85 = vector.multi_reduction <add>, %84, %cst_29 [1] : vector<8x8xf32> to vector<8xf32>
    %86 = vector.shape_cast %85 : vector<8xf32> to vector<8x1xf32>
    %87 = tpu.reciprocal %86 {approx = true} : vector<8x1xf32> -> vector<8x1xf32>
    %88 = vector.broadcast %87 : vector<8x1xf32> to vector<8x8xf32>
    %89 = arith.mulf %84, %88 : vector<8x8xf32>
    %90 = arith.truncf %89 : vector<8x8xf32> to vector<8x8xbf16>
    %91 = vector.broadcast %14 : vector<1x32xf32> to vector<8x32xf32>
    %92 = arith.mulf %47, %91 : vector<8x32xf32>
    %93 = arith.truncf %92 : vector<8x32xf32> to vector<8x32xbf16>
    %cst_30 = arith.constant dense<0.000000e+00> : vector<8x32xf32>
    %94 = tpu.matmul %90, %93, %cst_30 {dimension_numbers = #tpu.dot_dimension_numbers<[1], [0], [0], [1], [0, 0, 1, 1], [], []>} : vector<8x8xbf16>, vector<8x32xbf16>, vector<8x32xf32> -> vector<8x32xf32>
    %95 = arith.addf %72, %94 : vector<8x32xf32>
    %96 = vector.broadcast %21 : vector<1x32xf32> to vector<8x32xf32>
    %97 = arith.mulf %45, %96 : vector<8x32xf32>
    %98 = arith.truncf %97 : vector<8x32xf32> to vector<8x32xbf16>
    %cst_31 = arith.constant dense<0.000000e+00> : vector<8x8xf32>
    %99 = tpu.matmul %98, %48, %cst_31 {dimension_numbers = #tpu.dot_dimension_numbers<[1], [1], [0], [0], [0, 0, 1, 0], [], []>} : vector<8x32xbf16>, vector<8x32xbf16>, vector<8x8xf32> -> vector<8x8xf32>
    %cst_32 = arith.constant 0.353553385 : f32
    %100 = vector.broadcast %cst_32 : f32 to vector<8x8xf32>
    %101 = arith.mulf %99, %100 : vector<8x8xf32>
    %102 = arith.addf %101, %30 : vector<8x8xf32>
    %cst_33 = arith.constant dense<0xFF800000> : vector<8xf32>
    %103 = vector.multi_reduction <maximumf>, %102, %cst_33 [1] : vector<8x8xf32> to vector<8xf32>
    %104 = vector.shape_cast %103 : vector<8xf32> to vector<8x1xf32>
    %105 = vector.broadcast %104 : vector<8x1xf32> to vector<8x8xf32>
    %106 = arith.subf %102, %105 : vector<8x8xf32>
    %107 = math.exp %106 : vector<8x8xf32>
    %cst_34 = arith.constant dense<0.000000e+00> : vector<8xf32>
    %108 = vector.multi_reduction <add>, %107, %cst_34 [1] : vector<8x8xf32> to vector<8xf32>
    %109 = vector.shape_cast %108 : vector<8xf32> to vector<8x1xf32>
    %110 = tpu.reciprocal %109 {approx = true} : vector<8x1xf32> -> vector<8x1xf32>
    %111 = vector.broadcast %110 : vector<8x1xf32> to vector<8x8xf32>
    %112 = arith.mulf %107, %111 : vector<8x8xf32>
    %113 = arith.truncf %112 : vector<8x8xf32> to vector<8x8xbf16>
    %114 = vector.broadcast %21 : vector<1x32xf32> to vector<8x32xf32>
    %115 = arith.mulf %47, %114 : vector<8x32xf32>
    %116 = arith.truncf %115 : vector<8x32xf32> to vector<8x32xbf16>
    %cst_35 = arith.constant dense<0.000000e+00> : vector<8x32xf32>
    %117 = tpu.matmul %113, %116, %cst_35 {dimension_numbers = #tpu.dot_dimension_numbers<[1], [0], [0], [1], [0, 0, 1, 1], [], []>} : vector<8x8xbf16>, vector<8x32xbf16>, vector<8x32xf32> -> vector<8x32xf32>
    %118 = arith.addf %95, %117 : vector<8x32xf32>
    %119 = vector.broadcast %28 : vector<1x32xf32> to vector<8x32xf32>
    %120 = arith.mulf %45, %119 : vector<8x32xf32>
    %121 = arith.truncf %120 : vector<8x32xf32> to vector<8x32xbf16>
    %cst_36 = arith.constant dense<0.000000e+00> : vector<8x8xf32>
    %122 = tpu.matmul %121, %48, %cst_36 {dimension_numbers = #tpu.dot_dimension_numbers<[1], [1], [0], [0], [0, 0, 1, 0], [], []>} : vector<8x32xbf16>, vector<8x32xbf16>, vector<8x8xf32> -> vector<8x8xf32>
    %cst_37 = arith.constant 0.353553385 : f32
    %123 = vector.broadcast %cst_37 : f32 to vector<8x8xf32>
    %124 = arith.mulf %122, %123 : vector<8x8xf32>
    %125 = arith.addf %124, %30 : vector<8x8xf32>
    %cst_38 = arith.constant dense<0xFF800000> : vector<8xf32>
    %126 = vector.multi_reduction <maximumf>, %125, %cst_38 [1] : vector<8x8xf32> to vector<8xf32>
    %127 = vector.shape_cast %126 : vector<8xf32> to vector<8x1xf32>
    %128 = vector.broadcast %127 : vector<8x1xf32> to vector<8x8xf32>
    %129 = arith.subf %125, %128 : vector<8x8xf32>
    %130 = math.exp %129 : vector<8x8xf32>
    %cst_39 = arith.constant dense<0.000000e+00> : vector<8xf32>
    %131 = vector.multi_reduction <add>, %130, %cst_39 [1] : vector<8x8xf32> to vector<8xf32>
    %132 = vector.shape_cast %131 : vector<8xf32> to vector<8x1xf32>
    %133 = tpu.reciprocal %132 {approx = true} : vector<8x1xf32> -> vector<8x1xf32>
    %134 = vector.broadcast %133 : vector<8x1xf32> to vector<8x8xf32>
    %135 = arith.mulf %130, %134 : vector<8x8xf32>
    %136 = arith.truncf %135 : vector<8x8xf32> to vector<8x8xbf16>
    %137 = vector.broadcast %28 : vector<1x32xf32> to vector<8x32xf32>
    %138 = arith.mulf %47, %137 : vector<8x32xf32>
    %139 = arith.truncf %138 : vector<8x32xf32> to vector<8x32xbf16>
    %cst_40 = arith.constant dense<0.000000e+00> : vector<8x32xf32>
    %140 = tpu.matmul %136, %139, %cst_40 {dimension_numbers = #tpu.dot_dimension_numbers<[1], [0], [0], [1], [0, 0, 1, 1], [], []>} : vector<8x8xbf16>, vector<8x32xbf16>, vector<8x32xf32> -> vector<8x32xf32>
    %141 = arith.addf %118, %140 : vector<8x32xf32>
    %c0_41 = arith.constant 0 : index
    %c0_42 = arith.constant 0 : index
    %c0_43 = arith.constant 0 : index
    %142 = vector.load %arg8[%c0_41, %c0_42, %c0_43] : memref<2x32x32xbf16, #tpu.memory_space<vmem>>, vector<1x32x32xbf16>
    %143 = vector.shape_cast %142 : vector<1x32x32xbf16> to vector<32x32xbf16>
    %144 = arith.truncf %141 : vector<8x32xf32> to vector<8x32xbf16>
    %cst_44 = arith.constant dense<0.000000e+00> : vector<8x32xf32>
    %145 = tpu.matmul %144, %143, %cst_44 {dimension_numbers = #tpu.dot_dimension_numbers<[1], [0], [0], [1], [0, 0, 1, 1], [], []>} : vector<8x32xbf16>, vector<32x32xbf16>, vector<8x32xf32> -> vector<8x32xf32>
    %c0_45 = arith.constant 0 : index
    %c0_46 = arith.constant 0 : index
    %c0_47 = arith.constant 0 : index
    %146 = vector.load %arg9[%c0_45, %c0_46, %c0_47] : memref<2x1x32xf32, #tpu.memory_space<vmem>>, vector<1x1x32xf32>
    %147 = vector.shape_cast %146 : vector<1x1x32xf32> to vector<1x32xf32>
    %148 = vector.broadcast %147 : vector<1x32xf32> to vector<8x32xf32>
    %149 = arith.addf %145, %148 : vector<8x32xf32>
    %150 = arith.addf %36, %149 : vector<8x32xf32>
    %c0_48 = arith.constant 0 : index
    %c0_49 = arith.constant 0 : index
    %c0_50 = arith.constant 0 : index
    %151 = vector.load %arg14[%c0_48, %c0_49, %c0_50] : memref<2x4x32xf32, #tpu.memory_space<vmem>>, vector<1x1x32xf32>
    %152 = vector.shape_cast %151 : vector<1x1x32xf32> to vector<1x32xf32>
    %c0_51 = arith.constant 0 : index
    %c1 = arith.constant 1 : index
    %c0_52 = arith.constant 0 : index
    %153 = vector.load %arg14[%c0_51, %c1, %c0_52] : memref<2x4x32xf32, #tpu.memory_space<vmem>>, vector<1x1x32xf32>
    %154 = vector.shape_cast %153 : vector<1x1x32xf32> to vector<1x32xf32>
    %cst_53 = arith.constant dense<0.000000e+00> : vector<8xf32>
    %155 = vector.multi_reduction <add>, %150, %cst_53 [1] : vector<8x32xf32> to vector<8xf32>
    %156 = vector.shape_cast %155 : vector<8xf32> to vector<8x1xf32>
    %cst_54 = arith.constant 3.200000e+01 : f32
    %157 = vector.broadcast %cst_54 : f32 to vector<8x1xf32>
    %158 = arith.divf %156, %157 : vector<8x1xf32>
    %159 = vector.broadcast %158 : vector<8x1xf32> to vector<8x32xf32>
    %160 = arith.subf %150, %159 : vector<8x32xf32>
    %161 = arith.mulf %160, %160 : vector<8x32xf32>
    %cst_55 = arith.constant dense<0.000000e+00> : vector<8xf32>
    %162 = vector.multi_reduction <add>, %161, %cst_55 [1] : vector<8x32xf32> to vector<8xf32>
    %163 = vector.shape_cast %162 : vector<8xf32> to vector<8x1xf32>
    %cst_56 = arith.constant 3.200000e+01 : f32
    %164 = vector.broadcast %cst_56 : f32 to vector<8x1xf32>
    %165 = arith.divf %163, %164 : vector<8x1xf32>
    %166 = vector.broadcast %158 : vector<8x1xf32> to vector<8x32xf32>
    %167 = arith.subf %150, %166 : vector<8x32xf32>
    %cst_57 = arith.constant 9.99999974E-6 : f32
    %168 = vector.broadcast %cst_57 : f32 to vector<8x1xf32>
    %169 = arith.addf %165, %168 : vector<8x1xf32>
    %170 = math.rsqrt %169 : vector<8x1xf32>
    %171 = vector.broadcast %170 : vector<8x1xf32> to vector<8x32xf32>
    %172 = arith.mulf %167, %171 : vector<8x32xf32>
    %173 = vector.broadcast %152 : vector<1x32xf32> to vector<8x32xf32>
    %174 = arith.mulf %172, %173 : vector<8x32xf32>
    %175 = vector.broadcast %154 : vector<1x32xf32> to vector<8x32xf32>
    %176 = arith.addf %174, %175 : vector<8x32xf32>
    %c0_58 = arith.constant 0 : index
    %c0_59 = arith.constant 0 : index
    %c0_60 = arith.constant 0 : index
    %177 = vector.load %arg10[%c0_58, %c0_59, %c0_60] : memref<2x32x64xbf16, #tpu.memory_space<vmem>>, vector<1x32x64xbf16>
    %178 = vector.shape_cast %177 : vector<1x32x64xbf16> to vector<32x64xbf16>
    %179 = arith.truncf %176 : vector<8x32xf32> to vector<8x32xbf16>
    %cst_61 = arith.constant dense<0.000000e+00> : vector<8x64xf32>
    %180 = tpu.matmul %179, %178, %cst_61 {dimension_numbers = #tpu.dot_dimension_numbers<[1], [0], [0], [1], [0, 0, 1, 1], [], []>} : vector<8x32xbf16>, vector<32x64xbf16>, vector<8x64xf32> -> vector<8x64xf32>
    %c0_62 = arith.constant 0 : index
    %c0_63 = arith.constant 0 : index
    %c0_64 = arith.constant 0 : index
    %181 = vector.load %arg11[%c0_62, %c0_63, %c0_64] : memref<2x1x64xf32, #tpu.memory_space<vmem>>, vector<1x1x64xf32>
    %182 = vector.shape_cast %181 : vector<1x1x64xf32> to vector<1x64xf32>
    %183 = vector.broadcast %182 : vector<1x64xf32> to vector<8x64xf32>
    %184 = arith.addf %180, %183 : vector<8x64xf32>
    %cst_65 = arith.constant 0.000000e+00 : f32
    %185 = vector.broadcast %cst_65 : f32 to vector<8x64xf32>
    %186 = arith.maximumf %184, %185 : vector<8x64xf32>
    %c0_66 = arith.constant 0 : index
    %c0_67 = arith.constant 0 : index
    %c0_68 = arith.constant 0 : index
    %187 = vector.load %arg12[%c0_66, %c0_67, %c0_68] : memref<2x64x32xbf16, #tpu.memory_space<vmem>>, vector<1x64x32xbf16>
    %188 = vector.shape_cast %187 : vector<1x64x32xbf16> to vector<64x32xbf16>
    %189 = arith.truncf %186 : vector<8x64xf32> to vector<8x64xbf16>
    %cst_69 = arith.constant dense<0.000000e+00> : vector<8x32xf32>
    %190 = tpu.matmul %189, %188, %cst_69 {dimension_numbers = #tpu.dot_dimension_numbers<[1], [0], [0], [1], [0, 0, 1, 1], [], []>} : vector<8x64xbf16>, vector<64x32xbf16>, vector<8x32xf32> -> vector<8x32xf32>
    %c0_70 = arith.constant 0 : index
    %c0_71 = arith.constant 0 : index
    %c0_72 = arith.constant 0 : index
    %191 = vector.load %arg13[%c0_70, %c0_71, %c0_72] : memref<2x1x32xf32, #tpu.memory_space<vmem>>, vector<1x1x32xf32>
    %192 = vector.shape_cast %191 : vector<1x1x32xf32> to vector<1x32xf32>
    %193 = vector.broadcast %192 : vector<1x32xf32> to vector<8x32xf32>
    %194 = arith.addf %190, %193 : vector<8x32xf32>
    %195 = arith.addf %176, %194 : vector<8x32xf32>
    %c0_73 = arith.constant 0 : index
    %c2 = arith.constant 2 : index
    %c0_74 = arith.constant 0 : index
    %196 = vector.load %arg14[%c0_73, %c2, %c0_74] : memref<2x4x32xf32, #tpu.memory_space<vmem>>, vector<1x1x32xf32>
    %197 = vector.shape_cast %196 : vector<1x1x32xf32> to vector<1x32xf32>
    %c0_75 = arith.constant 0 : index
    %c3 = arith.constant 3 : index
    %c0_76 = arith.constant 0 : index
    %198 = vector.load %arg14[%c0_75, %c3, %c0_76] : memref<2x4x32xf32, #tpu.memory_space<vmem>>, vector<1x1x32xf32>
    %199 = vector.shape_cast %198 : vector<1x1x32xf32> to vector<1x32xf32>
    %cst_77 = arith.constant dense<0.000000e+00> : vector<8xf32>
    %200 = vector.multi_reduction <add>, %195, %cst_77 [1] : vector<8x32xf32> to vector<8xf32>
    %201 = vector.shape_cast %200 : vector<8xf32> to vector<8x1xf32>
    %cst_78 = arith.constant 3.200000e+01 : f32
    %202 = vector.broadcast %cst_78 : f32 to vector<8x1xf32>
    %203 = arith.divf %201, %202 : vector<8x1xf32>
    %204 = vector.broadcast %203 : vector<8x1xf32> to vector<8x32xf32>
    %205 = arith.subf %195, %204 : vector<8x32xf32>
    %206 = arith.mulf %205, %205 : vector<8x32xf32>
    %cst_79 = arith.constant dense<0.000000e+00> : vector<8xf32>
    %207 = vector.multi_reduction <add>, %206, %cst_79 [1] : vector<8x32xf32> to vector<8xf32>
    %208 = vector.shape_cast %207 : vector<8xf32> to vector<8x1xf32>
    %cst_80 = arith.constant 3.200000e+01 : f32
    %209 = vector.broadcast %cst_80 : f32 to vector<8x1xf32>
    %210 = arith.divf %208, %209 : vector<8x1xf32>
    %211 = vector.broadcast %203 : vector<8x1xf32> to vector<8x32xf32>
    %212 = arith.subf %195, %211 : vector<8x32xf32>
    %cst_81 = arith.constant 9.99999974E-6 : f32
    %213 = vector.broadcast %cst_81 : f32 to vector<8x1xf32>
    %214 = arith.addf %210, %213 : vector<8x1xf32>
    %215 = math.rsqrt %214 : vector<8x1xf32>
    %216 = vector.broadcast %215 : vector<8x1xf32> to vector<8x32xf32>
    %217 = arith.mulf %212, %216 : vector<8x32xf32>
    %218 = vector.broadcast %197 : vector<1x32xf32> to vector<8x32xf32>
    %219 = arith.mulf %217, %218 : vector<8x32xf32>
    %220 = vector.broadcast %199 : vector<1x32xf32> to vector<8x32xf32>
    %221 = arith.addf %219, %220 : vector<8x32xf32>
    %c1_82 = arith.constant 1 : index
    %c0_83 = arith.constant 0 : index
    %c0_84 = arith.constant 0 : index
    %222 = vector.load %arg6[%c1_82, %c0_83, %c0_84] : memref<2x32x96xbf16, #tpu.memory_space<vmem>>, vector<1x32x96xbf16>
    %223 = vector.shape_cast %222 : vector<1x32x96xbf16> to vector<32x96xbf16>
    %224 = arith.truncf %221 : vector<8x32xf32> to vector<8x32xbf16>
    %cst_85 = arith.constant dense<0.000000e+00> : vector<8x96xf32>
    %225 = tpu.matmul %224, %223, %cst_85 {dimension_numbers = #tpu.dot_dimension_numbers<[1], [0], [0], [1], [0, 0, 1, 1], [], []>} : vector<8x32xbf16>, vector<32x96xbf16>, vector<8x96xf32> -> vector<8x96xf32>
    %c1_86 = arith.constant 1 : index
    %c0_87 = arith.constant 0 : index
    %c0_88 = arith.constant 0 : index
    %226 = vector.load %arg7[%c1_86, %c0_87, %c0_88] : memref<2x1x96xf32, #tpu.memory_space<vmem>>, vector<1x1x96xf32>
    %227 = vector.shape_cast %226 : vector<1x1x96xf32> to vector<1x96xf32>
    %228 = vector.broadcast %227 : vector<1x96xf32> to vector<8x96xf32>
    %229 = arith.addf %225, %228 : vector<8x96xf32>
    %230 = vector.extract_strided_slice %229 {offsets = [0, 0], sizes = [8, 32], strides = [1, 1]} : vector<8x96xf32> to vector<8x32xf32>
    %231 = vector.extract_strided_slice %229 {offsets = [0, 32], sizes = [8, 32], strides = [1, 1]} : vector<8x96xf32> to vector<8x32xf32>
    %232 = vector.extract_strided_slice %229 {offsets = [0, 64], sizes = [8, 32], strides = [1, 1]} : vector<8x96xf32> to vector<8x32xf32>
    %233 = arith.truncf %231 : vector<8x32xf32> to vector<8x32xbf16>
    %cst_89 = arith.constant 0.000000e+00 : f32
    %234 = vector.broadcast %cst_89 : f32 to vector<8x32xf32>
    %235 = vector.broadcast %7 : vector<1x32xf32> to vector<8x32xf32>
    %236 = arith.mulf %230, %235 : vector<8x32xf32>
    %237 = arith.truncf %236 : vector<8x32xf32> to vector<8x32xbf16>
    %cst_90 = arith.constant dense<0.000000e+00> : vector<8x8xf32>
    %238 = tpu.matmul %237, %233, %cst_90 {dimension_numbers = #tpu.dot_dimension_numbers<[1], [1], [0], [0], [0, 0, 1, 0], [], []>} : vector<8x32xbf16>, vector<8x32xbf16>, vector<8x8xf32> -> vector<8x8xf32>
    %cst_91 = arith.constant 0.353553385 : f32
    %239 = vector.broadcast %cst_91 : f32 to vector<8x8xf32>
    %240 = arith.mulf %238, %239 : vector<8x8xf32>
    %241 = arith.addf %240, %30 : vector<8x8xf32>
    %cst_92 = arith.constant dense<0xFF800000> : vector<8xf32>
    %242 = vector.multi_reduction <maximumf>, %241, %cst_92 [1] : vector<8x8xf32> to vector<8xf32>
    %243 = vector.shape_cast %242 : vector<8xf32> to vector<8x1xf32>
    %244 = vector.broadcast %243 : vector<8x1xf32> to vector<8x8xf32>
    %245 = arith.subf %241, %244 : vector<8x8xf32>
    %246 = math.exp %245 : vector<8x8xf32>
    %cst_93 = arith.constant dense<0.000000e+00> : vector<8xf32>
    %247 = vector.multi_reduction <add>, %246, %cst_93 [1] : vector<8x8xf32> to vector<8xf32>
    %248 = vector.shape_cast %247 : vector<8xf32> to vector<8x1xf32>
    %249 = tpu.reciprocal %248 {approx = true} : vector<8x1xf32> -> vector<8x1xf32>
    %250 = vector.broadcast %249 : vector<8x1xf32> to vector<8x8xf32>
    %251 = arith.mulf %246, %250 : vector<8x8xf32>
    %252 = arith.truncf %251 : vector<8x8xf32> to vector<8x8xbf16>
    %253 = vector.broadcast %7 : vector<1x32xf32> to vector<8x32xf32>
    %254 = arith.mulf %232, %253 : vector<8x32xf32>
    %255 = arith.truncf %254 : vector<8x32xf32> to vector<8x32xbf16>
    %cst_94 = arith.constant dense<0.000000e+00> : vector<8x32xf32>
    %256 = tpu.matmul %252, %255, %cst_94 {dimension_numbers = #tpu.dot_dimension_numbers<[1], [0], [0], [1], [0, 0, 1, 1], [], []>} : vector<8x8xbf16>, vector<8x32xbf16>, vector<8x32xf32> -> vector<8x32xf32>
    %257 = arith.addf %234, %256 : vector<8x32xf32>
    %258 = vector.broadcast %14 : vector<1x32xf32> to vector<8x32xf32>
    %259 = arith.mulf %230, %258 : vector<8x32xf32>
    %260 = arith.truncf %259 : vector<8x32xf32> to vector<8x32xbf16>
    %cst_95 = arith.constant dense<0.000000e+00> : vector<8x8xf32>
    %261 = tpu.matmul %260, %233, %cst_95 {dimension_numbers = #tpu.dot_dimension_numbers<[1], [1], [0], [0], [0, 0, 1, 0], [], []>} : vector<8x32xbf16>, vector<8x32xbf16>, vector<8x8xf32> -> vector<8x8xf32>
    %cst_96 = arith.constant 0.353553385 : f32
    %262 = vector.broadcast %cst_96 : f32 to vector<8x8xf32>
    %263 = arith.mulf %261, %262 : vector<8x8xf32>
    %264 = arith.addf %263, %30 : vector<8x8xf32>
    %cst_97 = arith.constant dense<0xFF800000> : vector<8xf32>
    %265 = vector.multi_reduction <maximumf>, %264, %cst_97 [1] : vector<8x8xf32> to vector<8xf32>
    %266 = vector.shape_cast %265 : vector<8xf32> to vector<8x1xf32>
    %267 = vector.broadcast %266 : vector<8x1xf32> to vector<8x8xf32>
    %268 = arith.subf %264, %267 : vector<8x8xf32>
    %269 = math.exp %268 : vector<8x8xf32>
    %cst_98 = arith.constant dense<0.000000e+00> : vector<8xf32>
    %270 = vector.multi_reduction <add>, %269, %cst_98 [1] : vector<8x8xf32> to vector<8xf32>
    %271 = vector.shape_cast %270 : vector<8xf32> to vector<8x1xf32>
    %272 = tpu.reciprocal %271 {approx = true} : vector<8x1xf32> -> vector<8x1xf32>
    %273 = vector.broadcast %272 : vector<8x1xf32> to vector<8x8xf32>
    %274 = arith.mulf %269, %273 : vector<8x8xf32>
    %275 = arith.truncf %274 : vector<8x8xf32> to vector<8x8xbf16>
    %276 = vector.broadcast %14 : vector<1x32xf32> to vector<8x32xf32>
    %277 = arith.mulf %232, %276 : vector<8x32xf32>
    %278 = arith.truncf %277 : vector<8x32xf32> to vector<8x32xbf16>
    %cst_99 = arith.constant dense<0.000000e+00> : vector<8x32xf32>
    %279 = tpu.matmul %275, %278, %cst_99 {dimension_numbers = #tpu.dot_dimension_numbers<[1], [0], [0], [1], [0, 0, 1, 1], [], []>} : vector<8x8xbf16>, vector<8x32xbf16>, vector<8x32xf32> -> vector<8x32xf32>
    %280 = arith.addf %257, %279 : vector<8x32xf32>
    %281 = vector.broadcast %21 : vector<1x32xf32> to vector<8x32xf32>
    %282 = arith.mulf %230, %281 : vector<8x32xf32>
    %283 = arith.truncf %282 : vector<8x32xf32> to vector<8x32xbf16>
    %cst_100 = arith.constant dense<0.000000e+00> : vector<8x8xf32>
    %284 = tpu.matmul %283, %233, %cst_100 {dimension_numbers = #tpu.dot_dimension_numbers<[1], [1], [0], [0], [0, 0, 1, 0], [], []>} : vector<8x32xbf16>, vector<8x32xbf16>, vector<8x8xf32> -> vector<8x8xf32>
    %cst_101 = arith.constant 0.353553385 : f32
    %285 = vector.broadcast %cst_101 : f32 to vector<8x8xf32>
    %286 = arith.mulf %284, %285 : vector<8x8xf32>
    %287 = arith.addf %286, %30 : vector<8x8xf32>
    %cst_102 = arith.constant dense<0xFF800000> : vector<8xf32>
    %288 = vector.multi_reduction <maximumf>, %287, %cst_102 [1] : vector<8x8xf32> to vector<8xf32>
    %289 = vector.shape_cast %288 : vector<8xf32> to vector<8x1xf32>
    %290 = vector.broadcast %289 : vector<8x1xf32> to vector<8x8xf32>
    %291 = arith.subf %287, %290 : vector<8x8xf32>
    %292 = math.exp %291 : vector<8x8xf32>
    %cst_103 = arith.constant dense<0.000000e+00> : vector<8xf32>
    %293 = vector.multi_reduction <add>, %292, %cst_103 [1] : vector<8x8xf32> to vector<8xf32>
    %294 = vector.shape_cast %293 : vector<8xf32> to vector<8x1xf32>
    %295 = tpu.reciprocal %294 {approx = true} : vector<8x1xf32> -> vector<8x1xf32>
    %296 = vector.broadcast %295 : vector<8x1xf32> to vector<8x8xf32>
    %297 = arith.mulf %292, %296 : vector<8x8xf32>
    %298 = arith.truncf %297 : vector<8x8xf32> to vector<8x8xbf16>
    %299 = vector.broadcast %21 : vector<1x32xf32> to vector<8x32xf32>
    %300 = arith.mulf %232, %299 : vector<8x32xf32>
    %301 = arith.truncf %300 : vector<8x32xf32> to vector<8x32xbf16>
    %cst_104 = arith.constant dense<0.000000e+00> : vector<8x32xf32>
    %302 = tpu.matmul %298, %301, %cst_104 {dimension_numbers = #tpu.dot_dimension_numbers<[1], [0], [0], [1], [0, 0, 1, 1], [], []>} : vector<8x8xbf16>, vector<8x32xbf16>, vector<8x32xf32> -> vector<8x32xf32>
    %303 = arith.addf %280, %302 : vector<8x32xf32>
    %304 = vector.broadcast %28 : vector<1x32xf32> to vector<8x32xf32>
    %305 = arith.mulf %230, %304 : vector<8x32xf32>
    %306 = arith.truncf %305 : vector<8x32xf32> to vector<8x32xbf16>
    %cst_105 = arith.constant dense<0.000000e+00> : vector<8x8xf32>
    %307 = tpu.matmul %306, %233, %cst_105 {dimension_numbers = #tpu.dot_dimension_numbers<[1], [1], [0], [0], [0, 0, 1, 0], [], []>} : vector<8x32xbf16>, vector<8x32xbf16>, vector<8x8xf32> -> vector<8x8xf32>
    %cst_106 = arith.constant 0.353553385 : f32
    %308 = vector.broadcast %cst_106 : f32 to vector<8x8xf32>
    %309 = arith.mulf %307, %308 : vector<8x8xf32>
    %310 = arith.addf %309, %30 : vector<8x8xf32>
    %cst_107 = arith.constant dense<0xFF800000> : vector<8xf32>
    %311 = vector.multi_reduction <maximumf>, %310, %cst_107 [1] : vector<8x8xf32> to vector<8xf32>
    %312 = vector.shape_cast %311 : vector<8xf32> to vector<8x1xf32>
    %313 = vector.broadcast %312 : vector<8x1xf32> to vector<8x8xf32>
    %314 = arith.subf %310, %313 : vector<8x8xf32>
    %315 = math.exp %314 : vector<8x8xf32>
    %cst_108 = arith.constant dense<0.000000e+00> : vector<8xf32>
    %316 = vector.multi_reduction <add>, %315, %cst_108 [1] : vector<8x8xf32> to vector<8xf32>
    %317 = vector.shape_cast %316 : vector<8xf32> to vector<8x1xf32>
    %318 = tpu.reciprocal %317 {approx = true} : vector<8x1xf32> -> vector<8x1xf32>
    %319 = vector.broadcast %318 : vector<8x1xf32> to vector<8x8xf32>
    %320 = arith.mulf %315, %319 : vector<8x8xf32>
    %321 = arith.truncf %320 : vector<8x8xf32> to vector<8x8xbf16>
    %322 = vector.broadcast %28 : vector<1x32xf32> to vector<8x32xf32>
    %323 = arith.mulf %232, %322 : vector<8x32xf32>
    %324 = arith.truncf %323 : vector<8x32xf32> to vector<8x32xbf16>
    %cst_109 = arith.constant dense<0.000000e+00> : vector<8x32xf32>
    %325 = tpu.matmul %321, %324, %cst_109 {dimension_numbers = #tpu.dot_dimension_numbers<[1], [0], [0], [1], [0, 0, 1, 1], [], []>} : vector<8x8xbf16>, vector<8x32xbf16>, vector<8x32xf32> -> vector<8x32xf32>
    %326 = arith.addf %303, %325 : vector<8x32xf32>
    %c1_110 = arith.constant 1 : index
    %c0_111 = arith.constant 0 : index
    %c0_112 = arith.constant 0 : index
    %327 = vector.load %arg8[%c1_110, %c0_111, %c0_112] : memref<2x32x32xbf16, #tpu.memory_space<vmem>>, vector<1x32x32xbf16>
    %328 = vector.shape_cast %327 : vector<1x32x32xbf16> to vector<32x32xbf16>
    %329 = arith.truncf %326 : vector<8x32xf32> to vector<8x32xbf16>
    %cst_113 = arith.constant dense<0.000000e+00> : vector<8x32xf32>
    %330 = tpu.matmul %329, %328, %cst_113 {dimension_numbers = #tpu.dot_dimension_numbers<[1], [0], [0], [1], [0, 0, 1, 1], [], []>} : vector<8x32xbf16>, vector<32x32xbf16>, vector<8x32xf32> -> vector<8x32xf32>
    %c1_114 = arith.constant 1 : index
    %c0_115 = arith.constant 0 : index
    %c0_116 = arith.constant 0 : index
    %331 = vector.load %arg9[%c1_114, %c0_115, %c0_116] : memref<2x1x32xf32, #tpu.memory_space<vmem>>, vector<1x1x32xf32>
    %332 = vector.shape_cast %331 : vector<1x1x32xf32> to vector<1x32xf32>
    %333 = vector.broadcast %332 : vector<1x32xf32> to vector<8x32xf32>
    %334 = arith.addf %330, %333 : vector<8x32xf32>
    %335 = arith.addf %221, %334 : vector<8x32xf32>
    %c1_117 = arith.constant 1 : index
    %c0_118 = arith.constant 0 : index
    %c0_119 = arith.constant 0 : index
    %336 = vector.load %arg14[%c1_117, %c0_118, %c0_119] : memref<2x4x32xf32, #tpu.memory_space<vmem>>, vector<1x1x32xf32>
    %337 = vector.shape_cast %336 : vector<1x1x32xf32> to vector<1x32xf32>
    %c1_120 = arith.constant 1 : index
    %c1_121 = arith.constant 1 : index
    %c0_122 = arith.constant 0 : index
    %338 = vector.load %arg14[%c1_120, %c1_121, %c0_122] : memref<2x4x32xf32, #tpu.memory_space<vmem>>, vector<1x1x32xf32>
    %339 = vector.shape_cast %338 : vector<1x1x32xf32> to vector<1x32xf32>
    %cst_123 = arith.constant dense<0.000000e+00> : vector<8xf32>
    %340 = vector.multi_reduction <add>, %335, %cst_123 [1] : vector<8x32xf32> to vector<8xf32>
    %341 = vector.shape_cast %340 : vector<8xf32> to vector<8x1xf32>
    %cst_124 = arith.constant 3.200000e+01 : f32
    %342 = vector.broadcast %cst_124 : f32 to vector<8x1xf32>
    %343 = arith.divf %341, %342 : vector<8x1xf32>
    %344 = vector.broadcast %343 : vector<8x1xf32> to vector<8x32xf32>
    %345 = arith.subf %335, %344 : vector<8x32xf32>
    %346 = arith.mulf %345, %345 : vector<8x32xf32>
    %cst_125 = arith.constant dense<0.000000e+00> : vector<8xf32>
    %347 = vector.multi_reduction <add>, %346, %cst_125 [1] : vector<8x32xf32> to vector<8xf32>
    %348 = vector.shape_cast %347 : vector<8xf32> to vector<8x1xf32>
    %cst_126 = arith.constant 3.200000e+01 : f32
    %349 = vector.broadcast %cst_126 : f32 to vector<8x1xf32>
    %350 = arith.divf %348, %349 : vector<8x1xf32>
    %351 = vector.broadcast %343 : vector<8x1xf32> to vector<8x32xf32>
    %352 = arith.subf %335, %351 : vector<8x32xf32>
    %cst_127 = arith.constant 9.99999974E-6 : f32
    %353 = vector.broadcast %cst_127 : f32 to vector<8x1xf32>
    %354 = arith.addf %350, %353 : vector<8x1xf32>
    %355 = math.rsqrt %354 : vector<8x1xf32>
    %356 = vector.broadcast %355 : vector<8x1xf32> to vector<8x32xf32>
    %357 = arith.mulf %352, %356 : vector<8x32xf32>
    %358 = vector.broadcast %337 : vector<1x32xf32> to vector<8x32xf32>
    %359 = arith.mulf %357, %358 : vector<8x32xf32>
    %360 = vector.broadcast %339 : vector<1x32xf32> to vector<8x32xf32>
    %361 = arith.addf %359, %360 : vector<8x32xf32>
    %c1_128 = arith.constant 1 : index
    %c0_129 = arith.constant 0 : index
    %c0_130 = arith.constant 0 : index
    %362 = vector.load %arg10[%c1_128, %c0_129, %c0_130] : memref<2x32x64xbf16, #tpu.memory_space<vmem>>, vector<1x32x64xbf16>
    %363 = vector.shape_cast %362 : vector<1x32x64xbf16> to vector<32x64xbf16>
    %364 = arith.truncf %361 : vector<8x32xf32> to vector<8x32xbf16>
    %cst_131 = arith.constant dense<0.000000e+00> : vector<8x64xf32>
    %365 = tpu.matmul %364, %363, %cst_131 {dimension_numbers = #tpu.dot_dimension_numbers<[1], [0], [0], [1], [0, 0, 1, 1], [], []>} : vector<8x32xbf16>, vector<32x64xbf16>, vector<8x64xf32> -> vector<8x64xf32>
    %c1_132 = arith.constant 1 : index
    %c0_133 = arith.constant 0 : index
    %c0_134 = arith.constant 0 : index
    %366 = vector.load %arg11[%c1_132, %c0_133, %c0_134] : memref<2x1x64xf32, #tpu.memory_space<vmem>>, vector<1x1x64xf32>
    %367 = vector.shape_cast %366 : vector<1x1x64xf32> to vector<1x64xf32>
    %368 = vector.broadcast %367 : vector<1x64xf32> to vector<8x64xf32>
    %369 = arith.addf %365, %368 : vector<8x64xf32>
    %cst_135 = arith.constant 0.000000e+00 : f32
    %370 = vector.broadcast %cst_135 : f32 to vector<8x64xf32>
    %371 = arith.maximumf %369, %370 : vector<8x64xf32>
    %c1_136 = arith.constant 1 : index
    %c0_137 = arith.constant 0 : index
    %c0_138 = arith.constant 0 : index
    %372 = vector.load %arg12[%c1_136, %c0_137, %c0_138] : memref<2x64x32xbf16, #tpu.memory_space<vmem>>, vector<1x64x32xbf16>
    %373 = vector.shape_cast %372 : vector<1x64x32xbf16> to vector<64x32xbf16>
    %374 = arith.truncf %371 : vector<8x64xf32> to vector<8x64xbf16>
    %cst_139 = arith.constant dense<0.000000e+00> : vector<8x32xf32>
    %375 = tpu.matmul %374, %373, %cst_139 {dimension_numbers = #tpu.dot_dimension_numbers<[1], [0], [0], [1], [0, 0, 1, 1], [], []>} : vector<8x64xbf16>, vector<64x32xbf16>, vector<8x32xf32> -> vector<8x32xf32>
    %c1_140 = arith.constant 1 : index
    %c0_141 = arith.constant 0 : index
    %c0_142 = arith.constant 0 : index
    %376 = vector.load %arg13[%c1_140, %c0_141, %c0_142] : memref<2x1x32xf32, #tpu.memory_space<vmem>>, vector<1x1x32xf32>
    %377 = vector.shape_cast %376 : vector<1x1x32xf32> to vector<1x32xf32>
    %378 = vector.broadcast %377 : vector<1x32xf32> to vector<8x32xf32>
    %379 = arith.addf %375, %378 : vector<8x32xf32>
    %380 = arith.addf %361, %379 : vector<8x32xf32>
    %c1_143 = arith.constant 1 : index
    %c2_144 = arith.constant 2 : index
    %c0_145 = arith.constant 0 : index
    %381 = vector.load %arg14[%c1_143, %c2_144, %c0_145] : memref<2x4x32xf32, #tpu.memory_space<vmem>>, vector<1x1x32xf32>
    %382 = vector.shape_cast %381 : vector<1x1x32xf32> to vector<1x32xf32>
    %c1_146 = arith.constant 1 : index
    %c3_147 = arith.constant 3 : index
    %c0_148 = arith.constant 0 : index
    %383 = vector.load %arg14[%c1_146, %c3_147, %c0_148] : memref<2x4x32xf32, #tpu.memory_space<vmem>>, vector<1x1x32xf32>
    %384 = vector.shape_cast %383 : vector<1x1x32xf32> to vector<1x32xf32>
    %cst_149 = arith.constant dense<0.000000e+00> : vector<8xf32>
    %385 = vector.multi_reduction <add>, %380, %cst_149 [1] : vector<8x32xf32> to vector<8xf32>
    %386 = vector.shape_cast %385 : vector<8xf32> to vector<8x1xf32>
    %cst_150 = arith.constant 3.200000e+01 : f32
    %387 = vector.broadcast %cst_150 : f32 to vector<8x1xf32>
    %388 = arith.divf %386, %387 : vector<8x1xf32>
    %389 = vector.broadcast %388 : vector<8x1xf32> to vector<8x32xf32>
    %390 = arith.subf %380, %389 : vector<8x32xf32>
    %391 = arith.mulf %390, %390 : vector<8x32xf32>
    %cst_151 = arith.constant dense<0.000000e+00> : vector<8xf32>
    %392 = vector.multi_reduction <add>, %391, %cst_151 [1] : vector<8x32xf32> to vector<8xf32>
    %393 = vector.shape_cast %392 : vector<8xf32> to vector<8x1xf32>
    %cst_152 = arith.constant 3.200000e+01 : f32
    %394 = vector.broadcast %cst_152 : f32 to vector<8x1xf32>
    %395 = arith.divf %393, %394 : vector<8x1xf32>
    %396 = vector.broadcast %388 : vector<8x1xf32> to vector<8x32xf32>
    %397 = arith.subf %380, %396 : vector<8x32xf32>
    %cst_153 = arith.constant 9.99999974E-6 : f32
    %398 = vector.broadcast %cst_153 : f32 to vector<8x1xf32>
    %399 = arith.addf %395, %398 : vector<8x1xf32>
    %400 = math.rsqrt %399 : vector<8x1xf32>
    %401 = vector.broadcast %400 : vector<8x1xf32> to vector<8x32xf32>
    %402 = arith.mulf %397, %401 : vector<8x32xf32>
    %403 = vector.broadcast %382 : vector<1x32xf32> to vector<8x32xf32>
    %404 = arith.mulf %402, %403 : vector<8x32xf32>
    %405 = vector.broadcast %384 : vector<1x32xf32> to vector<8x32xf32>
    %406 = arith.addf %404, %405 : vector<8x32xf32>
    %c0_154 = arith.constant 0 : index
    %c0_155 = arith.constant 0 : index
    %c0_156 = arith.constant 0 : index
    %407 = vector.load %arg30[%c0_154, %c0_155, %c0_156] : memref<1x8x32xf32, #tpu.memory_space<vmem>>, vector<1x8x32xf32>
    %408 = vector.shape_cast %407 : vector<1x8x32xf32> to vector<8x32xf32>
    %409 = vector.shape_cast %406 : vector<8x32xf32> to vector<1x8x32xf32>
    tpu.vector_store %arg30[%c0_154, %c0_155, %c0_156], %409 {strides = array<i32>} : memref<1x8x32xf32, #tpu.memory_space<vmem>>, vector<1x8x32xf32>,
    %c0_157 = arith.constant 0 : index
    %c0_158 = arith.constant 0 : index
    %c0_159 = arith.constant 0 : index
    %410 = vector.load %arg2[%c0_157, %c0_158, %c0_159] : memref<1x8x32xf32, #tpu.memory_space<vmem>>, vector<1x8x32xf32>
    %411 = vector.shape_cast %410 : vector<1x8x32xf32> to vector<8x32xf32>
    %c0_160 = arith.constant 0 : index
    %c0_161 = arith.constant 0 : index
    %c0_162 = arith.constant 0 : index
    %412 = vector.load %arg15[%c0_160, %c0_161, %c0_162] : memref<2x32x96xbf16, #tpu.memory_space<vmem>>, vector<1x32x96xbf16>
    %413 = vector.shape_cast %412 : vector<1x32x96xbf16> to vector<32x96xbf16>
    %414 = arith.truncf %411 : vector<8x32xf32> to vector<8x32xbf16>
    %cst_163 = arith.constant dense<0.000000e+00> : vector<8x96xf32>
    %415 = tpu.matmul %414, %413, %cst_163 {dimension_numbers = #tpu.dot_dimension_numbers<[1], [0], [0], [1], [0, 0, 1, 1], [], []>} : vector<8x32xbf16>, vector<32x96xbf16>, vector<8x96xf32> -> vector<8x96xf32>
    %c0_164 = arith.constant 0 : index
    %c0_165 = arith.constant 0 : index
    %c0_166 = arith.constant 0 : index
    %416 = vector.load %arg16[%c0_164, %c0_165, %c0_166] : memref<2x1x96xf32, #tpu.memory_space<vmem>>, vector<1x1x96xf32>
    %417 = vector.shape_cast %416 : vector<1x1x96xf32> to vector<1x96xf32>
    %418 = vector.broadcast %417 : vector<1x96xf32> to vector<8x96xf32>
    %419 = arith.addf %415, %418 : vector<8x96xf32>
    %420 = vector.extract_strided_slice %419 {offsets = [0, 0], sizes = [8, 32], strides = [1, 1]} : vector<8x96xf32> to vector<8x32xf32>
    %421 = vector.extract_strided_slice %419 {offsets = [0, 32], sizes = [8, 32], strides = [1, 1]} : vector<8x96xf32> to vector<8x32xf32>
    %422 = vector.extract_strided_slice %419 {offsets = [0, 64], sizes = [8, 32], strides = [1, 1]} : vector<8x96xf32> to vector<8x32xf32>
    %423 = arith.truncf %421 : vector<8x32xf32> to vector<8x32xbf16>
    %cst_167 = arith.constant 0.000000e+00 : f32
    %424 = vector.broadcast %cst_167 : f32 to vector<8x32xf32>
    %425 = vector.broadcast %7 : vector<1x32xf32> to vector<8x32xf32>
    %426 = arith.mulf %420, %425 : vector<8x32xf32>
    %427 = arith.truncf %426 : vector<8x32xf32> to vector<8x32xbf16>
    %cst_168 = arith.constant dense<0.000000e+00> : vector<8x8xf32>
    %428 = tpu.matmul %427, %423, %cst_168 {dimension_numbers = #tpu.dot_dimension_numbers<[1], [1], [0], [0], [0, 0, 1, 0], [], []>} : vector<8x32xbf16>, vector<8x32xbf16>, vector<8x8xf32> -> vector<8x8xf32>
    %cst_169 = arith.constant 0.353553385 : f32
    %429 = vector.broadcast %cst_169 : f32 to vector<8x8xf32>
    %430 = arith.mulf %428, %429 : vector<8x8xf32>
    %431 = arith.addf %430, %32 : vector<8x8xf32>
    %cst_170 = arith.constant dense<0xFF800000> : vector<8xf32>
    %432 = vector.multi_reduction <maximumf>, %431, %cst_170 [1] : vector<8x8xf32> to vector<8xf32>
    %433 = vector.shape_cast %432 : vector<8xf32> to vector<8x1xf32>
    %434 = vector.broadcast %433 : vector<8x1xf32> to vector<8x8xf32>
    %435 = arith.subf %431, %434 : vector<8x8xf32>
    %436 = math.exp %435 : vector<8x8xf32>
    %cst_171 = arith.constant dense<0.000000e+00> : vector<8xf32>
    %437 = vector.multi_reduction <add>, %436, %cst_171 [1] : vector<8x8xf32> to vector<8xf32>
    %438 = vector.shape_cast %437 : vector<8xf32> to vector<8x1xf32>
    %439 = tpu.reciprocal %438 {approx = true} : vector<8x1xf32> -> vector<8x1xf32>
    %440 = vector.broadcast %439 : vector<8x1xf32> to vector<8x8xf32>
    %441 = arith.mulf %436, %440 : vector<8x8xf32>
    %442 = arith.truncf %441 : vector<8x8xf32> to vector<8x8xbf16>
    %443 = vector.broadcast %7 : vector<1x32xf32> to vector<8x32xf32>
    %444 = arith.mulf %422, %443 : vector<8x32xf32>
    %445 = arith.truncf %444 : vector<8x32xf32> to vector<8x32xbf16>
    %cst_172 = arith.constant dense<0.000000e+00> : vector<8x32xf32>
    %446 = tpu.matmul %442, %445, %cst_172 {dimension_numbers = #tpu.dot_dimension_numbers<[1], [0], [0], [1], [0, 0, 1, 1], [], []>} : vector<8x8xbf16>, vector<8x32xbf16>, vector<8x32xf32> -> vector<8x32xf32>
    %447 = arith.addf %424, %446 : vector<8x32xf32>
    %448 = vector.broadcast %14 : vector<1x32xf32> to vector<8x32xf32>
    %449 = arith.mulf %420, %448 : vector<8x32xf32>
    %450 = arith.truncf %449 : vector<8x32xf32> to vector<8x32xbf16>
    %cst_173 = arith.constant dense<0.000000e+00> : vector<8x8xf32>
    %451 = tpu.matmul %450, %423, %cst_173 {dimension_numbers = #tpu.dot_dimension_numbers<[1], [1], [0], [0], [0, 0, 1, 0], [], []>} : vector<8x32xbf16>, vector<8x32xbf16>, vector<8x8xf32> -> vector<8x8xf32>
    %cst_174 = arith.constant 0.353553385 : f32
    %452 = vector.broadcast %cst_174 : f32 to vector<8x8xf32>
    %453 = arith.mulf %451, %452 : vector<8x8xf32>
    %454 = arith.addf %453, %32 : vector<8x8xf32>
    %cst_175 = arith.constant dense<0xFF800000> : vector<8xf32>
    %455 = vector.multi_reduction <maximumf>, %454, %cst_175 [1] : vector<8x8xf32> to vector<8xf32>
    %456 = vector.shape_cast %455 : vector<8xf32> to vector<8x1xf32>
    %457 = vector.broadcast %456 : vector<8x1xf32> to vector<8x8xf32>
    %458 = arith.subf %454, %457 : vector<8x8xf32>
    %459 = math.exp %458 : vector<8x8xf32>
    %cst_176 = arith.constant dense<0.000000e+00> : vector<8xf32>
    %460 = vector.multi_reduction <add>, %459, %cst_176 [1] : vector<8x8xf32> to vector<8xf32>
    %461 = vector.shape_cast %460 : vector<8xf32> to vector<8x1xf32>
    %462 = tpu.reciprocal %461 {approx = true} : vector<8x1xf32> -> vector<8x1xf32>
    %463 = vector.broadcast %462 : vector<8x1xf32> to vector<8x8xf32>
    %464 = arith.mulf %459, %463 : vector<8x8xf32>
    %465 = arith.truncf %464 : vector<8x8xf32> to vector<8x8xbf16>
    %466 = vector.broadcast %14 : vector<1x32xf32> to vector<8x32xf32>
    %467 = arith.mulf %422, %466 : vector<8x32xf32>
    %468 = arith.truncf %467 : vector<8x32xf32> to vector<8x32xbf16>
    %cst_177 = arith.constant dense<0.000000e+00> : vector<8x32xf32>
    %469 = tpu.matmul %465, %468, %cst_177 {dimension_numbers = #tpu.dot_dimension_numbers<[1], [0], [0], [1], [0, 0, 1, 1], [], []>} : vector<8x8xbf16>, vector<8x32xbf16>, vector<8x32xf32> -> vector<8x32xf32>
    %470 = arith.addf %447, %469 : vector<8x32xf32>
    %471 = vector.broadcast %21 : vector<1x32xf32> to vector<8x32xf32>
    %472 = arith.mulf %420, %471 : vector<8x32xf32>
    %473 = arith.truncf %472 : vector<8x32xf32> to vector<8x32xbf16>
    %cst_178 = arith.constant dense<0.000000e+00> : vector<8x8xf32>
    %474 = tpu.matmul %473, %423, %cst_178 {dimension_numbers = #tpu.dot_dimension_numbers<[1], [1], [0], [0], [0, 0, 1, 0], [], []>} : vector<8x32xbf16>, vector<8x32xbf16>, vector<8x8xf32> -> vector<8x8xf32>
    %cst_179 = arith.constant 0.353553385 : f32
    %475 = vector.broadcast %cst_179 : f32 to vector<8x8xf32>
    %476 = arith.mulf %474, %475 : vector<8x8xf32>
    %477 = arith.addf %476, %32 : vector<8x8xf32>
    %cst_180 = arith.constant dense<0xFF800000> : vector<8xf32>
    %478 = vector.multi_reduction <maximumf>, %477, %cst_180 [1] : vector<8x8xf32> to vector<8xf32>
    %479 = vector.shape_cast %478 : vector<8xf32> to vector<8x1xf32>
    %480 = vector.broadcast %479 : vector<8x1xf32> to vector<8x8xf32>
    %481 = arith.subf %477, %480 : vector<8x8xf32>
    %482 = math.exp %481 : vector<8x8xf32>
    %cst_181 = arith.constant dense<0.000000e+00> : vector<8xf32>
    %483 = vector.multi_reduction <add>, %482, %cst_181 [1] : vector<8x8xf32> to vector<8xf32>
    %484 = vector.shape_cast %483 : vector<8xf32> to vector<8x1xf32>
    %485 = tpu.reciprocal %484 {approx = true} : vector<8x1xf32> -> vector<8x1xf32>
    %486 = vector.broadcast %485 : vector<8x1xf32> to vector<8x8xf32>
    %487 = arith.mulf %482, %486 : vector<8x8xf32>
    %488 = arith.truncf %487 : vector<8x8xf32> to vector<8x8xbf16>
    %489 = vector.broadcast %21 : vector<1x32xf32> to vector<8x32xf32>
    %490 = arith.mulf %422, %489 : vector<8x32xf32>
    %491 = arith.truncf %490 : vector<8x32xf32> to vector<8x32xbf16>
    %cst_182 = arith.constant dense<0.000000e+00> : vector<8x32xf32>
    %492 = tpu.matmul %488, %491, %cst_182 {dimension_numbers = #tpu.dot_dimension_numbers<[1], [0], [0], [1], [0, 0, 1, 1], [], []>} : vector<8x8xbf16>, vector<8x32xbf16>, vector<8x32xf32> -> vector<8x32xf32>
    %493 = arith.addf %470, %492 : vector<8x32xf32>
    %494 = vector.broadcast %28 : vector<1x32xf32> to vector<8x32xf32>
    %495 = arith.mulf %420, %494 : vector<8x32xf32>
    %496 = arith.truncf %495 : vector<8x32xf32> to vector<8x32xbf16>
    %cst_183 = arith.constant dense<0.000000e+00> : vector<8x8xf32>
    %497 = tpu.matmul %496, %423, %cst_183 {dimension_numbers = #tpu.dot_dimension_numbers<[1], [1], [0], [0], [0, 0, 1, 0], [], []>} : vector<8x32xbf16>, vector<8x32xbf16>, vector<8x8xf32> -> vector<8x8xf32>
    %cst_184 = arith.constant 0.353553385 : f32
    %498 = vector.broadcast %cst_184 : f32 to vector<8x8xf32>
    %499 = arith.mulf %497, %498 : vector<8x8xf32>
    %500 = arith.addf %499, %32 : vector<8x8xf32>
    %cst_185 = arith.constant dense<0xFF800000> : vector<8xf32>
    %501 = vector.multi_reduction <maximumf>, %500, %cst_185 [1] : vector<8x8xf32> to vector<8xf32>
    %502 = vector.shape_cast %501 : vector<8xf32> to vector<8x1xf32>
    %503 = vector.broadcast %502 : vector<8x1xf32> to vector<8x8xf32>
    %504 = arith.subf %500, %503 : vector<8x8xf32>
    %505 = math.exp %504 : vector<8x8xf32>
    %cst_186 = arith.constant dense<0.000000e+00> : vector<8xf32>
    %506 = vector.multi_reduction <add>, %505, %cst_186 [1] : vector<8x8xf32> to vector<8xf32>
    %507 = vector.shape_cast %506 : vector<8xf32> to vector<8x1xf32>
    %508 = tpu.reciprocal %507 {approx = true} : vector<8x1xf32> -> vector<8x1xf32>
    %509 = vector.broadcast %508 : vector<8x1xf32> to vector<8x8xf32>
    %510 = arith.mulf %505, %509 : vector<8x8xf32>
    %511 = arith.truncf %510 : vector<8x8xf32> to vector<8x8xbf16>
    %512 = vector.broadcast %28 : vector<1x32xf32> to vector<8x32xf32>
    %513 = arith.mulf %422, %512 : vector<8x32xf32>
    %514 = arith.truncf %513 : vector<8x32xf32> to vector<8x32xbf16>
    %cst_187 = arith.constant dense<0.000000e+00> : vector<8x32xf32>
    %515 = tpu.matmul %511, %514, %cst_187 {dimension_numbers = #tpu.dot_dimension_numbers<[1], [0], [0], [1], [0, 0, 1, 1], [], []>} : vector<8x8xbf16>, vector<8x32xbf16>, vector<8x32xf32> -> vector<8x32xf32>
    %516 = arith.addf %493, %515 : vector<8x32xf32>
    %c0_188 = arith.constant 0 : index
    %c0_189 = arith.constant 0 : index
    %c0_190 = arith.constant 0 : index
    %517 = vector.load %arg17[%c0_188, %c0_189, %c0_190] : memref<2x32x32xbf16, #tpu.memory_space<vmem>>, vector<1x32x32xbf16>
    %518 = vector.shape_cast %517 : vector<1x32x32xbf16> to vector<32x32xbf16>
    %519 = arith.truncf %516 : vector<8x32xf32> to vector<8x32xbf16>
    %cst_191 = arith.constant dense<0.000000e+00> : vector<8x32xf32>
    %520 = tpu.matmul %519, %518, %cst_191 {dimension_numbers = #tpu.dot_dimension_numbers<[1], [0], [0], [1], [0, 0, 1, 1], [], []>} : vector<8x32xbf16>, vector<32x32xbf16>, vector<8x32xf32> -> vector<8x32xf32>
    %c0_192 = arith.constant 0 : index
    %c0_193 = arith.constant 0 : index
    %c0_194 = arith.constant 0 : index
    %521 = vector.load %arg18[%c0_192, %c0_193, %c0_194] : memref<2x1x32xf32, #tpu.memory_space<vmem>>, vector<1x1x32xf32>
    %522 = vector.shape_cast %521 : vector<1x1x32xf32> to vector<1x32xf32>
    %523 = vector.broadcast %522 : vector<1x32xf32> to vector<8x32xf32>
    %524 = arith.addf %520, %523 : vector<8x32xf32>
    %525 = arith.addf %411, %524 : vector<8x32xf32>
    %c0_195 = arith.constant 0 : index
    %c0_196 = arith.constant 0 : index
    %c0_197 = arith.constant 0 : index
    %526 = vector.load %arg27[%c0_195, %c0_196, %c0_197] : memref<2x6x32xf32, #tpu.memory_space<vmem>>, vector<1x1x32xf32>
    %527 = vector.shape_cast %526 : vector<1x1x32xf32> to vector<1x32xf32>
    %c0_198 = arith.constant 0 : index
    %c1_199 = arith.constant 1 : index
    %c0_200 = arith.constant 0 : index
    %528 = vector.load %arg27[%c0_198, %c1_199, %c0_200] : memref<2x6x32xf32, #tpu.memory_space<vmem>>, vector<1x1x32xf32>
    %529 = vector.shape_cast %528 : vector<1x1x32xf32> to vector<1x32xf32>
    %cst_201 = arith.constant dense<0.000000e+00> : vector<8xf32>
    %530 = vector.multi_reduction <add>, %525, %cst_201 [1] : vector<8x32xf32> to vector<8xf32>
    %531 = vector.shape_cast %530 : vector<8xf32> to vector<8x1xf32>
    %cst_202 = arith.constant 3.200000e+01 : f32
    %532 = vector.broadcast %cst_202 : f32 to vector<8x1xf32>
    %533 = arith.divf %531, %532 : vector<8x1xf32>
    %534 = vector.broadcast %533 : vector<8x1xf32> to vector<8x32xf32>
    %535 = arith.subf %525, %534 : vector<8x32xf32>
    %536 = arith.mulf %535, %535 : vector<8x32xf32>
    %cst_203 = arith.constant dense<0.000000e+00> : vector<8xf32>
    %537 = vector.multi_reduction <add>, %536, %cst_203 [1] : vector<8x32xf32> to vector<8xf32>
    %538 = vector.shape_cast %537 : vector<8xf32> to vector<8x1xf32>
    %cst_204 = arith.constant 3.200000e+01 : f32
    %539 = vector.broadcast %cst_204 : f32 to vector<8x1xf32>
    %540 = arith.divf %538, %539 : vector<8x1xf32>
    %541 = vector.broadcast %533 : vector<8x1xf32> to vector<8x32xf32>
    %542 = arith.subf %525, %541 : vector<8x32xf32>
    %cst_205 = arith.constant 9.99999974E-6 : f32
    %543 = vector.broadcast %cst_205 : f32 to vector<8x1xf32>
    %544 = arith.addf %540, %543 : vector<8x1xf32>
    %545 = math.rsqrt %544 : vector<8x1xf32>
    %546 = vector.broadcast %545 : vector<8x1xf32> to vector<8x32xf32>
    %547 = arith.mulf %542, %546 : vector<8x32xf32>
    %548 = vector.broadcast %527 : vector<1x32xf32> to vector<8x32xf32>
    %549 = arith.mulf %547, %548 : vector<8x32xf32>
    %550 = vector.broadcast %529 : vector<1x32xf32> to vector<8x32xf32>
    %551 = arith.addf %549, %550 : vector<8x32xf32>
    %c0_206 = arith.constant 0 : index
    %c0_207 = arith.constant 0 : index
    %c0_208 = arith.constant 0 : index
    %552 = vector.load %arg19[%c0_206, %c0_207, %c0_208] : memref<2x32x96xbf16, #tpu.memory_space<vmem>>, vector<1x32x96xbf16>
    %553 = vector.shape_cast %552 : vector<1x32x96xbf16> to vector<32x96xbf16>
    %c0_209 = arith.constant 0 : index
    %c0_210 = arith.constant 0 : index
    %c0_211 = arith.constant 0 : index
    %554 = vector.load %arg20[%c0_209, %c0_210, %c0_211] : memref<2x1x96xf32, #tpu.memory_space<vmem>>, vector<1x1x96xf32>
    %555 = vector.shape_cast %554 : vector<1x1x96xf32> to vector<1x96xf32>
    %556 = vector.extract_strided_slice %553 {offsets = [0, 0], sizes = [32, 32], strides = [1, 1]} : vector<32x96xbf16> to vector<32x32xbf16>
    %557 = arith.truncf %551 : vector<8x32xf32> to vector<8x32xbf16>
    %cst_212 = arith.constant dense<0.000000e+00> : vector<8x32xf32>
    %558 = tpu.matmul %557, %556, %cst_212 {dimension_numbers = #tpu.dot_dimension_numbers<[1], [0], [0], [1], [0, 0, 1, 1], [], []>} : vector<8x32xbf16>, vector<32x32xbf16>, vector<8x32xf32> -> vector<8x32xf32>
    %559 = vector.extract_strided_slice %555 {offsets = [0, 0], sizes = [1, 32], strides = [1, 1]} : vector<1x96xf32> to vector<1x32xf32>
    %560 = vector.broadcast %559 : vector<1x32xf32> to vector<8x32xf32>
    %561 = arith.addf %558, %560 : vector<8x32xf32>
    %562 = vector.extract_strided_slice %553 {offsets = [0, 32], sizes = [32, 64], strides = [1, 1]} : vector<32x96xbf16> to vector<32x64xbf16>
    %563 = arith.truncf %406 : vector<8x32xf32> to vector<8x32xbf16>
    %cst_213 = arith.constant dense<0.000000e+00> : vector<8x64xf32>
    %564 = tpu.matmul %563, %562, %cst_213 {dimension_numbers = #tpu.dot_dimension_numbers<[1], [0], [0], [1], [0, 0, 1, 1], [], []>} : vector<8x32xbf16>, vector<32x64xbf16>, vector<8x64xf32> -> vector<8x64xf32>
    %565 = vector.extract_strided_slice %555 {offsets = [0, 32], sizes = [1, 64], strides = [1, 1]} : vector<1x96xf32> to vector<1x64xf32>
    %566 = vector.broadcast %565 : vector<1x64xf32> to vector<8x64xf32>
    %567 = arith.addf %564, %566 : vector<8x64xf32>
    %568 = vector.extract_strided_slice %567 {offsets = [0, 0], sizes = [8, 32], strides = [1, 1]} : vector<8x64xf32> to vector<8x32xf32>
    %569 = vector.extract_strided_slice %567 {offsets = [0, 32], sizes = [8, 32], strides = [1, 1]} : vector<8x64xf32> to vector<8x32xf32>
    %570 = arith.truncf %568 : vector<8x32xf32> to vector<8x32xbf16>
    %cst_214 = arith.constant 0.000000e+00 : f32
    %571 = vector.broadcast %cst_214 : f32 to vector<8x32xf32>
    %572 = vector.broadcast %7 : vector<1x32xf32> to vector<8x32xf32>
    %573 = arith.mulf %561, %572 : vector<8x32xf32>
    %574 = arith.truncf %573 : vector<8x32xf32> to vector<8x32xbf16>
    %cst_215 = arith.constant dense<0.000000e+00> : vector<8x8xf32>
    %575 = tpu.matmul %574, %570, %cst_215 {dimension_numbers = #tpu.dot_dimension_numbers<[1], [1], [0], [0], [0, 0, 1, 0], [], []>} : vector<8x32xbf16>, vector<8x32xbf16>, vector<8x8xf32> -> vector<8x8xf32>
    %cst_216 = arith.constant 0.353553385 : f32
    %576 = vector.broadcast %cst_216 : f32 to vector<8x8xf32>
    %577 = arith.mulf %575, %576 : vector<8x8xf32>
    %578 = arith.addf %577, %34 : vector<8x8xf32>
    %cst_217 = arith.constant dense<0xFF800000> : vector<8xf32>
    %579 = vector.multi_reduction <maximumf>, %578, %cst_217 [1] : vector<8x8xf32> to vector<8xf32>
    %580 = vector.shape_cast %579 : vector<8xf32> to vector<8x1xf32>
    %581 = vector.broadcast %580 : vector<8x1xf32> to vector<8x8xf32>
    %582 = arith.subf %578, %581 : vector<8x8xf32>
    %583 = math.exp %582 : vector<8x8xf32>
    %cst_218 = arith.constant dense<0.000000e+00> : vector<8xf32>
    %584 = vector.multi_reduction <add>, %583, %cst_218 [1] : vector<8x8xf32> to vector<8xf32>
    %585 = vector.shape_cast %584 : vector<8xf32> to vector<8x1xf32>
    %586 = tpu.reciprocal %585 {approx = true} : vector<8x1xf32> -> vector<8x1xf32>
    %587 = vector.broadcast %586 : vector<8x1xf32> to vector<8x8xf32>
    %588 = arith.mulf %583, %587 : vector<8x8xf32>
    %589 = arith.truncf %588 : vector<8x8xf32> to vector<8x8xbf16>
    %590 = vector.broadcast %7 : vector<1x32xf32> to vector<8x32xf32>
    %591 = arith.mulf %569, %590 : vector<8x32xf32>
    %592 = arith.truncf %591 : vector<8x32xf32> to vector<8x32xbf16>
    %cst_219 = arith.constant dense<0.000000e+00> : vector<8x32xf32>
    %593 = tpu.matmul %589, %592, %cst_219 {dimension_numbers = #tpu.dot_dimension_numbers<[1], [0], [0], [1], [0, 0, 1, 1], [], []>} : vector<8x8xbf16>, vector<8x32xbf16>, vector<8x32xf32> -> vector<8x32xf32>
    %594 = arith.addf %571, %593 : vector<8x32xf32>
    %595 = vector.broadcast %14 : vector<1x32xf32> to vector<8x32xf32>
    %596 = arith.mulf %561, %595 : vector<8x32xf32>
    %597 = arith.truncf %596 : vector<8x32xf32> to vector<8x32xbf16>
    %cst_220 = arith.constant dense<0.000000e+00> : vector<8x8xf32>
    %598 = tpu.matmul %597, %570, %cst_220 {dimension_numbers = #tpu.dot_dimension_numbers<[1], [1], [0], [0], [0, 0, 1, 0], [], []>} : vector<8x32xbf16>, vector<8x32xbf16>, vector<8x8xf32> -> vector<8x8xf32>
    %cst_221 = arith.constant 0.353553385 : f32
    %599 = vector.broadcast %cst_221 : f32 to vector<8x8xf32>
    %600 = arith.mulf %598, %599 : vector<8x8xf32>
    %601 = arith.addf %600, %34 : vector<8x8xf32>
    %cst_222 = arith.constant dense<0xFF800000> : vector<8xf32>
    %602 = vector.multi_reduction <maximumf>, %601, %cst_222 [1] : vector<8x8xf32> to vector<8xf32>
    %603 = vector.shape_cast %602 : vector<8xf32> to vector<8x1xf32>
    %604 = vector.broadcast %603 : vector<8x1xf32> to vector<8x8xf32>
    %605 = arith.subf %601, %604 : vector<8x8xf32>
    %606 = math.exp %605 : vector<8x8xf32>
    %cst_223 = arith.constant dense<0.000000e+00> : vector<8xf32>
    %607 = vector.multi_reduction <add>, %606, %cst_223 [1] : vector<8x8xf32> to vector<8xf32>
    %608 = vector.shape_cast %607 : vector<8xf32> to vector<8x1xf32>
    %609 = tpu.reciprocal %608 {approx = true} : vector<8x1xf32> -> vector<8x1xf32>
    %610 = vector.broadcast %609 : vector<8x1xf32> to vector<8x8xf32>
    %611 = arith.mulf %606, %610 : vector<8x8xf32>
    %612 = arith.truncf %611 : vector<8x8xf32> to vector<8x8xbf16>
    %613 = vector.broadcast %14 : vector<1x32xf32> to vector<8x32xf32>
    %614 = arith.mulf %569, %613 : vector<8x32xf32>
    %615 = arith.truncf %614 : vector<8x32xf32> to vector<8x32xbf16>
    %cst_224 = arith.constant dense<0.000000e+00> : vector<8x32xf32>
    %616 = tpu.matmul %612, %615, %cst_224 {dimension_numbers = #tpu.dot_dimension_numbers<[1], [0], [0], [1], [0, 0, 1, 1], [], []>} : vector<8x8xbf16>, vector<8x32xbf16>, vector<8x32xf32> -> vector<8x32xf32>
    %617 = arith.addf %594, %616 : vector<8x32xf32>
    %618 = vector.broadcast %21 : vector<1x32xf32> to vector<8x32xf32>
    %619 = arith.mulf %561, %618 : vector<8x32xf32>
    %620 = arith.truncf %619 : vector<8x32xf32> to vector<8x32xbf16>
    %cst_225 = arith.constant dense<0.000000e+00> : vector<8x8xf32>
    %621 = tpu.matmul %620, %570, %cst_225 {dimension_numbers = #tpu.dot_dimension_numbers<[1], [1], [0], [0], [0, 0, 1, 0], [], []>} : vector<8x32xbf16>, vector<8x32xbf16>, vector<8x8xf32> -> vector<8x8xf32>
    %cst_226 = arith.constant 0.353553385 : f32
    %622 = vector.broadcast %cst_226 : f32 to vector<8x8xf32>
    %623 = arith.mulf %621, %622 : vector<8x8xf32>
    %624 = arith.addf %623, %34 : vector<8x8xf32>
    %cst_227 = arith.constant dense<0xFF800000> : vector<8xf32>
    %625 = vector.multi_reduction <maximumf>, %624, %cst_227 [1] : vector<8x8xf32> to vector<8xf32>
    %626 = vector.shape_cast %625 : vector<8xf32> to vector<8x1xf32>
    %627 = vector.broadcast %626 : vector<8x1xf32> to vector<8x8xf32>
    %628 = arith.subf %624, %627 : vector<8x8xf32>
    %629 = math.exp %628 : vector<8x8xf32>
    %cst_228 = arith.constant dense<0.000000e+00> : vector<8xf32>
    %630 = vector.multi_reduction <add>, %629, %cst_228 [1] : vector<8x8xf32> to vector<8xf32>
    %631 = vector.shape_cast %630 : vector<8xf32> to vector<8x1xf32>
    %632 = tpu.reciprocal %631 {approx = true} : vector<8x1xf32> -> vector<8x1xf32>
    %633 = vector.broadcast %632 : vector<8x1xf32> to vector<8x8xf32>
    %634 = arith.mulf %629, %633 : vector<8x8xf32>
    %635 = arith.truncf %634 : vector<8x8xf32> to vector<8x8xbf16>
    %636 = vector.broadcast %21 : vector<1x32xf32> to vector<8x32xf32>
    %637 = arith.mulf %569, %636 : vector<8x32xf32>
    %638 = arith.truncf %637 : vector<8x32xf32> to vector<8x32xbf16>
    %cst_229 = arith.constant dense<0.000000e+00> : vector<8x32xf32>
    %639 = tpu.matmul %635, %638, %cst_229 {dimension_numbers = #tpu.dot_dimension_numbers<[1], [0], [0], [1], [0, 0, 1, 1], [], []>} : vector<8x8xbf16>, vector<8x32xbf16>, vector<8x32xf32> -> vector<8x32xf32>
    %640 = arith.addf %617, %639 : vector<8x32xf32>
    %641 = vector.broadcast %28 : vector<1x32xf32> to vector<8x32xf32>
    %642 = arith.mulf %561, %641 : vector<8x32xf32>
    %643 = arith.truncf %642 : vector<8x32xf32> to vector<8x32xbf16>
    %cst_230 = arith.constant dense<0.000000e+00> : vector<8x8xf32>
    %644 = tpu.matmul %643, %570, %cst_230 {dimension_numbers = #tpu.dot_dimension_numbers<[1], [1], [0], [0], [0, 0, 1, 0], [], []>} : vector<8x32xbf16>, vector<8x32xbf16>, vector<8x8xf32> -> vector<8x8xf32>
    %cst_231 = arith.constant 0.353553385 : f32
    %645 = vector.broadcast %cst_231 : f32 to vector<8x8xf32>
    %646 = arith.mulf %644, %645 : vector<8x8xf32>
    %647 = arith.addf %646, %34 : vector<8x8xf32>
    %cst_232 = arith.constant dense<0xFF800000> : vector<8xf32>
    %648 = vector.multi_reduction <maximumf>, %647, %cst_232 [1] : vector<8x8xf32> to vector<8xf32>
    %649 = vector.shape_cast %648 : vector<8xf32> to vector<8x1xf32>
    %650 = vector.broadcast %649 : vector<8x1xf32> to vector<8x8xf32>
    %651 = arith.subf %647, %650 : vector<8x8xf32>
    %652 = math.exp %651 : vector<8x8xf32>
    %cst_233 = arith.constant dense<0.000000e+00> : vector<8xf32>
    %653 = vector.multi_reduction <add>, %652, %cst_233 [1] : vector<8x8xf32> to vector<8xf32>
    %654 = vector.shape_cast %653 : vector<8xf32> to vector<8x1xf32>
    %655 = tpu.reciprocal %654 {approx = true} : vector<8x1xf32> -> vector<8x1xf32>
    %656 = vector.broadcast %655 : vector<8x1xf32> to vector<8x8xf32>
    %657 = arith.mulf %652, %656 : vector<8x8xf32>
    %658 = arith.truncf %657 : vector<8x8xf32> to vector<8x8xbf16>
    %659 = vector.broadcast %28 : vector<1x32xf32> to vector<8x32xf32>
    %660 = arith.mulf %569, %659 : vector<8x32xf32>
    %661 = arith.truncf %660 : vector<8x32xf32> to vector<8x32xbf16>
    %cst_234 = arith.constant dense<0.000000e+00> : vector<8x32xf32>
    %662 = tpu.matmul %658, %661, %cst_234 {dimension_numbers = #tpu.dot_dimension_numbers<[1], [0], [0], [1], [0, 0, 1, 1], [], []>} : vector<8x8xbf16>, vector<8x32xbf16>, vector<8x32xf32> -> vector<8x32xf32>
    %663 = arith.addf %640, %662 : vector<8x32xf32>
    %c0_235 = arith.constant 0 : index
    %c0_236 = arith.constant 0 : index
    %c0_237 = arith.constant 0 : index
    %664 = vector.load %arg21[%c0_235, %c0_236, %c0_237] : memref<2x32x32xbf16, #tpu.memory_space<vmem>>, vector<1x32x32xbf16>
    %665 = vector.shape_cast %664 : vector<1x32x32xbf16> to vector<32x32xbf16>
    %666 = arith.truncf %663 : vector<8x32xf32> to vector<8x32xbf16>
    %cst_238 = arith.constant dense<0.000000e+00> : vector<8x32xf32>
    %667 = tpu.matmul %666, %665, %cst_238 {dimension_numbers = #tpu.dot_dimension_numbers<[1], [0], [0], [1], [0, 0, 1, 1], [], []>} : vector<8x32xbf16>, vector<32x32xbf16>, vector<8x32xf32> -> vector<8x32xf32>
    %c0_239 = arith.constant 0 : index
    %c0_240 = arith.constant 0 : index
    %c0_241 = arith.constant 0 : index
    %668 = vector.load %arg22[%c0_239, %c0_240, %c0_241] : memref<2x1x32xf32, #tpu.memory_space<vmem>>, vector<1x1x32xf32>
    %669 = vector.shape_cast %668 : vector<1x1x32xf32> to vector<1x32xf32>
    %670 = vector.broadcast %669 : vector<1x32xf32> to vector<8x32xf32>
    %671 = arith.addf %667, %670 : vector<8x32xf32>
    %672 = arith.addf %551, %671 : vector<8x32xf32>
    %c0_242 = arith.constant 0 : index
    %c2_243 = arith.constant 2 : index
    %c0_244 = arith.constant 0 : index
    %673 = vector.load %arg27[%c0_242, %c2_243, %c0_244] : memref<2x6x32xf32, #tpu.memory_space<vmem>>, vector<1x1x32xf32>
    %674 = vector.shape_cast %673 : vector<1x1x32xf32> to vector<1x32xf32>
    %c0_245 = arith.constant 0 : index
    %c3_246 = arith.constant 3 : index
    %c0_247 = arith.constant 0 : index
    %675 = vector.load %arg27[%c0_245, %c3_246, %c0_247] : memref<2x6x32xf32, #tpu.memory_space<vmem>>, vector<1x1x32xf32>
    %676 = vector.shape_cast %675 : vector<1x1x32xf32> to vector<1x32xf32>
    %cst_248 = arith.constant dense<0.000000e+00> : vector<8xf32>
    %677 = vector.multi_reduction <add>, %672, %cst_248 [1] : vector<8x32xf32> to vector<8xf32>
    %678 = vector.shape_cast %677 : vector<8xf32> to vector<8x1xf32>
    %cst_249 = arith.constant 3.200000e+01 : f32
    %679 = vector.broadcast %cst_249 : f32 to vector<8x1xf32>
    %680 = arith.divf %678, %679 : vector<8x1xf32>
    %681 = vector.broadcast %680 : vector<8x1xf32> to vector<8x32xf32>
    %682 = arith.subf %672, %681 : vector<8x32xf32>
    %683 = arith.mulf %682, %682 : vector<8x32xf32>
    %cst_250 = arith.constant dense<0.000000e+00> : vector<8xf32>
    %684 = vector.multi_reduction <add>, %683, %cst_250 [1] : vector<8x32xf32> to vector<8xf32>
    %685 = vector.shape_cast %684 : vector<8xf32> to vector<8x1xf32>
    %cst_251 = arith.constant 3.200000e+01 : f32
    %686 = vector.broadcast %cst_251 : f32 to vector<8x1xf32>
    %687 = arith.divf %685, %686 : vector<8x1xf32>
    %688 = vector.broadcast %680 : vector<8x1xf32> to vector<8x32xf32>
    %689 = arith.subf %672, %688 : vector<8x32xf32>
    %cst_252 = arith.constant 9.99999974E-6 : f32
    %690 = vector.broadcast %cst_252 : f32 to vector<8x1xf32>
    %691 = arith.addf %687, %690 : vector<8x1xf32>
    %692 = math.rsqrt %691 : vector<8x1xf32>
    %693 = vector.broadcast %692 : vector<8x1xf32> to vector<8x32xf32>
    %694 = arith.mulf %689, %693 : vector<8x32xf32>
    %695 = vector.broadcast %674 : vector<1x32xf32> to vector<8x32xf32>
    %696 = arith.mulf %694, %695 : vector<8x32xf32>
    %697 = vector.broadcast %676 : vector<1x32xf32> to vector<8x32xf32>
    %698 = arith.addf %696, %697 : vector<8x32xf32>
    %c0_253 = arith.constant 0 : index
    %c0_254 = arith.constant 0 : index
    %c0_255 = arith.constant 0 : index
    %699 = vector.load %arg23[%c0_253, %c0_254, %c0_255] : memref<2x32x64xbf16, #tpu.memory_space<vmem>>, vector<1x32x64xbf16>
    %700 = vector.shape_cast %699 : vector<1x32x64xbf16> to vector<32x64xbf16>
    %701 = arith.truncf %698 : vector<8x32xf32> to vector<8x32xbf16>
    %cst_256 = arith.constant dense<0.000000e+00> : vector<8x64xf32>
    %702 = tpu.matmul %701, %700, %cst_256 {dimension_numbers = #tpu.dot_dimension_numbers<[1], [0], [0], [1], [0, 0, 1, 1], [], []>} : vector<8x32xbf16>, vector<32x64xbf16>, vector<8x64xf32> -> vector<8x64xf32>
    %c0_257 = arith.constant 0 : index
    %c0_258 = arith.constant 0 : index
    %c0_259 = arith.constant 0 : index
    %703 = vector.load %arg24[%c0_257, %c0_258, %c0_259] : memref<2x1x64xf32, #tpu.memory_space<vmem>>, vector<1x1x64xf32>
    %704 = vector.shape_cast %703 : vector<1x1x64xf32> to vector<1x64xf32>
    %705 = vector.broadcast %704 : vector<1x64xf32> to vector<8x64xf32>
    %706 = arith.addf %702, %705 : vector<8x64xf32>
    %cst_260 = arith.constant 0.000000e+00 : f32
    %707 = vector.broadcast %cst_260 : f32 to vector<8x64xf32>
    %708 = arith.maximumf %706, %707 : vector<8x64xf32>
    %c0_261 = arith.constant 0 : index
    %c0_262 = arith.constant 0 : index
    %c0_263 = arith.constant 0 : index
    %709 = vector.load %arg25[%c0_261, %c0_262, %c0_263] : memref<2x64x32xbf16, #tpu.memory_space<vmem>>, vector<1x64x32xbf16>
    %710 = vector.shape_cast %709 : vector<1x64x32xbf16> to vector<64x32xbf16>
    %711 = arith.truncf %708 : vector<8x64xf32> to vector<8x64xbf16>
    %cst_264 = arith.constant dense<0.000000e+00> : vector<8x32xf32>
    %712 = tpu.matmul %711, %710, %cst_264 {dimension_numbers = #tpu.dot_dimension_numbers<[1], [0], [0], [1], [0, 0, 1, 1], [], []>} : vector<8x64xbf16>, vector<64x32xbf16>, vector<8x32xf32> -> vector<8x32xf32>
    %c0_265 = arith.constant 0 : index
    %c0_266 = arith.constant 0 : index
    %c0_267 = arith.constant 0 : index
    %713 = vector.load %arg26[%c0_265, %c0_266, %c0_267] : memref<2x1x32xf32, #tpu.memory_space<vmem>>, vector<1x1x32xf32>
    %714 = vector.shape_cast %713 : vector<1x1x32xf32> to vector<1x32xf32>
    %715 = vector.broadcast %714 : vector<1x32xf32> to vector<8x32xf32>
    %716 = arith.addf %712, %715 : vector<8x32xf32>
    %717 = arith.addf %698, %716 : vector<8x32xf32>
    %c0_268 = arith.constant 0 : index
    %c4 = arith.constant 4 : index
    %c0_269 = arith.constant 0 : index
    %718 = vector.load %arg27[%c0_268, %c4, %c0_269] : memref<2x6x32xf32, #tpu.memory_space<vmem>>, vector<1x1x32xf32>
    %719 = vector.shape_cast %718 : vector<1x1x32xf32> to vector<1x32xf32>
    %c0_270 = arith.constant 0 : index
    %c5 = arith.constant 5 : index
    %c0_271 = arith.constant 0 : index
    %720 = vector.load %arg27[%c0_270, %c5, %c0_271] : memref<2x6x32xf32, #tpu.memory_space<vmem>>, vector<1x1x32xf32>
    %721 = vector.shape_cast %720 : vector<1x1x32xf32> to vector<1x32xf32>
    %cst_272 = arith.constant dense<0.000000e+00> : vector<8xf32>
    %722 = vector.multi_reduction <add>, %717, %cst_272 [1] : vector<8x32xf32> to vector<8xf32>
    %723 = vector.shape_cast %722 : vector<8xf32> to vector<8x1xf32>
    %cst_273 = arith.constant 3.200000e+01 : f32
    %724 = vector.broadcast %cst_273 : f32 to vector<8x1xf32>
    %725 = arith.divf %723, %724 : vector<8x1xf32>
    %726 = vector.broadcast %725 : vector<8x1xf32> to vector<8x32xf32>
    %727 = arith.subf %717, %726 : vector<8x32xf32>
    %728 = arith.mulf %727, %727 : vector<8x32xf32>
    %cst_274 = arith.constant dense<0.000000e+00> : vector<8xf32>
    %729 = vector.multi_reduction <add>, %728, %cst_274 [1] : vector<8x32xf32> to vector<8xf32>
    %730 = vector.shape_cast %729 : vector<8xf32> to vector<8x1xf32>
    %cst_275 = arith.constant 3.200000e+01 : f32
    %731 = vector.broadcast %cst_275 : f32 to vector<8x1xf32>
    %732 = arith.divf %730, %731 : vector<8x1xf32>
    %733 = vector.broadcast %725 : vector<8x1xf32> to vector<8x32xf32>
    %734 = arith.subf %717, %733 : vector<8x32xf32>
    %cst_276 = arith.constant 9.99999974E-6 : f32
    %735 = vector.broadcast %cst_276 : f32 to vector<8x1xf32>
    %736 = arith.addf %732, %735 : vector<8x1xf32>
    %737 = math.rsqrt %736 : vector<8x1xf32>
    %738 = vector.broadcast %737 : vector<8x1xf32> to vector<8x32xf32>
    %739 = arith.mulf %734, %738 : vector<8x32xf32>
    %740 = vector.broadcast %719 : vector<1x32xf32> to vector<8x32xf32>
    %741 = arith.mulf %739, %740 : vector<8x32xf32>
    %742 = vector.broadcast %721 : vector<1x32xf32> to vector<8x32xf32>
    %743 = arith.addf %741, %742 : vector<8x32xf32>
    %c1_277 = arith.constant 1 : index
    %c0_278 = arith.constant 0 : index
    %c0_279 = arith.constant 0 : index
    %744 = vector.load %arg15[%c1_277, %c0_278, %c0_279] : memref<2x32x96xbf16, #tpu.memory_space<vmem>>, vector<1x32x96xbf16>
    %745 = vector.shape_cast %744 : vector<1x32x96xbf16> to vector<32x96xbf16>
    %746 = arith.truncf %743 : vector<8x32xf32> to vector<8x32xbf16>
    %cst_280 = arith.constant dense<0.000000e+00> : vector<8x96xf32>
    %747 = tpu.matmul %746, %745, %cst_280 {dimension_numbers = #tpu.dot_dimension_numbers<[1], [0], [0], [1], [0, 0, 1, 1], [], []>} : vector<8x32xbf16>, vector<32x96xbf16>, vector<8x96xf32> -> vector<8x96xf32>
    %c1_281 = arith.constant 1 : index
    %c0_282 = arith.constant 0 : index
    %c0_283 = arith.constant 0 : index
    %748 = vector.load %arg16[%c1_281, %c0_282, %c0_283] : memref<2x1x96xf32, #tpu.memory_space<vmem>>, vector<1x1x96xf32>
    %749 = vector.shape_cast %748 : vector<1x1x96xf32> to vector<1x96xf32>
    %750 = vector.broadcast %749 : vector<1x96xf32> to vector<8x96xf32>
    %751 = arith.addf %747, %750 : vector<8x96xf32>
    %752 = vector.extract_strided_slice %751 {offsets = [0, 0], sizes = [8, 32], strides = [1, 1]} : vector<8x96xf32> to vector<8x32xf32>
    %753 = vector.extract_strided_slice %751 {offsets = [0, 32], sizes = [8, 32], strides = [1, 1]} : vector<8x96xf32> to vector<8x32xf32>
    %754 = vector.extract_strided_slice %751 {offsets = [0, 64], sizes = [8, 32], strides = [1, 1]} : vector<8x96xf32> to vector<8x32xf32>
    %755 = arith.truncf %753 : vector<8x32xf32> to vector<8x32xbf16>
    %cst_284 = arith.constant 0.000000e+00 : f32
    %756 = vector.broadcast %cst_284 : f32 to vector<8x32xf32>
    %757 = vector.broadcast %7 : vector<1x32xf32> to vector<8x32xf32>
    %758 = arith.mulf %752, %757 : vector<8x32xf32>
    %759 = arith.truncf %758 : vector<8x32xf32> to vector<8x32xbf16>
    %cst_285 = arith.constant dense<0.000000e+00> : vector<8x8xf32>
    %760 = tpu.matmul %759, %755, %cst_285 {dimension_numbers = #tpu.dot_dimension_numbers<[1], [1], [0], [0], [0, 0, 1, 0], [], []>} : vector<8x32xbf16>, vector<8x32xbf16>, vector<8x8xf32> -> vector<8x8xf32>
    %cst_286 = arith.constant 0.353553385 : f32
    %761 = vector.broadcast %cst_286 : f32 to vector<8x8xf32>
    %762 = arith.mulf %760, %761 : vector<8x8xf32>
    %763 = arith.addf %762, %32 : vector<8x8xf32>
    %cst_287 = arith.constant dense<0xFF800000> : vector<8xf32>
    %764 = vector.multi_reduction <maximumf>, %763, %cst_287 [1] : vector<8x8xf32> to vector<8xf32>
    %765 = vector.shape_cast %764 : vector<8xf32> to vector<8x1xf32>
    %766 = vector.broadcast %765 : vector<8x1xf32> to vector<8x8xf32>
    %767 = arith.subf %763, %766 : vector<8x8xf32>
    %768 = math.exp %767 : vector<8x8xf32>
    %cst_288 = arith.constant dense<0.000000e+00> : vector<8xf32>
    %769 = vector.multi_reduction <add>, %768, %cst_288 [1] : vector<8x8xf32> to vector<8xf32>
    %770 = vector.shape_cast %769 : vector<8xf32> to vector<8x1xf32>
    %771 = tpu.reciprocal %770 {approx = true} : vector<8x1xf32> -> vector<8x1xf32>
    %772 = vector.broadcast %771 : vector<8x1xf32> to vector<8x8xf32>
    %773 = arith.mulf %768, %772 : vector<8x8xf32>
    %774 = arith.truncf %773 : vector<8x8xf32> to vector<8x8xbf16>
    %775 = vector.broadcast %7 : vector<1x32xf32> to vector<8x32xf32>
    %776 = arith.mulf %754, %775 : vector<8x32xf32>
    %777 = arith.truncf %776 : vector<8x32xf32> to vector<8x32xbf16>
    %cst_289 = arith.constant dense<0.000000e+00> : vector<8x32xf32>
    %778 = tpu.matmul %774, %777, %cst_289 {dimension_numbers = #tpu.dot_dimension_numbers<[1], [0], [0], [1], [0, 0, 1, 1], [], []>} : vector<8x8xbf16>, vector<8x32xbf16>, vector<8x32xf32> -> vector<8x32xf32>
    %779 = arith.addf %756, %778 : vector<8x32xf32>
    %780 = vector.broadcast %14 : vector<1x32xf32> to vector<8x32xf32>
    %781 = arith.mulf %752, %780 : vector<8x32xf32>
    %782 = arith.truncf %781 : vector<8x32xf32> to vector<8x32xbf16>
    %cst_290 = arith.constant dense<0.000000e+00> : vector<8x8xf32>
    %783 = tpu.matmul %782, %755, %cst_290 {dimension_numbers = #tpu.dot_dimension_numbers<[1], [1], [0], [0], [0, 0, 1, 0], [], []>} : vector<8x32xbf16>, vector<8x32xbf16>, vector<8x8xf32> -> vector<8x8xf32>
    %cst_291 = arith.constant 0.353553385 : f32
    %784 = vector.broadcast %cst_291 : f32 to vector<8x8xf32>
    %785 = arith.mulf %783, %784 : vector<8x8xf32>
    %786 = arith.addf %785, %32 : vector<8x8xf32>
    %cst_292 = arith.constant dense<0xFF800000> : vector<8xf32>
    %787 = vector.multi_reduction <maximumf>, %786, %cst_292 [1] : vector<8x8xf32> to vector<8xf32>
    %788 = vector.shape_cast %787 : vector<8xf32> to vector<8x1xf32>
    %789 = vector.broadcast %788 : vector<8x1xf32> to vector<8x8xf32>
    %790 = arith.subf %786, %789 : vector<8x8xf32>
    %791 = math.exp %790 : vector<8x8xf32>
    %cst_293 = arith.constant dense<0.000000e+00> : vector<8xf32>
    %792 = vector.multi_reduction <add>, %791, %cst_293 [1] : vector<8x8xf32> to vector<8xf32>
    %793 = vector.shape_cast %792 : vector<8xf32> to vector<8x1xf32>
    %794 = tpu.reciprocal %793 {approx = true} : vector<8x1xf32> -> vector<8x1xf32>
    %795 = vector.broadcast %794 : vector<8x1xf32> to vector<8x8xf32>
    %796 = arith.mulf %791, %795 : vector<8x8xf32>
    %797 = arith.truncf %796 : vector<8x8xf32> to vector<8x8xbf16>
    %798 = vector.broadcast %14 : vector<1x32xf32> to vector<8x32xf32>
    %799 = arith.mulf %754, %798 : vector<8x32xf32>
    %800 = arith.truncf %799 : vector<8x32xf32> to vector<8x32xbf16>
    %cst_294 = arith.constant dense<0.000000e+00> : vector<8x32xf32>
    %801 = tpu.matmul %797, %800, %cst_294 {dimension_numbers = #tpu.dot_dimension_numbers<[1], [0], [0], [1], [0, 0, 1, 1], [], []>} : vector<8x8xbf16>, vector<8x32xbf16>, vector<8x32xf32> -> vector<8x32xf32>
    %802 = arith.addf %779, %801 : vector<8x32xf32>
    %803 = vector.broadcast %21 : vector<1x32xf32> to vector<8x32xf32>
    %804 = arith.mulf %752, %803 : vector<8x32xf32>
    %805 = arith.truncf %804 : vector<8x32xf32> to vector<8x32xbf16>
    %cst_295 = arith.constant dense<0.000000e+00> : vector<8x8xf32>
    %806 = tpu.matmul %805, %755, %cst_295 {dimension_numbers = #tpu.dot_dimension_numbers<[1], [1], [0], [0], [0, 0, 1, 0], [], []>} : vector<8x32xbf16>, vector<8x32xbf16>, vector<8x8xf32> -> vector<8x8xf32>
    %cst_296 = arith.constant 0.353553385 : f32
    %807 = vector.broadcast %cst_296 : f32 to vector<8x8xf32>
    %808 = arith.mulf %806, %807 : vector<8x8xf32>
    %809 = arith.addf %808, %32 : vector<8x8xf32>
    %cst_297 = arith.constant dense<0xFF800000> : vector<8xf32>
    %810 = vector.multi_reduction <maximumf>, %809, %cst_297 [1] : vector<8x8xf32> to vector<8xf32>
    %811 = vector.shape_cast %810 : vector<8xf32> to vector<8x1xf32>
    %812 = vector.broadcast %811 : vector<8x1xf32> to vector<8x8xf32>
    %813 = arith.subf %809, %812 : vector<8x8xf32>
    %814 = math.exp %813 : vector<8x8xf32>
    %cst_298 = arith.constant dense<0.000000e+00> : vector<8xf32>
    %815 = vector.multi_reduction <add>, %814, %cst_298 [1] : vector<8x8xf32> to vector<8xf32>
    %816 = vector.shape_cast %815 : vector<8xf32> to vector<8x1xf32>
    %817 = tpu.reciprocal %816 {approx = true} : vector<8x1xf32> -> vector<8x1xf32>
    %818 = vector.broadcast %817 : vector<8x1xf32> to vector<8x8xf32>
    %819 = arith.mulf %814, %818 : vector<8x8xf32>
    %820 = arith.truncf %819 : vector<8x8xf32> to vector<8x8xbf16>
    %821 = vector.broadcast %21 : vector<1x32xf32> to vector<8x32xf32>
    %822 = arith.mulf %754, %821 : vector<8x32xf32>
    %823 = arith.truncf %822 : vector<8x32xf32> to vector<8x32xbf16>
    %cst_299 = arith.constant dense<0.000000e+00> : vector<8x32xf32>
    %824 = tpu.matmul %820, %823, %cst_299 {dimension_numbers = #tpu.dot_dimension_numbers<[1], [0], [0], [1], [0, 0, 1, 1], [], []>} : vector<8x8xbf16>, vector<8x32xbf16>, vector<8x32xf32> -> vector<8x32xf32>
    %825 = arith.addf %802, %824 : vector<8x32xf32>
    %826 = vector.broadcast %28 : vector<1x32xf32> to vector<8x32xf32>
    %827 = arith.mulf %752, %826 : vector<8x32xf32>
    %828 = arith.truncf %827 : vector<8x32xf32> to vector<8x32xbf16>
    %cst_300 = arith.constant dense<0.000000e+00> : vector<8x8xf32>
    %829 = tpu.matmul %828, %755, %cst_300 {dimension_numbers = #tpu.dot_dimension_numbers<[1], [1], [0], [0], [0, 0, 1, 0], [], []>} : vector<8x32xbf16>, vector<8x32xbf16>, vector<8x8xf32> -> vector<8x8xf32>
    %cst_301 = arith.constant 0.353553385 : f32
    %830 = vector.broadcast %cst_301 : f32 to vector<8x8xf32>
    %831 = arith.mulf %829, %830 : vector<8x8xf32>
    %832 = arith.addf %831, %32 : vector<8x8xf32>
    %cst_302 = arith.constant dense<0xFF800000> : vector<8xf32>
    %833 = vector.multi_reduction <maximumf>, %832, %cst_302 [1] : vector<8x8xf32> to vector<8xf32>
    %834 = vector.shape_cast %833 : vector<8xf32> to vector<8x1xf32>
    %835 = vector.broadcast %834 : vector<8x1xf32> to vector<8x8xf32>
    %836 = arith.subf %832, %835 : vector<8x8xf32>
    %837 = math.exp %836 : vector<8x8xf32>
    %cst_303 = arith.constant dense<0.000000e+00> : vector<8xf32>
    %838 = vector.multi_reduction <add>, %837, %cst_303 [1] : vector<8x8xf32> to vector<8xf32>
    %839 = vector.shape_cast %838 : vector<8xf32> to vector<8x1xf32>
    %840 = tpu.reciprocal %839 {approx = true} : vector<8x1xf32> -> vector<8x1xf32>
    %841 = vector.broadcast %840 : vector<8x1xf32> to vector<8x8xf32>
    %842 = arith.mulf %837, %841 : vector<8x8xf32>
    %843 = arith.truncf %842 : vector<8x8xf32> to vector<8x8xbf16>
    %844 = vector.broadcast %28 : vector<1x32xf32> to vector<8x32xf32>
    %845 = arith.mulf %754, %844 : vector<8x32xf32>
    %846 = arith.truncf %845 : vector<8x32xf32> to vector<8x32xbf16>
    %cst_304 = arith.constant dense<0.000000e+00> : vector<8x32xf32>
    %847 = tpu.matmul %843, %846, %cst_304 {dimension_numbers = #tpu.dot_dimension_numbers<[1], [0], [0], [1], [0, 0, 1, 1], [], []>} : vector<8x8xbf16>, vector<8x32xbf16>, vector<8x32xf32> -> vector<8x32xf32>
    %848 = arith.addf %825, %847 : vector<8x32xf32>
    %c1_305 = arith.constant 1 : index
    %c0_306 = arith.constant 0 : index
    %c0_307 = arith.constant 0 : index
    %849 = vector.load %arg17[%c1_305, %c0_306, %c0_307] : memref<2x32x32xbf16, #tpu.memory_space<vmem>>, vector<1x32x32xbf16>
    %850 = vector.shape_cast %849 : vector<1x32x32xbf16> to vector<32x32xbf16>
    %851 = arith.truncf %848 : vector<8x32xf32> to vector<8x32xbf16>
    %cst_308 = arith.constant dense<0.000000e+00> : vector<8x32xf32>
    %852 = tpu.matmul %851, %850, %cst_308 {dimension_numbers = #tpu.dot_dimension_numbers<[1], [0], [0], [1], [0, 0, 1, 1], [], []>} : vector<8x32xbf16>, vector<32x32xbf16>, vector<8x32xf32> -> vector<8x32xf32>
    %c1_309 = arith.constant 1 : index
    %c0_310 = arith.constant 0 : index
    %c0_311 = arith.constant 0 : index
    %853 = vector.load %arg18[%c1_309, %c0_310, %c0_311] : memref<2x1x32xf32, #tpu.memory_space<vmem>>, vector<1x1x32xf32>
    %854 = vector.shape_cast %853 : vector<1x1x32xf32> to vector<1x32xf32>
    %855 = vector.broadcast %854 : vector<1x32xf32> to vector<8x32xf32>
    %856 = arith.addf %852, %855 : vector<8x32xf32>
    %857 = arith.addf %743, %856 : vector<8x32xf32>
    %c1_312 = arith.constant 1 : index
    %c0_313 = arith.constant 0 : index
    %c0_314 = arith.constant 0 : index
    %858 = vector.load %arg27[%c1_312, %c0_313, %c0_314] : memref<2x6x32xf32, #tpu.memory_space<vmem>>, vector<1x1x32xf32>
    %859 = vector.shape_cast %858 : vector<1x1x32xf32> to vector<1x32xf32>
    %c1_315 = arith.constant 1 : index
    %c1_316 = arith.constant 1 : index
    %c0_317 = arith.constant 0 : index
    %860 = vector.load %arg27[%c1_315, %c1_316, %c0_317] : memref<2x6x32xf32, #tpu.memory_space<vmem>>, vector<1x1x32xf32>
    %861 = vector.shape_cast %860 : vector<1x1x32xf32> to vector<1x32xf32>
    %cst_318 = arith.constant dense<0.000000e+00> : vector<8xf32>
    %862 = vector.multi_reduction <add>, %857, %cst_318 [1] : vector<8x32xf32> to vector<8xf32>
    %863 = vector.shape_cast %862 : vector<8xf32> to vector<8x1xf32>
    %cst_319 = arith.constant 3.200000e+01 : f32
    %864 = vector.broadcast %cst_319 : f32 to vector<8x1xf32>
    %865 = arith.divf %863, %864 : vector<8x1xf32>
    %866 = vector.broadcast %865 : vector<8x1xf32> to vector<8x32xf32>
    %867 = arith.subf %857, %866 : vector<8x32xf32>
    %868 = arith.mulf %867, %867 : vector<8x32xf32>
    %cst_320 = arith.constant dense<0.000000e+00> : vector<8xf32>
    %869 = vector.multi_reduction <add>, %868, %cst_320 [1] : vector<8x32xf32> to vector<8xf32>
    %870 = vector.shape_cast %869 : vector<8xf32> to vector<8x1xf32>
    %cst_321 = arith.constant 3.200000e+01 : f32
    %871 = vector.broadcast %cst_321 : f32 to vector<8x1xf32>
    %872 = arith.divf %870, %871 : vector<8x1xf32>
    %873 = vector.broadcast %865 : vector<8x1xf32> to vector<8x32xf32>
    %874 = arith.subf %857, %873 : vector<8x32xf32>
    %cst_322 = arith.constant 9.99999974E-6 : f32
    %875 = vector.broadcast %cst_322 : f32 to vector<8x1xf32>
    %876 = arith.addf %872, %875 : vector<8x1xf32>
    %877 = math.rsqrt %876 : vector<8x1xf32>
    %878 = vector.broadcast %877 : vector<8x1xf32> to vector<8x32xf32>
    %879 = arith.mulf %874, %878 : vector<8x32xf32>
    %880 = vector.broadcast %859 : vector<1x32xf32> to vector<8x32xf32>
    %881 = arith.mulf %879, %880 : vector<8x32xf32>
    %882 = vector.broadcast %861 : vector<1x32xf32> to vector<8x32xf32>
    %883 = arith.addf %881, %882 : vector<8x32xf32>
    %c1_323 = arith.constant 1 : index
    %c0_324 = arith.constant 0 : index
    %c0_325 = arith.constant 0 : index
    %884 = vector.load %arg19[%c1_323, %c0_324, %c0_325] : memref<2x32x96xbf16, #tpu.memory_space<vmem>>, vector<1x32x96xbf16>
    %885 = vector.shape_cast %884 : vector<1x32x96xbf16> to vector<32x96xbf16>
    %c1_326 = arith.constant 1 : index
    %c0_327 = arith.constant 0 : index
    %c0_328 = arith.constant 0 : index
    %886 = vector.load %arg20[%c1_326, %c0_327, %c0_328] : memref<2x1x96xf32, #tpu.memory_space<vmem>>, vector<1x1x96xf32>
    %887 = vector.shape_cast %886 : vector<1x1x96xf32> to vector<1x96xf32>
    %888 = vector.extract_strided_slice %885 {offsets = [0, 0], sizes = [32, 32], strides = [1, 1]} : vector<32x96xbf16> to vector<32x32xbf16>
    %889 = arith.truncf %883 : vector<8x32xf32> to vector<8x32xbf16>
    %cst_329 = arith.constant dense<0.000000e+00> : vector<8x32xf32>
    %890 = tpu.matmul %889, %888, %cst_329 {dimension_numbers = #tpu.dot_dimension_numbers<[1], [0], [0], [1], [0, 0, 1, 1], [], []>} : vector<8x32xbf16>, vector<32x32xbf16>, vector<8x32xf32> -> vector<8x32xf32>
    %891 = vector.extract_strided_slice %887 {offsets = [0, 0], sizes = [1, 32], strides = [1, 1]} : vector<1x96xf32> to vector<1x32xf32>
    %892 = vector.broadcast %891 : vector<1x32xf32> to vector<8x32xf32>
    %893 = arith.addf %890, %892 : vector<8x32xf32>
    %894 = vector.extract_strided_slice %885 {offsets = [0, 32], sizes = [32, 64], strides = [1, 1]} : vector<32x96xbf16> to vector<32x64xbf16>
    %895 = arith.truncf %406 : vector<8x32xf32> to vector<8x32xbf16>
    %cst_330 = arith.constant dense<0.000000e+00> : vector<8x64xf32>
    %896 = tpu.matmul %895, %894, %cst_330 {dimension_numbers = #tpu.dot_dimension_numbers<[1], [0], [0], [1], [0, 0, 1, 1], [], []>} : vector<8x32xbf16>, vector<32x64xbf16>, vector<8x64xf32> -> vector<8x64xf32>
    %897 = vector.extract_strided_slice %887 {offsets = [0, 32], sizes = [1, 64], strides = [1, 1]} : vector<1x96xf32> to vector<1x64xf32>
    %898 = vector.broadcast %897 : vector<1x64xf32> to vector<8x64xf32>
    %899 = arith.addf %896, %898 : vector<8x64xf32>
    %900 = vector.extract_strided_slice %899 {offsets = [0, 0], sizes = [8, 32], strides = [1, 1]} : vector<8x64xf32> to vector<8x32xf32>
    %901 = vector.extract_strided_slice %899 {offsets = [0, 32], sizes = [8, 32], strides = [1, 1]} : vector<8x64xf32> to vector<8x32xf32>
    %902 = arith.truncf %900 : vector<8x32xf32> to vector<8x32xbf16>
    %cst_331 = arith.constant 0.000000e+00 : f32
    %903 = vector.broadcast %cst_331 : f32 to vector<8x32xf32>
    %904 = vector.broadcast %7 : vector<1x32xf32> to vector<8x32xf32>
    %905 = arith.mulf %893, %904 : vector<8x32xf32>
    %906 = arith.truncf %905 : vector<8x32xf32> to vector<8x32xbf16>
    %cst_332 = arith.constant dense<0.000000e+00> : vector<8x8xf32>
    %907 = tpu.matmul %906, %902, %cst_332 {dimension_numbers = #tpu.dot_dimension_numbers<[1], [1], [0], [0], [0, 0, 1, 0], [], []>} : vector<8x32xbf16>, vector<8x32xbf16>, vector<8x8xf32> -> vector<8x8xf32>
    %cst_333 = arith.constant 0.353553385 : f32
    %908 = vector.broadcast %cst_333 : f32 to vector<8x8xf32>
    %909 = arith.mulf %907, %908 : vector<8x8xf32>
    %910 = arith.addf %909, %34 : vector<8x8xf32>
    %cst_334 = arith.constant dense<0xFF800000> : vector<8xf32>
    %911 = vector.multi_reduction <maximumf>, %910, %cst_334 [1] : vector<8x8xf32> to vector<8xf32>
    %912 = vector.shape_cast %911 : vector<8xf32> to vector<8x1xf32>
    %913 = vector.broadcast %912 : vector<8x1xf32> to vector<8x8xf32>
    %914 = arith.subf %910, %913 : vector<8x8xf32>
    %915 = math.exp %914 : vector<8x8xf32>
    %cst_335 = arith.constant dense<0.000000e+00> : vector<8xf32>
    %916 = vector.multi_reduction <add>, %915, %cst_335 [1] : vector<8x8xf32> to vector<8xf32>
    %917 = vector.shape_cast %916 : vector<8xf32> to vector<8x1xf32>
    %918 = tpu.reciprocal %917 {approx = true} : vector<8x1xf32> -> vector<8x1xf32>
    %919 = vector.broadcast %918 : vector<8x1xf32> to vector<8x8xf32>
    %920 = arith.mulf %915, %919 : vector<8x8xf32>
    %921 = arith.truncf %920 : vector<8x8xf32> to vector<8x8xbf16>
    %922 = vector.broadcast %7 : vector<1x32xf32> to vector<8x32xf32>
    %923 = arith.mulf %901, %922 : vector<8x32xf32>
    %924 = arith.truncf %923 : vector<8x32xf32> to vector<8x32xbf16>
    %cst_336 = arith.constant dense<0.000000e+00> : vector<8x32xf32>
    %925 = tpu.matmul %921, %924, %cst_336 {dimension_numbers = #tpu.dot_dimension_numbers<[1], [0], [0], [1], [0, 0, 1, 1], [], []>} : vector<8x8xbf16>, vector<8x32xbf16>, vector<8x32xf32> -> vector<8x32xf32>
    %926 = arith.addf %903, %925 : vector<8x32xf32>
    %927 = vector.broadcast %14 : vector<1x32xf32> to vector<8x32xf32>
    %928 = arith.mulf %893, %927 : vector<8x32xf32>
    %929 = arith.truncf %928 : vector<8x32xf32> to vector<8x32xbf16>
    %cst_337 = arith.constant dense<0.000000e+00> : vector<8x8xf32>
    %930 = tpu.matmul %929, %902, %cst_337 {dimension_numbers = #tpu.dot_dimension_numbers<[1], [1], [0], [0], [0, 0, 1, 0], [], []>} : vector<8x32xbf16>, vector<8x32xbf16>, vector<8x8xf32> -> vector<8x8xf32>
    %cst_338 = arith.constant 0.353553385 : f32
    %931 = vector.broadcast %cst_338 : f32 to vector<8x8xf32>
    %932 = arith.mulf %930, %931 : vector<8x8xf32>
    %933 = arith.addf %932, %34 : vector<8x8xf32>
    %cst_339 = arith.constant dense<0xFF800000> : vector<8xf32>
    %934 = vector.multi_reduction <maximumf>, %933, %cst_339 [1] : vector<8x8xf32> to vector<8xf32>
    %935 = vector.shape_cast %934 : vector<8xf32> to vector<8x1xf32>
    %936 = vector.broadcast %935 : vector<8x1xf32> to vector<8x8xf32>
    %937 = arith.subf %933, %936 : vector<8x8xf32>
    %938 = math.exp %937 : vector<8x8xf32>
    %cst_340 = arith.constant dense<0.000000e+00> : vector<8xf32>
    %939 = vector.multi_reduction <add>, %938, %cst_340 [1] : vector<8x8xf32> to vector<8xf32>
    %940 = vector.shape_cast %939 : vector<8xf32> to vector<8x1xf32>
    %941 = tpu.reciprocal %940 {approx = true} : vector<8x1xf32> -> vector<8x1xf32>
    %942 = vector.broadcast %941 : vector<8x1xf32> to vector<8x8xf32>
    %943 = arith.mulf %938, %942 : vector<8x8xf32>
    %944 = arith.truncf %943 : vector<8x8xf32> to vector<8x8xbf16>
    %945 = vector.broadcast %14 : vector<1x32xf32> to vector<8x32xf32>
    %946 = arith.mulf %901, %945 : vector<8x32xf32>
    %947 = arith.truncf %946 : vector<8x32xf32> to vector<8x32xbf16>
    %cst_341 = arith.constant dense<0.000000e+00> : vector<8x32xf32>
    %948 = tpu.matmul %944, %947, %cst_341 {dimension_numbers = #tpu.dot_dimension_numbers<[1], [0], [0], [1], [0, 0, 1, 1], [], []>} : vector<8x8xbf16>, vector<8x32xbf16>, vector<8x32xf32> -> vector<8x32xf32>
    %949 = arith.addf %926, %948 : vector<8x32xf32>
    %950 = vector.broadcast %21 : vector<1x32xf32> to vector<8x32xf32>
    %951 = arith.mulf %893, %950 : vector<8x32xf32>
    %952 = arith.truncf %951 : vector<8x32xf32> to vector<8x32xbf16>
    %cst_342 = arith.constant dense<0.000000e+00> : vector<8x8xf32>
    %953 = tpu.matmul %952, %902, %cst_342 {dimension_numbers = #tpu.dot_dimension_numbers<[1], [1], [0], [0], [0, 0, 1, 0], [], []>} : vector<8x32xbf16>, vector<8x32xbf16>, vector<8x8xf32> -> vector<8x8xf32>
    %cst_343 = arith.constant 0.353553385 : f32
    %954 = vector.broadcast %cst_343 : f32 to vector<8x8xf32>
    %955 = arith.mulf %953, %954 : vector<8x8xf32>
    %956 = arith.addf %955, %34 : vector<8x8xf32>
    %cst_344 = arith.constant dense<0xFF800000> : vector<8xf32>
    %957 = vector.multi_reduction <maximumf>, %956, %cst_344 [1] : vector<8x8xf32> to vector<8xf32>
    %958 = vector.shape_cast %957 : vector<8xf32> to vector<8x1xf32>
    %959 = vector.broadcast %958 : vector<8x1xf32> to vector<8x8xf32>
    %960 = arith.subf %956, %959 : vector<8x8xf32>
    %961 = math.exp %960 : vector<8x8xf32>
    %cst_345 = arith.constant dense<0.000000e+00> : vector<8xf32>
    %962 = vector.multi_reduction <add>, %961, %cst_345 [1] : vector<8x8xf32> to vector<8xf32>
    %963 = vector.shape_cast %962 : vector<8xf32> to vector<8x1xf32>
    %964 = tpu.reciprocal %963 {approx = true} : vector<8x1xf32> -> vector<8x1xf32>
    %965 = vector.broadcast %964 : vector<8x1xf32> to vector<8x8xf32>
    %966 = arith.mulf %961, %965 : vector<8x8xf32>
    %967 = arith.truncf %966 : vector<8x8xf32> to vector<8x8xbf16>
    %968 = vector.broadcast %21 : vector<1x32xf32> to vector<8x32xf32>
    %969 = arith.mulf %901, %968 : vector<8x32xf32>
    %970 = arith.truncf %969 : vector<8x32xf32> to vector<8x32xbf16>
    %cst_346 = arith.constant dense<0.000000e+00> : vector<8x32xf32>
    %971 = tpu.matmul %967, %970, %cst_346 {dimension_numbers = #tpu.dot_dimension_numbers<[1], [0], [0], [1], [0, 0, 1, 1], [], []>} : vector<8x8xbf16>, vector<8x32xbf16>, vector<8x32xf32> -> vector<8x32xf32>
    %972 = arith.addf %949, %971 : vector<8x32xf32>
    %973 = vector.broadcast %28 : vector<1x32xf32> to vector<8x32xf32>
    %974 = arith.mulf %893, %973 : vector<8x32xf32>
    %975 = arith.truncf %974 : vector<8x32xf32> to vector<8x32xbf16>
    %cst_347 = arith.constant dense<0.000000e+00> : vector<8x8xf32>
    %976 = tpu.matmul %975, %902, %cst_347 {dimension_numbers = #tpu.dot_dimension_numbers<[1], [1], [0], [0], [0, 0, 1, 0], [], []>} : vector<8x32xbf16>, vector<8x32xbf16>, vector<8x8xf32> -> vector<8x8xf32>
    %cst_348 = arith.constant 0.353553385 : f32
    %977 = vector.broadcast %cst_348 : f32 to vector<8x8xf32>
    %978 = arith.mulf %976, %977 : vector<8x8xf32>
    %979 = arith.addf %978, %34 : vector<8x8xf32>
    %cst_349 = arith.constant dense<0xFF800000> : vector<8xf32>
    %980 = vector.multi_reduction <maximumf>, %979, %cst_349 [1] : vector<8x8xf32> to vector<8xf32>
    %981 = vector.shape_cast %980 : vector<8xf32> to vector<8x1xf32>
    %982 = vector.broadcast %981 : vector<8x1xf32> to vector<8x8xf32>
    %983 = arith.subf %979, %982 : vector<8x8xf32>
    %984 = math.exp %983 : vector<8x8xf32>
    %cst_350 = arith.constant dense<0.000000e+00> : vector<8xf32>
    %985 = vector.multi_reduction <add>, %984, %cst_350 [1] : vector<8x8xf32> to vector<8xf32>
    %986 = vector.shape_cast %985 : vector<8xf32> to vector<8x1xf32>
    %987 = tpu.reciprocal %986 {approx = true} : vector<8x1xf32> -> vector<8x1xf32>
    %988 = vector.broadcast %987 : vector<8x1xf32> to vector<8x8xf32>
    %989 = arith.mulf %984, %988 : vector<8x8xf32>
    %990 = arith.truncf %989 : vector<8x8xf32> to vector<8x8xbf16>
    %991 = vector.broadcast %28 : vector<1x32xf32> to vector<8x32xf32>
    %992 = arith.mulf %901, %991 : vector<8x32xf32>
    %993 = arith.truncf %992 : vector<8x32xf32> to vector<8x32xbf16>
    %cst_351 = arith.constant dense<0.000000e+00> : vector<8x32xf32>
    %994 = tpu.matmul %990, %993, %cst_351 {dimension_numbers = #tpu.dot_dimension_numbers<[1], [0], [0], [1], [0, 0, 1, 1], [], []>} : vector<8x8xbf16>, vector<8x32xbf16>, vector<8x32xf32> -> vector<8x32xf32>
    %995 = arith.addf %972, %994 : vector<8x32xf32>
    %c1_352 = arith.constant 1 : index
    %c0_353 = arith.constant 0 : index
    %c0_354 = arith.constant 0 : index
    %996 = vector.load %arg21[%c1_352, %c0_353, %c0_354] : memref<2x32x32xbf16, #tpu.memory_space<vmem>>, vector<1x32x32xbf16>
    %997 = vector.shape_cast %996 : vector<1x32x32xbf16> to vector<32x32xbf16>
    %998 = arith.truncf %995 : vector<8x32xf32> to vector<8x32xbf16>
    %cst_355 = arith.constant dense<0.000000e+00> : vector<8x32xf32>
    %999 = tpu.matmul %998, %997, %cst_355 {dimension_numbers = #tpu.dot_dimension_numbers<[1], [0], [0], [1], [0, 0, 1, 1], [], []>} : vector<8x32xbf16>, vector<32x32xbf16>, vector<8x32xf32> -> vector<8x32xf32>
    %c1_356 = arith.constant 1 : index
    %c0_357 = arith.constant 0 : index
    %c0_358 = arith.constant 0 : index
    %1000 = vector.load %arg22[%c1_356, %c0_357, %c0_358] : memref<2x1x32xf32, #tpu.memory_space<vmem>>, vector<1x1x32xf32>
    %1001 = vector.shape_cast %1000 : vector<1x1x32xf32> to vector<1x32xf32>
    %1002 = vector.broadcast %1001 : vector<1x32xf32> to vector<8x32xf32>
    %1003 = arith.addf %999, %1002 : vector<8x32xf32>
    %1004 = arith.addf %883, %1003 : vector<8x32xf32>
    %c1_359 = arith.constant 1 : index
    %c2_360 = arith.constant 2 : index
    %c0_361 = arith.constant 0 : index
    %1005 = vector.load %arg27[%c1_359, %c2_360, %c0_361] : memref<2x6x32xf32, #tpu.memory_space<vmem>>, vector<1x1x32xf32>
    %1006 = vector.shape_cast %1005 : vector<1x1x32xf32> to vector<1x32xf32>
    %c1_362 = arith.constant 1 : index
    %c3_363 = arith.constant 3 : index
    %c0_364 = arith.constant 0 : index
    %1007 = vector.load %arg27[%c1_362, %c3_363, %c0_364] : memref<2x6x32xf32, #tpu.memory_space<vmem>>, vector<1x1x32xf32>
    %1008 = vector.shape_cast %1007 : vector<1x1x32xf32> to vector<1x32xf32>
    %cst_365 = arith.constant dense<0.000000e+00> : vector<8xf32>
    %1009 = vector.multi_reduction <add>, %1004, %cst_365 [1] : vector<8x32xf32> to vector<8xf32>
    %1010 = vector.shape_cast %1009 : vector<8xf32> to vector<8x1xf32>
    %cst_366 = arith.constant 3.200000e+01 : f32
    %1011 = vector.broadcast %cst_366 : f32 to vector<8x1xf32>
    %1012 = arith.divf %1010, %1011 : vector<8x1xf32>
    %1013 = vector.broadcast %1012 : vector<8x1xf32> to vector<8x32xf32>
    %1014 = arith.subf %1004, %1013 : vector<8x32xf32>
    %1015 = arith.mulf %1014, %1014 : vector<8x32xf32>
    %cst_367 = arith.constant dense<0.000000e+00> : vector<8xf32>
    %1016 = vector.multi_reduction <add>, %1015, %cst_367 [1] : vector<8x32xf32> to vector<8xf32>
    %1017 = vector.shape_cast %1016 : vector<8xf32> to vector<8x1xf32>
    %cst_368 = arith.constant 3.200000e+01 : f32
    %1018 = vector.broadcast %cst_368 : f32 to vector<8x1xf32>
    %1019 = arith.divf %1017, %1018 : vector<8x1xf32>
    %1020 = vector.broadcast %1012 : vector<8x1xf32> to vector<8x32xf32>
    %1021 = arith.subf %1004, %1020 : vector<8x32xf32>
    %cst_369 = arith.constant 9.99999974E-6 : f32
    %1022 = vector.broadcast %cst_369 : f32 to vector<8x1xf32>
    %1023 = arith.addf %1019, %1022 : vector<8x1xf32>
    %1024 = math.rsqrt %1023 : vector<8x1xf32>
    %1025 = vector.broadcast %1024 : vector<8x1xf32> to vector<8x32xf32>
    %1026 = arith.mulf %1021, %1025 : vector<8x32xf32>
    %1027 = vector.broadcast %1006 : vector<1x32xf32> to vector<8x32xf32>
    %1028 = arith.mulf %1026, %1027 : vector<8x32xf32>
    %1029 = vector.broadcast %1008 : vector<1x32xf32> to vector<8x32xf32>
    %1030 = arith.addf %1028, %1029 : vector<8x32xf32>
    %c1_370 = arith.constant 1 : index
    %c0_371 = arith.constant 0 : index
    %c0_372 = arith.constant 0 : index
    %1031 = vector.load %arg23[%c1_370, %c0_371, %c0_372] : memref<2x32x64xbf16, #tpu.memory_space<vmem>>, vector<1x32x64xbf16>
    %1032 = vector.shape_cast %1031 : vector<1x32x64xbf16> to vector<32x64xbf16>
    %1033 = arith.truncf %1030 : vector<8x32xf32> to vector<8x32xbf16>
    %cst_373 = arith.constant dense<0.000000e+00> : vector<8x64xf32>
    %1034 = tpu.matmul %1033, %1032, %cst_373 {dimension_numbers = #tpu.dot_dimension_numbers<[1], [0], [0], [1], [0, 0, 1, 1], [], []>} : vector<8x32xbf16>, vector<32x64xbf16>, vector<8x64xf32> -> vector<8x64xf32>
    %c1_374 = arith.constant 1 : index
    %c0_375 = arith.constant 0 : index
    %c0_376 = arith.constant 0 : index
    %1035 = vector.load %arg24[%c1_374, %c0_375, %c0_376] : memref<2x1x64xf32, #tpu.memory_space<vmem>>, vector<1x1x64xf32>
    %1036 = vector.shape_cast %1035 : vector<1x1x64xf32> to vector<1x64xf32>
    %1037 = vector.broadcast %1036 : vector<1x64xf32> to vector<8x64xf32>
    %1038 = arith.addf %1034, %1037 : vector<8x64xf32>
    %cst_377 = arith.constant 0.000000e+00 : f32
    %1039 = vector.broadcast %cst_377 : f32 to vector<8x64xf32>
    %1040 = arith.maximumf %1038, %1039 : vector<8x64xf32>
    %c1_378 = arith.constant 1 : index
    %c0_379 = arith.constant 0 : index
    %c0_380 = arith.constant 0 : index
    %1041 = vector.load %arg25[%c1_378, %c0_379, %c0_380] : memref<2x64x32xbf16, #tpu.memory_space<vmem>>, vector<1x64x32xbf16>
    %1042 = vector.shape_cast %1041 : vector<1x64x32xbf16> to vector<64x32xbf16>
    %1043 = arith.truncf %1040 : vector<8x64xf32> to vector<8x64xbf16>
    %cst_381 = arith.constant dense<0.000000e+00> : vector<8x32xf32>
    %1044 = tpu.matmul %1043, %1042, %cst_381 {dimension_numbers = #tpu.dot_dimension_numbers<[1], [0], [0], [1], [0, 0, 1, 1], [], []>} : vector<8x64xbf16>, vector<64x32xbf16>, vector<8x32xf32> -> vector<8x32xf32>
    %c1_382 = arith.constant 1 : index
    %c0_383 = arith.constant 0 : index
    %c0_384 = arith.constant 0 : index
    %1045 = vector.load %arg26[%c1_382, %c0_383, %c0_384] : memref<2x1x32xf32, #tpu.memory_space<vmem>>, vector<1x1x32xf32>
    %1046 = vector.shape_cast %1045 : vector<1x1x32xf32> to vector<1x32xf32>
    %1047 = vector.broadcast %1046 : vector<1x32xf32> to vector<8x32xf32>
    %1048 = arith.addf %1044, %1047 : vector<8x32xf32>
    %1049 = arith.addf %1030, %1048 : vector<8x32xf32>
    %c1_385 = arith.constant 1 : index
    %c4_386 = arith.constant 4 : index
    %c0_387 = arith.constant 0 : index
    %1050 = vector.load %arg27[%c1_385, %c4_386, %c0_387] : memref<2x6x32xf32, #tpu.memory_space<vmem>>, vector<1x1x32xf32>
    %1051 = vector.shape_cast %1050 : vector<1x1x32xf32> to vector<1x32xf32>
    %c1_388 = arith.constant 1 : index
    %c5_389 = arith.constant 5 : index
    %c0_390 = arith.constant 0 : index
    %1052 = vector.load %arg27[%c1_388, %c5_389, %c0_390] : memref<2x6x32xf32, #tpu.memory_space<vmem>>, vector<1x1x32xf32>
    %1053 = vector.shape_cast %1052 : vector<1x1x32xf32> to vector<1x32xf32>
    %cst_391 = arith.constant dense<0.000000e+00> : vector<8xf32>
    %1054 = vector.multi_reduction <add>, %1049, %cst_391 [1] : vector<8x32xf32> to vector<8xf32>
    %1055 = vector.shape_cast %1054 : vector<8xf32> to vector<8x1xf32>
    %cst_392 = arith.constant 3.200000e+01 : f32
    %1056 = vector.broadcast %cst_392 : f32 to vector<8x1xf32>
    %1057 = arith.divf %1055, %1056 : vector<8x1xf32>
    %1058 = vector.broadcast %1057 : vector<8x1xf32> to vector<8x32xf32>
    %1059 = arith.subf %1049, %1058 : vector<8x32xf32>
    %1060 = arith.mulf %1059, %1059 : vector<8x32xf32>
    %cst_393 = arith.constant dense<0.000000e+00> : vector<8xf32>
    %1061 = vector.multi_reduction <add>, %1060, %cst_393 [1] : vector<8x32xf32> to vector<8xf32>
    %1062 = vector.shape_cast %1061 : vector<8xf32> to vector<8x1xf32>
    %cst_394 = arith.constant 3.200000e+01 : f32
    %1063 = vector.broadcast %cst_394 : f32 to vector<8x1xf32>
    %1064 = arith.divf %1062, %1063 : vector<8x1xf32>
    %1065 = vector.broadcast %1057 : vector<8x1xf32> to vector<8x32xf32>
    %1066 = arith.subf %1049, %1065 : vector<8x32xf32>
    %cst_395 = arith.constant 9.99999974E-6 : f32
    %1067 = vector.broadcast %cst_395 : f32 to vector<8x1xf32>
    %1068 = arith.addf %1064, %1067 : vector<8x1xf32>
    %1069 = math.rsqrt %1068 : vector<8x1xf32>
    %1070 = vector.broadcast %1069 : vector<8x1xf32> to vector<8x32xf32>
    %1071 = arith.mulf %1066, %1070 : vector<8x32xf32>
    %1072 = vector.broadcast %1051 : vector<1x32xf32> to vector<8x32xf32>
    %1073 = arith.mulf %1071, %1072 : vector<8x32xf32>
    %1074 = vector.broadcast %1053 : vector<1x32xf32> to vector<8x32xf32>
    %1075 = arith.addf %1073, %1074 : vector<8x32xf32>
    %c0_396 = arith.constant 0 : index
    %c0_397 = arith.constant 0 : index
    %1076 = vector.load %arg28[%c0_396, %c0_397] : memref<32x128xbf16, #tpu.memory_space<vmem>>, vector<32x128xbf16>
    %1077 = arith.truncf %1075 : vector<8x32xf32> to vector<8x32xbf16>
    %cst_398 = arith.constant dense<0.000000e+00> : vector<8x128xf32>
    %1078 = tpu.matmul %1077, %1076, %cst_398 {dimension_numbers = #tpu.dot_dimension_numbers<[1], [0], [0], [1], [0, 0, 1, 1], [], []>} : vector<8x32xbf16>, vector<32x128xbf16>, vector<8x128xf32> -> vector<8x128xf32>
    %c0_399 = arith.constant 0 : index
    %c0_400 = arith.constant 0 : index
    %1079 = vector.load %arg29[%c0_399, %c0_400] : memref<1x128xf32, #tpu.memory_space<vmem>>, vector<1x128xf32>
    %1080 = vector.broadcast %1079 : vector<1x128xf32> to vector<8x128xf32>
    %1081 = arith.addf %1078, %1080 : vector<8x128xf32>
    %cst_401 = arith.constant dense<0xFF800000> : vector<8xf32>
    %1082 = vector.multi_reduction <maximumf>, %1081, %cst_401 [1] : vector<8x128xf32> to vector<8xf32>
    %1083 = vector.shape_cast %1082 : vector<8xf32> to vector<8x1xf32>
    %1084 = vector.broadcast %1083 : vector<8x1xf32> to vector<8x128xf32>
    %1085 = arith.subf %1081, %1084 : vector<8x128xf32>
    %1086 = math.exp %1085 : vector<8x128xf32>
    %cst_402 = arith.constant dense<0.000000e+00> : vector<8xf32>
    %1087 = vector.multi_reduction <add>, %1086, %cst_402 [1] : vector<8x128xf32> to vector<8xf32>
    %1088 = vector.shape_cast %1087 : vector<8xf32> to vector<8x1xf32>
    %1089 = math.log %1088 : vector<8x1xf32>
    %1090 = vector.broadcast %1089 : vector<8x1xf32> to vector<8x128xf32>
    %1091 = arith.subf %1085, %1090 : vector<8x128xf32>
    %c0_403 = arith.constant 0 : index
    %c0_404 = arith.constant 0 : index
    %c0_405 = arith.constant 0 : index
    %1092 = vector.load %arg31[%c0_403, %c0_404, %c0_405] : memref<1x8x128xf32, #tpu.memory_space<vmem>>, vector<1x8x128xf32>
    %1093 = vector.shape_cast %1092 : vector<1x8x128xf32> to vector<8x128xf32>
    %1094 = vector.shape_cast %1091 : vector<8x128xf32> to vector<1x8x128xf32>
    tpu.vector_store %arg31[%c0_403, %c0_404, %c0_405], %1094 {strides = array<i32>} : memref<1x8x128xf32, #tpu.memory_space<vmem>>, vector<1x8x128xf32>,
    return
  }
  func.func @transform_0(%arg0: i32) -> (i32, i32, i32) {
    %c0_i32 = arith.constant 0 : i32
    %c0_i32_0 = arith.constant 0 : i32
    %c0_i32_1 = arith.constant 0 : i32
    return %arg0, %c0_i32, %c0_i32_0 : i32, i32, i32
  }
  func.func @transform_1(%arg0: i32) -> (i32, i32, i32) {
    %c0_i32 = arith.constant 0 : i32
    %c0_i32_0 = arith.constant 0 : i32
    %c0_i32_1 = arith.constant 0 : i32
    return %arg0, %c0_i32, %c0_i32_0 : i32, i32, i32
  }
  func.func @transform_2(%arg0: i32) -> (i32, i32, i32) {
    %c0_i32 = arith.constant 0 : i32
    %c0_i32_0 = arith.constant 0 : i32
    %c0_i32_1 = arith.constant 0 : i32
    return %arg0, %c0_i32, %c0_i32_0 : i32, i32, i32
  }
  func.func @transform_3(%arg0: i32) -> (i32, i32, i32) {
    %c0_i32 = arith.constant 0 : i32
    %c0_i32_0 = arith.constant 0 : i32
    %c0_i32_1 = arith.constant 0 : i32
    return %arg0, %c0_i32, %c0_i32_0 : i32, i32, i32
  }
  func.func @transform_4(%arg0: i32) -> (i32, i32, i32) {
    %c0_i32 = arith.constant 0 : i32
    %c0_i32_0 = arith.constant 0 : i32
    %c0_i32_1 = arith.constant 0 : i32
    return %arg0, %c0_i32, %c0_i32_0 : i32, i32, i32
  }
  func.func @transform_5(%arg0: i32) -> (i32, i32, i32) {
    %c0_i32 = arith.constant 0 : i32
    %c0_i32_0 = arith.constant 0 : i32
    %c0_i32_1 = arith.constant 0 : i32
    %c0_i32_2 = arith.constant 0 : i32
    return %c0_i32, %c0_i32_0, %c0_i32_1 : i32, i32, i32
  }
  func.func @transform_6(%arg0: i32) -> (i32, i32, i32) {
    %c0_i32 = arith.constant 0 : i32
    %c0_i32_0 = arith.constant 0 : i32
    %c0_i32_1 = arith.constant 0 : i32
    %c0_i32_2 = arith.constant 0 : i32
    return %c0_i32, %c0_i32_0, %c0_i32_1 : i32, i32, i32
  }
  func.func @transform_7(%arg0: i32) -> (i32, i32, i32) {
    %c0_i32 = arith.constant 0 : i32
    %c0_i32_0 = arith.constant 0 : i32
    %c0_i32_1 = arith.constant 0 : i32
    %c0_i32_2 = arith.constant 0 : i32
    return %c0_i32, %c0_i32_0, %c0_i32_1 : i32, i32, i32
  }
  func.func @transform_8(%arg0: i32) -> (i32, i32, i32) {
    %c0_i32 = arith.constant 0 : i32
    %c0_i32_0 = arith.constant 0 : i32
    %c0_i32_1 = arith.constant 0 : i32
    %c0_i32_2 = arith.constant 0 : i32
    return %c0_i32, %c0_i32_0, %c0_i32_1 : i32, i32, i32
  }
  func.func @transform_9(%arg0: i32) -> (i32, i32, i32) {
    %c0_i32 = arith.constant 0 : i32
    %c0_i32_0 = arith.constant 0 : i32
    %c0_i32_1 = arith.constant 0 : i32
    %c0_i32_2 = arith.constant 0 : i32
    return %c0_i32, %c0_i32_0, %c0_i32_1 : i32, i32, i32
  }
  func.func @transform_10(%arg0: i32) -> (i32, i32, i32) {
    %c0_i32 = arith.constant 0 : i32
    %c0_i32_0 = arith.constant 0 : i32
    %c0_i32_1 = arith.constant 0 : i32
    %c0_i32_2 = arith.constant 0 : i32
    return %c0_i32, %c0_i32_0, %c0_i32_1 : i32, i32, i32
  }
  func.func @transform_11(%arg0: i32) -> (i32, i32, i32) {
    %c0_i32 = arith.constant 0 : i32
    %c0_i32_0 = arith.constant 0 : i32
    %c0_i32_1 = arith.constant 0 : i32
    %c0_i32_2 = arith.constant 0 : i32
    return %c0_i32, %c0_i32_0, %c0_i32_1 : i32, i32, i32
  }
  func.func @transform_12(%arg0: i32) -> (i32, i32, i32) {
    %c0_i32 = arith.constant 0 : i32
    %c0_i32_0 = arith.constant 0 : i32
    %c0_i32_1 = arith.constant 0 : i32
    %c0_i32_2 = arith.constant 0 : i32
    return %c0_i32, %c0_i32_0, %c0_i32_1 : i32, i32, i32
  }
  func.func @transform_13(%arg0: i32) -> (i32, i32, i32) {
    %c0_i32 = arith.constant 0 : i32
    %c0_i32_0 = arith.constant 0 : i32
    %c0_i32_1 = arith.constant 0 : i32
    %c0_i32_2 = arith.constant 0 : i32
    return %c0_i32, %c0_i32_0, %c0_i32_1 : i32, i32, i32
  }
  func.func @transform_14(%arg0: i32) -> (i32, i32, i32) {
    %c0_i32 = arith.constant 0 : i32
    %c0_i32_0 = arith.constant 0 : i32
    %c0_i32_1 = arith.constant 0 : i32
    %c0_i32_2 = arith.constant 0 : i32
    return %c0_i32, %c0_i32_0, %c0_i32_1 : i32, i32, i32
  }
  func.func @transform_15(%arg0: i32) -> (i32, i32, i32) {
    %c0_i32 = arith.constant 0 : i32
    %c0_i32_0 = arith.constant 0 : i32
    %c0_i32_1 = arith.constant 0 : i32
    %c0_i32_2 = arith.constant 0 : i32
    return %c0_i32, %c0_i32_0, %c0_i32_1 : i32, i32, i32
  }
  func.func @transform_16(%arg0: i32) -> (i32, i32, i32) {
    %c0_i32 = arith.constant 0 : i32
    %c0_i32_0 = arith.constant 0 : i32
    %c0_i32_1 = arith.constant 0 : i32
    %c0_i32_2 = arith.constant 0 : i32
    return %c0_i32, %c0_i32_0, %c0_i32_1 : i32, i32, i32
  }
  func.func @transform_17(%arg0: i32) -> (i32, i32, i32) {
    %c0_i32 = arith.constant 0 : i32
    %c0_i32_0 = arith.constant 0 : i32
    %c0_i32_1 = arith.constant 0 : i32
    %c0_i32_2 = arith.constant 0 : i32
    return %c0_i32, %c0_i32_0, %c0_i32_1 : i32, i32, i32
  }
  func.func @transform_18(%arg0: i32) -> (i32, i32, i32) {
    %c0_i32 = arith.constant 0 : i32
    %c0_i32_0 = arith.constant 0 : i32
    %c0_i32_1 = arith.constant 0 : i32
    %c0_i32_2 = arith.constant 0 : i32
    return %c0_i32, %c0_i32_0, %c0_i32_1 : i32, i32, i32
  }
  func.func @transform_19(%arg0: i32) -> (i32, i32, i32) {
    %c0_i32 = arith.constant 0 : i32
    %c0_i32_0 = arith.constant 0 : i32
    %c0_i32_1 = arith.constant 0 : i32
    %c0_i32_2 = arith.constant 0 : i32
    return %c0_i32, %c0_i32_0, %c0_i32_1 : i32, i32, i32
  }
  func.func @transform_20(%arg0: i32) -> (i32, i32, i32) {
    %c0_i32 = arith.constant 0 : i32
    %c0_i32_0 = arith.constant 0 : i32
    %c0_i32_1 = arith.constant 0 : i32
    %c0_i32_2 = arith.constant 0 : i32
    return %c0_i32, %c0_i32_0, %c0_i32_1 : i32, i32, i32
  }
  func.func @transform_21(%arg0: i32) -> (i32, i32, i32) {
    %c0_i32 = arith.constant 0 : i32
    %c0_i32_0 = arith.constant 0 : i32
    %c0_i32_1 = arith.constant 0 : i32
    %c0_i32_2 = arith.constant 0 : i32
    return %c0_i32, %c0_i32_0, %c0_i32_1 : i32, i32, i32
  }
  func.func @transform_22(%arg0: i32) -> (i32, i32, i32) {
    %c0_i32 = arith.constant 0 : i32
    %c0_i32_0 = arith.constant 0 : i32
    %c0_i32_1 = arith.constant 0 : i32
    %c0_i32_2 = arith.constant 0 : i32
    return %c0_i32, %c0_i32_0, %c0_i32_1 : i32, i32, i32
  }
  func.func @transform_23(%arg0: i32) -> (i32, i32, i32) {
    %c0_i32 = arith.constant 0 : i32
    %c0_i32_0 = arith.constant 0 : i32
    %c0_i32_1 = arith.constant 0 : i32
    %c0_i32_2 = arith.constant 0 : i32
    return %c0_i32, %c0_i32_0, %c0_i32_1 : i32, i32, i32
  }
  func.func @transform_24(%arg0: i32) -> (i32, i32, i32) {
    %c0_i32 = arith.constant 0 : i32
    %c0_i32_0 = arith.constant 0 : i32
    %c0_i32_1 = arith.constant 0 : i32
    %c0_i32_2 = arith.constant 0 : i32
    return %c0_i32, %c0_i32_0, %c0_i32_1 : i32, i32, i32
  }
  func.func @transform_25(%arg0: i32) -> (i32, i32, i32) {
    %c0_i32 = arith.constant 0 : i32
    %c0_i32_0 = arith.constant 0 : i32
    %c0_i32_1 = arith.constant 0 : i32
    %c0_i32_2 = arith.constant 0 : i32
    return %c0_i32, %c0_i32_0, %c0_i32_1 : i32, i32, i32
  }
  func.func @transform_26(%arg0: i32) -> (i32, i32, i32) {
    %c0_i32 = arith.constant 0 : i32
    %c0_i32_0 = arith.constant 0 : i32
    %c0_i32_1 = arith.constant 0 : i32
    %c0_i32_2 = arith.constant 0 : i32
    return %c0_i32, %c0_i32_0, %c0_i32_1 : i32, i32, i32
  }
  func.func @transform_27(%arg0: i32) -> (i32, i32) {
    %c0_i32 = arith.constant 0 : i32
    %c0_i32_0 = arith.constant 0 : i32
    %c0_i32_1 = arith.constant 0 : i32
    return %c0_i32, %c0_i32_0 : i32, i32
  }
  func.func @transform_28(%arg0: i32) -> (i32, i32) {
    %c0_i32 = arith.constant 0 : i32
    %c0_i32_0 = arith.constant 0 : i32
    %c0_i32_1 = arith.constant 0 : i32
    return %c0_i32, %c0_i32_0 : i32, i32
  }
  func.func @transform_29(%arg0: i32) -> (i32, i32, i32) {
    %c0_i32 = arith.constant 0 : i32
    %c0_i32_0 = arith.constant 0 : i32
    %c0_i32_1 = arith.constant 0 : i32
    return %arg0, %c0_i32, %c0_i32_0 : i32, i32, i32
  }
  func.func @transform_30(%arg0: i32) -> (i32, i32, i32) {
    %c0_i32 = arith.constant 0 : i32
    %c0_i32_0 = arith.constant 0 : i32
    %c0_i32_1 = arith.constant 0 : i32
    return %arg0, %c0_i32, %c0_i32_0 : i32, i32, i32
  }
}

</mosaic_0001>

<llo_original>
// kernel: transformer_forward.1
$region0: #{transformer_forward.1}
  #allocation0 [shape = 'u32[]', space=smem, size = 0x4, offset = 0x4, fixed_abs, tag = 'smem constant byte address 0x4 - core index']
  #allocation1 [shape = 'u32[144,128]{1,0:T(1,128)}', space=vmem, size = 0x12000, scoped, tag = 'internal scratch']
  %s0 = inlined_call_operand.smem [shape: u32[31], index: -1, kind: input, shape index: {}]
  %s1 = sld [smem:[%s0]]
  %s2 = scalar_lea.smem %s0, 1
  %s3 = sld [smem:[%s2]]
  %s4 = scalar_lea.smem %s0, 2
  %s5 = sld [smem:[%s4]]
  %s6 = scalar_lea.smem %s0, 3
  %s7 = sld [smem:[%s6]]
  %s8 = scalar_lea.smem %s0, 4
  %s9 = sld [smem:[%s8]]
  %s10 = scalar_lea.smem %s0, 5
  %s11 = sld [smem:[%s10]]
  %s12 = scalar_lea.smem %s0, 6
  %s13 = sld [smem:[%s12]]
  %s14 = scalar_lea.smem %s0, 7
  %s15 = sld [smem:[%s14]]
  %s16 = scalar_lea.smem %s0, 8
  %s17 = sld [smem:[%s16]]
  %s18 = scalar_lea.smem %s0, 9
  %s19 = sld [smem:[%s18]]
  %s20 = scalar_lea.smem %s0, 10
  %s21 = sld [smem:[%s20]]
  %s22 = scalar_lea.smem %s0, 11
  %s23 = sld [smem:[%s22]]
  %s24 = scalar_lea.smem %s0, 12
  %s25 = sld [smem:[%s24]]
  %s26 = scalar_lea.smem %s0, 13
  %s27 = sld [smem:[%s26]]
  %s28 = scalar_lea.smem %s0, 14
  %s29 = sld [smem:[%s28]]
  %s30 = scalar_lea.smem %s0, 15
  %s31 = sld [smem:[%s30]]
  %s32 = scalar_lea.smem %s0, 16
  %s33 = sld [smem:[%s32]]
  %s34 = scalar_lea.smem %s0, 17
  %s35 = sld [smem:[%s34]]
  %s36 = scalar_lea.smem %s0, 18
  %s37 = sld [smem:[%s36]]
  %s38 = scalar_lea.smem %s0, 19
  %s39 = sld [smem:[%s38]]
  %s40 = scalar_lea.smem %s0, 20
  %s41 = sld [smem:[%s40]]
  %s42 = scalar_lea.smem %s0, 21
  %s43 = sld [smem:[%s42]]
  %s44 = scalar_lea.smem %s0, 22
  %s45 = sld [smem:[%s44]]
  %s46 = scalar_lea.smem %s0, 23
  %s47 = sld [smem:[%s46]]
  %s48 = scalar_lea.smem %s0, 24
  %s49 = sld [smem:[%s48]]
  %s50 = scalar_lea.smem %s0, 25
  %s51 = sld [smem:[%s50]]
  %s52 = scalar_lea.smem %s0, 26
  %s53 = sld [smem:[%s52]]
  %s54 = scalar_lea.smem %s0, 27
  %s55 = sld [smem:[%s54]]
  %s56 = scalar_lea.smem %s0, 28
  %s57 = sld [smem:[%s56]]
  %s58 = scalar_lea.smem %s0, 29
  %s59 = sld [smem:[%s58]]
  %s60 = scalar_lea.smem %s0, 30
  %s61 = sld [smem:[%s60]]
  %62 = xla_tuple %s59, %s61
  %s63 = sld [smem:[#allocation0]]
  $region157: #{transformer_forward.1} parent=0
    _
  %s65 = ssub.s32 1, %s63
  %s66 = scalar_select 0, %s65, %s63
  $region1: #{transformer_forward.1} parent=0
    #allocation2 [shape = 'u8[8192]{0}', space=vmem, size = 0x2000, scoped, tag = 'output window, operand 0']
    #allocation3 [shape = 's32[2]{0}', space=sflag, size = 0x8, scoped, tag = 'scoped memory for transformer_forward.1']
    #allocation4 [shape = 'u8[8192]{0}', space=vmem, size = 0x2000, scoped, tag = 'output window, operand 1']
    #allocation5 [shape = 's32[2]{0}', space=sflag, size = 0x8, scoped, tag = 'scoped memory for transformer_forward.1']
    %67 = vsyncpa [#allocation3], 0
    %s68 = scalar_lea.sflag [#allocation3], 1
    %69 = vsyncpa %s68, 0
    %70 = vsyncpa [#allocation5], 0
    %s71 = scalar_lea.sflag [#allocation5], 1
    %72 = vsyncpa %s71, 0
    loop: start=0, step=1, limit=4
    $region2: #{transformer_forward.1} parent=1 // loop_pre_header
      _
    $region3: #{transformer_forward.1} parent=1 // loop_header
      %s74 = sphi 0, %s78
      %p75 = scmp.ge.s32.totalorder %s74, 4
      %s84 = sphi 0, %s86
      %s87 = sphi 0, %s84
      %s88 = sphi 0, %s87
      %s104 = sphi 0, %s88
      %s110 = sphi 0, %s112
      %s113 = sphi 0, %s110
      %s114 = sphi 0, %s113
      %s130 = sphi 0, %s114
      %s136 = sphi 0, %s138
      %s139 = sphi 0, %s136
      %s140 = sphi 0, %s139
      %s156 = sphi 0, %s140
      %s162 = sphi 0, %s164
      %s165 = sphi 0, %s162
      %s166 = sphi 0, %s165
      %s182 = sphi 0, %s166
      %s188 = sphi 0, %s190
      %s191 = sphi 0, %s188
      %s192 = sphi 0, %s191
      %s208 = sphi 0, %s192
      %s212 = sphi 0, %s212
      %s214 = sphi 0, %s212
      %s215 = sphi 0, %s214
      %s229 = sphi 0, %s215
      %s233 = sphi 0, %s233
      %s235 = sphi 0, %s233
      %s236 = sphi 0, %s235
      %s250 = sphi 0, %s236
      %s254 = sphi 0, %s254
      %s256 = sphi 0, %s254
      %s257 = sphi 0, %s256
      %s271 = sphi 0, %s257
      %s275 = sphi 0, %s275
      %s277 = sphi 0, %s275
      %s278 = sphi 0, %s277
      %s292 = sphi 0, %s278
      %s296 = sphi 0, %s296
      %s298 = sphi 0, %s296
      %s299 = sphi 0, %s298
      %s313 = sphi 0, %s299
      %s317 = sphi 0, %s317
      %s319 = sphi 0, %s317
      %s320 = sphi 0, %s319
      %s334 = sphi 0, %s320
      %s338 = sphi 0, %s338
      %s340 = sphi 0, %s338
      %s341 = sphi 0, %s340
      %s355 = sphi 0, %s341
      %s359 = sphi 0, %s359
      %s361 = sphi 0, %s359
      %s362 = sphi 0, %s361
      %s376 = sphi 0, %s362
      %s380 = sphi 0, %s380
      %s382 = sphi 0, %s380
      %s383 = sphi 0, %s382
      %s397 = sphi 0, %s383
      %s401 = sphi 0, %s401
      %s403 = sphi 0, %s401
      %s404 = sphi 0, %s403
      %s418 = sphi 0, %s404
      %s422 = sphi 0, %s422
      %s424 = sphi 0, %s422
      %s425 = sphi 0, %s424
      %s439 = sphi 0, %s425
      %s443 = sphi 0, %s443
      %s445 = sphi 0, %s443
      %s446 = sphi 0, %s445
      %s460 = sphi 0, %s446
      %s464 = sphi 0, %s464
      %s466 = sphi 0, %s464
      %s467 = sphi 0, %s466
      %s481 = sphi 0, %s467
      %s485 = sphi 0, %s485
      %s487 = sphi 0, %s485
      %s488 = sphi 0, %s487
      %s502 = sphi 0, %s488
      %s506 = sphi 0, %s506
      %s508 = sphi 0, %s506
      %s509 = sphi 0, %s508
      %s523 = sphi 0, %s509
      %s527 = sphi 0, %s527
      %s529 = sphi 0, %s527
      %s530 = sphi 0, %s529
      %s544 = sphi 0, %s530
      %s548 = sphi 0, %s548
      %s550 = sphi 0, %s548
      %s551 = sphi 0, %s550
      %s565 = sphi 0, %s551
      %s569 = sphi 0, %s569
      %s571 = sphi 0, %s569
      %s572 = sphi 0, %s571
      %s586 = sphi 0, %s572
      %s590 = sphi 0, %s590
      %s592 = sphi 0, %s590
      %s593 = sphi 0, %s592
      %s607 = sphi 0, %s593
      %s611 = sphi 0, %s611
      %s613 = sphi 0, %s611
      %s614 = sphi 0, %s613
      %s628 = sphi 0, %s614
      %s632 = sphi 0, %s632
      %s634 = sphi 0, %s632
      %s635 = sphi 0, %s634
      %s649 = sphi 0, %s635
      %s653 = sphi 0, %s653
      %s655 = sphi 0, %s653
      %s656 = sphi 0, %s655
      %s670 = sphi 0, %s656
      %s674 = sphi 0, %s674
      %s676 = sphi 0, %s674
      %s677 = sphi 0, %s676
      %s691 = sphi 0, %s677
      %s695 = sphi 0, %s695
      %s697 = sphi 0, %s695
      %s698 = sphi 0, %s697
      %s712 = sphi 0, %s698
      %s718 = sphi 0, %s720
      %s721 = sphi 0, %s718
      %s722 = sphi 0, %s721
      %s738 = sphi 0, %s722
      %s744 = sphi 0, %s746
      %s747 = sphi 0, %s744
      %s748 = sphi 0, %s747
      %s764 = sphi 0, %s748
    $region4: #{transformer_forward.1} parent=1 // loop_header_branch
      %77 = sbr.rel (%p75) target = $region8
    $region5: #{transformer_forward.1} parent=1 // loop_body
      %s79 = ssub.s32 %s74, 1
      %s80 = ssub.s32 %s74, 2
      %s81 = sadd.s32 %s74, 1
      %s82 = ssub.s32 %s74, %s81
      %p83 = scmp.eq.s32.totalorder %s82, 0
      %s85 = sadd.s32 %s84, 1
      %s86 = scalar_select %p83, %s84, %s85
      %p89 = pneg %p83
      %p90 = scmp.eq.s32.totalorder %s74, 1
      %p91 = por %p89, %p90
      %p92 = scmp.ne.s32.totalorder %s84, %s87
      %p93 = scmp.eq.s32.totalorder %s74, 0
      %p94 = por %p92, %p93
      %p95 = scmp.ne.s32.totalorder %s84, %s87
      %p96 = scmp.eq.s32.totalorder %s79, 1
      %p97 = por %p95, %p96
      %p98 = scmp.ne.s32.totalorder %s87, %s88
      %p99 = scmp.eq.s32.totalorder %s79, 0
      %p100 = por %p98, %p99
      %p101 = scmp.ne.s32.totalorder %s87, %s88
      %p102 = scmp.eq.s32.totalorder %s80, 1
      %p103 = por %p101, %p102
      %p105 = scmp.ne.s32.totalorder %s88, %s104
      %p106 = scmp.eq.s32.totalorder %s80, 0
      %p107 = por %p105, %p106
      %s108 = ssub.s32 %s74, %s81
      %p109 = scmp.eq.s32.totalorder %s108, 0
      %s111 = sadd.s32 %s110, 1
      %s112 = scalar_select %p109, %s110, %s111
      %p115 = pneg %p109
      %p116 = scmp.eq.s32.totalorder %s74, 1
      %p117 = por %p115, %p116
      %p118 = scmp.ne.s32.totalorder %s110, %s113
      %p119 = scmp.eq.s32.totalorder %s74, 0
      %p120 = por %p118, %p119
      %p121 = scmp.ne.s32.totalorder %s110, %s113
      %p122 = scmp.eq.s32.totalorder %s79, 1
      %p123 = por %p121, %p122
      %p124 = scmp.ne.s32.totalorder %s113, %s114
      %p125 = scmp.eq.s32.totalorder %s79, 0
      %p126 = por %p124, %p125
      %p127 = scmp.ne.s32.totalorder %s113, %s114
      %p128 = scmp.eq.s32.totalorder %s80, 1
      %p129 = por %p127, %p128
      %p131 = scmp.ne.s32.totalorder %s114, %s130
      %p132 = scmp.eq.s32.totalorder %s80, 0
      %p133 = por %p131, %p132
      %s134 = ssub.s32 %s74, %s81
      %p135 = scmp.eq.s32.totalorder %s134, 0
      %s137 = sadd.s32 %s136, 1
      %s138 = scalar_select %p135, %s136, %s137
      %p141 = pneg %p135
      %p142 = scmp.eq.s32.totalorder %s74, 1
      %p143 = por %p141, %p142
      %p144 = scmp.ne.s32.totalorder %s136, %s139
      %p145 = scmp.eq.s32.totalorder %s74, 0
      %p146 = por %p144, %p145
      %p147 = scmp.ne.s32.totalorder %s136, %s139
      %p148 = scmp.eq.s32.totalorder %s79, 1
      %p149 = por %p147, %p148
      %p150 = scmp.ne.s32.totalorder %s139, %s140
      %p151 = scmp.eq.s32.totalorder %s79, 0
      %p152 = por %p150, %p151
      %p153 = scmp.ne.s32.totalorder %s139, %s140
      %p154 = scmp.eq.s32.totalorder %s80, 1
      %p155 = por %p153, %p154
      %p157 = scmp.ne.s32.totalorder %s140, %s156
      %p158 = scmp.eq.s32.totalorder %s80, 0
      %p159 = por %p157, %p158
      %s160 = ssub.s32 %s74, %s81
      %p161 = scmp.eq.s32.totalorder %s160, 0
      %s163 = sadd.s32 %s162, 1
      %s164 = scalar_select %p161, %s162, %s163
      %p167 = pneg %p161
      %p168 = scmp.eq.s32.totalorder %s74, 1
      %p169 = por %p167, %p168
      %p170 = scmp.ne.s32.totalorder %s162, %s165
      %p171 = scmp.eq.s32.totalorder %s74, 0
      %p172 = por %p170, %p171
      %p173 = scmp.ne.s32.totalorder %s162, %s165
      %p174 = scmp.eq.s32.totalorder %s79, 1
      %p175 = por %p173, %p174
      %p176 = scmp.ne.s32.totalorder %s165, %s166
      %p177 = scmp.eq.s32.totalorder %s79, 0
      %p178 = por %p176, %p177
      %p179 = scmp.ne.s32.totalorder %s165, %s166
      %p180 = scmp.eq.s32.totalorder %s80, 1
      %p181 = por %p179, %p180
      %p183 = scmp.ne.s32.totalorder %s166, %s182
      %p184 = scmp.eq.s32.totalorder %s80, 0
      %p185 = por %p183, %p184
      %s186 = ssub.s32 %s74, %s81
      %p187 = scmp.eq.s32.totalorder %s186, 0
      %s189 = sadd.s32 %s188, 1
      %s190 = scalar_select %p187, %s188, %s189
      %p193 = pneg %p187
      %p194 = scmp.eq.s32.totalorder %s74, 1
      %p195 = por %p193, %p194
      %p196 = scmp.ne.s32.totalorder %s188, %s191
      %p197 = scmp.eq.s32.totalorder %s74, 0
      %p198 = por %p196, %p197
      %p199 = scmp.ne.s32.totalorder %s188, %s191
      %p200 = scmp.eq.s32.totalorder %s79, 1
      %p201 = por %p199, %p200
      %p202 = scmp.ne.s32.totalorder %s191, %s192
      %p203 = scmp.eq.s32.totalorder %s79, 0
      %p204 = por %p202, %p203
      %p205 = scmp.ne.s32.totalorder %s191, %s192
      %p206 = scmp.eq.s32.totalorder %s80, 1
      %p207 = por %p205, %p206
      %p209 = scmp.ne.s32.totalorder %s192, %s208
      %p210 = scmp.eq.s32.totalorder %s80, 0
      %p211 = por %p209, %p210
      %s213 = sadd.s32 %s212, 1
      %p216 = scmp.eq.s32.totalorder %s74, 1
      %p217 = scmp.ne.s32.totalorder %s212, %s214
      %p218 = scmp.eq.s32.totalorder %s74, 0
      %p219 = por %p217, %p218
      %p220 = scmp.ne.s32.totalorder %s212, %s214
      %p221 = scmp.eq.s32.totalorder %s79, 1
      %p222 = por %p220, %p221
      %p223 = scmp.ne.s32.totalorder %s214, %s215
      %p224 = scmp.eq.s32.totalorder %s79, 0
      %p225 = por %p223, %p224
      %p226 = scmp.ne.s32.totalorder %s214, %s215
      %p227 = scmp.eq.s32.totalorder %s80, 1
      %p228 = por %p226, %p227
      %p230 = scmp.ne.s32.totalorder %s215, %s229
      %p231 = scmp.eq.s32.totalorder %s80, 0
      %p232 = por %p230, %p231
      %s234 = sadd.s32 %s233, 1
      %p237 = scmp.eq.s32.totalorder %s74, 1
      %p238 = scmp.ne.s32.totalorder %s233, %s235
      %p239 = scmp.eq.s32.totalorder %s74, 0
      %p240 = por %p238, %p239
      %p241 = scmp.ne.s32.totalorder %s233, %s235
      %p242 = scmp.eq.s32.totalorder %s79, 1
      %p243 = por %p241, %p242
      %p244 = scmp.ne.s32.totalorder %s235, %s236
      %p245 = scmp.eq.s32.totalorder %s79, 0
      %p246 = por %p244, %p245
      %p247 = scmp.ne.s32.totalorder %s235, %s236
      %p248 = scmp.eq.s32.totalorder %s80, 1
      %p249 = por %p247, %p248
      %p251 = scmp.ne.s32.totalorder %s236, %s250
      %p252 = scmp.eq.s32.totalorder %s80, 0
      %p253 = por %p251, %p252
      %s255 = sadd.s32 %s254, 1
      %p258 = scmp.eq.s32.totalorder %s74, 1
      %p259 = scmp.ne.s32.totalorder %s254, %s256
      %p260 = scmp.eq.s32.totalorder %s74, 0
      %p261 = por %p259, %p260
      %p262 = scmp.ne.s32.totalorder %s254, %s256
      %p263 = scmp.eq.s32.totalorder %s79, 1
      %p264 = por %p262, %p263
      %p265 = scmp.ne.s32.totalorder %s256, %s257
      %p266 = scmp.eq.s32.totalorder %s79, 0
      %p267 = por %p265, %p266
      %p268 = scmp.ne.s32.totalorder %s256, %s257
      %p269 = scmp.eq.s32.totalorder %s80, 1
      %p270 = por %p268, %p269
      %p272 = scmp.ne.s32.totalorder %s257, %s271
      %p273 = scmp.eq.s32.totalorder %s80, 0
      %p274 = por %p272, %p273
      %s276 = sadd.s32 %s275, 1
      %p279 = scmp.eq.s32.totalorder %s74, 1
      %p280 = scmp.ne.s32.totalorder %s275, %s277
      %p281 = scmp.eq.s32.totalorder %s74, 0
      %p282 = por %p280, %p281
      %p283 = scmp.ne.s32.totalorder %s275, %s277
      %p284 = scmp.eq.s32.totalorder %s79, 1
      %p285 = por %p283, %p284
      %p286 = scmp.ne.s32.totalorder %s277, %s278
      %p287 = scmp.eq.s32.totalorder %s79, 0
      %p288 = por %p286, %p287
      %p289 = scmp.ne.s32.totalorder %s277, %s278
      %p290 = scmp.eq.s32.totalorder %s80, 1
      %p291 = por %p289, %p290
      %p293 = scmp.ne.s32.totalorder %s278, %s292
      %p294 = scmp.eq.s32.totalorder %s80, 0
      %p295 = por %p293, %p294
      %s297 = sadd.s32 %s296, 1
      %p300 = scmp.eq.s32.totalorder %s74, 1
      %p301 = scmp.ne.s32.totalorder %s296, %s298
      %p302 = scmp.eq.s32.totalorder %s74, 0
      %p303 = por %p301, %p302
      %p304 = scmp.ne.s32.totalorder %s296, %s298
      %p305 = scmp.eq.s32.totalorder %s79, 1
      %p306 = por %p304, %p305
      %p307 = scmp.ne.s32.totalorder %s298, %s299
      %p308 = scmp.eq.s32.totalorder %s79, 0
      %p309 = por %p307, %p308
      %p310 = scmp.ne.s32.totalorder %s298, %s299
      %p311 = scmp.eq.s32.totalorder %s80, 1
      %p312 = por %p310, %p311
      %p314 = scmp.ne.s32.totalorder %s299, %s313
      %p315 = scmp.eq.s32.totalorder %s80, 0
      %p316 = por %p314, %p315
      %s318 = sadd.s32 %s317, 1
      %p321 = scmp.eq.s32.totalorder %s74, 1
      %p322 = scmp.ne.s32.totalorder %s317, %s319
      %p323 = scmp.eq.s32.totalorder %s74, 0
      %p324 = por %p322, %p323
      %p325 = scmp.ne.s32.totalorder %s317, %s319
      %p326 = scmp.eq.s32.totalorder %s79, 1
      %p327 = por %p325, %p326
      %p328 = scmp.ne.s32.totalorder %s319, %s320
      %p329 = scmp.eq.s32.totalorder %s79, 0
      %p330 = por %p328, %p329
      %p331 = scmp.ne.s32.totalorder %s319, %s320
      %p332 = scmp.eq.s32.totalorder %s80, 1
      %p333 = por %p331, %p332
      %p335 = scmp.ne.s32.totalorder %s320, %s334
      %p336 = scmp.eq.s32.totalorder %s80, 0
      %p337 = por %p335, %p336
      %s339 = sadd.s32 %s338, 1
      %p342 = scmp.eq.s32.totalorder %s74, 1
      %p343 = scmp.ne.s32.totalorder %s338, %s340
      %p344 = scmp.eq.s32.totalorder %s74, 0
      %p345 = por %p343, %p344
      %p346 = scmp.ne.s32.totalorder %s338, %s340
      %p347 = scmp.eq.s32.totalorder %s79, 1
      %p348 = por %p346, %p347
      %p349 = scmp.ne.s32.totalorder %s340, %s341
      %p350 = scmp.eq.s32.totalorder %s79, 0
      %p351 = por %p349, %p350
      %p352 = scmp.ne.s32.totalorder %s340, %s341
      %p353 = scmp.eq.s32.totalorder %s80, 1
      %p354 = por %p352, %p353
      %p356 = scmp.ne.s32.totalorder %s341, %s355
      %p357 = scmp.eq.s32.totalorder %s80, 0
      %p358 = por %p356, %p357
      %s360 = sadd.s32 %s359, 1
      %p363 = scmp.eq.s32.totalorder %s74, 1
      %p364 = scmp.ne.s32.totalorder %s359, %s361
      %p365 = scmp.eq.s32.totalorder %s74, 0
      %p366 = por %p364, %p365
      %p367 = scmp.ne.s32.totalorder %s359, %s361
      %p368 = scmp.eq.s32.totalorder %s79, 1
      %p369 = por %p367, %p368
      %p370 = scmp.ne.s32.totalorder %s361, %s362
      %p371 = scmp.eq.s32.totalorder %s79, 0
      %p372 = por %p370, %p371
      %p373 = scmp.ne.s32.totalorder %s361, %s362
      %p374 = scmp.eq.s32.totalorder %s80, 1
      %p375 = por %p373, %p374
      %p377 = scmp.ne.s32.totalorder %s362, %s376
      %p378 = scmp.eq.s32.totalorder %s80, 0
      %p379 = por %p377, %p378
      %s381 = sadd.s32 %s380, 1
      %p384 = scmp.eq.s32.totalorder %s74, 1
      %p385 = scmp.ne.s32.totalorder %s380, %s382
      %p386 = scmp.eq.s32.totalorder %s74, 0
      %p387 = por %p385, %p386
      %p388 = scmp.ne.s32.totalorder %s380, %s382
      %p389 = scmp.eq.s32.totalorder %s79, 1
      %p390 = por %p388, %p389
      %p391 = scmp.ne.s32.totalorder %s382, %s383
      %p392 = scmp.eq.s32.totalorder %s79, 0
      %p393 = por %p391, %p392
      %p394 = scmp.ne.s32.totalorder %s382, %s383
      %p395 = scmp.eq.s32.totalorder %s80, 1
      %p396 = por %p394, %p395
      %p398 = scmp.ne.s32.totalorder %s383, %s397
      %p399 = scmp.eq.s32.totalorder %s80, 0
      %p400 = por %p398, %p399
      %s402 = sadd.s32 %s401, 1
      %p405 = scmp.eq.s32.totalorder %s74, 1
      %p406 = scmp.ne.s32.totalorder %s401, %s403
      %p407 = scmp.eq.s32.totalorder %s74, 0
      %p408 = por %p406, %p407
      %p409 = scmp.ne.s32.totalorder %s401, %s403
      %p410 = scmp.eq.s32.totalorder %s79, 1
      %p411 = por %p409, %p410
      %p412 = scmp.ne.s32.totalorder %s403, %s404
      %p413 = scmp.eq.s32.totalorder %s79, 0
      %p414 = por %p412, %p413
      %p415 = scmp.ne.s32.totalorder %s403, %s404
      %p416 = scmp.eq.s32.totalorder %s80, 1
      %p417 = por %p415, %p416
      %p419 = scmp.ne.s32.totalorder %s404, %s418
      %p420 = scmp.eq.s32.totalorder %s80, 0
      %p421 = por %p419, %p420
      %s423 = sadd.s32 %s422, 1
      %p426 = scmp.eq.s32.totalorder %s74, 1
      %p427 = scmp.ne.s32.totalorder %s422, %s424
      %p428 = scmp.eq.s32.totalorder %s74, 0
      %p429 = por %p427, %p428
      %p430 = scmp.ne.s32.totalorder %s422, %s424
      %p431 = scmp.eq.s32.totalorder %s79, 1
      %p432 = por %p430, %p431
      %p433 = scmp.ne.s32.totalorder %s424, %s425
      %p434 = scmp.eq.s32.totalorder %s79, 0
      %p435 = por %p433, %p434
      %p436 = scmp.ne.s32.totalorder %s424, %s425
      %p437 = scmp.eq.s32.totalorder %s80, 1
      %p438 = por %p436, %p437
      %p440 = scmp.ne.s32.totalorder %s425, %s439
      %p441 = scmp.eq.s32.totalorder %s80, 0
      %p442 = por %p440, %p441
      %s444 = sadd.s32 %s443, 1
      %p447 = scmp.eq.s32.totalorder %s74, 1
      %p448 = scmp.ne.s32.totalorder %s443, %s445
      %p449 = scmp.eq.s32.totalorder %s74, 0
      %p450 = por %p448, %p449
      %p451 = scmp.ne.s32.totalorder %s443, %s445
      %p452 = scmp.eq.s32.totalorder %s79, 1
      %p453 = por %p451, %p452
      %p454 = scmp.ne.s32.totalorder %s445, %s446
      %p455 = scmp.eq.s32.totalorder %s79, 0
      %p456 = por %p454, %p455
      %p457 = scmp.ne.s32.totalorder %s445, %s446
      %p458 = scmp.eq.s32.totalorder %s80, 1
      %p459 = por %p457, %p458
      %p461 = scmp.ne.s32.totalorder %s446, %s460
      %p462 = scmp.eq.s32.totalorder %s80, 0
      %p463 = por %p461, %p462
      %s465 = sadd.s32 %s464, 1
      %p468 = scmp.eq.s32.totalorder %s74, 1
      %p469 = scmp.ne.s32.totalorder %s464, %s466
      %p470 = scmp.eq.s32.totalorder %s74, 0
      %p471 = por %p469, %p470
      %p472 = scmp.ne.s32.totalorder %s464, %s466
      %p473 = scmp.eq.s32.totalorder %s79, 1
      %p474 = por %p472, %p473
      %p475 = scmp.ne.s32.totalorder %s466, %s467
      %p476 = scmp.eq.s32.totalorder %s79, 0
      %p477 = por %p475, %p476
      %p478 = scmp.ne.s32.totalorder %s466, %s467
      %p479 = scmp.eq.s32.totalorder %s80, 1
      %p480 = por %p478, %p479
      %p482 = scmp.ne.s32.totalorder %s467, %s481
      %p483 = scmp.eq.s32.totalorder %s80, 0
      %p484 = por %p482, %p483
      %s486 = sadd.s32 %s485, 1
      %p489 = scmp.eq.s32.totalorder %s74, 1
      %p490 = scmp.ne.s32.totalorder %s485, %s487
      %p491 = scmp.eq.s32.totalorder %s74, 0
      %p492 = por %p490, %p491
      %p493 = scmp.ne.s32.totalorder %s485, %s487
      %p494 = scmp.eq.s32.totalorder %s79, 1
      %p495 = por %p493, %p494
      %p496 = scmp.ne.s32.totalorder %s487, %s488
      %p497 = scmp.eq.s32.totalorder %s79, 0
      %p498 = por %p496, %p497
      %p499 = scmp.ne.s32.totalorder %s487, %s488
      %p500 = scmp.eq.s32.totalorder %s80, 1
      %p501 = por %p499, %p500
      %p503 = scmp.ne.s32.totalorder %s488, %s502
      %p504 = scmp.eq.s32.totalorder %s80, 0
      %p505 = por %p503, %p504
      %s507 = sadd.s32 %s506, 1
      %p510 = scmp.eq.s32.totalorder %s74, 1
      %p511 = scmp.ne.s32.totalorder %s506, %s508
      %p512 = scmp.eq.s32.totalorder %s74, 0
      %p513 = por %p511, %p512
      %p514 = scmp.ne.s32.totalorder %s506, %s508
      %p515 = scmp.eq.s32.totalorder %s79, 1
      %p516 = por %p514, %p515
      %p517 = scmp.ne.s32.totalorder %s508, %s509
      %p518 = scmp.eq.s32.totalorder %s79, 0
      %p519 = por %p517, %p518
      %p520 = scmp.ne.s32.totalorder %s508, %s509
      %p521 = scmp.eq.s32.totalorder %s80, 1
      %p522 = por %p520, %p521
      %p524 = scmp.ne.s32.totalorder %s509, %s523
      %p525 = scmp.eq.s32.totalorder %s80, 0
      %p526 = por %p524, %p525
      %s528 = sadd.s32 %s527, 1
      %p531 = scmp.eq.s32.totalorder %s74, 1
      %p532 = scmp.ne.s32.totalorder %s527, %s529
      %p533 = scmp.eq.s32.totalorder %s74, 0
      %p534 = por %p532, %p533
      %p535 = scmp.ne.s32.totalorder %s527, %s529
      %p536 = scmp.eq.s32.totalorder %s79, 1
      %p537 = por %p535, %p536
      %p538 = scmp.ne.s32.totalorder %s529, %s530
      %p539 = scmp.eq.s32.totalorder %s79, 0
      %p540 = por %p538, %p539
      %p541 = scmp.ne.s32.totalorder %s529, %s530
      %p542 = scmp.eq.s32.totalorder %s80, 1
      %p543 = por %p541, %p542
      %p545 = scmp.ne.s32.totalorder %s530, %s544
      %p546 = scmp.eq.s32.totalorder %s80, 0
      %p547 = por %p545, %p546
      %s549 = sadd.s32 %s548, 1
      %p552 = scmp.eq.s32.totalorder %s74, 1
      %p553 = scmp.ne.s32.totalorder %s548, %s550
      %p554 = scmp.eq.s32.totalorder %s74, 0
      %p555 = por %p553, %p554
      %p556 = scmp.ne.s32.totalorder %s548, %s550
      %p557 = scmp.eq.s32.totalorder %s79, 1
      %p558 = por %p556, %p557
      %p559 = scmp.ne.s32.totalorder %s550, %s551
      %p560 = scmp.eq.s32.totalorder %s79, 0
      %p561 = por %p559, %p560
      %p562 = scmp.ne.s32.totalorder %s550, %s551
      %p563 = scmp.eq.s32.totalorder %s80, 1
      %p564 = por %p562, %p563
      %p566 = scmp.ne.s32.totalorder %s551, %s565
      %p567 = scmp.eq.s32.totalorder %s80, 0
      %p568 = por %p566, %p567
      %s570 = sadd.s32 %s569, 1
      %p573 = scmp.eq.s32.totalorder %s74, 1
      %p574 = scmp.ne.s32.totalorder %s569, %s571
      %p575 = scmp.eq.s32.totalorder %s74, 0
      %p576 = por %p574, %p575
      %p577 = scmp.ne.s32.totalorder %s569, %s571
      %p578 = scmp.eq.s32.totalorder %s79, 1
      %p579 = por %p577, %p578
      %p580 = scmp.ne.s32.totalorder %s571, %s572
      %p581 = scmp.eq.s32.totalorder %s79, 0
      %p582 = por %p580, %p581
      %p583 = scmp.ne.s32.totalorder %s571, %s572
      %p584 = scmp.eq.s32.totalorder %s80, 1
      %p585 = por %p583, %p584
      %p587 = scmp.ne.s32.totalorder %s572, %s586
      %p588 = scmp.eq.s32.totalorder %s80, 0
      %p589 = por %p587, %p588
      %s591 = sadd.s32 %s590, 1
      %p594 = scmp.eq.s32.totalorder %s74, 1
      %p595 = scmp.ne.s32.totalorder %s590, %s592
      %p596 = scmp.eq.s32.totalorder %s74, 0
      %p597 = por %p595, %p596
      %p598 = scmp.ne.s32.totalorder %s590, %s592
      %p599 = scmp.eq.s32.totalorder %s79, 1
      %p600 = por %p598, %p599
      %p601 = scmp.ne.s32.totalorder %s592, %s593
      %p602 = scmp.eq.s32.totalorder %s79, 0
      %p603 = por %p601, %p602
      %p604 = scmp.ne.s32.totalorder %s592, %s593
      %p605 = scmp.eq.s32.totalorder %s80, 1
      %p606 = por %p604, %p605
      %p608 = scmp.ne.s32.totalorder %s593, %s607
      %p609 = scmp.eq.s32.totalorder %s80, 0
      %p610 = por %p608, %p609
      %s612 = sadd.s32 %s611, 1
      %p615 = scmp.eq.s32.totalorder %s74, 1
      %p616 = scmp.ne.s32.totalorder %s611, %s613
      %p617 = scmp.eq.s32.totalorder %s74, 0
      %p618 = por %p616, %p617
      %p619 = scmp.ne.s32.totalorder %s611, %s613
      %p620 = scmp.eq.s32.totalorder %s79, 1
      %p621 = por %p619, %p620
      %p622 = scmp.ne.s32.totalorder %s613, %s614
      %p623 = scmp.eq.s32.totalorder %s79, 0
      %p624 = por %p622, %p623
      %p625 = scmp.ne.s32.totalorder %s613, %s614
      %p626 = scmp.eq.s32.totalorder %s80, 1
      %p627 = por %p625, %p626
      %p629 = scmp.ne.s32.totalorder %s614, %s628
      %p630 = scmp.eq.s32.totalorder %s80, 0
      %p631 = por %p629, %p630
      %s633 = sadd.s32 %s632, 1
      %p636 = scmp.eq.s32.totalorder %s74, 1
      %p637 = scmp.ne.s32.totalorder %s632, %s634
      %p638 = scmp.eq.s32.totalorder %s74, 0
      %p639 = por %p637, %p638
      %p640 = scmp.ne.s32.totalorder %s632, %s634
      %p641 = scmp.eq.s32.totalorder %s79, 1
      %p642 = por %p640, %p641
      %p643 = scmp.ne.s32.totalorder %s634, %s635
      %p644 = scmp.eq.s32.totalorder %s79, 0
      %p645 = por %p643, %p644
      %p646 = scmp.ne.s32.totalorder %s634, %s635
      %p647 = scmp.eq.s32.totalorder %s80, 1
      %p648 = por %p646, %p647
      %p650 = scmp.ne.s32.totalorder %s635, %s649
      %p651 = scmp.eq.s32.totalorder %s80, 0
      %p652 = por %p650, %p651
      %s654 = sadd.s32 %s653, 1
      %p657 = scmp.eq.s32.totalorder %s74, 1
      %p658 = scmp.ne.s32.totalorder %s653, %s655
      %p659 = scmp.eq.s32.totalorder %s74, 0
      %p660 = por %p658, %p659
      %p661 = scmp.ne.s32.totalorder %s653, %s655
      %p662 = scmp.eq.s32.totalorder %s79, 1
      %p663 = por %p661, %p662
      %p664 = scmp.ne.s32.totalorder %s655, %s656
      %p665 = scmp.eq.s32.totalorder %s79, 0
      %p666 = por %p664, %p665
      %p667 = scmp.ne.s32.totalorder %s655, %s656
      %p668 = scmp.eq.s32.totalorder %s80, 1
      %p669 = por %p667, %p668
      %p671 = scmp.ne.s32.totalorder %s656, %s670
      %p672 = scmp.eq.s32.totalorder %s80, 0
      %p673 = por %p671, %p672
      %s675 = sadd.s32 %s674, 1
      %p678 = scmp.eq.s32.totalorder %s74, 1
      %p679 = scmp.ne.s32.totalorder %s674, %s676
      %p680 = scmp.eq.s32.totalorder %s74, 0
      %p681 = por %p679, %p680
      %p682 = scmp.ne.s32.totalorder %s674, %s676
      %p683 = scmp.eq.s32.totalorder %s79, 1
      %p684 = por %p682, %p683
      %p685 = scmp.ne.s32.totalorder %s676, %s677
      %p686 = scmp.eq.s32.totalorder %s79, 0
      %p687 = por %p685, %p686
      %p688 = scmp.ne.s32.totalorder %s676, %s677
      %p689 = scmp.eq.s32.totalorder %s80, 1
      %p690 = por %p688, %p689
      %p692 = scmp.ne.s32.totalorder %s677, %s691
      %p693 = scmp.eq.s32.totalorder %s80, 0
      %p694 = por %p692, %p693
      %s696 = sadd.s32 %s695, 1
      %p699 = scmp.eq.s32.totalorder %s74, 1
      %p700 = scmp.ne.s32.totalorder %s695, %s697
      %p701 = scmp.eq.s32.totalorder %s74, 0
      %p702 = por %p700, %p701
      %p703 = scmp.ne.s32.totalorder %s695, %s697
      %p704 = scmp.eq.s32.totalorder %s79, 1
      %p705 = por %p703, %p704
      %p706 = scmp.ne.s32.totalorder %s697, %s698
      %p707 = scmp.eq.s32.totalorder %s79, 0
      %p708 = por %p706, %p707
      %p709 = scmp.ne.s32.totalorder %s697, %s698
      %p710 = scmp.eq.s32.totalorder %s80, 1
      %p711 = por %p709, %p710
      %p713 = scmp.ne.s32.totalorder %s698, %s712
      %p714 = scmp.eq.s32.totalorder %s80, 0
      %p715 = por %p713, %p714
      %s716 = ssub.s32 %s74, %s81
      %p717 = scmp.eq.s32.totalorder %s716, 0
      %s719 = sadd.s32 %s718, 1
      %s720 = scalar_select %p717, %s718, %s719
      %p723 = pneg %p717
      %p724 = scmp.eq.s32.totalorder %s74, 1
      %p725 = por %p723, %p724
      %p726 = scmp.ne.s32.totalorder %s718, %s721
      %p727 = scmp.eq.s32.totalorder %s74, 0
      %p728 = por %p726, %p727
      %p729 = scmp.ne.s32.totalorder %s718, %s721
      %p730 = scmp.eq.s32.totalorder %s79, 1
      %p731 = por %p729, %p730
      %p732 = scmp.ne.s32.totalorder %s721, %s722
      %p733 = scmp.eq.s32.totalorder %s79, 0
      %p734 = por %p732, %p733
      %p735 = scmp.ne.s32.totalorder %s721, %s722
      %p736 = scmp.eq.s32.totalorder %s80, 1
      %p737 = por %p735, %p736
      %p739 = scmp.ne.s32.totalorder %s722, %s738
      %p740 = scmp.eq.s32.totalorder %s80, 0
      %p741 = por %p739, %p740
      %s742 = ssub.s32 %s74, %s81
      %p743 = scmp.eq.s32.totalorder %s742, 0
      %s745 = sadd.s32 %s744, 1
      %s746 = scalar_select %p743, %s744, %s745
      %p749 = pneg %p743
      %p750 = scmp.eq.s32.totalorder %s74, 1
      %p751 = por %p749, %p750
      %p752 = scmp.ne.s32.totalorder %s744, %s747
      %p753 = scmp.eq.s32.totalorder %s74, 0
      %p754 = por %p752, %p753
      %p755 = scmp.ne.s32.totalorder %s744, %s747
      %p756 = scmp.eq.s32.totalorder %s79, 1
      %p757 = por %p755, %p756
      %p758 = scmp.ne.s32.totalorder %s747, %s748
      %p759 = scmp.eq.s32.totalorder %s79, 0
      %p760 = por %p758, %p759
      %p761 = scmp.ne.s32.totalorder %s747, %s748
      %p762 = scmp.eq.s32.totalorder %s80, 1
      %p763 = por %p761, %p762
      %p765 = scmp.ne.s32.totalorder %s748, %s764
      %p766 = scmp.eq.s32.totalorder %s80, 0
      %p767 = por %p765, %p766
      %p768 = scmp.le.s32.totalorder 1, %s74
      %p769 = scmp.lt.s32.totalorder %s74, 3
      %p770 = pnand %p768, %p769
      %p771 = pneg %p770
      // Predicated region
      $region9: #{transformer_forward.1} parent=5 // pred_check
        _
      $region10: #{transformer_forward.1} parent=5 // pred_check_branch
        %773 = sbr.rel (%p770) target = $region12
      $region11: #{transformer_forward.1} parent=5 // pred_region
        %s774 = ssub.s32 %s74, 1
        // Predicated region
        $region13: #{transformer_forward.1} parent=11 // pred_check
          %p775 = pneg %p225
        $region14: #{transformer_forward.1} parent=11 // pred_check_branch
          %777 = sbr.rel (%p775) target = $region16
        $region15: #{transformer_forward.1} parent=11 // pred_region
          _
        $region16: #{transformer_forward.1} parent=11 // pred_fallthru
          _
        // Predicated region
        $region17: #{transformer_forward.1} parent=11 // pred_check
          %p778 = pneg %p246
        $region18: #{transformer_forward.1} parent=11 // pred_check_branch
          %780 = sbr.rel (%p778) target = $region20
        $region19: #{transformer_forward.1} parent=11 // pred_region
          _
        $region20: #{transformer_forward.1} parent=11 // pred_fallthru
          _
        // Predicated region
        $region21: #{transformer_forward.1} parent=11 // pred_check
          %p781 = pneg %p267
        $region22: #{transformer_forward.1} parent=11 // pred_check_branch
          %783 = sbr.rel (%p781) target = $region24
        $region23: #{transformer_forward.1} parent=11 // pred_region
          _
        $region24: #{transformer_forward.1} parent=11 // pred_fallthru
          _
        // Predicated region
        $region25: #{transformer_forward.1} parent=11 // pred_check
          %p784 = pneg %p288
        $region26: #{transformer_forward.1} parent=11 // pred_check_branch
          %786 = sbr.rel (%p784) target = $region28
        $region27: #{transformer_forward.1} parent=11 // pred_region
          _
        $region28: #{transformer_forward.1} parent=11 // pred_fallthru
          _
        // Predicated region
        $region29: #{transformer_forward.1} parent=11 // pred_check
          %p787 = pneg %p309
        $region30: #{transformer_forward.1} parent=11 // pred_check_branch
          %789 = sbr.rel (%p787) target = $region32
        $region31: #{transformer_forward.1} parent=11 // pred_region
          _
        $region32: #{transformer_forward.1} parent=11 // pred_fallthru
          _
        // Predicated region
        $region33: #{transformer_forward.1} parent=11 // pred_check
          %p790 = pneg %p330
        $region34: #{transformer_forward.1} parent=11 // pred_check_branch
          %792 = sbr.rel (%p790) target = $region36
        $region35: #{transformer_forward.1} parent=11 // pred_region
          _
        $region36: #{transformer_forward.1} parent=11 // pred_fallthru
          _
        // Predicated region
        $region37: #{transformer_forward.1} parent=11 // pred_check
          %p793 = pneg %p351
        $region38: #{transformer_forward.1} parent=11 // pred_check_branch
          %795 = sbr.rel (%p793) target = $region40
        $region39: #{transformer_forward.1} parent=11 // pred_region
          _
        $region40: #{transformer_forward.1} parent=11 // pred_fallthru
          _
        // Predicated region
        $region41: #{transformer_forward.1} parent=11 // pred_check
          %p796 = pneg %p372
        $region42: #{transformer_forward.1} parent=11 // pred_check_branch
          %798 = sbr.rel (%p796) target = $region44
        $region43: #{transformer_forward.1} parent=11 // pred_region
          _
        $region44: #{transformer_forward.1} parent=11 // pred_fallthru
          _
        // Predicated region
        $region45: #{transformer_forward.1} parent=11 // pred_check
          %p799 = pneg %p393
        $region46: #{transformer_forward.1} parent=11 // pred_check_branch
          %801 = sbr.rel (%p799) target = $region48
        $region47: #{transformer_forward.1} parent=11 // pred_region
          _
        $region48: #{transformer_forward.1} parent=11 // pred_fallthru
          _
        // Predicated region
        $region49: #{transformer_forward.1} parent=11 // pred_check
          %p802 = pneg %p414
        $region50: #{transformer_forward.1} parent=11 // pred_check_branch
          %804 = sbr.rel (%p802) target = $region52
        $region51: #{transformer_forward.1} parent=11 // pred_region
          _
        $region52: #{transformer_forward.1} parent=11 // pred_fallthru
          _
        // Predicated region
        $region53: #{transformer_forward.1} parent=11 // pred_check
          %p805 = pneg %p435
        $region54: #{transformer_forward.1} parent=11 // pred_check_branch
          %807 = sbr.rel (%p805) target = $region56
        $region55: #{transformer_forward.1} parent=11 // pred_region
          _
        $region56: #{transformer_forward.1} parent=11 // pred_fallthru
          _
        // Predicated region
        $region57: #{transformer_forward.1} parent=11 // pred_check
          %p808 = pneg %p456
        $region58: #{transformer_forward.1} parent=11 // pred_check_branch
          %810 = sbr.rel (%p808) target = $region60
        $region59: #{transformer_forward.1} parent=11 // pred_region
          _
        $region60: #{transformer_forward.1} parent=11 // pred_fallthru
          _
        // Predicated region
        $region61: #{transformer_forward.1} parent=11 // pred_check
          %p811 = pneg %p477
        $region62: #{transformer_forward.1} parent=11 // pred_check_branch
          %813 = sbr.rel (%p811) target = $region64
        $region63: #{transformer_forward.1} parent=11 // pred_region
          _
        $region64: #{transformer_forward.1} parent=11 // pred_fallthru
          _
        // Predicated region
        $region65: #{transformer_forward.1} parent=11 // pred_check
          %p814 = pneg %p498
        $region66: #{transformer_forward.1} parent=11 // pred_check_branch
          %816 = sbr.rel (%p814) target = $region68
        $region67: #{transformer_forward.1} parent=11 // pred_region
          _
        $region68: #{transformer_forward.1} parent=11 // pred_fallthru
          _
        // Predicated region
        $region69: #{transformer_forward.1} parent=11 // pred_check
          %p817 = pneg %p519
        $region70: #{transformer_forward.1} parent=11 // pred_check_branch
          %819 = sbr.rel (%p817) target = $region72
        $region71: #{transformer_forward.1} parent=11 // pred_region
          _
        $region72: #{transformer_forward.1} parent=11 // pred_fallthru
          _
        // Predicated region
        $region73: #{transformer_forward.1} parent=11 // pred_check
          %p820 = pneg %p540
        $region74: #{transformer_forward.1} parent=11 // pred_check_branch
          %822 = sbr.rel (%p820) target = $region76
        $region75: #{transformer_forward.1} parent=11 // pred_region
          _
        $region76: #{transformer_forward.1} parent=11 // pred_fallthru
          _
        // Predicated region
        $region77: #{transformer_forward.1} parent=11 // pred_check
          %p823 = pneg %p561
        $region78: #{transformer_forward.1} parent=11 // pred_check_branch
          %825 = sbr.rel (%p823) target = $region80
        $region79: #{transformer_forward.1} parent=11 // pred_region
          _
        $region80: #{transformer_forward.1} parent=11 // pred_fallthru
          _
        // Predicated region
        $region81: #{transformer_forward.1} parent=11 // pred_check
          %p826 = pneg %p582
        $region82: #{transformer_forward.1} parent=11 // pred_check_branch
          %828 = sbr.rel (%p826) target = $region84
        $region83: #{transformer_forward.1} parent=11 // pred_region
          _
        $region84: #{transformer_forward.1} parent=11 // pred_fallthru
          _
        // Predicated region
        $region85: #{transformer_forward.1} parent=11 // pred_check
          %p829 = pneg %p603
        $region86: #{transformer_forward.1} parent=11 // pred_check_branch
          %831 = sbr.rel (%p829) target = $region88
        $region87: #{transformer_forward.1} parent=11 // pred_region
          _
        $region88: #{transformer_forward.1} parent=11 // pred_fallthru
          _
        // Predicated region
        $region89: #{transformer_forward.1} parent=11 // pred_check
          %p832 = pneg %p624
        $region90: #{transformer_forward.1} parent=11 // pred_check_branch
          %834 = sbr.rel (%p832) target = $region92
        $region91: #{transformer_forward.1} parent=11 // pred_region
          _
        $region92: #{transformer_forward.1} parent=11 // pred_fallthru
          _
        // Predicated region
        $region93: #{transformer_forward.1} parent=11 // pred_check
          %p835 = pneg %p645
        $region94: #{transformer_forward.1} parent=11 // pred_check_branch
          %837 = sbr.rel (%p835) target = $region96
        $region95: #{transformer_forward.1} parent=11 // pred_region
          _
        $region96: #{transformer_forward.1} parent=11 // pred_fallthru
          _
        // Predicated region
        $region97: #{transformer_forward.1} parent=11 // pred_check
          %p838 = pneg %p666
        $region98: #{transformer_forward.1} parent=11 // pred_check_branch
          %840 = sbr.rel (%p838) target = $region100
        $region99: #{transformer_forward.1} parent=11 // pred_region
          _
        $region100: #{transformer_forward.1} parent=11 // pred_fallthru
          _
        // Predicated region
        $region101: #{transformer_forward.1} parent=11 // pred_check
          %p841 = pneg %p687
        $region102: #{transformer_forward.1} parent=11 // pred_check_branch
          %843 = sbr.rel (%p841) target = $region104
        $region103: #{transformer_forward.1} parent=11 // pred_region
          _
        $region104: #{transformer_forward.1} parent=11 // pred_fallthru
          _
        // Predicated region
        $region105: #{transformer_forward.1} parent=11 // pred_check
          %p844 = pneg %p708
        $region106: #{transformer_forward.1} parent=11 // pred_check_branch
          %846 = sbr.rel (%p844) target = $region108
        $region107: #{transformer_forward.1} parent=11 // pred_region
          _
        $region108: #{transformer_forward.1} parent=11 // pred_fallthru
          _
      $region12: #{transformer_forward.1} parent=5 // pred_fallthru
        _
      %p847 = scmp.lt.s32.totalorder %s74, 2
      // Predicated region
      $region109: #{transformer_forward.1} parent=5 // pred_check
        %p848 = pneg %p847
      $region110: #{transformer_forward.1} parent=5 // pred_check_branch
        %850 = sbr.rel (%p848) target = $region112
      $region111: #{transformer_forward.1} parent=5 // pred_region
        // Predicated region
        $region113: #{transformer_forward.1} parent=111 // pred_check
          %p851 = pneg %p94
        $region114: #{transformer_forward.1} parent=111 // pred_check_branch
          %853 = sbr.rel (%p851) target = $region116
        $region115: #{transformer_forward.1} parent=111 // pred_region
          %p854 = scmp.lt.s32.totalorder %s74, 1
          %s855 = scalar_select %p854, %s74, 1
          %s856 = smul.addr %s855, 8
          %s857 = scalar_lea.vmem %s1, %s856
        $region116: #{transformer_forward.1} parent=111 // pred_fallthru
          _
        // Predicated region
        $region117: #{transformer_forward.1} parent=111 // pred_check
          %p858 = pneg %p120
        $region118: #{transformer_forward.1} parent=111 // pred_check_branch
          %860 = sbr.rel (%p858) target = $region120
        $region119: #{transformer_forward.1} parent=111 // pred_region
          %p861 = scmp.lt.s32.totalorder %s74, 1
          %s862 = scalar_select %p861, %s74, 1
          %s863 = smul.addr %s862, 8
          %s864 = scalar_lea.vmem %s3, %s863
        $region120: #{transformer_forward.1} parent=111 // pred_fallthru
          _
        // Predicated region
        $region121: #{transformer_forward.1} parent=111 // pred_check
          %p865 = pneg %p146
        $region122: #{transformer_forward.1} parent=111 // pred_check_branch
          %867 = sbr.rel (%p865) target = $region124
        $region123: #{transformer_forward.1} parent=111 // pred_region
          %p868 = scmp.lt.s32.totalorder %s74, 1
          %s869 = scalar_select %p868, %s74, 1
          %s870 = smul.addr %s869, 8
          %s871 = scalar_lea.vmem %s5, %s870
        $region124: #{transformer_forward.1} parent=111 // pred_fallthru
          _
        // Predicated region
        $region125: #{transformer_forward.1} parent=111 // pred_check
          %p872 = pneg %p172
        $region126: #{transformer_forward.1} parent=111 // pred_check_branch
          %874 = sbr.rel (%p872) target = $region128
        $region127: #{transformer_forward.1} parent=111 // pred_region
          %p875 = scmp.lt.s32.totalorder %s74, 1
          %s876 = scalar_select %p875, %s74, 1
          %s877 = smul.addr %s876, 8
          %s878 = scalar_lea.vmem %s7, %s877
        $region128: #{transformer_forward.1} parent=111 // pred_fallthru
          _
        // Predicated region
        $region129: #{transformer_forward.1} parent=111 // pred_check
          %p879 = pneg %p198
        $region130: #{transformer_forward.1} parent=111 // pred_check_branch
          %881 = sbr.rel (%p879) target = $region132
        $region131: #{transformer_forward.1} parent=111 // pred_region
          %p882 = scmp.lt.s32.totalorder %s74, 1
          %s883 = scalar_select %p882, %s74, 1
          %s884 = smul.addr %s883, 8
          %s885 = scalar_lea.vmem %s9, %s884
        $region132: #{transformer_forward.1} parent=111 // pred_fallthru
          _
      $region112: #{transformer_forward.1} parent=5 // pred_fallthru
        _
      %p886 = scmp.le.s32.totalorder 1, %s74
      %p887 = scmp.lt.s32.totalorder %s74, 3
      %p888 = pnand %p886, %p887
      %p889 = pneg %p888
      // Predicated region
      $region133: #{transformer_forward.1} parent=5 // pred_check
        _
      $region134: #{transformer_forward.1} parent=5 // pred_check_branch
        %891 = sbr.rel (%p888) target = $region136
      $region135: #{transformer_forward.1} parent=5 // pred_region
        %s892 = ssub.s32 %s74, 1
        %p893 = scmp.lt.s32.totalorder %s79, 1
        %s894 = scalar_select %p893, %s79, 1
        %s895 = smul.addr %s894, 8
        %s896 = scalar_lea.vmem %s1, %s895
        %p897 = pneg %p100
        %p898 = pneg %p97
        %p899 = scmp.lt.s32.totalorder %s79, 1
        %s900 = scalar_select %p899, %s79, 1
        %s901 = smul.addr %s900, 8
        %s902 = scalar_lea.vmem %s3, %s901
        %p903 = pneg %p126
        %p904 = pneg %p123
        %p905 = scmp.lt.s32.totalorder %s79, 1
        %s906 = scalar_select %p905, %s79, 1
        %s907 = smul.addr %s906, 8
        %s908 = scalar_lea.vmem %s5, %s907
        %p909 = pneg %p152
        %p910 = pneg %p149
        %p911 = scmp.lt.s32.totalorder %s79, 1
        %s912 = scalar_select %p911, %s79, 1
        %s913 = smul.addr %s912, 8
        %s914 = scalar_lea.vmem %s7, %s913
        %p915 = pneg %p178
        %p916 = pneg %p175
        %p917 = scmp.lt.s32.totalorder %s79, 1
        %s918 = scalar_select %p917, %s79, 1
        %s919 = smul.addr %s918, 8
        %s920 = scalar_lea.vmem %s9, %s919
        %p921 = pneg %p204
        %p922 = pneg %p201
        %p923 = pneg %p225
        %p924 = pneg %p222
        %p925 = pneg %p246
        %p926 = pneg %p243
        %p927 = pneg %p267
        %p928 = pneg %p264
        %p929 = pneg %p288
        %p930 = pneg %p285
        %p931 = pneg %p309
        %p932 = pneg %p306
        %p933 = pneg %p330
        %p934 = pneg %p327
        %p935 = pneg %p351
        %p936 = pneg %p348
        %p937 = pneg %p372
        %p938 = pneg %p369
        %p939 = pneg %p393
        %p940 = pneg %p390
        %p941 = pneg %p414
        %p942 = pneg %p411
        %p943 = pneg %p435
        %p944 = pneg %p432
        %p945 = pneg %p456
        %p946 = pneg %p453
        %p947 = pneg %p477
        %p948 = pneg %p474
        %p949 = pneg %p498
        %p950 = pneg %p495
        %p951 = pneg %p519
        %p952 = pneg %p516
        %p953 = pneg %p540
        %p954 = pneg %p537
        %p955 = pneg %p561
        %p956 = pneg %p558
        %p957 = pneg %p582
        %p958 = pneg %p579
        %p959 = pneg %p603
        %p960 = pneg %p600
        %p961 = pneg %p624
        %p962 = pneg %p621
        %p963 = pneg %p645
        %p964 = pneg %p642
        %p965 = pneg %p666
        %p966 = pneg %p663
        %p967 = pneg %p687
        %p968 = pneg %p684
        %p969 = pneg %p708
        %p970 = pneg %p705
        %p971 = pneg %p734
        %p972 = pneg %p731
        %s973 = sand.u32 %s721, 1
        %s974 = scalar_lea.sflag [#allocation3], %s973
        %s975 = sand.u32 %s721, 1
        %s976 = smul.addr %s975, 8
        %s977 = scalar_lea.vmem [#allocation2], %s976
        %p978 = pneg %p760
        %p979 = pneg %p757
        %s980 = sand.u32 %s747, 1
        %s981 = scalar_lea.sflag [#allocation5], %s980
        %s982 = sand.u32 %s747, 1
        %s983 = smul.addr %s982, 8
        %s984 = scalar_lea.vmem [#allocation4], %s983
        %p985 = scmp.lt.s32.totalorder %s79, 1
        %s986 = scalar_select %p985, %s79, 1
        %s987 = smul.addr %s986, 8
        %s988 = scalar_lea.vmem %s1, %s987
        %p989 = scmp.lt.s32.totalorder %s79, 1
        %s990 = scalar_select %p989, %s79, 1
        %s991 = smul.addr %s990, 8
        %s992 = scalar_lea.vmem %s3, %s991
        %p993 = scmp.lt.s32.totalorder %s79, 1
        %s994 = scalar_select %p993, %s79, 1
        %s995 = smul.addr %s994, 8
        %s996 = scalar_lea.vmem %s5, %s995
        %p997 = scmp.lt.s32.totalorder %s79, 1
        %s998 = scalar_select %p997, %s79, 1
        %s999 = smul.addr %s998, 8
        %s1000 = scalar_lea.vmem %s7, %s999
        %p1001 = scmp.lt.s32.totalorder %s79, 1
        %s1002 = scalar_select %p1001, %s79, 1
        %s1003 = smul.addr %s1002, 8
        %s1004 = scalar_lea.vmem %s9, %s1003
        %v1006 = vlaneseq
        %v1007 = vand.u32 %v1006, 127
        %vm1008 = vcmp.ge.s32.totalorder %v1007, 0
        %vm1009 = vcmp.lt.s32.totalorder %v1007, 8
        %vm1010 = vmand %vm1008, %vm1009
        %v1011 = vsel %vm1010, 1, 0
        %v1012 = vcvt.s32.f32 %v1011
        %vm1013 = vcmp.ge.s32.totalorder %v1007, 8
        %vm1014 = vcmp.lt.s32.totalorder %v1007, 16
        %vm1015 = vmand %vm1013, %vm1014
        %v1016 = vsel %vm1015, 1, 0
        %v1017 = vcvt.s32.f32 %v1016
        %vm1018 = vcmp.ge.s32.totalorder %v1007, 16
        %vm1019 = vcmp.lt.s32.totalorder %v1007, 24
        %vm1020 = vmand %vm1018, %vm1019
        %v1021 = vsel %vm1020, 1, 0
        %v1022 = vcvt.s32.f32 %v1021
        %vm1023 = vcmp.ge.s32.totalorder %v1007, 24
        %vm1024 = vcmp.lt.s32.totalorder %v1007, 32
        %vm1025 = vmand %vm1023, %vm1024
        %v1026 = vsel %vm1025, 1, 0
        %v1027 = vcvt.s32.f32 %v1026
        %v1028 = vld [vmem:[%s996] sm:$0xff]
        %v1029 = vld [vmem:[%s1000] sm:$0xff]
        %v1030 = vld [vmem:[%s1004] sm:$0xff]
        %v1031 = vld [vmem:[%s988] sm:$0xff]
        %v1032 = vld [vmem:[%s11] sm:$0xf]
        %v1033 = vld [vmem:[%s11 + $0x4] sm:$0xf]
        %v1034 = vld [vmem:[%s11 + $0x8] sm:$0xf]
        %v1035 = vld [vmem:[%s11 + $0xc] sm:$0xf]
        %v1036 = vpack.c.bf16 %v1031, %v1031
        %v1037 = vld [vmem:[%s13] sm:$0x1]
        %v1039 = vlaneseq
        %v1040 = vshrl.u32 %v1039, 7
        %v1041 = vsub.s32 0, %v1040
        %v1042 = vrot.slane %v1037, %v1041
        %v1048 = vunpack.c.l.b16 %v1032
        %v1049 = vunpack.c.l.b16 %v1033
        %v1050 = vunpack.c.l.b16 %v1034
        %v1051 = vunpack.c.l.b16 %v1035
        %v1052 = vpack.c.b16 %v1049, %v1048
        %v1053 = vpack.c.b16 %v1051, %v1050
        %vm1056 = vcmask 261120
        %v1058 = vsel %vm1056, %v1036, 0
        %1060 = vmatprep.subr.bf16.mxu0 0
        %1061 = vmatpush1.bf16.msra.mxu0 0
        %1062 = vmatprep.subr.bf16.mxu0 0
        %1063 = vmatpush1.bf16.msra.mxu0 0
        %1064 = vmatprep.subr.bf16.mxu0 0
        %1065 = vmatpush1.bf16.msra.mxu0 0
        %1066 = vmatprep.subr.bf16.mxu0 0
        %1067 = vmatpush1.bf16.msra.mxu0 0
        %1068 = vmatprep.subr.bf16.mxu0 0
        %1069 = vmatpush1.bf16.msra.mxu0 0
        %1070 = vmatprep.subr.bf16.mxu0 0
        %1071 = vmatpush1.bf16.msra.mxu0 0
        %1072 = vmatprep.subr.bf16.mxu0 0
        %1073 = vmatpush1.bf16.msra.mxu0 %v1053
        %1074 = vmatprep.subr.bf16.mxu0 0
        %1075 = vmatpush1.bf16.msra.mxu0 %v1052
        %1076 = vmatprep.subr.bf16.mxu0 0
        %1077 = vmatpush2.bf16.msra.mxu0 0
        %1078 = vmatprep.subr.bf16.mxu0 0
        %1079 = vmatpush2.bf16.msra.mxu0 0
        %1080 = vmatprep.subr.bf16.mxu0 0
        %1081 = vmatpush2.bf16.msra.mxu0 0
        %1082 = vmatprep.subr.bf16.mxu0 0
        %1083 = vmatpush2.bf16.msra.mxu0 0
        %1084 = vmatprep.subr.bf16.mxu0 0
        %1085 = vmatpush2.bf16.msra.mxu0 0
        %1086 = vmatprep.subr.bf16.mxu0 0
        %1087 = vmatpush2.bf16.msra.mxu0 0
        %1088 = vmatprep.subr.bf16.mxu0 0
        %1089 = vmatpush2.bf16.msra.mxu0 0
        %1090 = vmatprep.subr.bf16.mxu0 0
        %1091 = vmatpush2.bf16.msra.mxu0 0
        %1092 = vmatprep.mubr.bf16.mxu0 0
        %1093 = vmatmul.mubr.bf16.gmra.mxu0 %v1058
        %v1094 = vpop.f32.mrf.mxu0
        %v1095 = vadd.f32 %v1042, %v1094
        %v1096 = vpop.f32.mrf.mxu0
        %v1097 = vpop.f32.mrf.mxu0
        %v1098 = vpop.f32.mrf.mxu0
        %1099 = vdwg.mxu0
        %v1100 = vpack.c.bf16 %v1095, %v1095
        %v1101 = vmul.f32 %v1095, %v1012
        %v1102 = vpack.c.bf16 %v1101, %v1101
        %1104 = vrot.lane.b32.xlu0 %v1100, 96
        %v1105 = vpop.permute.xlu0 %1104
        %v1107 = vsel %vm1056, %v1102, 0
        %v1110 = vsel %vm1056, %v1105, 0
        %1112 = vmatprep.subr.bf16.mxu0 0
        %1113 = vmatpush1.bf16.xpose.msra.mxu0 0
        %1114 = vmatprep.subr.bf16.mxu0 0
        %1115 = vmatpush1.bf16.xpose.msra.mxu0 0
        %1116 = vmatprep.subr.bf16.mxu0 0
        %1117 = vmatpush1.bf16.xpose.msra.mxu0 0
        %1118 = vmatprep.subr.bf16.mxu0 0
        %1119 = vmatpush1.bf16.xpose.msra.mxu0 0
        %1120 = vmatprep.subr.bf16.mxu0 0
        %1121 = vmatpush1.bf16.xpose.msra.mxu0 0
        %1122 = vmatprep.subr.bf16.mxu0 0
        %1123 = vmatpush1.bf16.xpose.msra.mxu0 0
        %1124 = vmatprep.subr.bf16.mxu0 0
        %1125 = vmatpush1.bf16.xpose.msra.mxu0 0
        %1126 = vmatprep.subr.bf16.mxu0 0
        %1127 = vmatpush1.bf16.xpose.msra.mxu0 %v1110
        %1128 = vmatprep.subr.bf16.mxu0 0
        %1129 = vmatpush2.bf16.xpose.msra.mxu0 0
        %1130 = vmatprep.subr.bf16.mxu0 0
        %1131 = vmatpush2.bf16.xpose.msra.mxu0 0
        %1132 = vmatprep.subr.bf16.mxu0 0
        %1133 = vmatpush2.bf16.xpose.msra.mxu0 0
        %1134 = vmatprep.subr.bf16.mxu0 0
        %1135 = vmatpush2.bf16.xpose.msra.mxu0 0
        %1136 = vmatprep.subr.bf16.mxu0 0
        %1137 = vmatpush2.bf16.xpose.msra.mxu0 0
        %1138 = vmatprep.subr.bf16.mxu0 0
        %1139 = vmatpush2.bf16.xpose.msra.mxu0 0
        %1140 = vmatprep.subr.bf16.mxu0 0
        %1141 = vmatpush2.bf16.xpose.msra.mxu0 0
        %1142 = vmatprep.subr.bf16.mxu0 0
        %1143 = vmatpush2.bf16.xpose.msra.mxu0 0
        %1144 = vmatprep.mubr.bf16.mxu0 0
        %1145 = vmatmul.mubr.bf16.gmra.mxu0 %v1107
        %v1146 = vpop.f32.mrf.mxu0
        %v1147 = vadd.f32 0.0, %v1146
        %v1148 = vpop.f32.mrf.mxu0
        %v1149 = vpop.f32.mrf.mxu0
        %v1150 = vpop.f32.mrf.mxu0
        %1151 = vdwg.mxu0
        %v1152 = vmul.f32 %v1147, 0.35355338
        %v1153 = vadd.f32 %v1152, %v1028
        %vm1154 = vcmask 64512
        %v1155 = vsel %vm1154, %v1153, -inf
        %1156 = vmax.xlane.f32.xlu0 %v1155
        %v1157 = vpop.xlane.xlu0 %1156
        %v1158 = vsub.f32 %v1153, %v1157
        %v1159 = vmul.f32 %v1158, 1.442695
        %v1160 = vpow.pop %v1159
        %v1161 = vsel %vm1154, %v1160, 0.0
        %1162 = vadd.xlane.f32.xlu0 %v1161
        %v1163 = vpop.xlane.xlu0 %1162
        %v1164 = vrcp.pop %v1163
        %v1165 = vmul.f32 %v1160, %v1164
        %v1166 = vpack.c.bf16 %v1165, %v1165
        %1168 = vrot.lane.b32.xlu0 %v1012, 64
        %v1169 = vpop.permute.xlu0 %1168
        %v1171 = vmul.f32 %v1095, %v1169
        %v1172 = vpack.c.bf16 %v1171, %v1171
        %v1173 = vmul.f32 %v1095, %v1017
        %v1174 = vpack.c.bf16 %v1173, %v1173
        %v1176 = vsel %vm1056, %v1174, 0
        %1178 = vmatprep.subr.bf16.mxu0 0
        %1179 = vmatpush1.bf16.xpose.msra.mxu0 0
        %1180 = vmatprep.subr.bf16.mxu0 0
        %1181 = vmatpush1.bf16.xpose.msra.mxu0 0
        %1182 = vmatprep.subr.bf16.mxu0 0
        %1183 = vmatpush1.bf16.xpose.msra.mxu0 0
        %1184 = vmatprep.subr.bf16.mxu0 0
        %1185 = vmatpush1.bf16.xpose.msra.mxu0 0
        %1186 = vmatprep.subr.bf16.mxu0 0
        %1187 = vmatpush1.bf16.xpose.msra.mxu0 0
        %1188 = vmatprep.subr.bf16.mxu0 0
        %1189 = vmatpush1.bf16.xpose.msra.mxu0 0
        %1190 = vmatprep.subr.bf16.mxu0 0
        %1191 = vmatpush1.bf16.xpose.msra.mxu0 0
        %1192 = vmatprep.subr.bf16.mxu0 0
        %1193 = vmatpush1.bf16.xpose.msra.mxu0 %v1110
        %1194 = vmatprep.subr.bf16.mxu0 0
        %1195 = vmatpush2.bf16.xpose.msra.mxu0 0
        %1196 = vmatprep.subr.bf16.mxu0 0
        %1197 = vmatpush2.bf16.xpose.msra.mxu0 0
        %1198 = vmatprep.subr.bf16.mxu0 0
        %1199 = vmatpush2.bf16.xpose.msra.mxu0 0
        %1200 = vmatprep.subr.bf16.mxu0 0
        %1201 = vmatpush2.bf16.xpose.msra.mxu0 0
        %1202 = vmatprep.subr.bf16.mxu0 0
        %1203 = vmatpush2.bf16.xpose.msra.mxu0 0
        %1204 = vmatprep.subr.bf16.mxu0 0
        %1205 = vmatpush2.bf16.xpose.msra.mxu0 0
        %1206 = vmatprep.subr.bf16.mxu0 0
        %1207 = vmatpush2.bf16.xpose.msra.mxu0 0
        %1208 = vmatprep.subr.bf16.mxu0 0
        %1209 = vmatpush2.bf16.xpose.msra.mxu0 0
        %1210 = vmatprep.mubr.bf16.mxu0 0
        %1211 = vmatmul.mubr.bf16.gmra.mxu0 %v1176
        %v1212 = vpop.f32.mrf.mxu0
        %v1213 = vadd.f32 0.0, %v1212
        %v1214 = vpop.f32.mrf.mxu0
        %v1215 = vpop.f32.mrf.mxu0
        %v1216 = vpop.f32.mrf.mxu0
        %1217 = vdwg.mxu0
        %v1218 = vmul.f32 %v1213, 0.35355338
        %v1219 = vadd.f32 %v1218, %v1028
        %v1220 = vsel %vm1154, %v1219, -inf
        %1221 = vmax.xlane.f32.xlu0 %v1220
        %v1222 = vpop.xlane.xlu0 %1221
        %v1223 = vsub.f32 %v1219, %v1222
        %v1224 = vmul.f32 %v1223, 1.442695
        %v1225 = vpow.pop %v1224
        %v1226 = vsel %vm1154, %v1225, 0.0
        %1227 = vadd.xlane.f32.xlu0 %v1226
        %v1228 = vpop.xlane.xlu0 %1227
        %v1229 = vrcp.pop %v1228
        %v1230 = vmul.f32 %v1225, %v1229
        %v1231 = vpack.c.bf16 %v1230, %v1230
        %1233 = vrot.lane.b32.xlu0 %v1017, 64
        %v1234 = vpop.permute.xlu0 %1233
        %v1236 = vmul.f32 %v1095, %v1234
        %v1237 = vpack.c.bf16 %v1236, %v1236
        %1239 = vrot.lane.b32.xlu0 %v1237, 64
        %v1240 = vpop.permute.xlu0 %1239
        %v1242 = vsel %vm1154, %v1231, 0
        %vm1244 = vcmask 1043456
        %v1246 = vsel %vm1244, %v1240, 0
        %1248 = vmatprep.subr.bf16.mxu0 0
        %1249 = vmatpush1.bf16.msra.mxu0 0
        %1250 = vmatprep.subr.bf16.mxu0 0
        %1251 = vmatpush1.bf16.msra.mxu0 0
        %1252 = vmatprep.subr.bf16.mxu0 0
        %1253 = vmatpush1.bf16.msra.mxu0 0
        %1254 = vmatprep.subr.bf16.mxu0 0
        %1255 = vmatpush1.bf16.msra.mxu0 0
        %1256 = vmatprep.subr.bf16.mxu0 0
        %1257 = vmatpush1.bf16.msra.mxu0 0
        %1258 = vmatprep.subr.bf16.mxu0 0
        %1259 = vmatpush1.bf16.msra.mxu0 0
        %1260 = vmatprep.subr.bf16.mxu0 0
        %1261 = vmatpush1.bf16.msra.mxu0 0
        %1262 = vmatprep.subr.bf16.mxu0 0
        %1263 = vmatpush1.bf16.msra.mxu0 %v1246
        %1264 = vmatprep.subr.bf16.mxu0 0
        %1265 = vmatpush2.bf16.msra.mxu0 0
        %1266 = vmatprep.subr.bf16.mxu0 0
        %1267 = vmatpush2.bf16.msra.mxu0 0
        %1268 = vmatprep.subr.bf16.mxu0 0
        %1269 = vmatpush2.bf16.msra.mxu0 0
        %1270 = vmatprep.subr.bf16.mxu0 0
        %1271 = vmatpush2.bf16.msra.mxu0 0
        %1272 = vmatprep.subr.bf16.mxu0 0
        %1273 = vmatpush2.bf16.msra.mxu0 0
        %1274 = vmatprep.subr.bf16.mxu0 0
        %1275 = vmatpush2.bf16.msra.mxu0 0
        %1276 = vmatprep.subr.bf16.mxu0 0
        %1277 = vmatpush2.bf16.msra.mxu0 0
        %1278 = vmatprep.subr.bf16.mxu0 0
        %1279 = vmatpush2.bf16.msra.mxu0 0
        %1280 = vmatprep.mubr.bf16.mxu0 0
        %1281 = vmatmul.mubr.bf16.gmra.mxu0 %v1242
        %v1282 = vpop.f32.mrf.mxu0
        %v1283 = vadd.f32 0.0, %v1282
        %v1284 = vpop.f32.mrf.mxu0
        %v1285 = vpop.f32.mrf.mxu0
        %v1286 = vpop.f32.mrf.mxu0
        %1287 = vdwg.mxu0
        %1289 = vrot.lane.b32.xlu0 %v1172, 64
        %v1290 = vpop.permute.xlu0 %1289
        %v1292 = vsel %vm1154, %v1166, 0
        %v1295 = vsel %vm1244, %v1290, 0
        %1297 = vmatprep.subr.bf16.mxu0 0
        %1298 = vmatpush1.bf16.msra.mxu0 0
        %1299 = vmatprep.subr.bf16.mxu0 0
        %1300 = vmatpush1.bf16.msra.mxu0 0
        %1301 = vmatprep.subr.bf16.mxu0 0
        %1302 = vmatpush1.bf16.msra.mxu0 0
        %1303 = vmatprep.subr.bf16.mxu0 0
        %1304 = vmatpush1.bf16.msra.mxu0 0
        %1305 = vmatprep.subr.bf16.mxu0 0
        %1306 = vmatpush1.bf16.msra.mxu0 0
        %1307 = vmatprep.subr.bf16.mxu0 0
        %1308 = vmatpush1.bf16.msra.mxu0 0
        %1309 = vmatprep.subr.bf16.mxu0 0
        %1310 = vmatpush1.bf16.msra.mxu0 0
        %1311 = vmatprep.subr.bf16.mxu0 0
        %1312 = vmatpush1.bf16.msra.mxu0 %v1295
        %1313 = vmatprep.subr.bf16.mxu0 0
        %1314 = vmatpush2.bf16.msra.mxu0 0
        %1315 = vmatprep.subr.bf16.mxu0 0
        %1316 = vmatpush2.bf16.msra.mxu0 0
        %1317 = vmatprep.subr.bf16.mxu0 0
        %1318 = vmatpush2.bf16.msra.mxu0 0
        %1319 = vmatprep.subr.bf16.mxu0 0
        %1320 = vmatpush2.bf16.msra.mxu0 0
        %1321 = vmatprep.subr.bf16.mxu0 0
        %1322 = vmatpush2.bf16.msra.mxu0 0
        %1323 = vmatprep.subr.bf16.mxu0 0
        %1324 = vmatpush2.bf16.msra.mxu0 0
        %1325 = vmatprep.subr.bf16.mxu0 0
        %1326 = vmatpush2.bf16.msra.mxu0 0
        %1327 = vmatprep.subr.bf16.mxu0 0
        %1328 = vmatpush2.bf16.msra.mxu0 0
        %1329 = vmatprep.mubr.bf16.mxu0 0
        %1330 = vmatmul.mubr.bf16.gmra.mxu0 %v1292
        %v1331 = vpop.f32.mrf.mxu0
        %v1332 = vadd.f32 %v1283, %v1331
        %v1333 = vpop.f32.mrf.mxu0
        %v1334 = vpop.f32.mrf.mxu0
        %v1335 = vpop.f32.mrf.mxu0
        %1336 = vdwg.mxu0
        %v1337 = vmul.f32 %v1095, %v1022
        %v1338 = vpack.c.bf16 %v1337, %v1337
        %v1340 = vsel %vm1056, %v1338, 0
        %1342 = vmatprep.subr.bf16.mxu0 0
        %1343 = vmatpush1.bf16.xpose.msra.mxu0 0
        %1344 = vmatprep.subr.bf16.mxu0 0
        %1345 = vmatpush1.bf16.xpose.msra.mxu0 0
        %1346 = vmatprep.subr.bf16.mxu0 0
        %1347 = vmatpush1.bf16.xpose.msra.mxu0 0
        %1348 = vmatprep.subr.bf16.mxu0 0
        %1349 = vmatpush1.bf16.xpose.msra.mxu0 0
        %1350 = vmatprep.subr.bf16.mxu0 0
        %1351 = vmatpush1.bf16.xpose.msra.mxu0 0
        %1352 = vmatprep.subr.bf16.mxu0 0
        %1353 = vmatpush1.bf16.xpose.msra.mxu0 0
        %1354 = vmatprep.subr.bf16.mxu0 0
        %1355 = vmatpush1.bf16.xpose.msra.mxu0 0
        %1356 = vmatprep.subr.bf16.mxu0 0
        %1357 = vmatpush1.bf16.xpose.msra.mxu0 %v1110
        %1358 = vmatprep.subr.bf16.mxu0 0
        %1359 = vmatpush2.bf16.xpose.msra.mxu0 0
        %1360 = vmatprep.subr.bf16.mxu0 0
        %1361 = vmatpush2.bf16.xpose.msra.mxu0 0
        %1362 = vmatprep.subr.bf16.mxu0 0
        %1363 = vmatpush2.bf16.xpose.msra.mxu0 0
        %1364 = vmatprep.subr.bf16.mxu0 0
        %1365 = vmatpush2.bf16.xpose.msra.mxu0 0
        %1366 = vmatprep.subr.bf16.mxu0 0
        %1367 = vmatpush2.bf16.xpose.msra.mxu0 0
        %1368 = vmatprep.subr.bf16.mxu0 0
        %1369 = vmatpush2.bf16.xpose.msra.mxu0 0
        %1370 = vmatprep.subr.bf16.mxu0 0
        %1371 = vmatpush2.bf16.xpose.msra.mxu0 0
        %1372 = vmatprep.subr.bf16.mxu0 0
        %1373 = vmatpush2.bf16.xpose.msra.mxu0 0
        %1374 = vmatprep.mubr.bf16.mxu0 0
        %1375 = vmatmul.mubr.bf16.gmra.mxu0 %v1340
        %v1376 = vpop.f32.mrf.mxu0
        %v1377 = vadd.f32 0.0, %v1376
        %v1378 = vpop.f32.mrf.mxu0
        %v1379 = vpop.f32.mrf.mxu0
        %v1380 = vpop.f32.mrf.mxu0
        %1381 = vdwg.mxu0
        %v1382 = vmul.f32 %v1377, 0.35355338
        %v1383 = vadd.f32 %v1382, %v1028
        %v1384 = vsel %vm1154, %v1383, -inf
        %1385 = vmax.xlane.f32.xlu0 %v1384
        %v1386 = vpop.xlane.xlu0 %1385
        %v1387 = vsub.f32 %v1383, %v1386
        %v1388 = vmul.f32 %v1387, 1.442695
        %v1389 = vpow.pop %v1388
        %v1390 = vsel %vm1154, %v1389, 0.0
        %1391 = vadd.xlane.f32.xlu0 %v1390
        %v1392 = vpop.xlane.xlu0 %1391
        %v1393 = vrcp.pop %v1392
        %v1394 = vmul.f32 %v1389, %v1393
        %v1395 = vpack.c.bf16 %v1394, %v1394
        %1397 = vrot.lane.b32.xlu0 %v1022, 64
        %v1398 = vpop.permute.xlu0 %1397
        %v1400 = vmul.f32 %v1095, %v1398
        %v1401 = vpack.c.bf16 %v1400, %v1400
        %1403 = vrot.lane.b32.xlu0 %v1401, 64
        %v1404 = vpop.permute.xlu0 %1403
        %v1406 = vsel %vm1154, %v1395, 0
        %v1409 = vsel %vm1244, %v1404, 0
        %1411 = vmatprep.subr.bf16.mxu0 0
        %1412 = vmatpush1.bf16.msra.mxu0 0
        %1413 = vmatprep.subr.bf16.mxu0 0
        %1414 = vmatpush1.bf16.msra.mxu0 0
        %1415 = vmatprep.subr.bf16.mxu0 0
        %1416 = vmatpush1.bf16.msra.mxu0 0
        %1417 = vmatprep.subr.bf16.mxu0 0
        %1418 = vmatpush1.bf16.msra.mxu0 0
        %1419 = vmatprep.subr.bf16.mxu0 0
        %1420 = vmatpush1.bf16.msra.mxu0 0
        %1421 = vmatprep.subr.bf16.mxu0 0
        %1422 = vmatpush1.bf16.msra.mxu0 0
        %1423 = vmatprep.subr.bf16.mxu0 0
        %1424 = vmatpush1.bf16.msra.mxu0 0
        %1425 = vmatprep.subr.bf16.mxu0 0
        %1426 = vmatpush1.bf16.msra.mxu0 %v1409
        %1427 = vmatprep.subr.bf16.mxu0 0
        %1428 = vmatpush2.bf16.msra.mxu0 0
        %1429 = vmatprep.subr.bf16.mxu0 0
        %1430 = vmatpush2.bf16.msra.mxu0 0
        %1431 = vmatprep.subr.bf16.mxu0 0
        %1432 = vmatpush2.bf16.msra.mxu0 0
        %1433 = vmatprep.subr.bf16.mxu0 0
        %1434 = vmatpush2.bf16.msra.mxu0 0
        %1435 = vmatprep.subr.bf16.mxu0 0
        %1436 = vmatpush2.bf16.msra.mxu0 0
        %1437 = vmatprep.subr.bf16.mxu0 0
        %1438 = vmatpush2.bf16.msra.mxu0 0
        %1439 = vmatprep.subr.bf16.mxu0 0
        %1440 = vmatpush2.bf16.msra.mxu0 0
        %1441 = vmatprep.subr.bf16.mxu0 0
        %1442 = vmatpush2.bf16.msra.mxu0 0
        %1443 = vmatprep.mubr.bf16.mxu0 0
        %1444 = vmatmul.mubr.bf16.gmra.mxu0 %v1406
        %v1445 = vpop.f32.mrf.mxu0
        %v1446 = vadd.f32 0.0, %v1445
        %v1447 = vpop.f32.mrf.mxu0
        %v1448 = vpop.f32.mrf.mxu0
        %v1449 = vpop.f32.mrf.mxu0
        %1450 = vdwg.mxu0
        %v1451 = vadd.f32 %v1332, %v1446
        %v1452 = vmul.f32 %v1095, %v1027
        %v1453 = vpack.c.bf16 %v1452, %v1452
        %v1455 = vsel %vm1056, %v1453, 0
        %1457 = vmatprep.subr.bf16.mxu0 0
        %1458 = vmatpush1.bf16.xpose.msra.mxu0 0
        %1459 = vmatprep.subr.bf16.mxu0 0
        %1460 = vmatpush1.bf16.xpose.msra.mxu0 0
        %1461 = vmatprep.subr.bf16.mxu0 0
        %1462 = vmatpush1.bf16.xpose.msra.mxu0 0
        %1463 = vmatprep.subr.bf16.mxu0 0
        %1464 = vmatpush1.bf16.xpose.msra.mxu0 0
        %1465 = vmatprep.subr.bf16.mxu0 0
        %1466 = vmatpush1.bf16.xpose.msra.mxu0 0
        %1467 = vmatprep.subr.bf16.mxu0 0
        %1468 = vmatpush1.bf16.xpose.msra.mxu0 0
        %1469 = vmatprep.subr.bf16.mxu0 0
        %1470 = vmatpush1.bf16.xpose.msra.mxu0 0
        %1471 = vmatprep.subr.bf16.mxu0 0
        %1472 = vmatpush1.bf16.xpose.msra.mxu0 %v1110
        %1473 = vmatprep.subr.bf16.mxu0 0
        %1474 = vmatpush2.bf16.xpose.msra.mxu0 0
        %1475 = vmatprep.subr.bf16.mxu0 0
        %1476 = vmatpush2.bf16.xpose.msra.mxu0 0
        %1477 = vmatprep.subr.bf16.mxu0 0
        %1478 = vmatpush2.bf16.xpose.msra.mxu0 0
        %1479 = vmatprep.subr.bf16.mxu0 0
        %1480 = vmatpush2.bf16.xpose.msra.mxu0 0
        %1481 = vmatprep.subr.bf16.mxu0 0
        %1482 = vmatpush2.bf16.xpose.msra.mxu0 0
        %1483 = vmatprep.subr.bf16.mxu0 0
        %1484 = vmatpush2.bf16.xpose.msra.mxu0 0
        %1485 = vmatprep.subr.bf16.mxu0 0
        %1486 = vmatpush2.bf16.xpose.msra.mxu0 0
        %1487 = vmatprep.subr.bf16.mxu0 0
        %1488 = vmatpush2.bf16.xpose.msra.mxu0 0
        %1489 = vmatprep.mubr.bf16.mxu0 0
        %1490 = vmatmul.mubr.bf16.gmra.mxu0 %v1455
        %v1491 = vpop.f32.mrf.mxu0
        %v1492 = vadd.f32 0.0, %v1491
        %v1493 = vpop.f32.mrf.mxu0
        %v1494 = vpop.f32.mrf.mxu0
        %v1495 = vpop.f32.mrf.mxu0
        %1496 = vdwg.mxu0
        %v1497 = vmul.f32 %v1492, 0.35355338
        %v1498 = vadd.f32 %v1497, %v1028
        %v1499 = vsel %vm1154, %v1498, -inf
        %1500 = vmax.xlane.f32.xlu0 %v1499
        %v1501 = vpop.xlane.xlu0 %1500
        %v1502 = vsub.f32 %v1498, %v1501
        %v1503 = vmul.f32 %v1502, 1.442695
        %v1504 = vpow.pop %v1503
        %v1505 = vsel %vm1154, %v1504, 0.0
        %1506 = vadd.xlane.f32.xlu0 %v1505
        %v1507 = vpop.xlane.xlu0 %1506
        %v1508 = vrcp.pop %v1507
        %v1509 = vmul.f32 %v1504, %v1508
        %v1510 = vpack.c.bf16 %v1509, %v1509
        %1512 = vrot.lane.b32.xlu0 %v1027, 64
        %v1513 = vpop.permute.xlu0 %1512
        %v1515 = vmul.f32 %v1095, %v1513
        %v1516 = vpack.c.bf16 %v1515, %v1515
        %1518 = vrot.lane.b32.xlu0 %v1516, 64
        %v1519 = vpop.permute.xlu0 %1518
        %v1521 = vsel %vm1154, %v1510, 0
        %v1524 = vsel %vm1244, %v1519, 0
        %1526 = vmatprep.subr.bf16.mxu0 0
        %1527 = vmatpush1.bf16.msra.mxu0 0
        %1528 = vmatprep.subr.bf16.mxu0 0
        %1529 = vmatpush1.bf16.msra.mxu0 0
        %1530 = vmatprep.subr.bf16.mxu0 0
        %1531 = vmatpush1.bf16.msra.mxu0 0
        %1532 = vmatprep.subr.bf16.mxu0 0
        %1533 = vmatpush1.bf16.msra.mxu0 0
        %1534 = vmatprep.subr.bf16.mxu0 0
        %1535 = vmatpush1.bf16.msra.mxu0 0
        %1536 = vmatprep.subr.bf16.mxu0 0
        %1537 = vmatpush1.bf16.msra.mxu0 0
        %1538 = vmatprep.subr.bf16.mxu0 0
        %1539 = vmatpush1.bf16.msra.mxu0 0
        %1540 = vmatprep.subr.bf16.mxu0 0
        %1541 = vmatpush1.bf16.msra.mxu0 %v1524
        %1542 = vmatprep.subr.bf16.mxu0 0
        %1543 = vmatpush2.bf16.msra.mxu0 0
        %1544 = vmatprep.subr.bf16.mxu0 0
        %1545 = vmatpush2.bf16.msra.mxu0 0
        %1546 = vmatprep.subr.bf16.mxu0 0
        %1547 = vmatpush2.bf16.msra.mxu0 0
        %1548 = vmatprep.subr.bf16.mxu0 0
        %1549 = vmatpush2.bf16.msra.mxu0 0
        %1550 = vmatprep.subr.bf16.mxu0 0
        %1551 = vmatpush2.bf16.msra.mxu0 0
        %1552 = vmatprep.subr.bf16.mxu0 0
        %1553 = vmatpush2.bf16.msra.mxu0 0
        %1554 = vmatprep.subr.bf16.mxu0 0
        %1555 = vmatpush2.bf16.msra.mxu0 0
        %1556 = vmatprep.subr.bf16.mxu0 0
        %1557 = vmatpush2.bf16.msra.mxu0 0
        %1558 = vmatprep.mubr.bf16.mxu0 0
        %1559 = vmatmul.mubr.bf16.gmra.mxu0 %v1521
        %v1560 = vpop.f32.mrf.mxu0
        %v1561 = vadd.f32 0.0, %v1560
        %v1562 = vpop.f32.mrf.mxu0
        %v1563 = vpop.f32.mrf.mxu0
        %v1564 = vpop.f32.mrf.mxu0
        %1565 = vdwg.mxu0
        %v1566 = vadd.f32 %v1451, %v1561
        %v1567 = vld [vmem:[%s15] sm:$0xf]
        %v1568 = vld [vmem:[%s15 + $0x4] sm:$0xf]
        %v1569 = vld [vmem:[%s15 + $0x8] sm:$0xf]
        %v1570 = vld [vmem:[%s15 + $0xc] sm:$0xf]
        %v1571 = vpack.c.bf16 %v1566, %v1566
        %v1572 = vld [vmem:[%s17] sm:$0x1]
        %v1574 = vlaneseq
        %v1575 = vshrl.u32 %v1574, 7
        %v1576 = vsub.s32 0, %v1575
        %v1577 = vrot.slane %v1572, %v1576
        %v1583 = vunpack.c.l.b16 %v1567
        %v1584 = vunpack.c.l.b16 %v1568
        %v1585 = vunpack.c.l.b16 %v1569
        %v1586 = vunpack.c.l.b16 %v1570
        %v1587 = vpack.c.b16 %v1584, %v1583
        %v1588 = vpack.c.b16 %v1586, %v1585
        %v1592 = vsel %vm1056, %v1571, 0
        %1594 = vmatprep.subr.bf16.mxu0 0
        %1595 = vmatpush1.bf16.msra.mxu0 0
        %1596 = vmatprep.subr.bf16.mxu0 0
        %1597 = vmatpush1.bf16.msra.mxu0 0
        %1598 = vmatprep.subr.bf16.mxu0 0
        %1599 = vmatpush1.bf16.msra.mxu0 0
        %1600 = vmatprep.subr.bf16.mxu0 0
        %1601 = vmatpush1.bf16.msra.mxu0 0
        %1602 = vmatprep.subr.bf16.mxu0 0
        %1603 = vmatpush1.bf16.msra.mxu0 0
        %1604 = vmatprep.subr.bf16.mxu0 0
        %1605 = vmatpush1.bf16.msra.mxu0 0
        %1606 = vmatprep.subr.bf16.mxu0 0
        %1607 = vmatpush1.bf16.msra.mxu0 %v1588
        %1608 = vmatprep.subr.bf16.mxu0 0
        %1609 = vmatpush1.bf16.msra.mxu0 %v1587
        %1610 = vmatprep.subr.bf16.mxu0 0
        %1611 = vmatpush2.bf16.msra.mxu0 0
        %1612 = vmatprep.subr.bf16.mxu0 0
        %1613 = vmatpush2.bf16.msra.mxu0 0
        %1614 = vmatprep.subr.bf16.mxu0 0
        %1615 = vmatpush2.bf16.msra.mxu0 0
        %1616 = vmatprep.subr.bf16.mxu0 0
        %1617 = vmatpush2.bf16.msra.mxu0 0
        %1618 = vmatprep.subr.bf16.mxu0 0
        %1619 = vmatpush2.bf16.msra.mxu0 0
        %1620 = vmatprep.subr.bf16.mxu0 0
        %1621 = vmatpush2.bf16.msra.mxu0 0
        %1622 = vmatprep.subr.bf16.mxu0 0
        %1623 = vmatpush2.bf16.msra.mxu0 0
        %1624 = vmatprep.subr.bf16.mxu0 0
        %1625 = vmatpush2.bf16.msra.mxu0 0
        %1626 = vmatprep.mubr.bf16.mxu0 0
        %1627 = vmatmul.mubr.bf16.gmra.mxu0 %v1592
        %v1628 = vpop.f32.mrf.mxu0
        %v1629 = vadd.f32 %v1577, %v1628
        %v1630 = vpop.f32.mrf.mxu0
        %v1631 = vpop.f32.mrf.mxu0
        %v1632 = vpop.f32.mrf.mxu0
        %1633 = vdwg.mxu0
        %v1634 = vadd.f32 %v1031, %v1629
        %v1635 = vld [vmem:[%s27] sm:$0x1]
        %v1636 = vld [vmem:[%s27 + $0x1] sm:$0x1]
        %v1637 = vsel %vm1056, %v1634, 0.0
        %1638 = vadd.xlane.f32.xlu0 %v1637
        %v1639 = vpop.xlane.xlu0 %1638
        %v1640 = vrcp.pop 32.0
        %v1641 = vmul.f32 %v1639, %v1640
        %v1642 = vsub.f32 %v1634, %v1641
        %v1643 = vmul.f32 %v1642, %v1642
        %v1644 = vsel %vm1056, %v1643, 0.0
        %1645 = vadd.xlane.f32.xlu0 %v1644
        %v1646 = vpop.xlane.xlu0 %1645
        %v1647 = vmul.f32 %v1646, %v1640
        %v1648 = vadd.f32 %v1647, 1e-05
        %v1649 = vrsqrt.pop %v1648
        %v1650 = vmul.f32 %v1642, %v1649
        %v1651 = vlaneseq
        %v1652 = vshrl.u32 %v1651, 7
        %v1653 = vsub.s32 0, %v1652
        %v1654 = vrot.slane %v1635, %v1653
        %v1655 = vmul.f32 %v1650, %v1654
        %v1656 = vlaneseq
        %v1657 = vshrl.u32 %v1656, 7
        %v1658 = vsub.s32 0, %v1657
        %v1659 = vrot.slane %v1636, %v1658
        %v1660 = vadd.f32 %v1655, %v1659
        %v1661 = vld [vmem:[%s19] sm:$0xf]
        %v1662 = vld [vmem:[%s19 + $0x4] sm:$0xf]
        %v1663 = vld [vmem:[%s19 + $0x8] sm:$0xf]
        %v1664 = vld [vmem:[%s19 + $0xc] sm:$0xf]
        %v1665 = vpack.c.bf16 %v1660, %v1660
        %v1666 = vld [vmem:[%s21] sm:$0x1]
        %v1668 = vlaneseq
        %v1669 = vshrl.u32 %v1668, 7
        %v1670 = vsub.s32 0, %v1669
        %v1671 = vrot.slane %v1666, %v1670
        %v1677 = vunpack.c.l.b16 %v1661
        %v1678 = vunpack.c.l.b16 %v1662
        %v1679 = vunpack.c.l.b16 %v1663
        %v1680 = vunpack.c.l.b16 %v1664
        %v1681 = vpack.c.b16 %v1678, %v1677
        %v1682 = vpack.c.b16 %v1680, %v1679
        %v1686 = vsel %vm1056, %v1665, 0
        %1688 = vmatprep.subr.bf16.mxu0 0
        %1689 = vmatpush1.bf16.msra.mxu0 0
        %1690 = vmatprep.subr.bf16.mxu0 0
        %1691 = vmatpush1.bf16.msra.mxu0 0
        %1692 = vmatprep.subr.bf16.mxu0 0
        %1693 = vmatpush1.bf16.msra.mxu0 0
        %1694 = vmatprep.subr.bf16.mxu0 0
        %1695 = vmatpush1.bf16.msra.mxu0 0
        %1696 = vmatprep.subr.bf16.mxu0 0
        %1697 = vmatpush1.bf16.msra.mxu0 0
        %1698 = vmatprep.subr.bf16.mxu0 0
        %1699 = vmatpush1.bf16.msra.mxu0 0
        %1700 = vmatprep.subr.bf16.mxu0 0
        %1701 = vmatpush1.bf16.msra.mxu0 %v1682
        %1702 = vmatprep.subr.bf16.mxu0 0
        %1703 = vmatpush1.bf16.msra.mxu0 %v1681
        %1704 = vmatprep.subr.bf16.mxu0 0
        %1705 = vmatpush2.bf16.msra.mxu0 0
        %1706 = vmatprep.subr.bf16.mxu0 0
        %1707 = vmatpush2.bf16.msra.mxu0 0
        %1708 = vmatprep.subr.bf16.mxu0 0
        %1709 = vmatpush2.bf16.msra.mxu0 0
        %1710 = vmatprep.subr.bf16.mxu0 0
        %1711 = vmatpush2.bf16.msra.mxu0 0
        %1712 = vmatprep.subr.bf16.mxu0 0
        %1713 = vmatpush2.bf16.msra.mxu0 0
        %1714 = vmatprep.subr.bf16.mxu0 0
        %1715 = vmatpush2.bf16.msra.mxu0 0
        %1716 = vmatprep.subr.bf16.mxu0 0
        %1717 = vmatpush2.bf16.msra.mxu0 0
        %1718 = vmatprep.subr.bf16.mxu0 0
        %1719 = vmatpush2.bf16.msra.mxu0 0
        %1720 = vmatprep.mubr.bf16.mxu0 0
        %1721 = vmatmul.mubr.bf16.gmra.mxu0 %v1686
        %v1722 = vpop.f32.mrf.mxu0
        %v1723 = vadd.f32 %v1671, %v1722
        %v1724 = vpop.f32.mrf.mxu0
        %v1725 = vpop.f32.mrf.mxu0
        %v1726 = vpop.f32.mrf.mxu0
        %1727 = vdwg.mxu0
        %v1728 = vmax.f32 %v1723, 0.0
        %v1729 = vld [vmem:[%s23] sm:$0xf]
        %v1730 = vld [vmem:[%s23 + $0x4] sm:$0xf]
        %v1731 = vld [vmem:[%s23 + $0x8] sm:$0xf]
        %v1732 = vld [vmem:[%s23 + $0xc] sm:$0xf]
        %v1733 = vld [vmem:[%s23 + $0x10] sm:$0xf]
        %v1734 = vld [vmem:[%s23 + $0x14] sm:$0xf]
        %v1735 = vld [vmem:[%s23 + $0x18] sm:$0xf]
        %v1736 = vld [vmem:[%s23 + $0x1c] sm:$0xf]
        %v1737 = vpack.c.bf16 %v1728, %v1728
        %v1738 = vld [vmem:[%s25] sm:$0x1]
        %v1740 = vlaneseq
        %v1741 = vshrl.u32 %v1740, 7
        %v1742 = vsub.s32 0, %v1741
        %v1743 = vrot.slane %v1738, %v1742
        %v1753 = vunpack.c.l.b16 %v1729
        %v1754 = vunpack.c.l.b16 %v1730
        %v1755 = vunpack.c.l.b16 %v1731
        %v1756 = vunpack.c.l.b16 %v1732
        %v1757 = vunpack.c.l.b16 %v1733
        %v1758 = vunpack.c.l.b16 %v1734
        %v1759 = vunpack.c.l.b16 %v1735
        %v1760 = vunpack.c.l.b16 %v1736
        %v1761 = vpack.c.b16 %v1754, %v1753
        %v1762 = vpack.c.b16 %v1756, %v1755
        %v1763 = vpack.c.b16 %v1758, %v1757
        %v1764 = vpack.c.b16 %v1760, %v1759
        %vm1769 = vcmask 523264
        %v1771 = vsel %vm1769, %v1737, 0
        %1773 = vmatprep.subr.bf16.mxu0 0
        %1774 = vmatpush1.bf16.msra.mxu0 0
        %1775 = vmatprep.subr.bf16.mxu0 0
        %1776 = vmatpush1.bf16.msra.mxu0 0
        %1777 = vmatprep.subr.bf16.mxu0 0
        %1778 = vmatpush1.bf16.msra.mxu0 0
        %1779 = vmatprep.subr.bf16.mxu0 0
        %1780 = vmatpush1.bf16.msra.mxu0 0
        %1781 = vmatprep.subr.bf16.mxu0 0
        %1782 = vmatpush1.bf16.msra.mxu0 %v1764
        %1783 = vmatprep.subr.bf16.mxu0 0
        %1784 = vmatpush1.bf16.msra.mxu0 %v1763
        %1785 = vmatprep.subr.bf16.mxu0 0
        %1786 = vmatpush1.bf16.msra.mxu0 %v1762
        %1787 = vmatprep.subr.bf16.mxu0 0
        %1788 = vmatpush1.bf16.msra.mxu0 %v1761
        %1789 = vmatprep.subr.bf16.mxu0 0
        %1790 = vmatpush2.bf16.msra.mxu0 0
        %1791 = vmatprep.subr.bf16.mxu0 0
        %1792 = vmatpush2.bf16.msra.mxu0 0
        %1793 = vmatprep.subr.bf16.mxu0 0
        %1794 = vmatpush2.bf16.msra.mxu0 0
        %1795 = vmatprep.subr.bf16.mxu0 0
        %1796 = vmatpush2.bf16.msra.mxu0 0
        %1797 = vmatprep.subr.bf16.mxu0 0
        %1798 = vmatpush2.bf16.msra.mxu0 0
        %1799 = vmatprep.subr.bf16.mxu0 0
        %1800 = vmatpush2.bf16.msra.mxu0 0
        %1801 = vmatprep.subr.bf16.mxu0 0
        %1802 = vmatpush2.bf16.msra.mxu0 0
        %1803 = vmatprep.subr.bf16.mxu0 0
        %1804 = vmatpush2.bf16.msra.mxu0 0
        %1805 = vmatprep.mubr.bf16.mxu0 0
        %1806 = vmatmul.mubr.bf16.gmra.mxu0 %v1771
        %v1807 = vpop.f32.mrf.mxu0
        %v1808 = vadd.f32 %v1743, %v1807
        %v1809 = vpop.f32.mrf.mxu0
        %v1810 = vpop.f32.mrf.mxu0
        %v1811 = vpop.f32.mrf.mxu0
        %1812 = vdwg.mxu0
        %v1813 = vadd.f32 %v1660, %v1808
        %v1814 = vld [vmem:[%s27 + $0x2] sm:$0x1]
        %v1815 = vld [vmem:[%s27 + $0x3] sm:$0x1]
        %v1816 = vsel %vm1056, %v1813, 0.0
        %1817 = vadd.xlane.f32.xlu0 %v1816
        %v1818 = vpop.xlane.xlu0 %1817
        %v1819 = vmul.f32 %v1818, %v1640
        %v1820 = vsub.f32 %v1813, %v1819
        %v1821 = vmul.f32 %v1820, %v1820
        %v1822 = vsel %vm1056, %v1821, 0.0
        %1823 = vadd.xlane.f32.xlu0 %v1822
        %v1824 = vpop.xlane.xlu0 %1823
        %v1825 = vmul.f32 %v1824, %v1640
        %v1826 = vadd.f32 %v1825, 1e-05
        %v1827 = vrsqrt.pop %v1826
        %v1828 = vmul.f32 %v1820, %v1827
        %v1829 = vlaneseq
        %v1830 = vshrl.u32 %v1829, 7
        %v1831 = vsub.s32 0, %v1830
        %v1832 = vrot.slane %v1814, %v1831
        %v1833 = vmul.f32 %v1828, %v1832
        %v1834 = vlaneseq
        %v1835 = vshrl.u32 %v1834, 7
        %v1836 = vsub.s32 0, %v1835
        %v1837 = vrot.slane %v1815, %v1836
        %v1838 = vadd.f32 %v1833, %v1837
        %s1839 = scalar_lea.vmem %s11, 16
        %v1840 = vld [vmem:[%s1839] sm:$0xf]
        %v1841 = vld [vmem:[%s1839 + $0x4] sm:$0xf]
        %v1842 = vld [vmem:[%s1839 + $0x8] sm:$0xf]
        %v1843 = vld [vmem:[%s1839 + $0xc] sm:$0xf]
        %v1844 = vpack.c.bf16 %v1838, %v1838
        %s1845 = scalar_lea.vmem %s13, 1
        %v1846 = vld [vmem:[%s1845] sm:$0x1]
        %v1848 = vlaneseq
        %v1849 = vshrl.u32 %v1848, 7
        %v1850 = vsub.s32 0, %v1849
        %v1851 = vrot.slane %v1846, %v1850
        %v1857 = vunpack.c.l.b16 %v1840
        %v1858 = vunpack.c.l.b16 %v1841
        %v1859 = vunpack.c.l.b16 %v1842
        %v1860 = vunpack.c.l.b16 %v1843
        %v1861 = vpack.c.b16 %v1858, %v1857
        %v1862 = vpack.c.b16 %v1860, %v1859
        %v1866 = vsel %vm1056, %v1844, 0
        %1868 = vmatprep.subr.bf16.mxu0 0
        %1869 = vmatpush1.bf16.msra.mxu0 0
        %1870 = vmatprep.subr.bf16.mxu0 0
        %1871 = vmatpush1.bf16.msra.mxu0 0
        %1872 = vmatprep.subr.bf16.mxu0 0
        %1873 = vmatpush1.bf16.msra.mxu0 0
        %1874 = vmatprep.subr.bf16.mxu0 0
        %1875 = vmatpush1.bf16.msra.mxu0 0
        %1876 = vmatprep.subr.bf16.mxu0 0
        %1877 = vmatpush1.bf16.msra.mxu0 0
        %1878 = vmatprep.subr.bf16.mxu0 0
        %1879 = vmatpush1.bf16.msra.mxu0 0
        %1880 = vmatprep.subr.bf16.mxu0 0
        %1881 = vmatpush1.bf16.msra.mxu0 %v1862
        %1882 = vmatprep.subr.bf16.mxu0 0
        %1883 = vmatpush1.bf16.msra.mxu0 %v1861
        %1884 = vmatprep.subr.bf16.mxu0 0
        %1885 = vmatpush2.bf16.msra.mxu0 0
        %1886 = vmatprep.subr.bf16.mxu0 0
        %1887 = vmatpush2.bf16.msra.mxu0 0
        %1888 = vmatprep.subr.bf16.mxu0 0
        %1889 = vmatpush2.bf16.msra.mxu0 0
        %1890 = vmatprep.subr.bf16.mxu0 0
        %1891 = vmatpush2.bf16.msra.mxu0 0
        %1892 = vmatprep.subr.bf16.mxu0 0
        %1893 = vmatpush2.bf16.msra.mxu0 0
        %1894 = vmatprep.subr.bf16.mxu0 0
        %1895 = vmatpush2.bf16.msra.mxu0 0
        %1896 = vmatprep.subr.bf16.mxu0 0
        %1897 = vmatpush2.bf16.msra.mxu0 0
        %1898 = vmatprep.subr.bf16.mxu0 0
        %1899 = vmatpush2.bf16.msra.mxu0 0
        %1900 = vmatprep.mubr.bf16.mxu0 0
        %1901 = vmatmul.mubr.bf16.gmra.mxu0 %v1866
        %v1902 = vpop.f32.mrf.mxu0
        %v1903 = vadd.f32 %v1851, %v1902
        %v1904 = vpop.f32.mrf.mxu0
        %v1905 = vpop.f32.mrf.mxu0
        %v1906 = vpop.f32.mrf.mxu0
        %1907 = vdwg.mxu0
        %v1908 = vpack.c.bf16 %v1903, %v1903
        %v1909 = vmul.f32 %v1903, %v1012
        %v1910 = vpack.c.bf16 %v1909, %v1909
        %1912 = vrot.lane.b32.xlu0 %v1908, 96
        %v1913 = vpop.permute.xlu0 %1912
        %v1915 = vsel %vm1056, %v1910, 0
        %v1918 = vsel %vm1056, %v1913, 0
        %1920 = vmatprep.subr.bf16.mxu0 0
        %1921 = vmatpush1.bf16.xpose.msra.mxu0 0
        %1922 = vmatprep.subr.bf16.mxu0 0
        %1923 = vmatpush1.bf16.xpose.msra.mxu0 0
        %1924 = vmatprep.subr.bf16.mxu0 0
        %1925 = vmatpush1.bf16.xpose.msra.mxu0 0
        %1926 = vmatprep.subr.bf16.mxu0 0
        %1927 = vmatpush1.bf16.xpose.msra.mxu0 0
        %1928 = vmatprep.subr.bf16.mxu0 0
        %1929 = vmatpush1.bf16.xpose.msra.mxu0 0
        %1930 = vmatprep.subr.bf16.mxu0 0
        %1931 = vmatpush1.bf16.xpose.msra.mxu0 0
        %1932 = vmatprep.subr.bf16.mxu0 0
        %1933 = vmatpush1.bf16.xpose.msra.mxu0 0
        %1934 = vmatprep.subr.bf16.mxu0 0
        %1935 = vmatpush1.bf16.xpose.msra.mxu0 %v1918
        %1936 = vmatprep.subr.bf16.mxu0 0
        %1937 = vmatpush2.bf16.xpose.msra.mxu0 0
        %1938 = vmatprep.subr.bf16.mxu0 0
        %1939 = vmatpush2.bf16.xpose.msra.mxu0 0
        %1940 = vmatprep.subr.bf16.mxu0 0
        %1941 = vmatpush2.bf16.xpose.msra.mxu0 0
        %1942 = vmatprep.subr.bf16.mxu0 0
        %1943 = vmatpush2.bf16.xpose.msra.mxu0 0
        %1944 = vmatprep.subr.bf16.mxu0 0
        %1945 = vmatpush2.bf16.xpose.msra.mxu0 0
        %1946 = vmatprep.subr.bf16.mxu0 0
        %1947 = vmatpush2.bf16.xpose.msra.mxu0 0
        %1948 = vmatprep.subr.bf16.mxu0 0
        %1949 = vmatpush2.bf16.xpose.msra.mxu0 0
        %1950 = vmatprep.subr.bf16.mxu0 0
        %1951 = vmatpush2.bf16.xpose.msra.mxu0 0
        %1952 = vmatprep.mubr.bf16.mxu0 0
        %1953 = vmatmul.mubr.bf16.gmra.mxu0 %v1915
        %v1954 = vpop.f32.mrf.mxu0
        %v1955 = vadd.f32 0.0, %v1954
        %v1956 = vpop.f32.mrf.mxu0
        %v1957 = vpop.f32.mrf.mxu0
        %v1958 = vpop.f32.mrf.mxu0
        %1959 = vdwg.mxu0
        %v1960 = vmul.f32 %v1955, 0.35355338
        %v1961 = vadd.f32 %v1960, %v1028
        %v1962 = vsel %vm1154, %v1961, -inf
        %1963 = vmax.xlane.f32.xlu0 %v1962
        %v1964 = vpop.xlane.xlu0 %1963
        %v1965 = vsub.f32 %v1961, %v1964
        %v1966 = vmul.f32 %v1965, 1.442695
        %v1967 = vpow.pop %v1966
        %v1968 = vsel %vm1154, %v1967, 0.0
        %1969 = vadd.xlane.f32.xlu0 %v1968
        %v1970 = vpop.xlane.xlu0 %1969
        %v1971 = vrcp.pop %v1970
        %v1972 = vmul.f32 %v1967, %v1971
        %v1973 = vpack.c.bf16 %v1972, %v1972
        %v1974 = vmul.f32 %v1903, %v1169
        %v1975 = vpack.c.bf16 %v1974, %v1974
        %v1976 = vmul.f32 %v1903, %v1017
        %v1977 = vpack.c.bf16 %v1976, %v1976
        %v1979 = vsel %vm1056, %v1977, 0
        %1981 = vmatprep.subr.bf16.mxu0 0
        %1982 = vmatpush1.bf16.xpose.msra.mxu0 0
        %1983 = vmatprep.subr.bf16.mxu0 0
        %1984 = vmatpush1.bf16.xpose.msra.mxu0 0
        %1985 = vmatprep.subr.bf16.mxu0 0
        %1986 = vmatpush1.bf16.xpose.msra.mxu0 0
        %1987 = vmatprep.subr.bf16.mxu0 0
        %1988 = vmatpush1.bf16.xpose.msra.mxu0 0
        %1989 = vmatprep.subr.bf16.mxu0 0
        %1990 = vmatpush1.bf16.xpose.msra.mxu0 0
        %1991 = vmatprep.subr.bf16.mxu0 0
        %1992 = vmatpush1.bf16.xpose.msra.mxu0 0
        %1993 = vmatprep.subr.bf16.mxu0 0
        %1994 = vmatpush1.bf16.xpose.msra.mxu0 0
        %1995 = vmatprep.subr.bf16.mxu0 0
        %1996 = vmatpush1.bf16.xpose.msra.mxu0 %v1918
        %1997 = vmatprep.subr.bf16.mxu0 0
        %1998 = vmatpush2.bf16.xpose.msra.mxu0 0
        %1999 = vmatprep.subr.bf16.mxu0 0
        %2000 = vmatpush2.bf16.xpose.msra.mxu0 0
        %2001 = vmatprep.subr.bf16.mxu0 0
        %2002 = vmatpush2.bf16.xpose.msra.mxu0 0
        %2003 = vmatprep.subr.bf16.mxu0 0
        %2004 = vmatpush2.bf16.xpose.msra.mxu0 0
        %2005 = vmatprep.subr.bf16.mxu0 0
        %2006 = vmatpush2.bf16.xpose.msra.mxu0 0
        %2007 = vmatprep.subr.bf16.mxu0 0
        %2008 = vmatpush2.bf16.xpose.msra.mxu0 0
        %2009 = vmatprep.subr.bf16.mxu0 0
        %2010 = vmatpush2.bf16.xpose.msra.mxu0 0
        %2011 = vmatprep.subr.bf16.mxu0 0
        %2012 = vmatpush2.bf16.xpose.msra.mxu0 0
        %2013 = vmatprep.mubr.bf16.mxu0 0
        %2014 = vmatmul.mubr.bf16.gmra.mxu0 %v1979
        %v2015 = vpop.f32.mrf.mxu0
        %v2016 = vadd.f32 0.0, %v2015
        %v2017 = vpop.f32.mrf.mxu0
        %v2018 = vpop.f32.mrf.mxu0
        %v2019 = vpop.f32.mrf.mxu0
        %2020 = vdwg.mxu0
        %v2021 = vmul.f32 %v2016, 0.35355338
        %v2022 = vadd.f32 %v2021, %v1028
        %v2023 = vsel %vm1154, %v2022, -inf
        %2024 = vmax.xlane.f32.xlu0 %v2023
        %v2025 = vpop.xlane.xlu0 %2024
        %v2026 = vsub.f32 %v2022, %v2025
        %v2027 = vmul.f32 %v2026, 1.442695
        %v2028 = vpow.pop %v2027
        %v2029 = vsel %vm1154, %v2028, 0.0
        %2030 = vadd.xlane.f32.xlu0 %v2029
        %v2031 = vpop.xlane.xlu0 %2030
        %v2032 = vrcp.pop %v2031
        %v2033 = vmul.f32 %v2028, %v2032
        %v2034 = vpack.c.bf16 %v2033, %v2033
        %v2035 = vmul.f32 %v1903, %v1234
        %v2036 = vpack.c.bf16 %v2035, %v2035
        %2038 = vrot.lane.b32.xlu0 %v2036, 64
        %v2039 = vpop.permute.xlu0 %2038
        %v2041 = vsel %vm1154, %v2034, 0
        %v2044 = vsel %vm1244, %v2039, 0
        %2046 = vmatprep.subr.bf16.mxu0 0
        %2047 = vmatpush1.bf16.msra.mxu0 0
        %2048 = vmatprep.subr.bf16.mxu0 0
        %2049 = vmatpush1.bf16.msra.mxu0 0
        %2050 = vmatprep.subr.bf16.mxu0 0
        %2051 = vmatpush1.bf16.msra.mxu0 0
        %2052 = vmatprep.subr.bf16.mxu0 0
        %2053 = vmatpush1.bf16.msra.mxu0 0
        %2054 = vmatprep.subr.bf16.mxu0 0
        %2055 = vmatpush1.bf16.msra.mxu0 0
        %2056 = vmatprep.subr.bf16.mxu0 0
        %2057 = vmatpush1.bf16.msra.mxu0 0
        %2058 = vmatprep.subr.bf16.mxu0 0
        %2059 = vmatpush1.bf16.msra.mxu0 0
        %2060 = vmatprep.subr.bf16.mxu0 0
        %2061 = vmatpush1.bf16.msra.mxu0 %v2044
        %2062 = vmatprep.subr.bf16.mxu0 0
        %2063 = vmatpush2.bf16.msra.mxu0 0
        %2064 = vmatprep.subr.bf16.mxu0 0
        %2065 = vmatpush2.bf16.msra.mxu0 0
        %2066 = vmatprep.subr.bf16.mxu0 0
        %2067 = vmatpush2.bf16.msra.mxu0 0
        %2068 = vmatprep.subr.bf16.mxu0 0
        %2069 = vmatpush2.bf16.msra.mxu0 0
        %2070 = vmatprep.subr.bf16.mxu0 0
        %2071 = vmatpush2.bf16.msra.mxu0 0
        %2072 = vmatprep.subr.bf16.mxu0 0
        %2073 = vmatpush2.bf16.msra.mxu0 0
        %2074 = vmatprep.subr.bf16.mxu0 0
        %2075 = vmatpush2.bf16.msra.mxu0 0
        %2076 = vmatprep.subr.bf16.mxu0 0
        %2077 = vmatpush2.bf16.msra.mxu0 0
        %2078 = vmatprep.mubr.bf16.mxu0 0
        %2079 = vmatmul.mubr.bf16.gmra.mxu0 %v2041
        %v2080 = vpop.f32.mrf.mxu0
        %v2081 = vadd.f32 0.0, %v2080
        %v2082 = vpop.f32.mrf.mxu0
        %v2083 = vpop.f32.mrf.mxu0
        %v2084 = vpop.f32.mrf.mxu0
        %2085 = vdwg.mxu0
        %2087 = vrot.lane.b32.xlu0 %v1975, 64
        %v2088 = vpop.permute.xlu0 %2087
        %v2090 = vsel %vm1154, %v1973, 0
        %v2093 = vsel %vm1244, %v2088, 0
        %2095 = vmatprep.subr.bf16.mxu0 0
        %2096 = vmatpush1.bf16.msra.mxu0 0
        %2097 = vmatprep.subr.bf16.mxu0 0
        %2098 = vmatpush1.bf16.msra.mxu0 0
        %2099 = vmatprep.subr.bf16.mxu0 0
        %2100 = vmatpush1.bf16.msra.mxu0 0
        %2101 = vmatprep.subr.bf16.mxu0 0
        %2102 = vmatpush1.bf16.msra.mxu0 0
        %2103 = vmatprep.subr.bf16.mxu0 0
        %2104 = vmatpush1.bf16.msra.mxu0 0
        %2105 = vmatprep.subr.bf16.mxu0 0
        %2106 = vmatpush1.bf16.msra.mxu0 0
        %2107 = vmatprep.subr.bf16.mxu0 0
        %2108 = vmatpush1.bf16.msra.mxu0 0
        %2109 = vmatprep.subr.bf16.mxu0 0
        %2110 = vmatpush1.bf16.msra.mxu0 %v2093
        %2111 = vmatprep.subr.bf16.mxu0 0
        %2112 = vmatpush2.bf16.msra.mxu0 0
        %2113 = vmatprep.subr.bf16.mxu0 0
        %2114 = vmatpush2.bf16.msra.mxu0 0
        %2115 = vmatprep.subr.bf16.mxu0 0
        %2116 = vmatpush2.bf16.msra.mxu0 0
        %2117 = vmatprep.subr.bf16.mxu0 0
        %2118 = vmatpush2.bf16.msra.mxu0 0
        %2119 = vmatprep.subr.bf16.mxu0 0
        %2120 = vmatpush2.bf16.msra.mxu0 0
        %2121 = vmatprep.subr.bf16.mxu0 0
        %2122 = vmatpush2.bf16.msra.mxu0 0
        %2123 = vmatprep.subr.bf16.mxu0 0
        %2124 = vmatpush2.bf16.msra.mxu0 0
        %2125 = vmatprep.subr.bf16.mxu0 0
        %2126 = vmatpush2.bf16.msra.mxu0 0
        %2127 = vmatprep.mubr.bf16.mxu0 0
        %2128 = vmatmul.mubr.bf16.gmra.mxu0 %v2090
        %v2129 = vpop.f32.mrf.mxu0
        %v2130 = vadd.f32 %v2081, %v2129
        %v2131 = vpop.f32.mrf.mxu0
        %v2132 = vpop.f32.mrf.mxu0
        %v2133 = vpop.f32.mrf.mxu0
        %2134 = vdwg.mxu0
        %v2135 = vmul.f32 %v1903, %v1022
        %v2136 = vpack.c.bf16 %v2135, %v2135
        %v2138 = vsel %vm1056, %v2136, 0
        %2140 = vmatprep.subr.bf16.mxu0 0
        %2141 = vmatpush1.bf16.xpose.msra.mxu0 0
        %2142 = vmatprep.subr.bf16.mxu0 0
        %2143 = vmatpush1.bf16.xpose.msra.mxu0 0
        %2144 = vmatprep.subr.bf16.mxu0 0
        %2145 = vmatpush1.bf16.xpose.msra.mxu0 0
        %2146 = vmatprep.subr.bf16.mxu0 0
        %2147 = vmatpush1.bf16.xpose.msra.mxu0 0
        %2148 = vmatprep.subr.bf16.mxu0 0
        %2149 = vmatpush1.bf16.xpose.msra.mxu0 0
        %2150 = vmatprep.subr.bf16.mxu0 0
        %2151 = vmatpush1.bf16.xpose.msra.mxu0 0
        %2152 = vmatprep.subr.bf16.mxu0 0
        %2153 = vmatpush1.bf16.xpose.msra.mxu0 0
        %2154 = vmatprep.subr.bf16.mxu0 0
        %2155 = vmatpush1.bf16.xpose.msra.mxu0 %v1918
        %2156 = vmatprep.subr.bf16.mxu0 0
        %2157 = vmatpush2.bf16.xpose.msra.mxu0 0
        %2158 = vmatprep.subr.bf16.mxu0 0
        %2159 = vmatpush2.bf16.xpose.msra.mxu0 0
        %2160 = vmatprep.subr.bf16.mxu0 0
        %2161 = vmatpush2.bf16.xpose.msra.mxu0 0
        %2162 = vmatprep.subr.bf16.mxu0 0
        %2163 = vmatpush2.bf16.xpose.msra.mxu0 0
        %2164 = vmatprep.subr.bf16.mxu0 0
        %2165 = vmatpush2.bf16.xpose.msra.mxu0 0
        %2166 = vmatprep.subr.bf16.mxu0 0
        %2167 = vmatpush2.bf16.xpose.msra.mxu0 0
        %2168 = vmatprep.subr.bf16.mxu0 0
        %2169 = vmatpush2.bf16.xpose.msra.mxu0 0
        %2170 = vmatprep.subr.bf16.mxu0 0
        %2171 = vmatpush2.bf16.xpose.msra.mxu0 0
        %2172 = vmatprep.mubr.bf16.mxu0 0
        %2173 = vmatmul.mubr.bf16.gmra.mxu0 %v2138
        %v2174 = vpop.f32.mrf.mxu0
        %v2175 = vadd.f32 0.0, %v2174
        %v2176 = vpop.f32.mrf.mxu0
        %v2177 = vpop.f32.mrf.mxu0
        %v2178 = vpop.f32.mrf.mxu0
        %2179 = vdwg.mxu0
        %v2180 = vmul.f32 %v2175, 0.35355338
        %v2181 = vadd.f32 %v2180, %v1028
        %v2182 = vsel %vm1154, %v2181, -inf
        %2183 = vmax.xlane.f32.xlu0 %v2182
        %v2184 = vpop.xlane.xlu0 %2183
        %v2185 = vsub.f32 %v2181, %v2184
        %v2186 = vmul.f32 %v2185, 1.442695
        %v2187 = vpow.pop %v2186
        %v2188 = vsel %vm1154, %v2187, 0.0
        %2189 = vadd.xlane.f32.xlu0 %v2188
        %v2190 = vpop.xlane.xlu0 %2189
        %v2191 = vrcp.pop %v2190
        %v2192 = vmul.f32 %v2187, %v2191
        %v2193 = vpack.c.bf16 %v2192, %v2192
        %v2194 = vmul.f32 %v1903, %v1398
        %v2195 = vpack.c.bf16 %v2194, %v2194
        %2197 = vrot.lane.b32.xlu0 %v2195, 64
        %v2198 = vpop.permute.xlu0 %2197
        %v2200 = vsel %vm1154, %v2193, 0
        %v2203 = vsel %vm1244, %v2198, 0
        %2205 = vmatprep.subr.bf16.mxu0 0
        %2206 = vmatpush1.bf16.msra.mxu0 0
        %2207 = vmatprep.subr.bf16.mxu0 0
        %2208 = vmatpush1.bf16.msra.mxu0 0
        %2209 = vmatprep.subr.bf16.mxu0 0
        %2210 = vmatpush1.bf16.msra.mxu0 0
        %2211 = vmatprep.subr.bf16.mxu0 0
        %2212 = vmatpush1.bf16.msra.mxu0 0
        %2213 = vmatprep.subr.bf16.mxu0 0
        %2214 = vmatpush1.bf16.msra.mxu0 0
        %2215 = vmatprep.subr.bf16.mxu0 0
        %2216 = vmatpush1.bf16.msra.mxu0 0
        %2217 = vmatprep.subr.bf16.mxu0 0
        %2218 = vmatpush1.bf16.msra.mxu0 0
        %2219 = vmatprep.subr.bf16.mxu0 0
        %2220 = vmatpush1.bf16.msra.mxu0 %v2203
        %2221 = vmatprep.subr.bf16.mxu0 0
        %2222 = vmatpush2.bf16.msra.mxu0 0
        %2223 = vmatprep.subr.bf16.mxu0 0
        %2224 = vmatpush2.bf16.msra.mxu0 0
        %2225 = vmatprep.subr.bf16.mxu0 0
        %2226 = vmatpush2.bf16.msra.mxu0 0
        %2227 = vmatprep.subr.bf16.mxu0 0
        %2228 = vmatpush2.bf16.msra.mxu0 0
        %2229 = vmatprep.subr.bf16.mxu0 0
        %2230 = vmatpush2.bf16.msra.mxu0 0
        %2231 = vmatprep.subr.bf16.mxu0 0
        %2232 = vmatpush2.bf16.msra.mxu0 0
        %2233 = vmatprep.subr.bf16.mxu0 0
        %2234 = vmatpush2.bf16.msra.mxu0 0
        %2235 = vmatprep.subr.bf16.mxu0 0
        %2236 = vmatpush2.bf16.msra.mxu0 0
        %2237 = vmatprep.mubr.bf16.mxu0 0
        %2238 = vmatmul.mubr.bf16.gmra.mxu0 %v2200
        %v2239 = vpop.f32.mrf.mxu0
        %v2240 = vadd.f32 0.0, %v2239
        %v2241 = vpop.f32.mrf.mxu0
        %v2242 = vpop.f32.mrf.mxu0
        %v2243 = vpop.f32.mrf.mxu0
        %2244 = vdwg.mxu0
        %v2245 = vadd.f32 %v2130, %v2240
        %v2246 = vmul.f32 %v1903, %v1027
        %v2247 = vpack.c.bf16 %v2246, %v2246
        %v2249 = vsel %vm1056, %v2247, 0
        %2251 = vmatprep.subr.bf16.mxu0 0
        %2252 = vmatpush1.bf16.xpose.msra.mxu0 0
        %2253 = vmatprep.subr.bf16.mxu0 0
        %2254 = vmatpush1.bf16.xpose.msra.mxu0 0
        %2255 = vmatprep.subr.bf16.mxu0 0
        %2256 = vmatpush1.bf16.xpose.msra.mxu0 0
        %2257 = vmatprep.subr.bf16.mxu0 0
        %2258 = vmatpush1.bf16.xpose.msra.mxu0 0
        %2259 = vmatprep.subr.bf16.mxu0 0
        %2260 = vmatpush1.bf16.xpose.msra.mxu0 0
        %2261 = vmatprep.subr.bf16.mxu0 0
        %2262 = vmatpush1.bf16.xpose.msra.mxu0 0
        %2263 = vmatprep.subr.bf16.mxu0 0
        %2264 = vmatpush1.bf16.xpose.msra.mxu0 0
        %2265 = vmatprep.subr.bf16.mxu0 0
        %2266 = vmatpush1.bf16.xpose.msra.mxu0 %v1918
        %2267 = vmatprep.subr.bf16.mxu0 0
        %2268 = vmatpush2.bf16.xpose.msra.mxu0 0
        %2269 = vmatprep.subr.bf16.mxu0 0
        %2270 = vmatpush2.bf16.xpose.msra.mxu0 0
        %2271 = vmatprep.subr.bf16.mxu0 0
        %2272 = vmatpush2.bf16.xpose.msra.mxu0 0
        %2273 = vmatprep.subr.bf16.mxu0 0
        %2274 = vmatpush2.bf16.xpose.msra.mxu0 0
        %2275 = vmatprep.subr.bf16.mxu0 0
        %2276 = vmatpush2.bf16.xpose.msra.mxu0 0
        %2277 = vmatprep.subr.bf16.mxu0 0
        %2278 = vmatpush2.bf16.xpose.msra.mxu0 0
        %2279 = vmatprep.subr.bf16.mxu0 0
        %2280 = vmatpush2.bf16.xpose.msra.mxu0 0
        %2281 = vmatprep.subr.bf16.mxu0 0
        %2282 = vmatpush2.bf16.xpose.msra.mxu0 0
        %2283 = vmatprep.mubr.bf16.mxu0 0
        %2284 = vmatmul.mubr.bf16.gmra.mxu0 %v2249
        %v2285 = vpop.f32.mrf.mxu0
        %v2286 = vadd.f32 0.0, %v2285
        %v2287 = vpop.f32.mrf.mxu0
        %v2288 = vpop.f32.mrf.mxu0
        %v2289 = vpop.f32.mrf.mxu0
        %2290 = vdwg.mxu0
        %v2291 = vmul.f32 %v2286, 0.35355338
        %v2292 = vadd.f32 %v2291, %v1028
        %v2293 = vsel %vm1154, %v2292, -inf
        %2294 = vmax.xlane.f32.xlu0 %v2293
        %v2295 = vpop.xlane.xlu0 %2294
        %v2296 = vsub.f32 %v2292, %v2295
        %v2297 = vmul.f32 %v2296, 1.442695
        %v2298 = vpow.pop %v2297
        %v2299 = vsel %vm1154, %v2298, 0.0
        %2300 = vadd.xlane.f32.xlu0 %v2299
        %v2301 = vpop.xlane.xlu0 %2300
        %v2302 = vrcp.pop %v2301
        %v2303 = vmul.f32 %v2298, %v2302
        %v2304 = vpack.c.bf16 %v2303, %v2303
        %v2305 = vmul.f32 %v1903, %v1513
        %v2306 = vpack.c.bf16 %v2305, %v2305
        %2308 = vrot.lane.b32.xlu0 %v2306, 64
        %v2309 = vpop.permute.xlu0 %2308
        %v2311 = vsel %vm1154, %v2304, 0
        %v2314 = vsel %vm1244, %v2309, 0
        %2316 = vmatprep.subr.bf16.mxu0 0
        %2317 = vmatpush1.bf16.msra.mxu0 0
        %2318 = vmatprep.subr.bf16.mxu0 0
        %2319 = vmatpush1.bf16.msra.mxu0 0
        %2320 = vmatprep.subr.bf16.mxu0 0
        %2321 = vmatpush1.bf16.msra.mxu0 0
        %2322 = vmatprep.subr.bf16.mxu0 0
        %2323 = vmatpush1.bf16.msra.mxu0 0
        %2324 = vmatprep.subr.bf16.mxu0 0
        %2325 = vmatpush1.bf16.msra.mxu0 0
        %2326 = vmatprep.subr.bf16.mxu0 0
        %2327 = vmatpush1.bf16.msra.mxu0 0
        %2328 = vmatprep.subr.bf16.mxu0 0
        %2329 = vmatpush1.bf16.msra.mxu0 0
        %2330 = vmatprep.subr.bf16.mxu0 0
        %2331 = vmatpush1.bf16.msra.mxu0 %v2314
        %2332 = vmatprep.subr.bf16.mxu0 0
        %2333 = vmatpush2.bf16.msra.mxu0 0
        %2334 = vmatprep.subr.bf16.mxu0 0
        %2335 = vmatpush2.bf16.msra.mxu0 0
        %2336 = vmatprep.subr.bf16.mxu0 0
        %2337 = vmatpush2.bf16.msra.mxu0 0
        %2338 = vmatprep.subr.bf16.mxu0 0
        %2339 = vmatpush2.bf16.msra.mxu0 0
        %2340 = vmatprep.subr.bf16.mxu0 0
        %2341 = vmatpush2.bf16.msra.mxu0 0
        %2342 = vmatprep.subr.bf16.mxu0 0
        %2343 = vmatpush2.bf16.msra.mxu0 0
        %2344 = vmatprep.subr.bf16.mxu0 0
        %2345 = vmatpush2.bf16.msra.mxu0 0
        %2346 = vmatprep.subr.bf16.mxu0 0
        %2347 = vmatpush2.bf16.msra.mxu0 0
        %2348 = vmatprep.mubr.bf16.mxu0 0
        %2349 = vmatmul.mubr.bf16.gmra.mxu0 %v2311
        %v2350 = vpop.f32.mrf.mxu0
        %v2351 = vadd.f32 0.0, %v2350
        %v2352 = vpop.f32.mrf.mxu0
        %v2353 = vpop.f32.mrf.mxu0
        %v2354 = vpop.f32.mrf.mxu0
        %2355 = vdwg.mxu0
        %v2356 = vadd.f32 %v2245, %v2351
        %s2357 = scalar_lea.vmem %s15, 16
        %v2358 = vld [vmem:[%s2357] sm:$0xf]
        %v2359 = vld [vmem:[%s2357 + $0x4] sm:$0xf]
        %v2360 = vld [vmem:[%s2357 + $0x8] sm:$0xf]
        %v2361 = vld [vmem:[%s2357 + $0xc] sm:$0xf]
        %v2362 = vpack.c.bf16 %v2356, %v2356
        %s2363 = scalar_lea.vmem %s17, 1
        %v2364 = vld [vmem:[%s2363] sm:$0x1]
        %v2366 = vlaneseq
        %v2367 = vshrl.u32 %v2366, 7
        %v2368 = vsub.s32 0, %v2367
        %v2369 = vrot.slane %v2364, %v2368
        %v2375 = vunpack.c.l.b16 %v2358
        %v2376 = vunpack.c.l.b16 %v2359
        %v2377 = vunpack.c.l.b16 %v2360
        %v2378 = vunpack.c.l.b16 %v2361
        %v2379 = vpack.c.b16 %v2376, %v2375
        %v2380 = vpack.c.b16 %v2378, %v2377
        %v2384 = vsel %vm1056, %v2362, 0
        %2386 = vmatprep.subr.bf16.mxu0 0
        %2387 = vmatpush1.bf16.msra.mxu0 0
        %2388 = vmatprep.subr.bf16.mxu0 0
        %2389 = vmatpush1.bf16.msra.mxu0 0
        %2390 = vmatprep.subr.bf16.mxu0 0
        %2391 = vmatpush1.bf16.msra.mxu0 0
        %2392 = vmatprep.subr.bf16.mxu0 0
        %2393 = vmatpush1.bf16.msra.mxu0 0
        %2394 = vmatprep.subr.bf16.mxu0 0
        %2395 = vmatpush1.bf16.msra.mxu0 0
        %2396 = vmatprep.subr.bf16.mxu0 0
        %2397 = vmatpush1.bf16.msra.mxu0 0
        %2398 = vmatprep.subr.bf16.mxu0 0
        %2399 = vmatpush1.bf16.msra.mxu0 %v2380
        %2400 = vmatprep.subr.bf16.mxu0 0
        %2401 = vmatpush1.bf16.msra.mxu0 %v2379
        %2402 = vmatprep.subr.bf16.mxu0 0
        %2403 = vmatpush2.bf16.msra.mxu0 0
        %2404 = vmatprep.subr.bf16.mxu0 0
        %2405 = vmatpush2.bf16.msra.mxu0 0
        %2406 = vmatprep.subr.bf16.mxu0 0
        %2407 = vmatpush2.bf16.msra.mxu0 0
        %2408 = vmatprep.subr.bf16.mxu0 0
        %2409 = vmatpush2.bf16.msra.mxu0 0
        %2410 = vmatprep.subr.bf16.mxu0 0
        %2411 = vmatpush2.bf16.msra.mxu0 0
        %2412 = vmatprep.subr.bf16.mxu0 0
        %2413 = vmatpush2.bf16.msra.mxu0 0
        %2414 = vmatprep.subr.bf16.mxu0 0
        %2415 = vmatpush2.bf16.msra.mxu0 0
        %2416 = vmatprep.subr.bf16.mxu0 0
        %2417 = vmatpush2.bf16.msra.mxu0 0
        %2418 = vmatprep.mubr.bf16.mxu0 0
        %2419 = vmatmul.mubr.bf16.gmra.mxu0 %v2384
        %v2420 = vpop.f32.mrf.mxu0
        %v2421 = vadd.f32 %v2369, %v2420
        %v2422 = vpop.f32.mrf.mxu0
        %v2423 = vpop.f32.mrf.mxu0
        %v2424 = vpop.f32.mrf.mxu0
        %2425 = vdwg.mxu0
        %v2426 = vadd.f32 %v1838, %v2421
        %s2427 = scalar_lea.vmem %s27, 4
        %v2428 = vld [vmem:[%s2427] sm:$0x1]
        %v2429 = vld [vmem:[%s2427 + $0x1] sm:$0x1]
        %v2430 = vsel %vm1056, %v2426, 0.0
        %2431 = vadd.xlane.f32.xlu0 %v2430
        %v2432 = vpop.xlane.xlu0 %2431
        %v2433 = vmul.f32 %v2432, %v1640
        %v2434 = vsub.f32 %v2426, %v2433
        %v2435 = vmul.f32 %v2434, %v2434
        %v2436 = vsel %vm1056, %v2435, 0.0
        %2437 = vadd.xlane.f32.xlu0 %v2436
        %v2438 = vpop.xlane.xlu0 %2437
        %v2439 = vmul.f32 %v2438, %v1640
        %v2440 = vadd.f32 %v2439, 1e-05
        %v2441 = vrsqrt.pop %v2440
        %v2442 = vmul.f32 %v2434, %v2441
        %v2443 = vlaneseq
        %v2444 = vshrl.u32 %v2443, 7
        %v2445 = vsub.s32 0, %v2444
        %v2446 = vrot.slane %v2428, %v2445
        %v2447 = vmul.f32 %v2442, %v2446
        %v2448 = vlaneseq
        %v2449 = vshrl.u32 %v2448, 7
        %v2450 = vsub.s32 0, %v2449
        %v2451 = vrot.slane %v2429, %v2450
        %v2452 = vadd.f32 %v2447, %v2451
        %s2453 = scalar_lea.vmem %s19, 16
        %v2454 = vld [vmem:[%s2453] sm:$0xf]
        %v2455 = vld [vmem:[%s2453 + $0x4] sm:$0xf]
        %v2456 = vld [vmem:[%s2453 + $0x8] sm:$0xf]
        %v2457 = vld [vmem:[%s2453 + $0xc] sm:$0xf]
        %v2458 = vpack.c.bf16 %v2452, %v2452
        %s2459 = scalar_lea.vmem %s21, 1
        %v2460 = vld [vmem:[%s2459] sm:$0x1]
        %v2462 = vlaneseq
        %v2463 = vshrl.u32 %v2462, 7
        %v2464 = vsub.s32 0, %v2463
        %v2465 = vrot.slane %v2460, %v2464
        %v2471 = vunpack.c.l.b16 %v2454
        %v2472 = vunpack.c.l.b16 %v2455
        %v2473 = vunpack.c.l.b16 %v2456
        %v2474 = vunpack.c.l.b16 %v2457
        %v2475 = vpack.c.b16 %v2472, %v2471
        %v2476 = vpack.c.b16 %v2474, %v2473
        %v2480 = vsel %vm1056, %v2458, 0
        %2482 = vmatprep.subr.bf16.mxu0 0
        %2483 = vmatpush1.bf16.msra.mxu0 0
        %2484 = vmatprep.subr.bf16.mxu0 0
        %2485 = vmatpush1.bf16.msra.mxu0 0
        %2486 = vmatprep.subr.bf16.mxu0 0
        %2487 = vmatpush1.bf16.msra.mxu0 0
        %2488 = vmatprep.subr.bf16.mxu0 0
        %2489 = vmatpush1.bf16.msra.mxu0 0
        %2490 = vmatprep.subr.bf16.mxu0 0
        %2491 = vmatpush1.bf16.msra.mxu0 0
        %2492 = vmatprep.subr.bf16.mxu0 0
        %2493 = vmatpush1.bf16.msra.mxu0 0
        %2494 = vmatprep.subr.bf16.mxu0 0
        %2495 = vmatpush1.bf16.msra.mxu0 %v2476
        %2496 = vmatprep.subr.bf16.mxu0 0
        %2497 = vmatpush1.bf16.msra.mxu0 %v2475
        %2498 = vmatprep.subr.bf16.mxu0 0
        %2499 = vmatpush2.bf16.msra.mxu0 0
        %2500 = vmatprep.subr.bf16.mxu0 0
        %2501 = vmatpush2.bf16.msra.mxu0 0
        %2502 = vmatprep.subr.bf16.mxu0 0
        %2503 = vmatpush2.bf16.msra.mxu0 0
        %2504 = vmatprep.subr.bf16.mxu0 0
        %2505 = vmatpush2.bf16.msra.mxu0 0
        %2506 = vmatprep.subr.bf16.mxu0 0
        %2507 = vmatpush2.bf16.msra.mxu0 0
        %2508 = vmatprep.subr.bf16.mxu0 0
        %2509 = vmatpush2.bf16.msra.mxu0 0
        %2510 = vmatprep.subr.bf16.mxu0 0
        %2511 = vmatpush2.bf16.msra.mxu0 0
        %2512 = vmatprep.subr.bf16.mxu0 0
        %2513 = vmatpush2.bf16.msra.mxu0 0
        %2514 = vmatprep.mubr.bf16.mxu0 0
        %2515 = vmatmul.mubr.bf16.gmra.mxu0 %v2480
        %v2516 = vpop.f32.mrf.mxu0
        %v2517 = vadd.f32 %v2465, %v2516
        %v2518 = vpop.f32.mrf.mxu0
        %v2519 = vpop.f32.mrf.mxu0
        %v2520 = vpop.f32.mrf.mxu0
        %2521 = vdwg.mxu0
        %v2522 = vmax.f32 %v2517, 0.0
        %s2523 = scalar_lea.vmem %s23, 32
        %v2524 = vld [vmem:[%s2523] sm:$0xf]
        %v2525 = vld [vmem:[%s2523 + $0x4] sm:$0xf]
        %v2526 = vld [vmem:[%s2523 + $0x8] sm:$0xf]
        %v2527 = vld [vmem:[%s2523 + $0xc] sm:$0xf]
        %v2528 = vld [vmem:[%s2523 + $0x10] sm:$0xf]
        %v2529 = vld [vmem:[%s2523 + $0x14] sm:$0xf]
        %v2530 = vld [vmem:[%s2523 + $0x18] sm:$0xf]
        %v2531 = vld [vmem:[%s2523 + $0x1c] sm:$0xf]
        %v2532 = vpack.c.bf16 %v2522, %v2522
        %s2533 = scalar_lea.vmem %s25, 1
        %v2534 = vld [vmem:[%s2533] sm:$0x1]
        %v2536 = vlaneseq
        %v2537 = vshrl.u32 %v2536, 7
        %v2538 = vsub.s32 0, %v2537
        %v2539 = vrot.slane %v2534, %v2538
        %v2549 = vunpack.c.l.b16 %v2524
        %v2550 = vunpack.c.l.b16 %v2525
        %v2551 = vunpack.c.l.b16 %v2526
        %v2552 = vunpack.c.l.b16 %v2527
        %v2553 = vunpack.c.l.b16 %v2528
        %v2554 = vunpack.c.l.b16 %v2529
        %v2555 = vunpack.c.l.b16 %v2530
        %v2556 = vunpack.c.l.b16 %v2531
        %v2557 = vpack.c.b16 %v2550, %v2549
        %v2558 = vpack.c.b16 %v2552, %v2551
        %v2559 = vpack.c.b16 %v2554, %v2553
        %v2560 = vpack.c.b16 %v2556, %v2555
        %v2566 = vsel %vm1769, %v2532, 0
        %2568 = vmatprep.subr.bf16.mxu0 0
        %2569 = vmatpush1.bf16.msra.mxu0 0
        %2570 = vmatprep.subr.bf16.mxu0 0
        %2571 = vmatpush1.bf16.msra.mxu0 0
        %2572 = vmatprep.subr.bf16.mxu0 0
        %2573 = vmatpush1.bf16.msra.mxu0 0
        %2574 = vmatprep.subr.bf16.mxu0 0
        %2575 = vmatpush1.bf16.msra.mxu0 0
        %2576 = vmatprep.subr.bf16.mxu0 0
        %2577 = vmatpush1.bf16.msra.mxu0 %v2560
        %2578 = vmatprep.subr.bf16.mxu0 0
        %2579 = vmatpush1.bf16.msra.mxu0 %v2559
        %2580 = vmatprep.subr.bf16.mxu0 0
        %2581 = vmatpush1.bf16.msra.mxu0 %v2558
        %2582 = vmatprep.subr.bf16.mxu0 0
        %2583 = vmatpush1.bf16.msra.mxu0 %v2557
        %2584 = vmatprep.subr.bf16.mxu0 0
        %2585 = vmatpush2.bf16.msra.mxu0 0
        %2586 = vmatprep.subr.bf16.mxu0 0
        %2587 = vmatpush2.bf16.msra.mxu0 0
        %2588 = vmatprep.subr.bf16.mxu0 0
        %2589 = vmatpush2.bf16.msra.mxu0 0
        %2590 = vmatprep.subr.bf16.mxu0 0
        %2591 = vmatpush2.bf16.msra.mxu0 0
        %2592 = vmatprep.subr.bf16.mxu0 0
        %2593 = vmatpush2.bf16.msra.mxu0 0
        %2594 = vmatprep.subr.bf16.mxu0 0
        %2595 = vmatpush2.bf16.msra.mxu0 0
        %2596 = vmatprep.subr.bf16.mxu0 0
        %2597 = vmatpush2.bf16.msra.mxu0 0
        %2598 = vmatprep.subr.bf16.mxu0 0
        %2599 = vmatpush2.bf16.msra.mxu0 0
        %2600 = vmatprep.mubr.bf16.mxu0 0
        %2601 = vmatmul.mubr.bf16.gmra.mxu0 %v2566
        %v2602 = vpop.f32.mrf.mxu0
        %v2603 = vadd.f32 %v2539, %v2602
        %v2604 = vpop.f32.mrf.mxu0
        %v2605 = vpop.f32.mrf.mxu0
        %v2606 = vpop.f32.mrf.mxu0
        %2607 = vdwg.mxu0
        %v2608 = vadd.f32 %v2452, %v2603
        %v2609 = vld [vmem:[%s2427 + $0x2] sm:$0x1]
        %v2610 = vld [vmem:[%s2427 + $0x3] sm:$0x1]
        %v2611 = vsel %vm1056, %v2608, 0.0
        %2612 = vadd.xlane.f32.xlu0 %v2611
        %v2613 = vpop.xlane.xlu0 %2612
        %v2614 = vmul.f32 %v2613, %v1640
        %v2615 = vsub.f32 %v2608, %v2614
        %v2616 = vmul.f32 %v2615, %v2615
        %v2617 = vsel %vm1056, %v2616, 0.0
        %2618 = vadd.xlane.f32.xlu0 %v2617
        %v2619 = vpop.xlane.xlu0 %2618
        %v2620 = vmul.f32 %v2619, %v1640
        %v2621 = vadd.f32 %v2620, 1e-05
        %v2622 = vrsqrt.pop %v2621
        %v2623 = vmul.f32 %v2615, %v2622
        %v2624 = vlaneseq
        %v2625 = vshrl.u32 %v2624, 7
        %v2626 = vsub.s32 0, %v2625
        %v2627 = vrot.slane %v2609, %v2626
        %v2628 = vmul.f32 %v2623, %v2627
        %v2629 = vlaneseq
        %v2630 = vshrl.u32 %v2629, 7
        %v2631 = vsub.s32 0, %v2630
        %v2632 = vrot.slane %v2610, %v2631
        %v2633 = vadd.f32 %v2628, %v2632
        %2634 = vst.msk [vmem:[%s977] sm:$0xff] %vm1056, %v2633
        %v2635 = vld [vmem:[%s992] sm:$0xff]
        %v2636 = vld [vmem:[%s29] sm:$0xf]
        %v2637 = vld [vmem:[%s29 + $0x4] sm:$0xf]
        %v2638 = vld [vmem:[%s29 + $0x8] sm:$0xf]
        %v2639 = vld [vmem:[%s29 + $0xc] sm:$0xf]
        %v2640 = vpack.c.bf16 %v2635, %v2635
        %v2641 = vld [vmem:[%s31] sm:$0x1]
        %v2643 = vlaneseq
        %v2644 = vshrl.u32 %v2643, 7
        %v2645 = vsub.s32 0, %v2644
        %v2646 = vrot.slane %v2641, %v2645
        %v2652 = vunpack.c.l.b16 %v2636
        %v2653 = vunpack.c.l.b16 %v2637
        %v2654 = vunpack.c.l.b16 %v2638
        %v2655 = vunpack.c.l.b16 %v2639
        %v2656 = vpack.c.b16 %v2653, %v2652
        %v2657 = vpack.c.b16 %v2655, %v2654
        %v2661 = vsel %vm1056, %v2640, 0
        %2663 = vmatprep.subr.bf16.mxu0 0
        %2664 = vmatpush1.bf16.msra.mxu0 0
        %2665 = vmatprep.subr.bf16.mxu0 0
        %2666 = vmatpush1.bf16.msra.mxu0 0
        %2667 = vmatprep.subr.bf16.mxu0 0
        %2668 = vmatpush1.bf16.msra.mxu0 0
        %2669 = vmatprep.subr.bf16.mxu0 0
        %2670 = vmatpush1.bf16.msra.mxu0 0
        %2671 = vmatprep.subr.bf16.mxu0 0
        %2672 = vmatpush1.bf16.msra.mxu0 0
        %2673 = vmatprep.subr.bf16.mxu0 0
        %2674 = vmatpush1.bf16.msra.mxu0 0
        %2675 = vmatprep.subr.bf16.mxu0 0
        %2676 = vmatpush1.bf16.msra.mxu0 %v2657
        %2677 = vmatprep.subr.bf16.mxu0 0
        %2678 = vmatpush1.bf16.msra.mxu0 %v2656
        %2679 = vmatprep.subr.bf16.mxu0 0
        %2680 = vmatpush2.bf16.msra.mxu0 0
        %2681 = vmatprep.subr.bf16.mxu0 0
        %2682 = vmatpush2.bf16.msra.mxu0 0
        %2683 = vmatprep.subr.bf16.mxu0 0
        %2684 = vmatpush2.bf16.msra.mxu0 0
        %2685 = vmatprep.subr.bf16.mxu0 0
        %2686 = vmatpush2.bf16.msra.mxu0 0
        %2687 = vmatprep.subr.bf16.mxu0 0
        %2688 = vmatpush2.bf16.msra.mxu0 0
        %2689 = vmatprep.subr.bf16.mxu0 0
        %2690 = vmatpush2.bf16.msra.mxu0 0
        %2691 = vmatprep.subr.bf16.mxu0 0
        %2692 = vmatpush2.bf16.msra.mxu0 0
        %2693 = vmatprep.subr.bf16.mxu0 0
        %2694 = vmatpush2.bf16.msra.mxu0 0
        %2695 = vmatprep.mubr.bf16.mxu0 0
        %2696 = vmatmul.mubr.bf16.gmra.mxu0 %v2661
        %v2697 = vpop.f32.mrf.mxu0
        %v2698 = vadd.f32 %v2646, %v2697
        %v2699 = vpop.f32.mrf.mxu0
        %v2700 = vpop.f32.mrf.mxu0
        %v2701 = vpop.f32.mrf.mxu0
        %2702 = vdwg.mxu0
        %v2703 = vpack.c.bf16 %v2698, %v2698
        %v2704 = vmul.f32 %v2698, %v1012
        %v2705 = vpack.c.bf16 %v2704, %v2704
        %2707 = vrot.lane.b32.xlu0 %v2703, 96
        %v2708 = vpop.permute.xlu0 %2707
        %v2710 = vsel %vm1056, %v2705, 0
        %v2713 = vsel %vm1056, %v2708, 0
        %2715 = vmatprep.subr.bf16.mxu0 0
        %2716 = vmatpush1.bf16.xpose.msra.mxu0 0
        %2717 = vmatprep.subr.bf16.mxu0 0
        %2718 = vmatpush1.bf16.xpose.msra.mxu0 0
        %2719 = vmatprep.subr.bf16.mxu0 0
        %2720 = vmatpush1.bf16.xpose.msra.mxu0 0
        %2721 = vmatprep.subr.bf16.mxu0 0
        %2722 = vmatpush1.bf16.xpose.msra.mxu0 0
        %2723 = vmatprep.subr.bf16.mxu0 0
        %2724 = vmatpush1.bf16.xpose.msra.mxu0 0
        %2725 = vmatprep.subr.bf16.mxu0 0
        %2726 = vmatpush1.bf16.xpose.msra.mxu0 0
        %2727 = vmatprep.subr.bf16.mxu0 0
        %2728 = vmatpush1.bf16.xpose.msra.mxu0 0
        %2729 = vmatprep.subr.bf16.mxu0 0
        %2730 = vmatpush1.bf16.xpose.msra.mxu0 %v2713
        %2731 = vmatprep.subr.bf16.mxu0 0
        %2732 = vmatpush2.bf16.xpose.msra.mxu0 0
        %2733 = vmatprep.subr.bf16.mxu0 0
        %2734 = vmatpush2.bf16.xpose.msra.mxu0 0
        %2735 = vmatprep.subr.bf16.mxu0 0
        %2736 = vmatpush2.bf16.xpose.msra.mxu0 0
        %2737 = vmatprep.subr.bf16.mxu0 0
        %2738 = vmatpush2.bf16.xpose.msra.mxu0 0
        %2739 = vmatprep.subr.bf16.mxu0 0
        %2740 = vmatpush2.bf16.xpose.msra.mxu0 0
        %2741 = vmatprep.subr.bf16.mxu0 0
        %2742 = vmatpush2.bf16.xpose.msra.mxu0 0
        %2743 = vmatprep.subr.bf16.mxu0 0
        %2744 = vmatpush2.bf16.xpose.msra.mxu0 0
        %2745 = vmatprep.subr.bf16.mxu0 0
        %2746 = vmatpush2.bf16.xpose.msra.mxu0 0
        %2747 = vmatprep.mubr.bf16.mxu0 0
        %2748 = vmatmul.mubr.bf16.gmra.mxu0 %v2710
        %v2749 = vpop.f32.mrf.mxu0
        %v2750 = vadd.f32 0.0, %v2749
        %v2751 = vpop.f32.mrf.mxu0
        %v2752 = vpop.f32.mrf.mxu0
        %v2753 = vpop.f32.mrf.mxu0
        %2754 = vdwg.mxu0
        %v2755 = vmul.f32 %v2750, 0.35355338
        %v2756 = vadd.f32 %v2755, %v1029
        %v2757 = vsel %vm1154, %v2756, -inf
        %2758 = vmax.xlane.f32.xlu0 %v2757
        %v2759 = vpop.xlane.xlu0 %2758
        %v2760 = vsub.f32 %v2756, %v2759
        %v2761 = vmul.f32 %v2760, 1.442695
        %v2762 = vpow.pop %v2761
        %v2763 = vsel %vm1154, %v2762, 0.0
        %2764 = vadd.xlane.f32.xlu0 %v2763
        %v2765 = vpop.xlane.xlu0 %2764
        %v2766 = vrcp.pop %v2765
        %v2767 = vmul.f32 %v2762, %v2766
        %v2768 = vpack.c.bf16 %v2767, %v2767
        %v2769 = vmul.f32 %v2698, %v1169
        %v2770 = vpack.c.bf16 %v2769, %v2769
        %v2771 = vmul.f32 %v2698, %v1017
        %v2772 = vpack.c.bf16 %v2771, %v2771
        %v2774 = vsel %vm1056, %v2772, 0
        %2776 = vmatprep.subr.bf16.mxu0 0
        %2777 = vmatpush1.bf16.xpose.msra.mxu0 0
        %2778 = vmatprep.subr.bf16.mxu0 0
        %2779 = vmatpush1.bf16.xpose.msra.mxu0 0
        %2780 = vmatprep.subr.bf16.mxu0 0
        %2781 = vmatpush1.bf16.xpose.msra.mxu0 0
        %2782 = vmatprep.subr.bf16.mxu0 0
        %2783 = vmatpush1.bf16.xpose.msra.mxu0 0
        %2784 = vmatprep.subr.bf16.mxu0 0
        %2785 = vmatpush1.bf16.xpose.msra.mxu0 0
        %2786 = vmatprep.subr.bf16.mxu0 0
        %2787 = vmatpush1.bf16.xpose.msra.mxu0 0
        %2788 = vmatprep.subr.bf16.mxu0 0
        %2789 = vmatpush1.bf16.xpose.msra.mxu0 0
        %2790 = vmatprep.subr.bf16.mxu0 0
        %2791 = vmatpush1.bf16.xpose.msra.mxu0 %v2713
        %2792 = vmatprep.subr.bf16.mxu0 0
        %2793 = vmatpush2.bf16.xpose.msra.mxu0 0
        %2794 = vmatprep.subr.bf16.mxu0 0
        %2795 = vmatpush2.bf16.xpose.msra.mxu0 0
        %2796 = vmatprep.subr.bf16.mxu0 0
        %2797 = vmatpush2.bf16.xpose.msra.mxu0 0
        %2798 = vmatprep.subr.bf16.mxu0 0
        %2799 = vmatpush2.bf16.xpose.msra.mxu0 0
        %2800 = vmatprep.subr.bf16.mxu0 0
        %2801 = vmatpush2.bf16.xpose.msra.mxu0 0
        %2802 = vmatprep.subr.bf16.mxu0 0
        %2803 = vmatpush2.bf16.xpose.msra.mxu0 0
        %2804 = vmatprep.subr.bf16.mxu0 0
        %2805 = vmatpush2.bf16.xpose.msra.mxu0 0
        %2806 = vmatprep.subr.bf16.mxu0 0
        %2807 = vmatpush2.bf16.xpose.msra.mxu0 0
        %2808 = vmatprep.mubr.bf16.mxu0 0
        %2809 = vmatmul.mubr.bf16.gmra.mxu0 %v2774
        %v2810 = vpop.f32.mrf.mxu0
        %v2811 = vadd.f32 0.0, %v2810
        %v2812 = vpop.f32.mrf.mxu0
        %v2813 = vpop.f32.mrf.mxu0
        %v2814 = vpop.f32.mrf.mxu0
        %2815 = vdwg.mxu0
        %v2816 = vmul.f32 %v2811, 0.35355338
        %v2817 = vadd.f32 %v2816, %v1029
        %v2818 = vsel %vm1154, %v2817, -inf
        %2819 = vmax.xlane.f32.xlu0 %v2818
        %v2820 = vpop.xlane.xlu0 %2819
        %v2821 = vsub.f32 %v2817, %v2820
        %v2822 = vmul.f32 %v2821, 1.442695
        %v2823 = vpow.pop %v2822
        %v2824 = vsel %vm1154, %v2823, 0.0
        %2825 = vadd.xlane.f32.xlu0 %v2824
        %v2826 = vpop.xlane.xlu0 %2825
        %v2827 = vrcp.pop %v2826
        %v2828 = vmul.f32 %v2823, %v2827
        %v2829 = vpack.c.bf16 %v2828, %v2828
        %v2830 = vmul.f32 %v2698, %v1234
        %v2831 = vpack.c.bf16 %v2830, %v2830
        %2833 = vrot.lane.b32.xlu0 %v2831, 64
        %v2834 = vpop.permute.xlu0 %2833
        %v2836 = vsel %vm1154, %v2829, 0
        %v2839 = vsel %vm1244, %v2834, 0
        %2841 = vmatprep.subr.bf16.mxu0 0
        %2842 = vmatpush1.bf16.msra.mxu0 0
        %2843 = vmatprep.subr.bf16.mxu0 0
        %2844 = vmatpush1.bf16.msra.mxu0 0
        %2845 = vmatprep.subr.bf16.mxu0 0
        %2846 = vmatpush1.bf16.msra.mxu0 0
        %2847 = vmatprep.subr.bf16.mxu0 0
        %2848 = vmatpush1.bf16.msra.mxu0 0
        %2849 = vmatprep.subr.bf16.mxu0 0
        %2850 = vmatpush1.bf16.msra.mxu0 0
        %2851 = vmatprep.subr.bf16.mxu0 0
        %2852 = vmatpush1.bf16.msra.mxu0 0
        %2853 = vmatprep.subr.bf16.mxu0 0
        %2854 = vmatpush1.bf16.msra.mxu0 0
        %2855 = vmatprep.subr.bf16.mxu0 0
        %2856 = vmatpush1.bf16.msra.mxu0 %v2839
        %2857 = vmatprep.subr.bf16.mxu0 0
        %2858 = vmatpush2.bf16.msra.mxu0 0
        %2859 = vmatprep.subr.bf16.mxu0 0
        %2860 = vmatpush2.bf16.msra.mxu0 0
        %2861 = vmatprep.subr.bf16.mxu0 0
        %2862 = vmatpush2.bf16.msra.mxu0 0
        %2863 = vmatprep.subr.bf16.mxu0 0
        %2864 = vmatpush2.bf16.msra.mxu0 0
        %2865 = vmatprep.subr.bf16.mxu0 0
        %2866 = vmatpush2.bf16.msra.mxu0 0
        %2867 = vmatprep.subr.bf16.mxu0 0
        %2868 = vmatpush2.bf16.msra.mxu0 0
        %2869 = vmatprep.subr.bf16.mxu0 0
        %2870 = vmatpush2.bf16.msra.mxu0 0
        %2871 = vmatprep.subr.bf16.mxu0 0
        %2872 = vmatpush2.bf16.msra.mxu0 0
        %2873 = vmatprep.mubr.bf16.mxu0 0
        %2874 = vmatmul.mubr.bf16.gmra.mxu0 %v2836
        %v2875 = vpop.f32.mrf.mxu0
        %v2876 = vadd.f32 0.0, %v2875
        %v2877 = vpop.f32.mrf.mxu0
        %v2878 = vpop.f32.mrf.mxu0
        %v2879 = vpop.f32.mrf.mxu0
        %2880 = vdwg.mxu0
        %2882 = vrot.lane.b32.xlu0 %v2770, 64
        %v2883 = vpop.permute.xlu0 %2882
        %v2885 = vsel %vm1154, %v2768, 0
        %v2888 = vsel %vm1244, %v2883, 0
        %2890 = vmatprep.subr.bf16.mxu0 0
        %2891 = vmatpush1.bf16.msra.mxu0 0
        %2892 = vmatprep.subr.bf16.mxu0 0
        %2893 = vmatpush1.bf16.msra.mxu0 0
        %2894 = vmatprep.subr.bf16.mxu0 0
        %2895 = vmatpush1.bf16.msra.mxu0 0
        %2896 = vmatprep.subr.bf16.mxu0 0
        %2897 = vmatpush1.bf16.msra.mxu0 0
        %2898 = vmatprep.subr.bf16.mxu0 0
        %2899 = vmatpush1.bf16.msra.mxu0 0
        %2900 = vmatprep.subr.bf16.mxu0 0
        %2901 = vmatpush1.bf16.msra.mxu0 0
        %2902 = vmatprep.subr.bf16.mxu0 0
        %2903 = vmatpush1.bf16.msra.mxu0 0
        %2904 = vmatprep.subr.bf16.mxu0 0
        %2905 = vmatpush1.bf16.msra.mxu0 %v2888
        %2906 = vmatprep.subr.bf16.mxu0 0
        %2907 = vmatpush2.bf16.msra.mxu0 0
        %2908 = vmatprep.subr.bf16.mxu0 0
        %2909 = vmatpush2.bf16.msra.mxu0 0
        %2910 = vmatprep.subr.bf16.mxu0 0
        %2911 = vmatpush2.bf16.msra.mxu0 0
        %2912 = vmatprep.subr.bf16.mxu0 0
        %2913 = vmatpush2.bf16.msra.mxu0 0
        %2914 = vmatprep.subr.bf16.mxu0 0
        %2915 = vmatpush2.bf16.msra.mxu0 0
        %2916 = vmatprep.subr.bf16.mxu0 0
        %2917 = vmatpush2.bf16.msra.mxu0 0
        %2918 = vmatprep.subr.bf16.mxu0 0
        %2919 = vmatpush2.bf16.msra.mxu0 0
        %2920 = vmatprep.subr.bf16.mxu0 0
        %2921 = vmatpush2.bf16.msra.mxu0 0
        %2922 = vmatprep.mubr.bf16.mxu0 0
        %2923 = vmatmul.mubr.bf16.gmra.mxu0 %v2885
        %v2924 = vpop.f32.mrf.mxu0
        %v2925 = vadd.f32 %v2876, %v2924
        %v2926 = vpop.f32.mrf.mxu0
        %v2927 = vpop.f32.mrf.mxu0
        %v2928 = vpop.f32.mrf.mxu0
        %2929 = vdwg.mxu0
        %v2930 = vmul.f32 %v2698, %v1022
        %v2931 = vpack.c.bf16 %v2930, %v2930
        %v2933 = vsel %vm1056, %v2931, 0
        %2935 = vmatprep.subr.bf16.mxu0 0
        %2936 = vmatpush1.bf16.xpose.msra.mxu0 0
        %2937 = vmatprep.subr.bf16.mxu0 0
        %2938 = vmatpush1.bf16.xpose.msra.mxu0 0
        %2939 = vmatprep.subr.bf16.mxu0 0
        %2940 = vmatpush1.bf16.xpose.msra.mxu0 0
        %2941 = vmatprep.subr.bf16.mxu0 0
        %2942 = vmatpush1.bf16.xpose.msra.mxu0 0
        %2943 = vmatprep.subr.bf16.mxu0 0
        %2944 = vmatpush1.bf16.xpose.msra.mxu0 0
        %2945 = vmatprep.subr.bf16.mxu0 0
        %2946 = vmatpush1.bf16.xpose.msra.mxu0 0
        %2947 = vmatprep.subr.bf16.mxu0 0
        %2948 = vmatpush1.bf16.xpose.msra.mxu0 0
        %2949 = vmatprep.subr.bf16.mxu0 0
        %2950 = vmatpush1.bf16.xpose.msra.mxu0 %v2713
        %2951 = vmatprep.subr.bf16.mxu0 0
        %2952 = vmatpush2.bf16.xpose.msra.mxu0 0
        %2953 = vmatprep.subr.bf16.mxu0 0
        %2954 = vmatpush2.bf16.xpose.msra.mxu0 0
        %2955 = vmatprep.subr.bf16.mxu0 0
        %2956 = vmatpush2.bf16.xpose.msra.mxu0 0
        %2957 = vmatprep.subr.bf16.mxu0 0
        %2958 = vmatpush2.bf16.xpose.msra.mxu0 0
        %2959 = vmatprep.subr.bf16.mxu0 0
        %2960 = vmatpush2.bf16.xpose.msra.mxu0 0
        %2961 = vmatprep.subr.bf16.mxu0 0
        %2962 = vmatpush2.bf16.xpose.msra.mxu0 0
        %2963 = vmatprep.subr.bf16.mxu0 0
        %2964 = vmatpush2.bf16.xpose.msra.mxu0 0
        %2965 = vmatprep.subr.bf16.mxu0 0
        %2966 = vmatpush2.bf16.xpose.msra.mxu0 0
        %2967 = vmatprep.mubr.bf16.mxu0 0
        %2968 = vmatmul.mubr.bf16.gmra.mxu0 %v2933
        %v2969 = vpop.f32.mrf.mxu0
        %v2970 = vadd.f32 0.0, %v2969
        %v2971 = vpop.f32.mrf.mxu0
        %v2972 = vpop.f32.mrf.mxu0
        %v2973 = vpop.f32.mrf.mxu0
        %2974 = vdwg.mxu0
        %v2975 = vmul.f32 %v2970, 0.35355338
        %v2976 = vadd.f32 %v2975, %v1029
        %v2977 = vsel %vm1154, %v2976, -inf
        %2978 = vmax.xlane.f32.xlu0 %v2977
        %v2979 = vpop.xlane.xlu0 %2978
        %v2980 = vsub.f32 %v2976, %v2979
        %v2981 = vmul.f32 %v2980, 1.442695
        %v2982 = vpow.pop %v2981
        %v2983 = vsel %vm1154, %v2982, 0.0
        %2984 = vadd.xlane.f32.xlu0 %v2983
        %v2985 = vpop.xlane.xlu0 %2984
        %v2986 = vrcp.pop %v2985
        %v2987 = vmul.f32 %v2982, %v2986
        %v2988 = vpack.c.bf16 %v2987, %v2987
        %v2989 = vmul.f32 %v2698, %v1398
        %v2990 = vpack.c.bf16 %v2989, %v2989
        %2992 = vrot.lane.b32.xlu0 %v2990, 64
        %v2993 = vpop.permute.xlu0 %2992
        %v2995 = vsel %vm1154, %v2988, 0
        %v2998 = vsel %vm1244, %v2993, 0
        %3000 = vmatprep.subr.bf16.mxu0 0
        %3001 = vmatpush1.bf16.msra.mxu0 0
        %3002 = vmatprep.subr.bf16.mxu0 0
        %3003 = vmatpush1.bf16.msra.mxu0 0
        %3004 = vmatprep.subr.bf16.mxu0 0
        %3005 = vmatpush1.bf16.msra.mxu0 0
        %3006 = vmatprep.subr.bf16.mxu0 0
        %3007 = vmatpush1.bf16.msra.mxu0 0
        %3008 = vmatprep.subr.bf16.mxu0 0
        %3009 = vmatpush1.bf16.msra.mxu0 0
        %3010 = vmatprep.subr.bf16.mxu0 0
        %3011 = vmatpush1.bf16.msra.mxu0 0
        %3012 = vmatprep.subr.bf16.mxu0 0
        %3013 = vmatpush1.bf16.msra.mxu0 0
        %3014 = vmatprep.subr.bf16.mxu0 0
        %3015 = vmatpush1.bf16.msra.mxu0 %v2998
        %3016 = vmatprep.subr.bf16.mxu0 0
        %3017 = vmatpush2.bf16.msra.mxu0 0
        %3018 = vmatprep.subr.bf16.mxu0 0
        %3019 = vmatpush2.bf16.msra.mxu0 0
        %3020 = vmatprep.subr.bf16.mxu0 0
        %3021 = vmatpush2.bf16.msra.mxu0 0
        %3022 = vmatprep.subr.bf16.mxu0 0
        %3023 = vmatpush2.bf16.msra.mxu0 0
        %3024 = vmatprep.subr.bf16.mxu0 0
        %3025 = vmatpush2.bf16.msra.mxu0 0
        %3026 = vmatprep.subr.bf16.mxu0 0
        %3027 = vmatpush2.bf16.msra.mxu0 0
        %3028 = vmatprep.subr.bf16.mxu0 0
        %3029 = vmatpush2.bf16.msra.mxu0 0
        %3030 = vmatprep.subr.bf16.mxu0 0
        %3031 = vmatpush2.bf16.msra.mxu0 0
        %3032 = vmatprep.mubr.bf16.mxu0 0
        %3033 = vmatmul.mubr.bf16.gmra.mxu0 %v2995
        %v3034 = vpop.f32.mrf.mxu0
        %v3035 = vadd.f32 0.0, %v3034
        %v3036 = vpop.f32.mrf.mxu0
        %v3037 = vpop.f32.mrf.mxu0
        %v3038 = vpop.f32.mrf.mxu0
        %3039 = vdwg.mxu0
        %v3040 = vadd.f32 %v2925, %v3035
        %v3041 = vmul.f32 %v2698, %v1027
        %v3042 = vpack.c.bf16 %v3041, %v3041
        %v3044 = vsel %vm1056, %v3042, 0
        %3046 = vmatprep.subr.bf16.mxu0 0
        %3047 = vmatpush1.bf16.xpose.msra.mxu0 0
        %3048 = vmatprep.subr.bf16.mxu0 0
        %3049 = vmatpush1.bf16.xpose.msra.mxu0 0
        %3050 = vmatprep.subr.bf16.mxu0 0
        %3051 = vmatpush1.bf16.xpose.msra.mxu0 0
        %3052 = vmatprep.subr.bf16.mxu0 0
        %3053 = vmatpush1.bf16.xpose.msra.mxu0 0
        %3054 = vmatprep.subr.bf16.mxu0 0
        %3055 = vmatpush1.bf16.xpose.msra.mxu0 0
        %3056 = vmatprep.subr.bf16.mxu0 0
        %3057 = vmatpush1.bf16.xpose.msra.mxu0 0
        %3058 = vmatprep.subr.bf16.mxu0 0
        %3059 = vmatpush1.bf16.xpose.msra.mxu0 0
        %3060 = vmatprep.subr.bf16.mxu0 0
        %3061 = vmatpush1.bf16.xpose.msra.mxu0 %v2713
        %3062 = vmatprep.subr.bf16.mxu0 0
        %3063 = vmatpush2.bf16.xpose.msra.mxu0 0
        %3064 = vmatprep.subr.bf16.mxu0 0
        %3065 = vmatpush2.bf16.xpose.msra.mxu0 0
        %3066 = vmatprep.subr.bf16.mxu0 0
        %3067 = vmatpush2.bf16.xpose.msra.mxu0 0
        %3068 = vmatprep.subr.bf16.mxu0 0
        %3069 = vmatpush2.bf16.xpose.msra.mxu0 0
        %3070 = vmatprep.subr.bf16.mxu0 0
        %3071 = vmatpush2.bf16.xpose.msra.mxu0 0
        %3072 = vmatprep.subr.bf16.mxu0 0
        %3073 = vmatpush2.bf16.xpose.msra.mxu0 0
        %3074 = vmatprep.subr.bf16.mxu0 0
        %3075 = vmatpush2.bf16.xpose.msra.mxu0 0
        %3076 = vmatprep.subr.bf16.mxu0 0
        %3077 = vmatpush2.bf16.xpose.msra.mxu0 0
        %3078 = vmatprep.mubr.bf16.mxu0 0
        %3079 = vmatmul.mubr.bf16.gmra.mxu0 %v3044
        %v3080 = vpop.f32.mrf.mxu0
        %v3081 = vadd.f32 0.0, %v3080
        %v3082 = vpop.f32.mrf.mxu0
        %v3083 = vpop.f32.mrf.mxu0
        %v3084 = vpop.f32.mrf.mxu0
        %3085 = vdwg.mxu0
        %v3086 = vmul.f32 %v3081, 0.35355338
        %v3087 = vadd.f32 %v3086, %v1029
        %v3088 = vsel %vm1154, %v3087, -inf
        %3089 = vmax.xlane.f32.xlu0 %v3088
        %v3090 = vpop.xlane.xlu0 %3089
        %v3091 = vsub.f32 %v3087, %v3090
        %v3092 = vmul.f32 %v3091, 1.442695
        %v3093 = vpow.pop %v3092
        %v3094 = vsel %vm1154, %v3093, 0.0
        %3095 = vadd.xlane.f32.xlu0 %v3094
        %v3096 = vpop.xlane.xlu0 %3095
        %v3097 = vrcp.pop %v3096
        %v3098 = vmul.f32 %v3093, %v3097
        %v3099 = vpack.c.bf16 %v3098, %v3098
        %v3100 = vmul.f32 %v2698, %v1513
        %v3101 = vpack.c.bf16 %v3100, %v3100
        %3103 = vrot.lane.b32.xlu0 %v3101, 64
        %v3104 = vpop.permute.xlu0 %3103
        %v3106 = vsel %vm1154, %v3099, 0
        %v3109 = vsel %vm1244, %v3104, 0
        %3111 = vmatprep.subr.bf16.mxu0 0
        %3112 = vmatpush1.bf16.msra.mxu0 0
        %3113 = vmatprep.subr.bf16.mxu0 0
        %3114 = vmatpush1.bf16.msra.mxu0 0
        %3115 = vmatprep.subr.bf16.mxu0 0
        %3116 = vmatpush1.bf16.msra.mxu0 0
        %3117 = vmatprep.subr.bf16.mxu0 0
        %3118 = vmatpush1.bf16.msra.mxu0 0
        %3119 = vmatprep.subr.bf16.mxu0 0
        %3120 = vmatpush1.bf16.msra.mxu0 0
        %3121 = vmatprep.subr.bf16.mxu0 0
        %3122 = vmatpush1.bf16.msra.mxu0 0
        %3123 = vmatprep.subr.bf16.mxu0 0
        %3124 = vmatpush1.bf16.msra.mxu0 0
        %3125 = vmatprep.subr.bf16.mxu0 0
        %3126 = vmatpush1.bf16.msra.mxu0 %v3109
        %3127 = vmatprep.subr.bf16.mxu0 0
        %3128 = vmatpush2.bf16.msra.mxu0 0
        %3129 = vmatprep.subr.bf16.mxu0 0
        %3130 = vmatpush2.bf16.msra.mxu0 0
        %3131 = vmatprep.subr.bf16.mxu0 0
        %3132 = vmatpush2.bf16.msra.mxu0 0
        %3133 = vmatprep.subr.bf16.mxu0 0
        %3134 = vmatpush2.bf16.msra.mxu0 0
        %3135 = vmatprep.subr.bf16.mxu0 0
        %3136 = vmatpush2.bf16.msra.mxu0 0
        %3137 = vmatprep.subr.bf16.mxu0 0
        %3138 = vmatpush2.bf16.msra.mxu0 0
        %3139 = vmatprep.subr.bf16.mxu0 0
        %3140 = vmatpush2.bf16.msra.mxu0 0
        %3141 = vmatprep.subr.bf16.mxu0 0
        %3142 = vmatpush2.bf16.msra.mxu0 0
        %3143 = vmatprep.mubr.bf16.mxu0 0
        %3144 = vmatmul.mubr.bf16.gmra.mxu0 %v3106
        %v3145 = vpop.f32.mrf.mxu0
        %v3146 = vadd.f32 0.0, %v3145
        %v3147 = vpop.f32.mrf.mxu0
        %v3148 = vpop.f32.mrf.mxu0
        %v3149 = vpop.f32.mrf.mxu0
        %3150 = vdwg.mxu0
        %v3151 = vadd.f32 %v3040, %v3146
        %v3152 = vld [vmem:[%s33] sm:$0xf]
        %v3153 = vld [vmem:[%s33 + $0x4] sm:$0xf]
        %v3154 = vld [vmem:[%s33 + $0x8] sm:$0xf]
        %v3155 = vld [vmem:[%s33 + $0xc] sm:$0xf]
        %v3156 = vpack.c.bf16 %v3151, %v3151
        %v3157 = vld [vmem:[%s35] sm:$0x1]
        %v3159 = vlaneseq
        %v3160 = vshrl.u32 %v3159, 7
        %v3161 = vsub.s32 0, %v3160
        %v3162 = vrot.slane %v3157, %v3161
        %v3168 = vunpack.c.l.b16 %v3152
        %v3169 = vunpack.c.l.b16 %v3153
        %v3170 = vunpack.c.l.b16 %v3154
        %v3171 = vunpack.c.l.b16 %v3155
        %v3172 = vpack.c.b16 %v3169, %v3168
        %v3173 = vpack.c.b16 %v3171, %v3170
        %v3177 = vsel %vm1056, %v3156, 0
        %3179 = vmatprep.subr.bf16.mxu0 0
        %3180 = vmatpush1.bf16.msra.mxu0 0
        %3181 = vmatprep.subr.bf16.mxu0 0
        %3182 = vmatpush1.bf16.msra.mxu0 0
        %3183 = vmatprep.subr.bf16.mxu0 0
        %3184 = vmatpush1.bf16.msra.mxu0 0
        %3185 = vmatprep.subr.bf16.mxu0 0
        %3186 = vmatpush1.bf16.msra.mxu0 0
        %3187 = vmatprep.subr.bf16.mxu0 0
        %3188 = vmatpush1.bf16.msra.mxu0 0
        %3189 = vmatprep.subr.bf16.mxu0 0
        %3190 = vmatpush1.bf16.msra.mxu0 0
        %3191 = vmatprep.subr.bf16.mxu0 0
        %3192 = vmatpush1.bf16.msra.mxu0 %v3173
        %3193 = vmatprep.subr.bf16.mxu0 0
        %3194 = vmatpush1.bf16.msra.mxu0 %v3172
        %3195 = vmatprep.subr.bf16.mxu0 0
        %3196 = vmatpush2.bf16.msra.mxu0 0
        %3197 = vmatprep.subr.bf16.mxu0 0
        %3198 = vmatpush2.bf16.msra.mxu0 0
        %3199 = vmatprep.subr.bf16.mxu0 0
        %3200 = vmatpush2.bf16.msra.mxu0 0
        %3201 = vmatprep.subr.bf16.mxu0 0
        %3202 = vmatpush2.bf16.msra.mxu0 0
        %3203 = vmatprep.subr.bf16.mxu0 0
        %3204 = vmatpush2.bf16.msra.mxu0 0
        %3205 = vmatprep.subr.bf16.mxu0 0
        %3206 = vmatpush2.bf16.msra.mxu0 0
        %3207 = vmatprep.subr.bf16.mxu0 0
        %3208 = vmatpush2.bf16.msra.mxu0 0
        %3209 = vmatprep.subr.bf16.mxu0 0
        %3210 = vmatpush2.bf16.msra.mxu0 0
        %3211 = vmatprep.mubr.bf16.mxu0 0
        %3212 = vmatmul.mubr.bf16.gmra.mxu0 %v3177
        %v3213 = vpop.f32.mrf.mxu0
        %v3214 = vadd.f32 %v3162, %v3213
        %v3215 = vpop.f32.mrf.mxu0
        %v3216 = vpop.f32.mrf.mxu0
        %v3217 = vpop.f32.mrf.mxu0
        %3218 = vdwg.mxu0
        %v3219 = vadd.f32 %v2635, %v3214
        %v3220 = vld [vmem:[%s53] sm:$0x1]
        %v3221 = vld [vmem:[%s53 + $0x1] sm:$0x1]
        %v3222 = vsel %vm1056, %v3219, 0.0
        %3223 = vadd.xlane.f32.xlu0 %v3222
        %v3224 = vpop.xlane.xlu0 %3223
        %v3225 = vmul.f32 %v3224, %v1640
        %v3226 = vsub.f32 %v3219, %v3225
        %v3227 = vmul.f32 %v3226, %v3226
        %v3228 = vsel %vm1056, %v3227, 0.0
        %3229 = vadd.xlane.f32.xlu0 %v3228
        %v3230 = vpop.xlane.xlu0 %3229
        %v3231 = vmul.f32 %v3230, %v1640
        %v3232 = vadd.f32 %v3231, 1e-05
        %v3233 = vrsqrt.pop %v3232
        %v3234 = vmul.f32 %v3226, %v3233
        %v3235 = vlaneseq
        %v3236 = vshrl.u32 %v3235, 7
        %v3237 = vsub.s32 0, %v3236
        %v3238 = vrot.slane %v3220, %v3237
        %v3239 = vmul.f32 %v3234, %v3238
        %v3240 = vlaneseq
        %v3241 = vshrl.u32 %v3240, 7
        %v3242 = vsub.s32 0, %v3241
        %v3243 = vrot.slane %v3221, %v3242
        %v3244 = vadd.f32 %v3239, %v3243
        %v3245 = vld [vmem:[%s37] sm:$0xf]
        %v3246 = vld [vmem:[%s37 + $0x4] sm:$0xf]
        %v3247 = vld [vmem:[%s37 + $0x8] sm:$0xf]
        %v3248 = vld [vmem:[%s37 + $0xc] sm:$0xf]
        %v3249 = vld [vmem:[%s39] sm:$0x1]
        %v3250 = vpack.c.bf16 %v3244, %v3244
        %v3252 = vlaneseq
        %v3253 = vshrl.u32 %v3252, 7
        %v3254 = vsub.s32 0, %v3253
        %v3255 = vrot.slane %v3249, %v3254
        %v3261 = vunpack.c.l.b16 %v3245
        %v3262 = vunpack.c.l.b16 %v3246
        %v3263 = vunpack.c.l.b16 %v3247
        %v3264 = vunpack.c.l.b16 %v3248
        %v3265 = vpack.c.b16 %v3262, %v3261
        %v3266 = vpack.c.b16 %v3264, %v3263
        %v3270 = vsel %vm1056, %v3250, 0
        %3272 = vmatprep.subr.bf16.mxu0 0
        %3273 = vmatpush1.bf16.msra.mxu0 0
        %3274 = vmatprep.subr.bf16.mxu0 0
        %3275 = vmatpush1.bf16.msra.mxu0 0
        %3276 = vmatprep.subr.bf16.mxu0 0
        %3277 = vmatpush1.bf16.msra.mxu0 0
        %3278 = vmatprep.subr.bf16.mxu0 0
        %3279 = vmatpush1.bf16.msra.mxu0 0
        %3280 = vmatprep.subr.bf16.mxu0 0
        %3281 = vmatpush1.bf16.msra.mxu0 0
        %3282 = vmatprep.subr.bf16.mxu0 0
        %3283 = vmatpush1.bf16.msra.mxu0 0
        %3284 = vmatprep.subr.bf16.mxu0 0
        %3285 = vmatpush1.bf16.msra.mxu0 %v3266
        %3286 = vmatprep.subr.bf16.mxu0 0
        %3287 = vmatpush1.bf16.msra.mxu0 %v3265
        %3288 = vmatprep.subr.bf16.mxu0 0
        %3289 = vmatpush2.bf16.msra.mxu0 0
        %3290 = vmatprep.subr.bf16.mxu0 0
        %3291 = vmatpush2.bf16.msra.mxu0 0
        %3292 = vmatprep.subr.bf16.mxu0 0
        %3293 = vmatpush2.bf16.msra.mxu0 0
        %3294 = vmatprep.subr.bf16.mxu0 0
        %3295 = vmatpush2.bf16.msra.mxu0 0
        %3296 = vmatprep.subr.bf16.mxu0 0
        %3297 = vmatpush2.bf16.msra.mxu0 0
        %3298 = vmatprep.subr.bf16.mxu0 0
        %3299 = vmatpush2.bf16.msra.mxu0 0
        %3300 = vmatprep.subr.bf16.mxu0 0
        %3301 = vmatpush2.bf16.msra.mxu0 0
        %3302 = vmatprep.subr.bf16.mxu0 0
        %3303 = vmatpush2.bf16.msra.mxu0 0
        %3304 = vmatprep.mubr.bf16.mxu0 0
        %3305 = vmatmul.mubr.bf16.gmra.mxu0 %v3270
        %v3306 = vpop.f32.mrf.mxu0
        %v3307 = vadd.f32 %v3255, %v3306
        %v3308 = vpop.f32.mrf.mxu0
        %v3309 = vpop.f32.mrf.mxu0
        %v3310 = vpop.f32.mrf.mxu0
        %3311 = vdwg.mxu0
        %v3312 = vpack.c.bf16 %v2633, %v2633
        %3313 = vrot.lane.b32.xlu0 %v3265, 96
        %v3314 = vpop.permute.xlu0 %3313
        %3315 = vrot.lane.b32.xlu0 %v3266, 96
        %v3316 = vpop.permute.xlu0 %3315
        %3319 = vrot.lane.b32.xlu0 %v3255, 96
        %v3320 = vpop.permute.xlu0 %3319
        %v3323 = vsel %vm1056, %v3312, 0
        %3325 = vmatprep.subr.bf16.mxu0 0
        %3326 = vmatpush1.bf16.msra.mxu0 0
        %3327 = vmatprep.subr.bf16.mxu0 0
        %3328 = vmatpush1.bf16.msra.mxu0 0
        %3329 = vmatprep.subr.bf16.mxu0 0
        %3330 = vmatpush1.bf16.msra.mxu0 0
        %3331 = vmatprep.subr.bf16.mxu0 0
        %3332 = vmatpush1.bf16.msra.mxu0 0
        %3333 = vmatprep.subr.bf16.mxu0 0
        %3334 = vmatpush1.bf16.msra.mxu0 0
        %3335 = vmatprep.subr.bf16.mxu0 0
        %3336 = vmatpush1.bf16.msra.mxu0 0
        %3337 = vmatprep.subr.bf16.mxu0 0
        %3338 = vmatpush1.bf16.msra.mxu0 %v3316
        %3339 = vmatprep.subr.bf16.mxu0 0
        %3340 = vmatpush1.bf16.msra.mxu0 %v3314
        %3341 = vmatprep.subr.bf16.mxu0 0
        %3342 = vmatpush2.bf16.msra.mxu0 0
        %3343 = vmatprep.subr.bf16.mxu0 0
        %3344 = vmatpush2.bf16.msra.mxu0 0
        %3345 = vmatprep.subr.bf16.mxu0 0
        %3346 = vmatpush2.bf16.msra.mxu0 0
        %3347 = vmatprep.subr.bf16.mxu0 0
        %3348 = vmatpush2.bf16.msra.mxu0 0
        %3349 = vmatprep.subr.bf16.mxu0 0
        %3350 = vmatpush2.bf16.msra.mxu0 0
        %3351 = vmatprep.subr.bf16.mxu0 0
        %3352 = vmatpush2.bf16.msra.mxu0 0
        %3353 = vmatprep.subr.bf16.mxu0 0
        %3354 = vmatpush2.bf16.msra.mxu0 0
        %3355 = vmatprep.subr.bf16.mxu0 0
        %3356 = vmatpush2.bf16.msra.mxu0 0
        %3357 = vmatprep.mubr.bf16.mxu0 0
        %3358 = vmatmul.mubr.bf16.gmra.mxu0 %v3323
        %v3359 = vpop.f32.mrf.mxu0
        %v3360 = vadd.f32 %v3320, %v3359
        %v3361 = vpop.f32.mrf.mxu0
        %v3362 = vpop.f32.mrf.mxu0
        %v3363 = vpop.f32.mrf.mxu0
        %3364 = vdwg.mxu0
        %v3365 = vpack.c.bf16 %v3360, %v3360
        %v3366 = vmul.f32 %v3307, %v1012
        %v3367 = vpack.c.bf16 %v3366, %v3366
        %v3369 = vsel %vm1056, %v3367, 0
        %v3372 = vsel %vm1056, %v3365, 0
        %3374 = vmatprep.subr.bf16.mxu0 0
        %3375 = vmatpush1.bf16.xpose.msra.mxu0 0
        %3376 = vmatprep.subr.bf16.mxu0 0
        %3377 = vmatpush1.bf16.xpose.msra.mxu0 0
        %3378 = vmatprep.subr.bf16.mxu0 0
        %3379 = vmatpush1.bf16.xpose.msra.mxu0 0
        %3380 = vmatprep.subr.bf16.mxu0 0
        %3381 = vmatpush1.bf16.xpose.msra.mxu0 0
        %3382 = vmatprep.subr.bf16.mxu0 0
        %3383 = vmatpush1.bf16.xpose.msra.mxu0 0
        %3384 = vmatprep.subr.bf16.mxu0 0
        %3385 = vmatpush1.bf16.xpose.msra.mxu0 0
        %3386 = vmatprep.subr.bf16.mxu0 0
        %3387 = vmatpush1.bf16.xpose.msra.mxu0 0
        %3388 = vmatprep.subr.bf16.mxu0 0
        %3389 = vmatpush1.bf16.xpose.msra.mxu0 %v3372
        %3390 = vmatprep.subr.bf16.mxu0 0
        %3391 = vmatpush2.bf16.xpose.msra.mxu0 0
        %3392 = vmatprep.subr.bf16.mxu0 0
        %3393 = vmatpush2.bf16.xpose.msra.mxu0 0
        %3394 = vmatprep.subr.bf16.mxu0 0
        %3395 = vmatpush2.bf16.xpose.msra.mxu0 0
        %3396 = vmatprep.subr.bf16.mxu0 0
        %3397 = vmatpush2.bf16.xpose.msra.mxu0 0
        %3398 = vmatprep.subr.bf16.mxu0 0
        %3399 = vmatpush2.bf16.xpose.msra.mxu0 0
        %3400 = vmatprep.subr.bf16.mxu0 0
        %3401 = vmatpush2.bf16.xpose.msra.mxu0 0
        %3402 = vmatprep.subr.bf16.mxu0 0
        %3403 = vmatpush2.bf16.xpose.msra.mxu0 0
        %3404 = vmatprep.subr.bf16.mxu0 0
        %3405 = vmatpush2.bf16.xpose.msra.mxu0 0
        %3406 = vmatprep.mubr.bf16.mxu0 0
        %3407 = vmatmul.mubr.bf16.gmra.mxu0 %v3369
        %v3408 = vpop.f32.mrf.mxu0
        %v3409 = vadd.f32 0.0, %v3408
        %v3410 = vpop.f32.mrf.mxu0
        %v3411 = vpop.f32.mrf.mxu0
        %v3412 = vpop.f32.mrf.mxu0
        %3413 = vdwg.mxu0
        %v3414 = vmul.f32 %v3409, 0.35355338
        %v3415 = vadd.f32 %v3414, %v1030
        %v3416 = vsel %vm1154, %v3415, -inf
        %3417 = vmax.xlane.f32.xlu0 %v3416
        %v3418 = vpop.xlane.xlu0 %3417
        %v3419 = vsub.f32 %v3415, %v3418
        %v3420 = vmul.f32 %v3419, 1.442695
        %v3421 = vpow.pop %v3420
        %v3422 = vsel %vm1154, %v3421, 0.0
        %3423 = vadd.xlane.f32.xlu0 %v3422
        %v3424 = vpop.xlane.xlu0 %3423
        %v3425 = vrcp.pop %v3424
        %v3426 = vmul.f32 %v3421, %v3425
        %v3427 = vpack.c.bf16 %v3426, %v3426
        %3428 = vrot.lane.b32.xlu0 %v1012, 32
        %v3429 = vpop.permute.xlu0 %3428
        %v3431 = vmul.f32 %v3360, %v3429
        %v3432 = vpack.c.bf16 %v3431, %v3431
        %v3433 = vmul.f32 %v3307, %v1017
        %v3434 = vpack.c.bf16 %v3433, %v3433
        %v3436 = vsel %vm1056, %v3434, 0
        %3438 = vmatprep.subr.bf16.mxu0 0
        %3439 = vmatpush1.bf16.xpose.msra.mxu0 0
        %3440 = vmatprep.subr.bf16.mxu0 0
        %3441 = vmatpush1.bf16.xpose.msra.mxu0 0
        %3442 = vmatprep.subr.bf16.mxu0 0
        %3443 = vmatpush1.bf16.xpose.msra.mxu0 0
        %3444 = vmatprep.subr.bf16.mxu0 0
        %3445 = vmatpush1.bf16.xpose.msra.mxu0 0
        %3446 = vmatprep.subr.bf16.mxu0 0
        %3447 = vmatpush1.bf16.xpose.msra.mxu0 0
        %3448 = vmatprep.subr.bf16.mxu0 0
        %3449 = vmatpush1.bf16.xpose.msra.mxu0 0
        %3450 = vmatprep.subr.bf16.mxu0 0
        %3451 = vmatpush1.bf16.xpose.msra.mxu0 0
        %3452 = vmatprep.subr.bf16.mxu0 0
        %3453 = vmatpush1.bf16.xpose.msra.mxu0 %v3372
        %3454 = vmatprep.subr.bf16.mxu0 0
        %3455 = vmatpush2.bf16.xpose.msra.mxu0 0
        %3456 = vmatprep.subr.bf16.mxu0 0
        %3457 = vmatpush2.bf16.xpose.msra.mxu0 0
        %3458 = vmatprep.subr.bf16.mxu0 0
        %3459 = vmatpush2.bf16.xpose.msra.mxu0 0
        %3460 = vmatprep.subr.bf16.mxu0 0
        %3461 = vmatpush2.bf16.xpose.msra.mxu0 0
        %3462 = vmatprep.subr.bf16.mxu0 0
        %3463 = vmatpush2.bf16.xpose.msra.mxu0 0
        %3464 = vmatprep.subr.bf16.mxu0 0
        %3465 = vmatpush2.bf16.xpose.msra.mxu0 0
        %3466 = vmatprep.subr.bf16.mxu0 0
        %3467 = vmatpush2.bf16.xpose.msra.mxu0 0
        %3468 = vmatprep.subr.bf16.mxu0 0
        %3469 = vmatpush2.bf16.xpose.msra.mxu0 0
        %3470 = vmatprep.mubr.bf16.mxu0 0
        %3471 = vmatmul.mubr.bf16.gmra.mxu0 %v3436
        %v3472 = vpop.f32.mrf.mxu0
        %v3473 = vadd.f32 0.0, %v3472
        %v3474 = vpop.f32.mrf.mxu0
        %v3475 = vpop.f32.mrf.mxu0
        %v3476 = vpop.f32.mrf.mxu0
        %3477 = vdwg.mxu0
        %v3478 = vmul.f32 %v3473, 0.35355338
        %v3479 = vadd.f32 %v3478, %v1030
        %v3480 = vsel %vm1154, %v3479, -inf
        %3481 = vmax.xlane.f32.xlu0 %v3480
        %v3482 = vpop.xlane.xlu0 %3481
        %v3483 = vsub.f32 %v3479, %v3482
        %v3484 = vmul.f32 %v3483, 1.442695
        %v3485 = vpow.pop %v3484
        %v3486 = vsel %vm1154, %v3485, 0.0
        %3487 = vadd.xlane.f32.xlu0 %v3486
        %v3488 = vpop.xlane.xlu0 %3487
        %v3489 = vrcp.pop %v3488
        %v3490 = vmul.f32 %v3485, %v3489
        %v3491 = vpack.c.bf16 %v3490, %v3490
        %3492 = vrot.lane.b32.xlu0 %v1017, 32
        %v3493 = vpop.permute.xlu0 %3492
        %v3495 = vmul.f32 %v3360, %v3493
        %v3496 = vpack.c.bf16 %v3495, %v3495
        %3498 = vrot.lane.b32.xlu0 %v3496, 96
        %v3499 = vpop.permute.xlu0 %3498
        %v3501 = vsel %vm1154, %v3491, 0
        %v3504 = vsel %vm1244, %v3499, 0
        %3506 = vmatprep.subr.bf16.mxu0 0
        %3507 = vmatpush1.bf16.msra.mxu0 0
        %3508 = vmatprep.subr.bf16.mxu0 0
        %3509 = vmatpush1.bf16.msra.mxu0 0
        %3510 = vmatprep.subr.bf16.mxu0 0
        %3511 = vmatpush1.bf16.msra.mxu0 0
        %3512 = vmatprep.subr.bf16.mxu0 0
        %3513 = vmatpush1.bf16.msra.mxu0 0
        %3514 = vmatprep.subr.bf16.mxu0 0
        %3515 = vmatpush1.bf16.msra.mxu0 0
        %3516 = vmatprep.subr.bf16.mxu0 0
        %3517 = vmatpush1.bf16.msra.mxu0 0
        %3518 = vmatprep.subr.bf16.mxu0 0
        %3519 = vmatpush1.bf16.msra.mxu0 0
        %3520 = vmatprep.subr.bf16.mxu0 0
        %3521 = vmatpush1.bf16.msra.mxu0 %v3504
        %3522 = vmatprep.subr.bf16.mxu0 0
        %3523 = vmatpush2.bf16.msra.mxu0 0
        %3524 = vmatprep.subr.bf16.mxu0 0
        %3525 = vmatpush2.bf16.msra.mxu0 0
        %3526 = vmatprep.subr.bf16.mxu0 0
        %3527 = vmatpush2.bf16.msra.mxu0 0
        %3528 = vmatprep.subr.bf16.mxu0 0
        %3529 = vmatpush2.bf16.msra.mxu0 0
        %3530 = vmatprep.subr.bf16.mxu0 0
        %3531 = vmatpush2.bf16.msra.mxu0 0
        %3532 = vmatprep.subr.bf16.mxu0 0
        %3533 = vmatpush2.bf16.msra.mxu0 0
        %3534 = vmatprep.subr.bf16.mxu0 0
        %3535 = vmatpush2.bf16.msra.mxu0 0
        %3536 = vmatprep.subr.bf16.mxu0 0
        %3537 = vmatpush2.bf16.msra.mxu0 0
        %3538 = vmatprep.mubr.bf16.mxu0 0
        %3539 = vmatmul.mubr.bf16.gmra.mxu0 %v3501
        %v3540 = vpop.f32.mrf.mxu0
        %v3541 = vadd.f32 0.0, %v3540
        %v3542 = vpop.f32.mrf.mxu0
        %v3543 = vpop.f32.mrf.mxu0
        %v3544 = vpop.f32.mrf.mxu0
        %3545 = vdwg.mxu0
        %3547 = vrot.lane.b32.xlu0 %v3432, 96
        %v3548 = vpop.permute.xlu0 %3547
        %v3550 = vsel %vm1154, %v3427, 0
        %v3553 = vsel %vm1244, %v3548, 0
        %3555 = vmatprep.subr.bf16.mxu0 0
        %3556 = vmatpush1.bf16.msra.mxu0 0
        %3557 = vmatprep.subr.bf16.mxu0 0
        %3558 = vmatpush1.bf16.msra.mxu0 0
        %3559 = vmatprep.subr.bf16.mxu0 0
        %3560 = vmatpush1.bf16.msra.mxu0 0
        %3561 = vmatprep.subr.bf16.mxu0 0
        %3562 = vmatpush1.bf16.msra.mxu0 0
        %3563 = vmatprep.subr.bf16.mxu0 0
        %3564 = vmatpush1.bf16.msra.mxu0 0
        %3565 = vmatprep.subr.bf16.mxu0 0
        %3566 = vmatpush1.bf16.msra.mxu0 0
        %3567 = vmatprep.subr.bf16.mxu0 0
        %3568 = vmatpush1.bf16.msra.mxu0 0
        %3569 = vmatprep.subr.bf16.mxu0 0
        %3570 = vmatpush1.bf16.msra.mxu0 %v3553
        %3571 = vmatprep.subr.bf16.mxu0 0
        %3572 = vmatpush2.bf16.msra.mxu0 0
        %3573 = vmatprep.subr.bf16.mxu0 0
        %3574 = vmatpush2.bf16.msra.mxu0 0
        %3575 = vmatprep.subr.bf16.mxu0 0
        %3576 = vmatpush2.bf16.msra.mxu0 0
        %3577 = vmatprep.subr.bf16.mxu0 0
        %3578 = vmatpush2.bf16.msra.mxu0 0
        %3579 = vmatprep.subr.bf16.mxu0 0
        %3580 = vmatpush2.bf16.msra.mxu0 0
        %3581 = vmatprep.subr.bf16.mxu0 0
        %3582 = vmatpush2.bf16.msra.mxu0 0
        %3583 = vmatprep.subr.bf16.mxu0 0
        %3584 = vmatpush2.bf16.msra.mxu0 0
        %3585 = vmatprep.subr.bf16.mxu0 0
        %3586 = vmatpush2.bf16.msra.mxu0 0
        %3587 = vmatprep.mubr.bf16.mxu0 0
        %3588 = vmatmul.mubr.bf16.gmra.mxu0 %v3550
        %v3589 = vpop.f32.mrf.mxu0
        %v3590 = vadd.f32 %v3541, %v3589
        %v3591 = vpop.f32.mrf.mxu0
        %v3592 = vpop.f32.mrf.mxu0
        %v3593 = vpop.f32.mrf.mxu0
        %3594 = vdwg.mxu0
        %v3595 = vmul.f32 %v3307, %v1022
        %v3596 = vpack.c.bf16 %v3595, %v3595
        %v3598 = vsel %vm1056, %v3596, 0
        %3600 = vmatprep.subr.bf16.mxu0 0
        %3601 = vmatpush1.bf16.xpose.msra.mxu0 0
        %3602 = vmatprep.subr.bf16.mxu0 0
        %3603 = vmatpush1.bf16.xpose.msra.mxu0 0
        %3604 = vmatprep.subr.bf16.mxu0 0
        %3605 = vmatpush1.bf16.xpose.msra.mxu0 0
        %3606 = vmatprep.subr.bf16.mxu0 0
        %3607 = vmatpush1.bf16.xpose.msra.mxu0 0
        %3608 = vmatprep.subr.bf16.mxu0 0
        %3609 = vmatpush1.bf16.xpose.msra.mxu0 0
        %3610 = vmatprep.subr.bf16.mxu0 0
        %3611 = vmatpush1.bf16.xpose.msra.mxu0 0
        %3612 = vmatprep.subr.bf16.mxu0 0
        %3613 = vmatpush1.bf16.xpose.msra.mxu0 0
        %3614 = vmatprep.subr.bf16.mxu0 0
        %3615 = vmatpush1.bf16.xpose.msra.mxu0 %v3372
        %3616 = vmatprep.subr.bf16.mxu0 0
        %3617 = vmatpush2.bf16.xpose.msra.mxu0 0
        %3618 = vmatprep.subr.bf16.mxu0 0
        %3619 = vmatpush2.bf16.xpose.msra.mxu0 0
        %3620 = vmatprep.subr.bf16.mxu0 0
        %3621 = vmatpush2.bf16.xpose.msra.mxu0 0
        %3622 = vmatprep.subr.bf16.mxu0 0
        %3623 = vmatpush2.bf16.xpose.msra.mxu0 0
        %3624 = vmatprep.subr.bf16.mxu0 0
        %3625 = vmatpush2.bf16.xpose.msra.mxu0 0
        %3626 = vmatprep.subr.bf16.mxu0 0
        %3627 = vmatpush2.bf16.xpose.msra.mxu0 0
        %3628 = vmatprep.subr.bf16.mxu0 0
        %3629 = vmatpush2.bf16.xpose.msra.mxu0 0
        %3630 = vmatprep.subr.bf16.mxu0 0
        %3631 = vmatpush2.bf16.xpose.msra.mxu0 0
        %3632 = vmatprep.mubr.bf16.mxu0 0
        %3633 = vmatmul.mubr.bf16.gmra.mxu0 %v3598
        %v3634 = vpop.f32.mrf.mxu0
        %v3635 = vadd.f32 0.0, %v3634
        %v3636 = vpop.f32.mrf.mxu0
        %v3637 = vpop.f32.mrf.mxu0
        %v3638 = vpop.f32.mrf.mxu0
        %3639 = vdwg.mxu0
        %v3640 = vmul.f32 %v3635, 0.35355338
        %v3641 = vadd.f32 %v3640, %v1030
        %v3642 = vsel %vm1154, %v3641, -inf
        %3643 = vmax.xlane.f32.xlu0 %v3642
        %v3644 = vpop.xlane.xlu0 %3643
        %v3645 = vsub.f32 %v3641, %v3644
        %v3646 = vmul.f32 %v3645, 1.442695
        %v3647 = vpow.pop %v3646
        %v3648 = vsel %vm1154, %v3647, 0.0
        %3649 = vadd.xlane.f32.xlu0 %v3648
        %v3650 = vpop.xlane.xlu0 %3649
        %v3651 = vrcp.pop %v3650
        %v3652 = vmul.f32 %v3647, %v3651
        %v3653 = vpack.c.bf16 %v3652, %v3652
        %3654 = vrot.lane.b32.xlu0 %v1022, 32
        %v3655 = vpop.permute.xlu0 %3654
        %v3657 = vmul.f32 %v3360, %v3655
        %v3658 = vpack.c.bf16 %v3657, %v3657
        %3660 = vrot.lane.b32.xlu0 %v3658, 96
        %v3661 = vpop.permute.xlu0 %3660
        %v3663 = vsel %vm1154, %v3653, 0
        %v3666 = vsel %vm1244, %v3661, 0
        %3668 = vmatprep.subr.bf16.mxu0 0
        %3669 = vmatpush1.bf16.msra.mxu0 0
        %3670 = vmatprep.subr.bf16.mxu0 0
        %3671 = vmatpush1.bf16.msra.mxu0 0
        %3672 = vmatprep.subr.bf16.mxu0 0
        %3673 = vmatpush1.bf16.msra.mxu0 0
        %3674 = vmatprep.subr.bf16.mxu0 0
        %3675 = vmatpush1.bf16.msra.mxu0 0
        %3676 = vmatprep.subr.bf16.mxu0 0
        %3677 = vmatpush1.bf16.msra.mxu0 0
        %3678 = vmatprep.subr.bf16.mxu0 0
        %3679 = vmatpush1.bf16.msra.mxu0 0
        %3680 = vmatprep.subr.bf16.mxu0 0
        %3681 = vmatpush1.bf16.msra.mxu0 0
        %3682 = vmatprep.subr.bf16.mxu0 0
        %3683 = vmatpush1.bf16.msra.mxu0 %v3666
        %3684 = vmatprep.subr.bf16.mxu0 0
        %3685 = vmatpush2.bf16.msra.mxu0 0
        %3686 = vmatprep.subr.bf16.mxu0 0
        %3687 = vmatpush2.bf16.msra.mxu0 0
        %3688 = vmatprep.subr.bf16.mxu0 0
        %3689 = vmatpush2.bf16.msra.mxu0 0
        %3690 = vmatprep.subr.bf16.mxu0 0
        %3691 = vmatpush2.bf16.msra.mxu0 0
        %3692 = vmatprep.subr.bf16.mxu0 0
        %3693 = vmatpush2.bf16.msra.mxu0 0
        %3694 = vmatprep.subr.bf16.mxu0 0
        %3695 = vmatpush2.bf16.msra.mxu0 0
        %3696 = vmatprep.subr.bf16.mxu0 0
        %3697 = vmatpush2.bf16.msra.mxu0 0
        %3698 = vmatprep.subr.bf16.mxu0 0
        %3699 = vmatpush2.bf16.msra.mxu0 0
        %3700 = vmatprep.mubr.bf16.mxu0 0
        %3701 = vmatmul.mubr.bf16.gmra.mxu0 %v3663
        %v3702 = vpop.f32.mrf.mxu0
        %v3703 = vadd.f32 0.0, %v3702
        %v3704 = vpop.f32.mrf.mxu0
        %v3705 = vpop.f32.mrf.mxu0
        %v3706 = vpop.f32.mrf.mxu0
        %3707 = vdwg.mxu0
        %v3708 = vadd.f32 %v3590, %v3703
        %v3709 = vmul.f32 %v3307, %v1027
        %v3710 = vpack.c.bf16 %v3709, %v3709
        %v3712 = vsel %vm1056, %v3710, 0
        %3714 = vmatprep.subr.bf16.mxu0 0
        %3715 = vmatpush1.bf16.xpose.msra.mxu0 0
        %3716 = vmatprep.subr.bf16.mxu0 0
        %3717 = vmatpush1.bf16.xpose.msra.mxu0 0
        %3718 = vmatprep.subr.bf16.mxu0 0
        %3719 = vmatpush1.bf16.xpose.msra.mxu0 0
        %3720 = vmatprep.subr.bf16.mxu0 0
        %3721 = vmatpush1.bf16.xpose.msra.mxu0 0
        %3722 = vmatprep.subr.bf16.mxu0 0
        %3723 = vmatpush1.bf16.xpose.msra.mxu0 0
        %3724 = vmatprep.subr.bf16.mxu0 0
        %3725 = vmatpush1.bf16.xpose.msra.mxu0 0
        %3726 = vmatprep.subr.bf16.mxu0 0
        %3727 = vmatpush1.bf16.xpose.msra.mxu0 0
        %3728 = vmatprep.subr.bf16.mxu0 0
        %3729 = vmatpush1.bf16.xpose.msra.mxu0 %v3372
        %3730 = vmatprep.subr.bf16.mxu0 0
        %3731 = vmatpush2.bf16.xpose.msra.mxu0 0
        %3732 = vmatprep.subr.bf16.mxu0 0
        %3733 = vmatpush2.bf16.xpose.msra.mxu0 0
        %3734 = vmatprep.subr.bf16.mxu0 0
        %3735 = vmatpush2.bf16.xpose.msra.mxu0 0
        %3736 = vmatprep.subr.bf16.mxu0 0
        %3737 = vmatpush2.bf16.xpose.msra.mxu0 0
        %3738 = vmatprep.subr.bf16.mxu0 0
        %3739 = vmatpush2.bf16.xpose.msra.mxu0 0
        %3740 = vmatprep.subr.bf16.mxu0 0
        %3741 = vmatpush2.bf16.xpose.msra.mxu0 0
        %3742 = vmatprep.subr.bf16.mxu0 0
        %3743 = vmatpush2.bf16.xpose.msra.mxu0 0
        %3744 = vmatprep.subr.bf16.mxu0 0
        %3745 = vmatpush2.bf16.xpose.msra.mxu0 0
        %3746 = vmatprep.mubr.bf16.mxu0 0
        %3747 = vmatmul.mubr.bf16.gmra.mxu0 %v3712
        %v3748 = vpop.f32.mrf.mxu0
        %v3749 = vadd.f32 0.0, %v3748
        %v3750 = vpop.f32.mrf.mxu0
        %v3751 = vpop.f32.mrf.mxu0
        %v3752 = vpop.f32.mrf.mxu0
        %3753 = vdwg.mxu0
        %v3754 = vmul.f32 %v3749, 0.35355338
        %v3755 = vadd.f32 %v3754, %v1030
        %v3756 = vsel %vm1154, %v3755, -inf
        %3757 = vmax.xlane.f32.xlu0 %v3756
        %v3758 = vpop.xlane.xlu0 %3757
        %v3759 = vsub.f32 %v3755, %v3758
        %v3760 = vmul.f32 %v3759, 1.442695
        %v3761 = vpow.pop %v3760
        %v3762 = vsel %vm1154, %v3761, 0.0
        %3763 = vadd.xlane.f32.xlu0 %v3762
        %v3764 = vpop.xlane.xlu0 %3763
        %v3765 = vrcp.pop %v3764
        %v3766 = vmul.f32 %v3761, %v3765
        %v3767 = vpack.c.bf16 %v3766, %v3766
        %3768 = vrot.lane.b32.xlu0 %v1027, 32
        %v3769 = vpop.permute.xlu0 %3768
        %v3771 = vmul.f32 %v3360, %v3769
        %v3772 = vpack.c.bf16 %v3771, %v3771
        %3774 = vrot.lane.b32.xlu0 %v3772, 96
        %v3775 = vpop.permute.xlu0 %3774
        %v3777 = vsel %vm1154, %v3767, 0
        %v3780 = vsel %vm1244, %v3775, 0
        %3782 = vmatprep.subr.bf16.mxu0 0
        %3783 = vmatpush1.bf16.msra.mxu0 0
        %3784 = vmatprep.subr.bf16.mxu0 0
        %3785 = vmatpush1.bf16.msra.mxu0 0
        %3786 = vmatprep.subr.bf16.mxu0 0
        %3787 = vmatpush1.bf16.msra.mxu0 0
        %3788 = vmatprep.subr.bf16.mxu0 0
        %3789 = vmatpush1.bf16.msra.mxu0 0
        %3790 = vmatprep.subr.bf16.mxu0 0
        %3791 = vmatpush1.bf16.msra.mxu0 0
        %3792 = vmatprep.subr.bf16.mxu0 0
        %3793 = vmatpush1.bf16.msra.mxu0 0
        %3794 = vmatprep.subr.bf16.mxu0 0
        %3795 = vmatpush1.bf16.msra.mxu0 0
        %3796 = vmatprep.subr.bf16.mxu0 0
        %3797 = vmatpush1.bf16.msra.mxu0 %v3780
        %3798 = vmatprep.subr.bf16.mxu0 0
        %3799 = vmatpush2.bf16.msra.mxu0 0
        %3800 = vmatprep.subr.bf16.mxu0 0
        %3801 = vmatpush2.bf16.msra.mxu0 0
        %3802 = vmatprep.subr.bf16.mxu0 0
        %3803 = vmatpush2.bf16.msra.mxu0 0
        %3804 = vmatprep.subr.bf16.mxu0 0
        %3805 = vmatpush2.bf16.msra.mxu0 0
        %3806 = vmatprep.subr.bf16.mxu0 0
        %3807 = vmatpush2.bf16.msra.mxu0 0
        %3808 = vmatprep.subr.bf16.mxu0 0
        %3809 = vmatpush2.bf16.msra.mxu0 0
        %3810 = vmatprep.subr.bf16.mxu0 0
        %3811 = vmatpush2.bf16.msra.mxu0 0
        %3812 = vmatprep.subr.bf16.mxu0 0
        %3813 = vmatpush2.bf16.msra.mxu0 0
        %3814 = vmatprep.mubr.bf16.mxu0 0
        %3815 = vmatmul.mubr.bf16.gmra.mxu0 %v3777
        %v3816 = vpop.f32.mrf.mxu0
        %v3817 = vadd.f32 0.0, %v3816
        %v3818 = vpop.f32.mrf.mxu0
        %v3819 = vpop.f32.mrf.mxu0
        %v3820 = vpop.f32.mrf.mxu0
        %3821 = vdwg.mxu0
        %v3822 = vadd.f32 %v3708, %v3817
        %v3823 = vld [vmem:[%s41] sm:$0xf]
        %v3824 = vld [vmem:[%s41 + $0x4] sm:$0xf]
        %v3825 = vld [vmem:[%s41 + $0x8] sm:$0xf]
        %v3826 = vld [vmem:[%s41 + $0xc] sm:$0xf]
        %v3827 = vpack.c.bf16 %v3822, %v3822
        %v3828 = vld [vmem:[%s43] sm:$0x1]
        %v3830 = vlaneseq
        %v3831 = vshrl.u32 %v3830, 7
        %v3832 = vsub.s32 0, %v3831
        %v3833 = vrot.slane %v3828, %v3832
        %v3839 = vunpack.c.l.b16 %v3823
        %v3840 = vunpack.c.l.b16 %v3824
        %v3841 = vunpack.c.l.b16 %v3825
        %v3842 = vunpack.c.l.b16 %v3826
        %v3843 = vpack.c.b16 %v3840, %v3839
        %v3844 = vpack.c.b16 %v3842, %v3841
        %v3848 = vsel %vm1056, %v3827, 0
        %3850 = vmatprep.subr.bf16.mxu0 0
        %3851 = vmatpush1.bf16.msra.mxu0 0
        %3852 = vmatprep.subr.bf16.mxu0 0
        %3853 = vmatpush1.bf16.msra.mxu0 0
        %3854 = vmatprep.subr.bf16.mxu0 0
        %3855 = vmatpush1.bf16.msra.mxu0 0
        %3856 = vmatprep.subr.bf16.mxu0 0
        %3857 = vmatpush1.bf16.msra.mxu0 0
        %3858 = vmatprep.subr.bf16.mxu0 0
        %3859 = vmatpush1.bf16.msra.mxu0 0
        %3860 = vmatprep.subr.bf16.mxu0 0
        %3861 = vmatpush1.bf16.msra.mxu0 0
        %3862 = vmatprep.subr.bf16.mxu0 0
        %3863 = vmatpush1.bf16.msra.mxu0 %v3844
        %3864 = vmatprep.subr.bf16.mxu0 0
        %3865 = vmatpush1.bf16.msra.mxu0 %v3843
        %3866 = vmatprep.subr.bf16.mxu0 0
        %3867 = vmatpush2.bf16.msra.mxu0 0
        %3868 = vmatprep.subr.bf16.mxu0 0
        %3869 = vmatpush2.bf16.msra.mxu0 0
        %3870 = vmatprep.subr.bf16.mxu0 0
        %3871 = vmatpush2.bf16.msra.mxu0 0
        %3872 = vmatprep.subr.bf16.mxu0 0
        %3873 = vmatpush2.bf16.msra.mxu0 0
        %3874 = vmatprep.subr.bf16.mxu0 0
        %3875 = vmatpush2.bf16.msra.mxu0 0
        %3876 = vmatprep.subr.bf16.mxu0 0
        %3877 = vmatpush2.bf16.msra.mxu0 0
        %3878 = vmatprep.subr.bf16.mxu0 0
        %3879 = vmatpush2.bf16.msra.mxu0 0
        %3880 = vmatprep.subr.bf16.mxu0 0
        %3881 = vmatpush2.bf16.msra.mxu0 0
        %3882 = vmatprep.mubr.bf16.mxu0 0
        %3883 = vmatmul.mubr.bf16.gmra.mxu0 %v3848
        %v3884 = vpop.f32.mrf.mxu0
        %v3885 = vadd.f32 %v3833, %v3884
        %v3886 = vpop.f32.mrf.mxu0
        %v3887 = vpop.f32.mrf.mxu0
        %v3888 = vpop.f32.mrf.mxu0
        %3889 = vdwg.mxu0
        %v3890 = vadd.f32 %v3244, %v3885
        %v3891 = vld [vmem:[%s53 + $0x2] sm:$0x1]
        %v3892 = vld [vmem:[%s53 + $0x3] sm:$0x1]
        %v3893 = vsel %vm1056, %v3890, 0.0
        %3894 = vadd.xlane.f32.xlu0 %v3893
        %v3895 = vpop.xlane.xlu0 %3894
        %v3896 = vmul.f32 %v3895, %v1640
        %v3897 = vsub.f32 %v3890, %v3896
        %v3898 = vmul.f32 %v3897, %v3897
        %v3899 = vsel %vm1056, %v3898, 0.0
        %3900 = vadd.xlane.f32.xlu0 %v3899
        %v3901 = vpop.xlane.xlu0 %3900
        %v3902 = vmul.f32 %v3901, %v1640
        %v3903 = vadd.f32 %v3902, 1e-05
        %v3904 = vrsqrt.pop %v3903
        %v3905 = vmul.f32 %v3897, %v3904
        %v3906 = vlaneseq
        %v3907 = vshrl.u32 %v3906, 7
        %v3908 = vsub.s32 0, %v3907
        %v3909 = vrot.slane %v3891, %v3908
        %v3910 = vmul.f32 %v3905, %v3909
        %v3911 = vlaneseq
        %v3912 = vshrl.u32 %v3911, 7
        %v3913 = vsub.s32 0, %v3912
        %v3914 = vrot.slane %v3892, %v3913
        %v3915 = vadd.f32 %v3910, %v3914
        %v3916 = vld [vmem:[%s45] sm:$0xf]
        %v3917 = vld [vmem:[%s45 + $0x4] sm:$0xf]
        %v3918 = vld [vmem:[%s45 + $0x8] sm:$0xf]
        %v3919 = vld [vmem:[%s45 + $0xc] sm:$0xf]
        %v3920 = vpack.c.bf16 %v3915, %v3915
        %v3921 = vld [vmem:[%s47] sm:$0x1]
        %v3923 = vlaneseq
        %v3924 = vshrl.u32 %v3923, 7
        %v3925 = vsub.s32 0, %v3924
        %v3926 = vrot.slane %v3921, %v3925
        %v3932 = vunpack.c.l.b16 %v3916
        %v3933 = vunpack.c.l.b16 %v3917
        %v3934 = vunpack.c.l.b16 %v3918
        %v3935 = vunpack.c.l.b16 %v3919
        %v3936 = vpack.c.b16 %v3933, %v3932
        %v3937 = vpack.c.b16 %v3935, %v3934
        %v3941 = vsel %vm1056, %v3920, 0
        %3943 = vmatprep.subr.bf16.mxu0 0
        %3944 = vmatpush1.bf16.msra.mxu0 0
        %3945 = vmatprep.subr.bf16.mxu0 0
        %3946 = vmatpush1.bf16.msra.mxu0 0
        %3947 = vmatprep.subr.bf16.mxu0 0
        %3948 = vmatpush1.bf16.msra.mxu0 0
        %3949 = vmatprep.subr.bf16.mxu0 0
        %3950 = vmatpush1.bf16.msra.mxu0 0
        %3951 = vmatprep.subr.bf16.mxu0 0
        %3952 = vmatpush1.bf16.msra.mxu0 0
        %3953 = vmatprep.subr.bf16.mxu0 0
        %3954 = vmatpush1.bf16.msra.mxu0 0
        %3955 = vmatprep.subr.bf16.mxu0 0
        %3956 = vmatpush1.bf16.msra.mxu0 %v3937
        %3957 = vmatprep.subr.bf16.mxu0 0
        %3958 = vmatpush1.bf16.msra.mxu0 %v3936
        %3959 = vmatprep.subr.bf16.mxu0 0
        %3960 = vmatpush2.bf16.msra.mxu0 0
        %3961 = vmatprep.subr.bf16.mxu0 0
        %3962 = vmatpush2.bf16.msra.mxu0 0
        %3963 = vmatprep.subr.bf16.mxu0 0
        %3964 = vmatpush2.bf16.msra.mxu0 0
        %3965 = vmatprep.subr.bf16.mxu0 0
        %3966 = vmatpush2.bf16.msra.mxu0 0
        %3967 = vmatprep.subr.bf16.mxu0 0
        %3968 = vmatpush2.bf16.msra.mxu0 0
        %3969 = vmatprep.subr.bf16.mxu0 0
        %3970 = vmatpush2.bf16.msra.mxu0 0
        %3971 = vmatprep.subr.bf16.mxu0 0
        %3972 = vmatpush2.bf16.msra.mxu0 0
        %3973 = vmatprep.subr.bf16.mxu0 0
        %3974 = vmatpush2.bf16.msra.mxu0 0
        %3975 = vmatprep.mubr.bf16.mxu0 0
        %3976 = vmatmul.mubr.bf16.gmra.mxu0 %v3941
        %v3977 = vpop.f32.mrf.mxu0
        %v3978 = vadd.f32 %v3926, %v3977
        %v3979 = vpop.f32.mrf.mxu0
        %v3980 = vpop.f32.mrf.mxu0
        %v3981 = vpop.f32.mrf.mxu0
        %3982 = vdwg.mxu0
        %v3983 = vmax.f32 %v3978, 0.0
        %v3984 = vld [vmem:[%s49] sm:$0xf]
        %v3985 = vld [vmem:[%s49 + $0x4] sm:$0xf]
        %v3986 = vld [vmem:[%s49 + $0x8] sm:$0xf]
        %v3987 = vld [vmem:[%s49 + $0xc] sm:$0xf]
        %v3988 = vld [vmem:[%s49 + $0x10] sm:$0xf]
        %v3989 = vld [vmem:[%s49 + $0x14] sm:$0xf]
        %v3990 = vld [vmem:[%s49 + $0x18] sm:$0xf]
        %v3991 = vld [vmem:[%s49 + $0x1c] sm:$0xf]
        %v3992 = vpack.c.bf16 %v3983, %v3983
        %v3993 = vld [vmem:[%s51] sm:$0x1]
        %v3995 = vlaneseq
        %v3996 = vshrl.u32 %v3995, 7
        %v3997 = vsub.s32 0, %v3996
        %v3998 = vrot.slane %v3993, %v3997
        %v4008 = vunpack.c.l.b16 %v3984
        %v4009 = vunpack.c.l.b16 %v3985
        %v4010 = vunpack.c.l.b16 %v3986
        %v4011 = vunpack.c.l.b16 %v3987
        %v4012 = vunpack.c.l.b16 %v3988
        %v4013 = vunpack.c.l.b16 %v3989
        %v4014 = vunpack.c.l.b16 %v3990
        %v4015 = vunpack.c.l.b16 %v3991
        %v4016 = vpack.c.b16 %v4009, %v4008
        %v4017 = vpack.c.b16 %v4011, %v4010
        %v4018 = vpack.c.b16 %v4013, %v4012
        %v4019 = vpack.c.b16 %v4015, %v4014
        %v4025 = vsel %vm1769, %v3992, 0
        %4027 = vmatprep.subr.bf16.mxu0 0
        %4028 = vmatpush1.bf16.msra.mxu0 0
        %4029 = vmatprep.subr.bf16.mxu0 0
        %4030 = vmatpush1.bf16.msra.mxu0 0
        %4031 = vmatprep.subr.bf16.mxu0 0
        %4032 = vmatpush1.bf16.msra.mxu0 0
        %4033 = vmatprep.subr.bf16.mxu0 0
        %4034 = vmatpush1.bf16.msra.mxu0 0
        %4035 = vmatprep.subr.bf16.mxu0 0
        %4036 = vmatpush1.bf16.msra.mxu0 %v4019
        %4037 = vmatprep.subr.bf16.mxu0 0
        %4038 = vmatpush1.bf16.msra.mxu0 %v4018
        %4039 = vmatprep.subr.bf16.mxu0 0
        %4040 = vmatpush1.bf16.msra.mxu0 %v4017
        %4041 = vmatprep.subr.bf16.mxu0 0
        %4042 = vmatpush1.bf16.msra.mxu0 %v4016
        %4043 = vmatprep.subr.bf16.mxu0 0
        %4044 = vmatpush2.bf16.msra.mxu0 0
        %4045 = vmatprep.subr.bf16.mxu0 0
        %4046 = vmatpush2.bf16.msra.mxu0 0
        %4047 = vmatprep.subr.bf16.mxu0 0
        %4048 = vmatpush2.bf16.msra.mxu0 0
        %4049 = vmatprep.subr.bf16.mxu0 0
        %4050 = vmatpush2.bf16.msra.mxu0 0
        %4051 = vmatprep.subr.bf16.mxu0 0
        %4052 = vmatpush2.bf16.msra.mxu0 0
        %4053 = vmatprep.subr.bf16.mxu0 0
        %4054 = vmatpush2.bf16.msra.mxu0 0
        %4055 = vmatprep.subr.bf16.mxu0 0
        %4056 = vmatpush2.bf16.msra.mxu0 0
        %4057 = vmatprep.subr.bf16.mxu0 0
        %4058 = vmatpush2.bf16.msra.mxu0 0
        %4059 = vmatprep.mubr.bf16.mxu0 0
        %4060 = vmatmul.mubr.bf16.gmra.mxu0 %v4025
        %v4061 = vpop.f32.mrf.mxu0
        %v4062 = vadd.f32 %v3998, %v4061
        %v4063 = vpop.f32.mrf.mxu0
        %v4064 = vpop.f32.mrf.mxu0
        %v4065 = vpop.f32.mrf.mxu0
        %4066 = vdwg.mxu0
        %v4067 = vadd.f32 %v3915, %v4062
        %v4068 = vld [vmem:[%s53 + $0x4] sm:$0x1]
        %v4069 = vld [vmem:[%s53 + $0x5] sm:$0x1]
        %v4070 = vsel %vm1056, %v4067, 0.0
        %4071 = vadd.xlane.f32.xlu0 %v4070
        %v4072 = vpop.xlane.xlu0 %4071
        %v4073 = vmul.f32 %v4072, %v1640
        %v4074 = vsub.f32 %v4067, %v4073
        %v4075 = vmul.f32 %v4074, %v4074
        %v4076 = vsel %vm1056, %v4075, 0.0
        %4077 = vadd.xlane.f32.xlu0 %v4076
        %v4078 = vpop.xlane.xlu0 %4077
        %v4079 = vmul.f32 %v4078, %v1640
        %v4080 = vadd.f32 %v4079, 1e-05
        %v4081 = vrsqrt.pop %v4080
        %v4082 = vmul.f32 %v4074, %v4081
        %v4083 = vlaneseq
        %v4084 = vshrl.u32 %v4083, 7
        %v4085 = vsub.s32 0, %v4084
        %v4086 = vrot.slane %v4068, %v4085
        %v4087 = vmul.f32 %v4082, %v4086
        %v4088 = vlaneseq
        %v4089 = vshrl.u32 %v4088, 7
        %v4090 = vsub.s32 0, %v4089
        %v4091 = vrot.slane %v4069, %v4090
        %v4092 = vadd.f32 %v4087, %v4091
        %s4093 = scalar_lea.vmem %s29, 16
        %v4094 = vld [vmem:[%s4093] sm:$0xf]
        %v4095 = vld [vmem:[%s4093 + $0x4] sm:$0xf]
        %v4096 = vld [vmem:[%s4093 + $0x8] sm:$0xf]
        %v4097 = vld [vmem:[%s4093 + $0xc] sm:$0xf]
        %v4098 = vpack.c.bf16 %v4092, %v4092
        %s4099 = scalar_lea.vmem %s31, 1
        %v4100 = vld [vmem:[%s4099] sm:$0x1]
        %v4102 = vlaneseq
        %v4103 = vshrl.u32 %v4102, 7
        %v4104 = vsub.s32 0, %v4103
        %v4105 = vrot.slane %v4100, %v4104
        %v4111 = vunpack.c.l.b16 %v4094
        %v4112 = vunpack.c.l.b16 %v4095
        %v4113 = vunpack.c.l.b16 %v4096
        %v4114 = vunpack.c.l.b16 %v4097
        %v4115 = vpack.c.b16 %v4112, %v4111
        %v4116 = vpack.c.b16 %v4114, %v4113
        %v4120 = vsel %vm1056, %v4098, 0
        %4122 = vmatprep.subr.bf16.mxu0 0
        %4123 = vmatpush1.bf16.msra.mxu0 0
        %4124 = vmatprep.subr.bf16.mxu0 0
        %4125 = vmatpush1.bf16.msra.mxu0 0
        %4126 = vmatprep.subr.bf16.mxu0 0
        %4127 = vmatpush1.bf16.msra.mxu0 0
        %4128 = vmatprep.subr.bf16.mxu0 0
        %4129 = vmatpush1.bf16.msra.mxu0 0
        %4130 = vmatprep.subr.bf16.mxu0 0
        %4131 = vmatpush1.bf16.msra.mxu0 0
        %4132 = vmatprep.subr.bf16.mxu0 0
        %4133 = vmatpush1.bf16.msra.mxu0 0
        %4134 = vmatprep.subr.bf16.mxu0 0
        %4135 = vmatpush1.bf16.msra.mxu0 %v4116
        %4136 = vmatprep.subr.bf16.mxu0 0
        %4137 = vmatpush1.bf16.msra.mxu0 %v4115
        %4138 = vmatprep.subr.bf16.mxu0 0
        %4139 = vmatpush2.bf16.msra.mxu0 0
        %4140 = vmatprep.subr.bf16.mxu0 0
        %4141 = vmatpush2.bf16.msra.mxu0 0
        %4142 = vmatprep.subr.bf16.mxu0 0
        %4143 = vmatpush2.bf16.msra.mxu0 0
        %4144 = vmatprep.subr.bf16.mxu0 0
        %4145 = vmatpush2.bf16.msra.mxu0 0
        %4146 = vmatprep.subr.bf16.mxu0 0
        %4147 = vmatpush2.bf16.msra.mxu0 0
        %4148 = vmatprep.subr.bf16.mxu0 0
        %4149 = vmatpush2.bf16.msra.mxu0 0
        %4150 = vmatprep.subr.bf16.mxu0 0
        %4151 = vmatpush2.bf16.msra.mxu0 0
        %4152 = vmatprep.subr.bf16.mxu0 0
        %4153 = vmatpush2.bf16.msra.mxu0 0
        %4154 = vmatprep.mubr.bf16.mxu0 0
        %4155 = vmatmul.mubr.bf16.gmra.mxu0 %v4120
        %v4156 = vpop.f32.mrf.mxu0
        %v4157 = vadd.f32 %v4105, %v4156
        %v4158 = vpop.f32.mrf.mxu0
        %v4159 = vpop.f32.mrf.mxu0
        %v4160 = vpop.f32.mrf.mxu0
        %4161 = vdwg.mxu0
        %v4162 = vpack.c.bf16 %v4157, %v4157
        %v4163 = vmul.f32 %v4157, %v1012
        %v4164 = vpack.c.bf16 %v4163, %v4163
        %4166 = vrot.lane.b32.xlu0 %v4162, 96
        %v4167 = vpop.permute.xlu0 %4166
        %v4169 = vsel %vm1056, %v4164, 0
        %v4172 = vsel %vm1056, %v4167, 0
        %4174 = vmatprep.subr.bf16.mxu0 0
        %4175 = vmatpush1.bf16.xpose.msra.mxu0 0
        %4176 = vmatprep.subr.bf16.mxu0 0
        %4177 = vmatpush1.bf16.xpose.msra.mxu0 0
        %4178 = vmatprep.subr.bf16.mxu0 0
        %4179 = vmatpush1.bf16.xpose.msra.mxu0 0
        %4180 = vmatprep.subr.bf16.mxu0 0
        %4181 = vmatpush1.bf16.xpose.msra.mxu0 0
        %4182 = vmatprep.subr.bf16.mxu0 0
        %4183 = vmatpush1.bf16.xpose.msra.mxu0 0
        %4184 = vmatprep.subr.bf16.mxu0 0
        %4185 = vmatpush1.bf16.xpose.msra.mxu0 0
        %4186 = vmatprep.subr.bf16.mxu0 0
        %4187 = vmatpush1.bf16.xpose.msra.mxu0 0
        %4188 = vmatprep.subr.bf16.mxu0 0
        %4189 = vmatpush1.bf16.xpose.msra.mxu0 %v4172
        %4190 = vmatprep.subr.bf16.mxu0 0
        %4191 = vmatpush2.bf16.xpose.msra.mxu0 0
        %4192 = vmatprep.subr.bf16.mxu0 0
        %4193 = vmatpush2.bf16.xpose.msra.mxu0 0
        %4194 = vmatprep.subr.bf16.mxu0 0
        %4195 = vmatpush2.bf16.xpose.msra.mxu0 0
        %4196 = vmatprep.subr.bf16.mxu0 0
        %4197 = vmatpush2.bf16.xpose.msra.mxu0 0
        %4198 = vmatprep.subr.bf16.mxu0 0
        %4199 = vmatpush2.bf16.xpose.msra.mxu0 0
        %4200 = vmatprep.subr.bf16.mxu0 0
        %4201 = vmatpush2.bf16.xpose.msra.mxu0 0
        %4202 = vmatprep.subr.bf16.mxu0 0
        %4203 = vmatpush2.bf16.xpose.msra.mxu0 0
        %4204 = vmatprep.subr.bf16.mxu0 0
        %4205 = vmatpush2.bf16.xpose.msra.mxu0 0
        %4206 = vmatprep.mubr.bf16.mxu0 0
        %4207 = vmatmul.mubr.bf16.gmra.mxu0 %v4169
        %v4208 = vpop.f32.mrf.mxu0
        %v4209 = vadd.f32 0.0, %v4208
        %v4210 = vpop.f32.mrf.mxu0
        %v4211 = vpop.f32.mrf.mxu0
        %v4212 = vpop.f32.mrf.mxu0
        %4213 = vdwg.mxu0
        %v4214 = vmul.f32 %v4209, 0.35355338
        %v4215 = vadd.f32 %v4214, %v1029
        %v4216 = vsel %vm1154, %v4215, -inf
        %4217 = vmax.xlane.f32.xlu0 %v4216
        %v4218 = vpop.xlane.xlu0 %4217
        %v4219 = vsub.f32 %v4215, %v4218
        %v4220 = vmul.f32 %v4219, 1.442695
        %v4221 = vpow.pop %v4220
        %v4222 = vsel %vm1154, %v4221, 0.0
        %4223 = vadd.xlane.f32.xlu0 %v4222
        %v4224 = vpop.xlane.xlu0 %4223
        %v4225 = vrcp.pop %v4224
        %v4226 = vmul.f32 %v4221, %v4225
        %v4227 = vpack.c.bf16 %v4226, %v4226
        %v4228 = vmul.f32 %v4157, %v1169
        %v4229 = vpack.c.bf16 %v4228, %v4228
        %v4230 = vmul.f32 %v4157, %v1017
        %v4231 = vpack.c.bf16 %v4230, %v4230
        %v4233 = vsel %vm1056, %v4231, 0
        %4235 = vmatprep.subr.bf16.mxu0 0
        %4236 = vmatpush1.bf16.xpose.msra.mxu0 0
        %4237 = vmatprep.subr.bf16.mxu0 0
        %4238 = vmatpush1.bf16.xpose.msra.mxu0 0
        %4239 = vmatprep.subr.bf16.mxu0 0
        %4240 = vmatpush1.bf16.xpose.msra.mxu0 0
        %4241 = vmatprep.subr.bf16.mxu0 0
        %4242 = vmatpush1.bf16.xpose.msra.mxu0 0
        %4243 = vmatprep.subr.bf16.mxu0 0
        %4244 = vmatpush1.bf16.xpose.msra.mxu0 0
        %4245 = vmatprep.subr.bf16.mxu0 0
        %4246 = vmatpush1.bf16.xpose.msra.mxu0 0
        %4247 = vmatprep.subr.bf16.mxu0 0
        %4248 = vmatpush1.bf16.xpose.msra.mxu0 0
        %4249 = vmatprep.subr.bf16.mxu0 0
        %4250 = vmatpush1.bf16.xpose.msra.mxu0 %v4172
        %4251 = vmatprep.subr.bf16.mxu0 0
        %4252 = vmatpush2.bf16.xpose.msra.mxu0 0
        %4253 = vmatprep.subr.bf16.mxu0 0
        %4254 = vmatpush2.bf16.xpose.msra.mxu0 0
        %4255 = vmatprep.subr.bf16.mxu0 0
        %4256 = vmatpush2.bf16.xpose.msra.mxu0 0
        %4257 = vmatprep.subr.bf16.mxu0 0
        %4258 = vmatpush2.bf16.xpose.msra.mxu0 0
        %4259 = vmatprep.subr.bf16.mxu0 0
        %4260 = vmatpush2.bf16.xpose.msra.mxu0 0
        %4261 = vmatprep.subr.bf16.mxu0 0
        %4262 = vmatpush2.bf16.xpose.msra.mxu0 0
        %4263 = vmatprep.subr.bf16.mxu0 0
        %4264 = vmatpush2.bf16.xpose.msra.mxu0 0
        %4265 = vmatprep.subr.bf16.mxu0 0
        %4266 = vmatpush2.bf16.xpose.msra.mxu0 0
        %4267 = vmatprep.mubr.bf16.mxu0 0
        %4268 = vmatmul.mubr.bf16.gmra.mxu0 %v4233
        %v4269 = vpop.f32.mrf.mxu0
        %v4270 = vadd.f32 0.0, %v4269
        %v4271 = vpop.f32.mrf.mxu0
        %v4272 = vpop.f32.mrf.mxu0
        %v4273 = vpop.f32.mrf.mxu0
        %4274 = vdwg.mxu0
        %v4275 = vmul.f32 %v4270, 0.35355338
        %v4276 = vadd.f32 %v4275, %v1029
        %v4277 = vsel %vm1154, %v4276, -inf
        %4278 = vmax.xlane.f32.xlu0 %v4277
        %v4279 = vpop.xlane.xlu0 %4278
        %v4280 = vsub.f32 %v4276, %v4279
        %v4281 = vmul.f32 %v4280, 1.442695
        %v4282 = vpow.pop %v4281
        %v4283 = vsel %vm1154, %v4282, 0.0
        %4284 = vadd.xlane.f32.xlu0 %v4283
        %v4285 = vpop.xlane.xlu0 %4284
        %v4286 = vrcp.pop %v4285
        %v4287 = vmul.f32 %v4282, %v4286
        %v4288 = vpack.c.bf16 %v4287, %v4287
        %v4289 = vmul.f32 %v4157, %v1234
        %v4290 = vpack.c.bf16 %v4289, %v4289
        %4292 = vrot.lane.b32.xlu0 %v4290, 64
        %v4293 = vpop.permute.xlu0 %4292
        %v4295 = vsel %vm1154, %v4288, 0
        %v4298 = vsel %vm1244, %v4293, 0
        %4300 = vmatprep.subr.bf16.mxu0 0
        %4301 = vmatpush1.bf16.msra.mxu0 0
        %4302 = vmatprep.subr.bf16.mxu0 0
        %4303 = vmatpush1.bf16.msra.mxu0 0
        %4304 = vmatprep.subr.bf16.mxu0 0
        %4305 = vmatpush1.bf16.msra.mxu0 0
        %4306 = vmatprep.subr.bf16.mxu0 0
        %4307 = vmatpush1.bf16.msra.mxu0 0
        %4308 = vmatprep.subr.bf16.mxu0 0
        %4309 = vmatpush1.bf16.msra.mxu0 0
        %4310 = vmatprep.subr.bf16.mxu0 0
        %4311 = vmatpush1.bf16.msra.mxu0 0
        %4312 = vmatprep.subr.bf16.mxu0 0
        %4313 = vmatpush1.bf16.msra.mxu0 0
        %4314 = vmatprep.subr.bf16.mxu0 0
        %4315 = vmatpush1.bf16.msra.mxu0 %v4298
        %4316 = vmatprep.subr.bf16.mxu0 0
        %4317 = vmatpush2.bf16.msra.mxu0 0
        %4318 = vmatprep.subr.bf16.mxu0 0
        %4319 = vmatpush2.bf16.msra.mxu0 0
        %4320 = vmatprep.subr.bf16.mxu0 0
        %4321 = vmatpush2.bf16.msra.mxu0 0
        %4322 = vmatprep.subr.bf16.mxu0 0
        %4323 = vmatpush2.bf16.msra.mxu0 0
        %4324 = vmatprep.subr.bf16.mxu0 0
        %4325 = vmatpush2.bf16.msra.mxu0 0
        %4326 = vmatprep.subr.bf16.mxu0 0
        %4327 = vmatpush2.bf16.msra.mxu0 0
        %4328 = vmatprep.subr.bf16.mxu0 0
        %4329 = vmatpush2.bf16.msra.mxu0 0
        %4330 = vmatprep.subr.bf16.mxu0 0
        %4331 = vmatpush2.bf16.msra.mxu0 0
        %4332 = vmatprep.mubr.bf16.mxu0 0
        %4333 = vmatmul.mubr.bf16.gmra.mxu0 %v4295
        %v4334 = vpop.f32.mrf.mxu0
        %v4335 = vadd.f32 0.0, %v4334
        %v4336 = vpop.f32.mrf.mxu0
        %v4337 = vpop.f32.mrf.mxu0
        %v4338 = vpop.f32.mrf.mxu0
        %4339 = vdwg.mxu0
        %4341 = vrot.lane.b32.xlu0 %v4229, 64
        %v4342 = vpop.permute.xlu0 %4341
        %v4344 = vsel %vm1154, %v4227, 0
        %v4347 = vsel %vm1244, %v4342, 0
        %4349 = vmatprep.subr.bf16.mxu0 0
        %4350 = vmatpush1.bf16.msra.mxu0 0
        %4351 = vmatprep.subr.bf16.mxu0 0
        %4352 = vmatpush1.bf16.msra.mxu0 0
        %4353 = vmatprep.subr.bf16.mxu0 0
        %4354 = vmatpush1.bf16.msra.mxu0 0
        %4355 = vmatprep.subr.bf16.mxu0 0
        %4356 = vmatpush1.bf16.msra.mxu0 0
        %4357 = vmatprep.subr.bf16.mxu0 0
        %4358 = vmatpush1.bf16.msra.mxu0 0
        %4359 = vmatprep.subr.bf16.mxu0 0
        %4360 = vmatpush1.bf16.msra.mxu0 0
        %4361 = vmatprep.subr.bf16.mxu0 0
        %4362 = vmatpush1.bf16.msra.mxu0 0
        %4363 = vmatprep.subr.bf16.mxu0 0
        %4364 = vmatpush1.bf16.msra.mxu0 %v4347
        %4365 = vmatprep.subr.bf16.mxu0 0
        %4366 = vmatpush2.bf16.msra.mxu0 0
        %4367 = vmatprep.subr.bf16.mxu0 0
        %4368 = vmatpush2.bf16.msra.mxu0 0
        %4369 = vmatprep.subr.bf16.mxu0 0
        %4370 = vmatpush2.bf16.msra.mxu0 0
        %4371 = vmatprep.subr.bf16.mxu0 0
        %4372 = vmatpush2.bf16.msra.mxu0 0
        %4373 = vmatprep.subr.bf16.mxu0 0
        %4374 = vmatpush2.bf16.msra.mxu0 0
        %4375 = vmatprep.subr.bf16.mxu0 0
        %4376 = vmatpush2.bf16.msra.mxu0 0
        %4377 = vmatprep.subr.bf16.mxu0 0
        %4378 = vmatpush2.bf16.msra.mxu0 0
        %4379 = vmatprep.subr.bf16.mxu0 0
        %4380 = vmatpush2.bf16.msra.mxu0 0
        %4381 = vmatprep.mubr.bf16.mxu0 0
        %4382 = vmatmul.mubr.bf16.gmra.mxu0 %v4344
        %v4383 = vpop.f32.mrf.mxu0
        %v4384 = vadd.f32 %v4335, %v4383
        %v4385 = vpop.f32.mrf.mxu0
        %v4386 = vpop.f32.mrf.mxu0
        %v4387 = vpop.f32.mrf.mxu0
        %4388 = vdwg.mxu0
        %v4389 = vmul.f32 %v4157, %v1022
        %v4390 = vpack.c.bf16 %v4389, %v4389
        %v4392 = vsel %vm1056, %v4390, 0
        %4394 = vmatprep.subr.bf16.mxu0 0
        %4395 = vmatpush1.bf16.xpose.msra.mxu0 0
        %4396 = vmatprep.subr.bf16.mxu0 0
        %4397 = vmatpush1.bf16.xpose.msra.mxu0 0
        %4398 = vmatprep.subr.bf16.mxu0 0
        %4399 = vmatpush1.bf16.xpose.msra.mxu0 0
        %4400 = vmatprep.subr.bf16.mxu0 0
        %4401 = vmatpush1.bf16.xpose.msra.mxu0 0
        %4402 = vmatprep.subr.bf16.mxu0 0
        %4403 = vmatpush1.bf16.xpose.msra.mxu0 0
        %4404 = vmatprep.subr.bf16.mxu0 0
        %4405 = vmatpush1.bf16.xpose.msra.mxu0 0
        %4406 = vmatprep.subr.bf16.mxu0 0
        %4407 = vmatpush1.bf16.xpose.msra.mxu0 0
        %4408 = vmatprep.subr.bf16.mxu0 0
        %4409 = vmatpush1.bf16.xpose.msra.mxu0 %v4172
        %4410 = vmatprep.subr.bf16.mxu0 0
        %4411 = vmatpush2.bf16.xpose.msra.mxu0 0
        %4412 = vmatprep.subr.bf16.mxu0 0
        %4413 = vmatpush2.bf16.xpose.msra.mxu0 0
        %4414 = vmatprep.subr.bf16.mxu0 0
        %4415 = vmatpush2.bf16.xpose.msra.mxu0 0
        %4416 = vmatprep.subr.bf16.mxu0 0
        %4417 = vmatpush2.bf16.xpose.msra.mxu0 0
        %4418 = vmatprep.subr.bf16.mxu0 0
        %4419 = vmatpush2.bf16.xpose.msra.mxu0 0
        %4420 = vmatprep.subr.bf16.mxu0 0
        %4421 = vmatpush2.bf16.xpose.msra.mxu0 0
        %4422 = vmatprep.subr.bf16.mxu0 0
        %4423 = vmatpush2.bf16.xpose.msra.mxu0 0
        %4424 = vmatprep.subr.bf16.mxu0 0
        %4425 = vmatpush2.bf16.xpose.msra.mxu0 0
        %4426 = vmatprep.mubr.bf16.mxu0 0
        %4427 = vmatmul.mubr.bf16.gmra.mxu0 %v4392
        %v4428 = vpop.f32.mrf.mxu0
        %v4429 = vadd.f32 0.0, %v4428
        %v4430 = vpop.f32.mrf.mxu0
        %v4431 = vpop.f32.mrf.mxu0
        %v4432 = vpop.f32.mrf.mxu0
        %4433 = vdwg.mxu0
        %v4434 = vmul.f32 %v4429, 0.35355338
        %v4435 = vadd.f32 %v4434, %v1029
        %v4436 = vsel %vm1154, %v4435, -inf
        %4437 = vmax.xlane.f32.xlu0 %v4436
        %v4438 = vpop.xlane.xlu0 %4437
        %v4439 = vsub.f32 %v4435, %v4438
        %v4440 = vmul.f32 %v4439, 1.442695
        %v4441 = vpow.pop %v4440
        %v4442 = vsel %vm1154, %v4441, 0.0
        %4443 = vadd.xlane.f32.xlu0 %v4442
        %v4444 = vpop.xlane.xlu0 %4443
        %v4445 = vrcp.pop %v4444
        %v4446 = vmul.f32 %v4441, %v4445
        %v4447 = vpack.c.bf16 %v4446, %v4446
        %v4448 = vmul.f32 %v4157, %v1398
        %v4449 = vpack.c.bf16 %v4448, %v4448
        %4451 = vrot.lane.b32.xlu0 %v4449, 64
        %v4452 = vpop.permute.xlu0 %4451
        %v4454 = vsel %vm1154, %v4447, 0
        %v4457 = vsel %vm1244, %v4452, 0
        %4459 = vmatprep.subr.bf16.mxu0 0
        %4460 = vmatpush1.bf16.msra.mxu0 0
        %4461 = vmatprep.subr.bf16.mxu0 0
        %4462 = vmatpush1.bf16.msra.mxu0 0
        %4463 = vmatprep.subr.bf16.mxu0 0
        %4464 = vmatpush1.bf16.msra.mxu0 0
        %4465 = vmatprep.subr.bf16.mxu0 0
        %4466 = vmatpush1.bf16.msra.mxu0 0
        %4467 = vmatprep.subr.bf16.mxu0 0
        %4468 = vmatpush1.bf16.msra.mxu0 0
        %4469 = vmatprep.subr.bf16.mxu0 0
        %4470 = vmatpush1.bf16.msra.mxu0 0
        %4471 = vmatprep.subr.bf16.mxu0 0
        %4472 = vmatpush1.bf16.msra.mxu0 0
        %4473 = vmatprep.subr.bf16.mxu0 0
        %4474 = vmatpush1.bf16.msra.mxu0 %v4457
        %4475 = vmatprep.subr.bf16.mxu0 0
        %4476 = vmatpush2.bf16.msra.mxu0 0
        %4477 = vmatprep.subr.bf16.mxu0 0
        %4478 = vmatpush2.bf16.msra.mxu0 0
        %4479 = vmatprep.subr.bf16.mxu0 0
        %4480 = vmatpush2.bf16.msra.mxu0 0
        %4481 = vmatprep.subr.bf16.mxu0 0
        %4482 = vmatpush2.bf16.msra.mxu0 0
        %4483 = vmatprep.subr.bf16.mxu0 0
        %4484 = vmatpush2.bf16.msra.mxu0 0
        %4485 = vmatprep.subr.bf16.mxu0 0
        %4486 = vmatpush2.bf16.msra.mxu0 0
        %4487 = vmatprep.subr.bf16.mxu0 0
        %4488 = vmatpush2.bf16.msra.mxu0 0
        %4489 = vmatprep.subr.bf16.mxu0 0
        %4490 = vmatpush2.bf16.msra.mxu0 0
        %4491 = vmatprep.mubr.bf16.mxu0 0
        %4492 = vmatmul.mubr.bf16.gmra.mxu0 %v4454
        %v4493 = vpop.f32.mrf.mxu0
        %v4494 = vadd.f32 0.0, %v4493
        %v4495 = vpop.f32.mrf.mxu0
        %v4496 = vpop.f32.mrf.mxu0
        %v4497 = vpop.f32.mrf.mxu0
        %4498 = vdwg.mxu0
        %v4499 = vadd.f32 %v4384, %v4494
        %v4500 = vmul.f32 %v4157, %v1027
        %v4501 = vpack.c.bf16 %v4500, %v4500
        %v4503 = vsel %vm1056, %v4501, 0
        %4505 = vmatprep.subr.bf16.mxu0 0
        %4506 = vmatpush1.bf16.xpose.msra.mxu0 0
        %4507 = vmatprep.subr.bf16.mxu0 0
        %4508 = vmatpush1.bf16.xpose.msra.mxu0 0
        %4509 = vmatprep.subr.bf16.mxu0 0
        %4510 = vmatpush1.bf16.xpose.msra.mxu0 0
        %4511 = vmatprep.subr.bf16.mxu0 0
        %4512 = vmatpush1.bf16.xpose.msra.mxu0 0
        %4513 = vmatprep.subr.bf16.mxu0 0
        %4514 = vmatpush1.bf16.xpose.msra.mxu0 0
        %4515 = vmatprep.subr.bf16.mxu0 0
        %4516 = vmatpush1.bf16.xpose.msra.mxu0 0
        %4517 = vmatprep.subr.bf16.mxu0 0
        %4518 = vmatpush1.bf16.xpose.msra.mxu0 0
        %4519 = vmatprep.subr.bf16.mxu0 0
        %4520 = vmatpush1.bf16.xpose.msra.mxu0 %v4172
        %4521 = vmatprep.subr.bf16.mxu0 0
        %4522 = vmatpush2.bf16.xpose.msra.mxu0 0
        %4523 = vmatprep.subr.bf16.mxu0 0
        %4524 = vmatpush2.bf16.xpose.msra.mxu0 0
        %4525 = vmatprep.subr.bf16.mxu0 0
        %4526 = vmatpush2.bf16.xpose.msra.mxu0 0
        %4527 = vmatprep.subr.bf16.mxu0 0
        %4528 = vmatpush2.bf16.xpose.msra.mxu0 0
        %4529 = vmatprep.subr.bf16.mxu0 0
        %4530 = vmatpush2.bf16.xpose.msra.mxu0 0
        %4531 = vmatprep.subr.bf16.mxu0 0
        %4532 = vmatpush2.bf16.xpose.msra.mxu0 0
        %4533 = vmatprep.subr.bf16.mxu0 0
        %4534 = vmatpush2.bf16.xpose.msra.mxu0 0
        %4535 = vmatprep.subr.bf16.mxu0 0
        %4536 = vmatpush2.bf16.xpose.msra.mxu0 0
        %4537 = vmatprep.mubr.bf16.mxu0 0
        %4538 = vmatmul.mubr.bf16.gmra.mxu0 %v4503
        %v4539 = vpop.f32.mrf.mxu0
        %v4540 = vadd.f32 0.0, %v4539
        %v4541 = vpop.f32.mrf.mxu0
        %v4542 = vpop.f32.mrf.mxu0
        %v4543 = vpop.f32.mrf.mxu0
        %4544 = vdwg.mxu0
        %v4545 = vmul.f32 %v4540, 0.35355338
        %v4546 = vadd.f32 %v4545, %v1029
        %v4547 = vsel %vm1154, %v4546, -inf
        %4548 = vmax.xlane.f32.xlu0 %v4547
        %v4549 = vpop.xlane.xlu0 %4548
        %v4550 = vsub.f32 %v4546, %v4549
        %v4551 = vmul.f32 %v4550, 1.442695
        %v4552 = vpow.pop %v4551
        %v4553 = vsel %vm1154, %v4552, 0.0
        %4554 = vadd.xlane.f32.xlu0 %v4553
        %v4555 = vpop.xlane.xlu0 %4554
        %v4556 = vrcp.pop %v4555
        %v4557 = vmul.f32 %v4552, %v4556
        %v4558 = vpack.c.bf16 %v4557, %v4557
        %v4559 = vmul.f32 %v4157, %v1513
        %v4560 = vpack.c.bf16 %v4559, %v4559
        %4562 = vrot.lane.b32.xlu0 %v4560, 64
        %v4563 = vpop.permute.xlu0 %4562
        %v4565 = vsel %vm1154, %v4558, 0
        %v4568 = vsel %vm1244, %v4563, 0
        %4570 = vmatprep.subr.bf16.mxu0 0
        %4571 = vmatpush1.bf16.msra.mxu0 0
        %4572 = vmatprep.subr.bf16.mxu0 0
        %4573 = vmatpush1.bf16.msra.mxu0 0
        %4574 = vmatprep.subr.bf16.mxu0 0
        %4575 = vmatpush1.bf16.msra.mxu0 0
        %4576 = vmatprep.subr.bf16.mxu0 0
        %4577 = vmatpush1.bf16.msra.mxu0 0
        %4578 = vmatprep.subr.bf16.mxu0 0
        %4579 = vmatpush1.bf16.msra.mxu0 0
        %4580 = vmatprep.subr.bf16.mxu0 0
        %4581 = vmatpush1.bf16.msra.mxu0 0
        %4582 = vmatprep.subr.bf16.mxu0 0
        %4583 = vmatpush1.bf16.msra.mxu0 0
        %4584 = vmatprep.subr.bf16.mxu0 0
        %4585 = vmatpush1.bf16.msra.mxu0 %v4568
        %4586 = vmatprep.subr.bf16.mxu0 0
        %4587 = vmatpush2.bf16.msra.mxu0 0
        %4588 = vmatprep.subr.bf16.mxu0 0
        %4589 = vmatpush2.bf16.msra.mxu0 0
        %4590 = vmatprep.subr.bf16.mxu0 0
        %4591 = vmatpush2.bf16.msra.mxu0 0
        %4592 = vmatprep.subr.bf16.mxu0 0
        %4593 = vmatpush2.bf16.msra.mxu0 0
        %4594 = vmatprep.subr.bf16.mxu0 0
        %4595 = vmatpush2.bf16.msra.mxu0 0
        %4596 = vmatprep.subr.bf16.mxu0 0
        %4597 = vmatpush2.bf16.msra.mxu0 0
        %4598 = vmatprep.subr.bf16.mxu0 0
        %4599 = vmatpush2.bf16.msra.mxu0 0
        %4600 = vmatprep.subr.bf16.mxu0 0
        %4601 = vmatpush2.bf16.msra.mxu0 0
        %4602 = vmatprep.mubr.bf16.mxu0 0
        %4603 = vmatmul.mubr.bf16.gmra.mxu0 %v4565
        %v4604 = vpop.f32.mrf.mxu0
        %v4605 = vadd.f32 0.0, %v4604
        %v4606 = vpop.f32.mrf.mxu0
        %v4607 = vpop.f32.mrf.mxu0
        %v4608 = vpop.f32.mrf.mxu0
        %4609 = vdwg.mxu0
        %v4610 = vadd.f32 %v4499, %v4605
        %s4611 = scalar_lea.vmem %s33, 16
        %v4612 = vld [vmem:[%s4611] sm:$0xf]
        %v4613 = vld [vmem:[%s4611 + $0x4] sm:$0xf]
        %v4614 = vld [vmem:[%s4611 + $0x8] sm:$0xf]
        %v4615 = vld [vmem:[%s4611 + $0xc] sm:$0xf]
        %v4616 = vpack.c.bf16 %v4610, %v4610
        %s4617 = scalar_lea.vmem %s35, 1
        %v4618 = vld [vmem:[%s4617] sm:$0x1]
        %v4620 = vlaneseq
        %v4621 = vshrl.u32 %v4620, 7
        %v4622 = vsub.s32 0, %v4621
        %v4623 = vrot.slane %v4618, %v4622
        %v4629 = vunpack.c.l.b16 %v4612
        %v4630 = vunpack.c.l.b16 %v4613
        %v4631 = vunpack.c.l.b16 %v4614
        %v4632 = vunpack.c.l.b16 %v4615
        %v4633 = vpack.c.b16 %v4630, %v4629
        %v4634 = vpack.c.b16 %v4632, %v4631
        %v4638 = vsel %vm1056, %v4616, 0
        %4640 = vmatprep.subr.bf16.mxu0 0
        %4641 = vmatpush1.bf16.msra.mxu0 0
        %4642 = vmatprep.subr.bf16.mxu0 0
        %4643 = vmatpush1.bf16.msra.mxu0 0
        %4644 = vmatprep.subr.bf16.mxu0 0
        %4645 = vmatpush1.bf16.msra.mxu0 0
        %4646 = vmatprep.subr.bf16.mxu0 0
        %4647 = vmatpush1.bf16.msra.mxu0 0
        %4648 = vmatprep.subr.bf16.mxu0 0
        %4649 = vmatpush1.bf16.msra.mxu0 0
        %4650 = vmatprep.subr.bf16.mxu0 0
        %4651 = vmatpush1.bf16.msra.mxu0 0
        %4652 = vmatprep.subr.bf16.mxu0 0
        %4653 = vmatpush1.bf16.msra.mxu0 %v4634
        %4654 = vmatprep.subr.bf16.mxu0 0
        %4655 = vmatpush1.bf16.msra.mxu0 %v4633
        %4656 = vmatprep.subr.bf16.mxu0 0
        %4657 = vmatpush2.bf16.msra.mxu0 0
        %4658 = vmatprep.subr.bf16.mxu0 0
        %4659 = vmatpush2.bf16.msra.mxu0 0
        %4660 = vmatprep.subr.bf16.mxu0 0
        %4661 = vmatpush2.bf16.msra.mxu0 0
        %4662 = vmatprep.subr.bf16.mxu0 0
        %4663 = vmatpush2.bf16.msra.mxu0 0
        %4664 = vmatprep.subr.bf16.mxu0 0
        %4665 = vmatpush2.bf16.msra.mxu0 0
        %4666 = vmatprep.subr.bf16.mxu0 0
        %4667 = vmatpush2.bf16.msra.mxu0 0
        %4668 = vmatprep.subr.bf16.mxu0 0
        %4669 = vmatpush2.bf16.msra.mxu0 0
        %4670 = vmatprep.subr.bf16.mxu0 0
        %4671 = vmatpush2.bf16.msra.mxu0 0
        %4672 = vmatprep.mubr.bf16.mxu0 0
        %4673 = vmatmul.mubr.bf16.gmra.mxu0 %v4638
        %v4674 = vpop.f32.mrf.mxu0
        %v4675 = vadd.f32 %v4623, %v4674
        %v4676 = vpop.f32.mrf.mxu0
        %v4677 = vpop.f32.mrf.mxu0
        %v4678 = vpop.f32.mrf.mxu0
        %4679 = vdwg.mxu0
        %v4680 = vadd.f32 %v4092, %v4675
        %s4681 = scalar_lea.vmem %s53, 8
        %v4682 = vld [vmem:[%s4681] sm:$0x1]
        %v4683 = vld [vmem:[%s4681 + $0x1] sm:$0x1]
        %v4684 = vsel %vm1056, %v4680, 0.0
        %4685 = vadd.xlane.f32.xlu0 %v4684
        %v4686 = vpop.xlane.xlu0 %4685
        %v4687 = vmul.f32 %v4686, %v1640
        %v4688 = vsub.f32 %v4680, %v4687
        %v4689 = vmul.f32 %v4688, %v4688
        %v4690 = vsel %vm1056, %v4689, 0.0
        %4691 = vadd.xlane.f32.xlu0 %v4690
        %v4692 = vpop.xlane.xlu0 %4691
        %v4693 = vmul.f32 %v4692, %v1640
        %v4694 = vadd.f32 %v4693, 1e-05
        %v4695 = vrsqrt.pop %v4694
        %v4696 = vmul.f32 %v4688, %v4695
        %v4697 = vlaneseq
        %v4698 = vshrl.u32 %v4697, 7
        %v4699 = vsub.s32 0, %v4698
        %v4700 = vrot.slane %v4682, %v4699
        %v4701 = vmul.f32 %v4696, %v4700
        %v4702 = vlaneseq
        %v4703 = vshrl.u32 %v4702, 7
        %v4704 = vsub.s32 0, %v4703
        %v4705 = vrot.slane %v4683, %v4704
        %v4706 = vadd.f32 %v4701, %v4705
        %s4707 = scalar_lea.vmem %s37, 16
        %v4708 = vld [vmem:[%s4707] sm:$0xf]
        %v4709 = vld [vmem:[%s4707 + $0x4] sm:$0xf]
        %v4710 = vld [vmem:[%s4707 + $0x8] sm:$0xf]
        %v4711 = vld [vmem:[%s4707 + $0xc] sm:$0xf]
        %s4712 = scalar_lea.vmem %s39, 1
        %v4713 = vld [vmem:[%s4712] sm:$0x1]
        %v4714 = vpack.c.bf16 %v4706, %v4706
        %v4716 = vlaneseq
        %v4717 = vshrl.u32 %v4716, 7
        %v4718 = vsub.s32 0, %v4717
        %v4719 = vrot.slane %v4713, %v4718
        %v4725 = vunpack.c.l.b16 %v4708
        %v4726 = vunpack.c.l.b16 %v4709
        %v4727 = vunpack.c.l.b16 %v4710
        %v4728 = vunpack.c.l.b16 %v4711
        %v4729 = vpack.c.b16 %v4726, %v4725
        %v4730 = vpack.c.b16 %v4728, %v4727
        %v4734 = vsel %vm1056, %v4714, 0
        %4736 = vmatprep.subr.bf16.mxu0 0
        %4737 = vmatpush1.bf16.msra.mxu0 0
        %4738 = vmatprep.subr.bf16.mxu0 0
        %4739 = vmatpush1.bf16.msra.mxu0 0
        %4740 = vmatprep.subr.bf16.mxu0 0
        %4741 = vmatpush1.bf16.msra.mxu0 0
        %4742 = vmatprep.subr.bf16.mxu0 0
        %4743 = vmatpush1.bf16.msra.mxu0 0
        %4744 = vmatprep.subr.bf16.mxu0 0
        %4745 = vmatpush1.bf16.msra.mxu0 0
        %4746 = vmatprep.subr.bf16.mxu0 0
        %4747 = vmatpush1.bf16.msra.mxu0 0
        %4748 = vmatprep.subr.bf16.mxu0 0
        %4749 = vmatpush1.bf16.msra.mxu0 %v4730
        %4750 = vmatprep.subr.bf16.mxu0 0
        %4751 = vmatpush1.bf16.msra.mxu0 %v4729
        %4752 = vmatprep.subr.bf16.mxu0 0
        %4753 = vmatpush2.bf16.msra.mxu0 0
        %4754 = vmatprep.subr.bf16.mxu0 0
        %4755 = vmatpush2.bf16.msra.mxu0 0
        %4756 = vmatprep.subr.bf16.mxu0 0
        %4757 = vmatpush2.bf16.msra.mxu0 0
        %4758 = vmatprep.subr.bf16.mxu0 0
        %4759 = vmatpush2.bf16.msra.mxu0 0
        %4760 = vmatprep.subr.bf16.mxu0 0
        %4761 = vmatpush2.bf16.msra.mxu0 0
        %4762 = vmatprep.subr.bf16.mxu0 0
        %4763 = vmatpush2.bf16.msra.mxu0 0
        %4764 = vmatprep.subr.bf16.mxu0 0
        %4765 = vmatpush2.bf16.msra.mxu0 0
        %4766 = vmatprep.subr.bf16.mxu0 0
        %4767 = vmatpush2.bf16.msra.mxu0 0
        %4768 = vmatprep.mubr.bf16.mxu0 0
        %4769 = vmatmul.mubr.bf16.gmra.mxu0 %v4734
        %v4770 = vpop.f32.mrf.mxu0
        %v4771 = vadd.f32 %v4719, %v4770
        %v4772 = vpop.f32.mrf.mxu0
        %v4773 = vpop.f32.mrf.mxu0
        %v4774 = vpop.f32.mrf.mxu0
        %4775 = vdwg.mxu0
        %4776 = vrot.lane.b32.xlu0 %v4729, 96
        %v4777 = vpop.permute.xlu0 %4776
        %4778 = vrot.lane.b32.xlu0 %v4730, 96
        %v4779 = vpop.permute.xlu0 %4778
        %4782 = vrot.lane.b32.xlu0 %v4719, 96
        %v4783 = vpop.permute.xlu0 %4782
        %4785 = vmatprep.subr.bf16.mxu0 0
        %4786 = vmatpush1.bf16.msra.mxu0 0
        %4787 = vmatprep.subr.bf16.mxu0 0
        %4788 = vmatpush1.bf16.msra.mxu0 0
        %4789 = vmatprep.subr.bf16.mxu0 0
        %4790 = vmatpush1.bf16.msra.mxu0 0
        %4791 = vmatprep.subr.bf16.mxu0 0
        %4792 = vmatpush1.bf16.msra.mxu0 0
        %4793 = vmatprep.subr.bf16.mxu0 0
        %4794 = vmatpush1.bf16.msra.mxu0 0
        %4795 = vmatprep.subr.bf16.mxu0 0
        %4796 = vmatpush1.bf16.msra.mxu0 0
        %4797 = vmatprep.subr.bf16.mxu0 0
        %4798 = vmatpush1.bf16.msra.mxu0 %v4779
        %4799 = vmatprep.subr.bf16.mxu0 0
        %4800 = vmatpush1.bf16.msra.mxu0 %v4777
        %4801 = vmatprep.subr.bf16.mxu0 0
        %4802 = vmatpush2.bf16.msra.mxu0 0
        %4803 = vmatprep.subr.bf16.mxu0 0
        %4804 = vmatpush2.bf16.msra.mxu0 0
        %4805 = vmatprep.subr.bf16.mxu0 0
        %4806 = vmatpush2.bf16.msra.mxu0 0
        %4807 = vmatprep.subr.bf16.mxu0 0
        %4808 = vmatpush2.bf16.msra.mxu0 0
        %4809 = vmatprep.subr.bf16.mxu0 0
        %4810 = vmatpush2.bf16.msra.mxu0 0
        %4811 = vmatprep.subr.bf16.mxu0 0
        %4812 = vmatpush2.bf16.msra.mxu0 0
        %4813 = vmatprep.subr.bf16.mxu0 0
        %4814 = vmatpush2.bf16.msra.mxu0 0
        %4815 = vmatprep.subr.bf16.mxu0 0
        %4816 = vmatpush2.bf16.msra.mxu0 0
        %4817 = vmatprep.mubr.bf16.mxu0 0
        %4818 = vmatmul.mubr.bf16.gmra.mxu0 %v3323
        %v4819 = vpop.f32.mrf.mxu0
        %v4820 = vadd.f32 %v4783, %v4819
        %v4821 = vpop.f32.mrf.mxu0
        %v4822 = vpop.f32.mrf.mxu0
        %v4823 = vpop.f32.mrf.mxu0
        %4824 = vdwg.mxu0
        %v4825 = vpack.c.bf16 %v4820, %v4820
        %v4826 = vmul.f32 %v4771, %v1012
        %v4827 = vpack.c.bf16 %v4826, %v4826
        %v4829 = vsel %vm1056, %v4827, 0
        %v4832 = vsel %vm1056, %v4825, 0
        %4834 = vmatprep.subr.bf16.mxu0 0
        %4835 = vmatpush1.bf16.xpose.msra.mxu0 0
        %4836 = vmatprep.subr.bf16.mxu0 0
        %4837 = vmatpush1.bf16.xpose.msra.mxu0 0
        %4838 = vmatprep.subr.bf16.mxu0 0
        %4839 = vmatpush1.bf16.xpose.msra.mxu0 0
        %4840 = vmatprep.subr.bf16.mxu0 0
        %4841 = vmatpush1.bf16.xpose.msra.mxu0 0
        %4842 = vmatprep.subr.bf16.mxu0 0
        %4843 = vmatpush1.bf16.xpose.msra.mxu0 0
        %4844 = vmatprep.subr.bf16.mxu0 0
        %4845 = vmatpush1.bf16.xpose.msra.mxu0 0
        %4846 = vmatprep.subr.bf16.mxu0 0
        %4847 = vmatpush1.bf16.xpose.msra.mxu0 0
        %4848 = vmatprep.subr.bf16.mxu0 0
        %4849 = vmatpush1.bf16.xpose.msra.mxu0 %v4832
        %4850 = vmatprep.subr.bf16.mxu0 0
        %4851 = vmatpush2.bf16.xpose.msra.mxu0 0
        %4852 = vmatprep.subr.bf16.mxu0 0
        %4853 = vmatpush2.bf16.xpose.msra.mxu0 0
        %4854 = vmatprep.subr.bf16.mxu0 0
        %4855 = vmatpush2.bf16.xpose.msra.mxu0 0
        %4856 = vmatprep.subr.bf16.mxu0 0
        %4857 = vmatpush2.bf16.xpose.msra.mxu0 0
        %4858 = vmatprep.subr.bf16.mxu0 0
        %4859 = vmatpush2.bf16.xpose.msra.mxu0 0
        %4860 = vmatprep.subr.bf16.mxu0 0
        %4861 = vmatpush2.bf16.xpose.msra.mxu0 0
        %4862 = vmatprep.subr.bf16.mxu0 0
        %4863 = vmatpush2.bf16.xpose.msra.mxu0 0
        %4864 = vmatprep.subr.bf16.mxu0 0
        %4865 = vmatpush2.bf16.xpose.msra.mxu0 0
        %4866 = vmatprep.mubr.bf16.mxu0 0
        %4867 = vmatmul.mubr.bf16.gmra.mxu0 %v4829
        %v4868 = vpop.f32.mrf.mxu0
        %v4869 = vadd.f32 0.0, %v4868
        %v4870 = vpop.f32.mrf.mxu0
        %v4871 = vpop.f32.mrf.mxu0
        %v4872 = vpop.f32.mrf.mxu0
        %4873 = vdwg.mxu0
        %v4874 = vmul.f32 %v4869, 0.35355338
        %v4875 = vadd.f32 %v4874, %v1030
        %v4876 = vsel %vm1154, %v4875, -inf
        %4877 = vmax.xlane.f32.xlu0 %v4876
        %v4878 = vpop.xlane.xlu0 %4877
        %v4879 = vsub.f32 %v4875, %v4878
        %v4880 = vmul.f32 %v4879, 1.442695
        %v4881 = vpow.pop %v4880
        %v4882 = vsel %vm1154, %v4881, 0.0
        %4883 = vadd.xlane.f32.xlu0 %v4882
        %v4884 = vpop.xlane.xlu0 %4883
        %v4885 = vrcp.pop %v4884
        %v4886 = vmul.f32 %v4881, %v4885
        %v4887 = vpack.c.bf16 %v4886, %v4886
        %v4888 = vmul.f32 %v4820, %v3429
        %v4889 = vpack.c.bf16 %v4888, %v4888
        %v4890 = vmul.f32 %v4771, %v1017
        %v4891 = vpack.c.bf16 %v4890, %v4890
        %v4893 = vsel %vm1056, %v4891, 0
        %4895 = vmatprep.subr.bf16.mxu0 0
        %4896 = vmatpush1.bf16.xpose.msra.mxu0 0
        %4897 = vmatprep.subr.bf16.mxu0 0
        %4898 = vmatpush1.bf16.xpose.msra.mxu0 0
        %4899 = vmatprep.subr.bf16.mxu0 0
        %4900 = vmatpush1.bf16.xpose.msra.mxu0 0
        %4901 = vmatprep.subr.bf16.mxu0 0
        %4902 = vmatpush1.bf16.xpose.msra.mxu0 0
        %4903 = vmatprep.subr.bf16.mxu0 0
        %4904 = vmatpush1.bf16.xpose.msra.mxu0 0
        %4905 = vmatprep.subr.bf16.mxu0 0
        %4906 = vmatpush1.bf16.xpose.msra.mxu0 0
        %4907 = vmatprep.subr.bf16.mxu0 0
        %4908 = vmatpush1.bf16.xpose.msra.mxu0 0
        %4909 = vmatprep.subr.bf16.mxu0 0
        %4910 = vmatpush1.bf16.xpose.msra.mxu0 %v4832
        %4911 = vmatprep.subr.bf16.mxu0 0
        %4912 = vmatpush2.bf16.xpose.msra.mxu0 0
        %4913 = vmatprep.subr.bf16.mxu0 0
        %4914 = vmatpush2.bf16.xpose.msra.mxu0 0
        %4915 = vmatprep.subr.bf16.mxu0 0
        %4916 = vmatpush2.bf16.xpose.msra.mxu0 0
        %4917 = vmatprep.subr.bf16.mxu0 0
        %4918 = vmatpush2.bf16.xpose.msra.mxu0 0
        %4919 = vmatprep.subr.bf16.mxu0 0
        %4920 = vmatpush2.bf16.xpose.msra.mxu0 0
        %4921 = vmatprep.subr.bf16.mxu0 0
        %4922 = vmatpush2.bf16.xpose.msra.mxu0 0
        %4923 = vmatprep.subr.bf16.mxu0 0
        %4924 = vmatpush2.bf16.xpose.msra.mxu0 0
        %4925 = vmatprep.subr.bf16.mxu0 0
        %4926 = vmatpush2.bf16.xpose.msra.mxu0 0
        %4927 = vmatprep.mubr.bf16.mxu0 0
        %4928 = vmatmul.mubr.bf16.gmra.mxu0 %v4893
        %v4929 = vpop.f32.mrf.mxu0
        %v4930 = vadd.f32 0.0, %v4929
        %v4931 = vpop.f32.mrf.mxu0
        %v4932 = vpop.f32.mrf.mxu0
        %v4933 = vpop.f32.mrf.mxu0
        %4934 = vdwg.mxu0
        %v4935 = vmul.f32 %v4930, 0.35355338
        %v4936 = vadd.f32 %v4935, %v1030
        %v4937 = vsel %vm1154, %v4936, -inf
        %4938 = vmax.xlane.f32.xlu0 %v4937
        %v4939 = vpop.xlane.xlu0 %4938
        %v4940 = vsub.f32 %v4936, %v4939
        %v4941 = vmul.f32 %v4940, 1.442695
        %v4942 = vpow.pop %v4941
        %v4943 = vsel %vm1154, %v4942, 0.0
        %4944 = vadd.xlane.f32.xlu0 %v4943
        %v4945 = vpop.xlane.xlu0 %4944
        %v4946 = vrcp.pop %v4945
        %v4947 = vmul.f32 %v4942, %v4946
        %v4948 = vpack.c.bf16 %v4947, %v4947
        %v4949 = vmul.f32 %v4820, %v3493
        %v4950 = vpack.c.bf16 %v4949, %v4949
        %4952 = vrot.lane.b32.xlu0 %v4950, 96
        %v4953 = vpop.permute.xlu0 %4952
        %v4955 = vsel %vm1154, %v4948, 0
        %v4958 = vsel %vm1244, %v4953, 0
        %4960 = vmatprep.subr.bf16.mxu0 0
        %4961 = vmatpush1.bf16.msra.mxu0 0
        %4962 = vmatprep.subr.bf16.mxu0 0
        %4963 = vmatpush1.bf16.msra.mxu0 0
        %4964 = vmatprep.subr.bf16.mxu0 0
        %4965 = vmatpush1.bf16.msra.mxu0 0
        %4966 = vmatprep.subr.bf16.mxu0 0
        %4967 = vmatpush1.bf16.msra.mxu0 0
        %4968 = vmatprep.subr.bf16.mxu0 0
        %4969 = vmatpush1.bf16.msra.mxu0 0
        %4970 = vmatprep.subr.bf16.mxu0 0
        %4971 = vmatpush1.bf16.msra.mxu0 0
        %4972 = vmatprep.subr.bf16.mxu0 0
        %4973 = vmatpush1.bf16.msra.mxu0 0
        %4974 = vmatprep.subr.bf16.mxu0 0
        %4975 = vmatpush1.bf16.msra.mxu0 %v4958
        %4976 = vmatprep.subr.bf16.mxu0 0
        %4977 = vmatpush2.bf16.msra.mxu0 0
        %4978 = vmatprep.subr.bf16.mxu0 0
        %4979 = vmatpush2.bf16.msra.mxu0 0
        %4980 = vmatprep.subr.bf16.mxu0 0
        %4981 = vmatpush2.bf16.msra.mxu0 0
        %4982 = vmatprep.subr.bf16.mxu0 0
        %4983 = vmatpush2.bf16.msra.mxu0 0
        %4984 = vmatprep.subr.bf16.mxu0 0
        %4985 = vmatpush2.bf16.msra.mxu0 0
        %4986 = vmatprep.subr.bf16.mxu0 0
        %4987 = vmatpush2.bf16.msra.mxu0 0
        %4988 = vmatprep.subr.bf16.mxu0 0
        %4989 = vmatpush2.bf16.msra.mxu0 0
        %4990 = vmatprep.subr.bf16.mxu0 0
        %4991 = vmatpush2.bf16.msra.mxu0 0
        %4992 = vmatprep.mubr.bf16.mxu0 0
        %4993 = vmatmul.mubr.bf16.gmra.mxu0 %v4955
        %v4994 = vpop.f32.mrf.mxu0
        %v4995 = vadd.f32 0.0, %v4994
        %v4996 = vpop.f32.mrf.mxu0
        %v4997 = vpop.f32.mrf.mxu0
        %v4998 = vpop.f32.mrf.mxu0
        %4999 = vdwg.mxu0
        %5001 = vrot.lane.b32.xlu0 %v4889, 96
        %v5002 = vpop.permute.xlu0 %5001
        %v5004 = vsel %vm1154, %v4887, 0
        %v5007 = vsel %vm1244, %v5002, 0
        %5009 = vmatprep.subr.bf16.mxu0 0
        %5010 = vmatpush1.bf16.msra.mxu0 0
        %5011 = vmatprep.subr.bf16.mxu0 0
        %5012 = vmatpush1.bf16.msra.mxu0 0
        %5013 = vmatprep.subr.bf16.mxu0 0
        %5014 = vmatpush1.bf16.msra.mxu0 0
        %5015 = vmatprep.subr.bf16.mxu0 0
        %5016 = vmatpush1.bf16.msra.mxu0 0
        %5017 = vmatprep.subr.bf16.mxu0 0
        %5018 = vmatpush1.bf16.msra.mxu0 0
        %5019 = vmatprep.subr.bf16.mxu0 0
        %5020 = vmatpush1.bf16.msra.mxu0 0
        %5021 = vmatprep.subr.bf16.mxu0 0
        %5022 = vmatpush1.bf16.msra.mxu0 0
        %5023 = vmatprep.subr.bf16.mxu0 0
        %5024 = vmatpush1.bf16.msra.mxu0 %v5007
        %5025 = vmatprep.subr.bf16.mxu0 0
        %5026 = vmatpush2.bf16.msra.mxu0 0
        %5027 = vmatprep.subr.bf16.mxu0 0
        %5028 = vmatpush2.bf16.msra.mxu0 0
        %5029 = vmatprep.subr.bf16.mxu0 0
        %5030 = vmatpush2.bf16.msra.mxu0 0
        %5031 = vmatprep.subr.bf16.mxu0 0
        %5032 = vmatpush2.bf16.msra.mxu0 0
        %5033 = vmatprep.subr.bf16.mxu0 0
        %5034 = vmatpush2.bf16.msra.mxu0 0
        %5035 = vmatprep.subr.bf16.mxu0 0
        %5036 = vmatpush2.bf16.msra.mxu0 0
        %5037 = vmatprep.subr.bf16.mxu0 0
        %5038 = vmatpush2.bf16.msra.mxu0 0
        %5039 = vmatprep.subr.bf16.mxu0 0
        %5040 = vmatpush2.bf16.msra.mxu0 0
        %5041 = vmatprep.mubr.bf16.mxu0 0
        %5042 = vmatmul.mubr.bf16.gmra.mxu0 %v5004
        %v5043 = vpop.f32.mrf.mxu0
        %v5044 = vadd.f32 %v4995, %v5043
        %v5045 = vpop.f32.mrf.mxu0
        %v5046 = vpop.f32.mrf.mxu0
        %v5047 = vpop.f32.mrf.mxu0
        %5048 = vdwg.mxu0
        %v5049 = vmul.f32 %v4771, %v1022
        %v5050 = vpack.c.bf16 %v5049, %v5049
        %v5052 = vsel %vm1056, %v5050, 0
        %5054 = vmatprep.subr.bf16.mxu0 0
        %5055 = vmatpush1.bf16.xpose.msra.mxu0 0
        %5056 = vmatprep.subr.bf16.mxu0 0
        %5057 = vmatpush1.bf16.xpose.msra.mxu0 0
        %5058 = vmatprep.subr.bf16.mxu0 0
        %5059 = vmatpush1.bf16.xpose.msra.mxu0 0
        %5060 = vmatprep.subr.bf16.mxu0 0
        %5061 = vmatpush1.bf16.xpose.msra.mxu0 0
        %5062 = vmatprep.subr.bf16.mxu0 0
        %5063 = vmatpush1.bf16.xpose.msra.mxu0 0
        %5064 = vmatprep.subr.bf16.mxu0 0
        %5065 = vmatpush1.bf16.xpose.msra.mxu0 0
        %5066 = vmatprep.subr.bf16.mxu0 0
        %5067 = vmatpush1.bf16.xpose.msra.mxu0 0
        %5068 = vmatprep.subr.bf16.mxu0 0
        %5069 = vmatpush1.bf16.xpose.msra.mxu0 %v4832
        %5070 = vmatprep.subr.bf16.mxu0 0
        %5071 = vmatpush2.bf16.xpose.msra.mxu0 0
        %5072 = vmatprep.subr.bf16.mxu0 0
        %5073 = vmatpush2.bf16.xpose.msra.mxu0 0
        %5074 = vmatprep.subr.bf16.mxu0 0
        %5075 = vmatpush2.bf16.xpose.msra.mxu0 0
        %5076 = vmatprep.subr.bf16.mxu0 0
        %5077 = vmatpush2.bf16.xpose.msra.mxu0 0
        %5078 = vmatprep.subr.bf16.mxu0 0
        %5079 = vmatpush2.bf16.xpose.msra.mxu0 0
        %5080 = vmatprep.subr.bf16.mxu0 0
        %5081 = vmatpush2.bf16.xpose.msra.mxu0 0
        %5082 = vmatprep.subr.bf16.mxu0 0
        %5083 = vmatpush2.bf16.xpose.msra.mxu0 0
        %5084 = vmatprep.subr.bf16.mxu0 0
        %5085 = vmatpush2.bf16.xpose.msra.mxu0 0
        %5086 = vmatprep.mubr.bf16.mxu0 0
        %5087 = vmatmul.mubr.bf16.gmra.mxu0 %v5052
        %v5088 = vpop.f32.mrf.mxu0
        %v5089 = vadd.f32 0.0, %v5088
        %v5090 = vpop.f32.mrf.mxu0
        %v5091 = vpop.f32.mrf.mxu0
        %v5092 = vpop.f32.mrf.mxu0
        %5093 = vdwg.mxu0
        %v5094 = vmul.f32 %v5089, 0.35355338
        %v5095 = vadd.f32 %v5094, %v1030
        %v5096 = vsel %vm1154, %v5095, -inf
        %5097 = vmax.xlane.f32.xlu0 %v5096
        %v5098 = vpop.xlane.xlu0 %5097
        %v5099 = vsub.f32 %v5095, %v5098
        %v5100 = vmul.f32 %v5099, 1.442695
        %v5101 = vpow.pop %v5100
        %v5102 = vsel %vm1154, %v5101, 0.0
        %5103 = vadd.xlane.f32.xlu0 %v5102
        %v5104 = vpop.xlane.xlu0 %5103
        %v5105 = vrcp.pop %v5104
        %v5106 = vmul.f32 %v5101, %v5105
        %v5107 = vpack.c.bf16 %v5106, %v5106
        %v5108 = vmul.f32 %v4820, %v3655
        %v5109 = vpack.c.bf16 %v5108, %v5108
        %5111 = vrot.lane.b32.xlu0 %v5109, 96
        %v5112 = vpop.permute.xlu0 %5111
        %v5114 = vsel %vm1154, %v5107, 0
        %v5117 = vsel %vm1244, %v5112, 0
        %5119 = vmatprep.subr.bf16.mxu0 0
        %5120 = vmatpush1.bf16.msra.mxu0 0
        %5121 = vmatprep.subr.bf16.mxu0 0
        %5122 = vmatpush1.bf16.msra.mxu0 0
        %5123 = vmatprep.subr.bf16.mxu0 0
        %5124 = vmatpush1.bf16.msra.mxu0 0
        %5125 = vmatprep.subr.bf16.mxu0 0
        %5126 = vmatpush1.bf16.msra.mxu0 0
        %5127 = vmatprep.subr.bf16.mxu0 0
        %5128 = vmatpush1.bf16.msra.mxu0 0
        %5129 = vmatprep.subr.bf16.mxu0 0
        %5130 = vmatpush1.bf16.msra.mxu0 0
        %5131 = vmatprep.subr.bf16.mxu0 0
        %5132 = vmatpush1.bf16.msra.mxu0 0
        %5133 = vmatprep.subr.bf16.mxu0 0
        %5134 = vmatpush1.bf16.msra.mxu0 %v5117
        %5135 = vmatprep.subr.bf16.mxu0 0
        %5136 = vmatpush2.bf16.msra.mxu0 0
        %5137 = vmatprep.subr.bf16.mxu0 0
        %5138 = vmatpush2.bf16.msra.mxu0 0
        %5139 = vmatprep.subr.bf16.mxu0 0
        %5140 = vmatpush2.bf16.msra.mxu0 0
        %5141 = vmatprep.subr.bf16.mxu0 0
        %5142 = vmatpush2.bf16.msra.mxu0 0
        %5143 = vmatprep.subr.bf16.mxu0 0
        %5144 = vmatpush2.bf16.msra.mxu0 0
        %5145 = vmatprep.subr.bf16.mxu0 0
        %5146 = vmatpush2.bf16.msra.mxu0 0
        %5147 = vmatprep.subr.bf16.mxu0 0
        %5148 = vmatpush2.bf16.msra.mxu0 0
        %5149 = vmatprep.subr.bf16.mxu0 0
        %5150 = vmatpush2.bf16.msra.mxu0 0
        %5151 = vmatprep.mubr.bf16.mxu0 0
        %5152 = vmatmul.mubr.bf16.gmra.mxu0 %v5114
        %v5153 = vpop.f32.mrf.mxu0
        %v5154 = vadd.f32 0.0, %v5153
        %v5155 = vpop.f32.mrf.mxu0
        %v5156 = vpop.f32.mrf.mxu0
        %v5157 = vpop.f32.mrf.mxu0
        %5158 = vdwg.mxu0
        %v5159 = vadd.f32 %v5044, %v5154
        %v5160 = vmul.f32 %v4771, %v1027
        %v5161 = vpack.c.bf16 %v5160, %v5160
        %v5163 = vsel %vm1056, %v5161, 0
        %5165 = vmatprep.subr.bf16.mxu0 0
        %5166 = vmatpush1.bf16.xpose.msra.mxu0 0
        %5167 = vmatprep.subr.bf16.mxu0 0
        %5168 = vmatpush1.bf16.xpose.msra.mxu0 0
        %5169 = vmatprep.subr.bf16.mxu0 0
        %5170 = vmatpush1.bf16.xpose.msra.mxu0 0
        %5171 = vmatprep.subr.bf16.mxu0 0
        %5172 = vmatpush1.bf16.xpose.msra.mxu0 0
        %5173 = vmatprep.subr.bf16.mxu0 0
        %5174 = vmatpush1.bf16.xpose.msra.mxu0 0
        %5175 = vmatprep.subr.bf16.mxu0 0
        %5176 = vmatpush1.bf16.xpose.msra.mxu0 0
        %5177 = vmatprep.subr.bf16.mxu0 0
        %5178 = vmatpush1.bf16.xpose.msra.mxu0 0
        %5179 = vmatprep.subr.bf16.mxu0 0
        %5180 = vmatpush1.bf16.xpose.msra.mxu0 %v4832
        %5181 = vmatprep.subr.bf16.mxu0 0
        %5182 = vmatpush2.bf16.xpose.msra.mxu0 0
        %5183 = vmatprep.subr.bf16.mxu0 0
        %5184 = vmatpush2.bf16.xpose.msra.mxu0 0
        %5185 = vmatprep.subr.bf16.mxu0 0
        %5186 = vmatpush2.bf16.xpose.msra.mxu0 0
        %5187 = vmatprep.subr.bf16.mxu0 0
        %5188 = vmatpush2.bf16.xpose.msra.mxu0 0
        %5189 = vmatprep.subr.bf16.mxu0 0
        %5190 = vmatpush2.bf16.xpose.msra.mxu0 0
        %5191 = vmatprep.subr.bf16.mxu0 0
        %5192 = vmatpush2.bf16.xpose.msra.mxu0 0
        %5193 = vmatprep.subr.bf16.mxu0 0
        %5194 = vmatpush2.bf16.xpose.msra.mxu0 0
        %5195 = vmatprep.subr.bf16.mxu0 0
        %5196 = vmatpush2.bf16.xpose.msra.mxu0 0
        %5197 = vmatprep.mubr.bf16.mxu0 0
        %5198 = vmatmul.mubr.bf16.gmra.mxu0 %v5163
        %v5199 = vpop.f32.mrf.mxu0
        %v5200 = vadd.f32 0.0, %v5199
        %v5201 = vpop.f32.mrf.mxu0
        %v5202 = vpop.f32.mrf.mxu0
        %v5203 = vpop.f32.mrf.mxu0
        %5204 = vdwg.mxu0
        %v5205 = vmul.f32 %v5200, 0.35355338
        %v5206 = vadd.f32 %v5205, %v1030
        %v5207 = vsel %vm1154, %v5206, -inf
        %5208 = vmax.xlane.f32.xlu0 %v5207
        %v5209 = vpop.xlane.xlu0 %5208
        %v5210 = vsub.f32 %v5206, %v5209
        %v5211 = vmul.f32 %v5210, 1.442695
        %v5212 = vpow.pop %v5211
        %v5213 = vsel %vm1154, %v5212, 0.0
        %5214 = vadd.xlane.f32.xlu0 %v5213
        %v5215 = vpop.xlane.xlu0 %5214
        %v5216 = vrcp.pop %v5215
        %v5217 = vmul.f32 %v5212, %v5216
        %v5218 = vpack.c.bf16 %v5217, %v5217
        %v5219 = vmul.f32 %v4820, %v3769
        %v5220 = vpack.c.bf16 %v5219, %v5219
        %5222 = vrot.lane.b32.xlu0 %v5220, 96
        %v5223 = vpop.permute.xlu0 %5222
        %v5225 = vsel %vm1154, %v5218, 0
        %v5228 = vsel %vm1244, %v5223, 0
        %5230 = vmatprep.subr.bf16.mxu0 0
        %5231 = vmatpush1.bf16.msra.mxu0 0
        %5232 = vmatprep.subr.bf16.mxu0 0
        %5233 = vmatpush1.bf16.msra.mxu0 0
        %5234 = vmatprep.subr.bf16.mxu0 0
        %5235 = vmatpush1.bf16.msra.mxu0 0
        %5236 = vmatprep.subr.bf16.mxu0 0
        %5237 = vmatpush1.bf16.msra.mxu0 0
        %5238 = vmatprep.subr.bf16.mxu0 0
        %5239 = vmatpush1.bf16.msra.mxu0 0
        %5240 = vmatprep.subr.bf16.mxu0 0
        %5241 = vmatpush1.bf16.msra.mxu0 0
        %5242 = vmatprep.subr.bf16.mxu0 0
        %5243 = vmatpush1.bf16.msra.mxu0 0
        %5244 = vmatprep.subr.bf16.mxu0 0
        %5245 = vmatpush1.bf16.msra.mxu0 %v5228
        %5246 = vmatprep.subr.bf16.mxu0 0
        %5247 = vmatpush2.bf16.msra.mxu0 0
        %5248 = vmatprep.subr.bf16.mxu0 0
        %5249 = vmatpush2.bf16.msra.mxu0 0
        %5250 = vmatprep.subr.bf16.mxu0 0
        %5251 = vmatpush2.bf16.msra.mxu0 0
        %5252 = vmatprep.subr.bf16.mxu0 0
        %5253 = vmatpush2.bf16.msra.mxu0 0
        %5254 = vmatprep.subr.bf16.mxu0 0
        %5255 = vmatpush2.bf16.msra.mxu0 0
        %5256 = vmatprep.subr.bf16.mxu0 0
        %5257 = vmatpush2.bf16.msra.mxu0 0
        %5258 = vmatprep.subr.bf16.mxu0 0
        %5259 = vmatpush2.bf16.msra.mxu0 0
        %5260 = vmatprep.subr.bf16.mxu0 0
        %5261 = vmatpush2.bf16.msra.mxu0 0
        %5262 = vmatprep.mubr.bf16.mxu0 0
        %5263 = vmatmul.mubr.bf16.gmra.mxu0 %v5225
        %v5264 = vpop.f32.mrf.mxu0
        %v5265 = vadd.f32 0.0, %v5264
        %v5266 = vpop.f32.mrf.mxu0
        %v5267 = vpop.f32.mrf.mxu0
        %v5268 = vpop.f32.mrf.mxu0
        %5269 = vdwg.mxu0
        %v5270 = vadd.f32 %v5159, %v5265
        %s5271 = scalar_lea.vmem %s41, 16
        %v5272 = vld [vmem:[%s5271] sm:$0xf]
        %v5273 = vld [vmem:[%s5271 + $0x4] sm:$0xf]
        %v5274 = vld [vmem:[%s5271 + $0x8] sm:$0xf]
        %v5275 = vld [vmem:[%s5271 + $0xc] sm:$0xf]
        %v5276 = vpack.c.bf16 %v5270, %v5270
        %s5277 = scalar_lea.vmem %s43, 1
        %v5278 = vld [vmem:[%s5277] sm:$0x1]
        %v5280 = vlaneseq
        %v5281 = vshrl.u32 %v5280, 7
        %v5282 = vsub.s32 0, %v5281
        %v5283 = vrot.slane %v5278, %v5282
        %v5289 = vunpack.c.l.b16 %v5272
        %v5290 = vunpack.c.l.b16 %v5273
        %v5291 = vunpack.c.l.b16 %v5274
        %v5292 = vunpack.c.l.b16 %v5275
        %v5293 = vpack.c.b16 %v5290, %v5289
        %v5294 = vpack.c.b16 %v5292, %v5291
        %v5298 = vsel %vm1056, %v5276, 0
        %5300 = vmatprep.subr.bf16.mxu0 0
        %5301 = vmatpush1.bf16.msra.mxu0 0
        %5302 = vmatprep.subr.bf16.mxu0 0
        %5303 = vmatpush1.bf16.msra.mxu0 0
        %5304 = vmatprep.subr.bf16.mxu0 0
        %5305 = vmatpush1.bf16.msra.mxu0 0
        %5306 = vmatprep.subr.bf16.mxu0 0
        %5307 = vmatpush1.bf16.msra.mxu0 0
        %5308 = vmatprep.subr.bf16.mxu0 0
        %5309 = vmatpush1.bf16.msra.mxu0 0
        %5310 = vmatprep.subr.bf16.mxu0 0
        %5311 = vmatpush1.bf16.msra.mxu0 0
        %5312 = vmatprep.subr.bf16.mxu0 0
        %5313 = vmatpush1.bf16.msra.mxu0 %v5294
        %5314 = vmatprep.subr.bf16.mxu0 0
        %5315 = vmatpush1.bf16.msra.mxu0 %v5293
        %5316 = vmatprep.subr.bf16.mxu0 0
        %5317 = vmatpush2.bf16.msra.mxu0 0
        %5318 = vmatprep.subr.bf16.mxu0 0
        %5319 = vmatpush2.bf16.msra.mxu0 0
        %5320 = vmatprep.subr.bf16.mxu0 0
        %5321 = vmatpush2.bf16.msra.mxu0 0
        %5322 = vmatprep.subr.bf16.mxu0 0
        %5323 = vmatpush2.bf16.msra.mxu0 0
        %5324 = vmatprep.subr.bf16.mxu0 0
        %5325 = vmatpush2.bf16.msra.mxu0 0
        %5326 = vmatprep.subr.bf16.mxu0 0
        %5327 = vmatpush2.bf16.msra.mxu0 0
        %5328 = vmatprep.subr.bf16.mxu0 0
        %5329 = vmatpush2.bf16.msra.mxu0 0
        %5330 = vmatprep.subr.bf16.mxu0 0
        %5331 = vmatpush2.bf16.msra.mxu0 0
        %5332 = vmatprep.mubr.bf16.mxu0 0
        %5333 = vmatmul.mubr.bf16.gmra.mxu0 %v5298
        %v5334 = vpop.f32.mrf.mxu0
        %v5335 = vadd.f32 %v5283, %v5334
        %v5336 = vpop.f32.mrf.mxu0
        %v5337 = vpop.f32.mrf.mxu0
        %v5338 = vpop.f32.mrf.mxu0
        %5339 = vdwg.mxu0
        %v5340 = vadd.f32 %v4706, %v5335
        %v5341 = vld [vmem:[%s4681 + $0x2] sm:$0x1]
        %v5342 = vld [vmem:[%s4681 + $0x3] sm:$0x1]
        %v5343 = vsel %vm1056, %v5340, 0.0
        %5344 = vadd.xlane.f32.xlu0 %v5343
        %v5345 = vpop.xlane.xlu0 %5344
        %v5346 = vmul.f32 %v5345, %v1640
        %v5347 = vsub.f32 %v5340, %v5346
        %v5348 = vmul.f32 %v5347, %v5347
        %v5349 = vsel %vm1056, %v5348, 0.0
        %5350 = vadd.xlane.f32.xlu0 %v5349
        %v5351 = vpop.xlane.xlu0 %5350
        %v5352 = vmul.f32 %v5351, %v1640
        %v5353 = vadd.f32 %v5352, 1e-05
        %v5354 = vrsqrt.pop %v5353
        %v5355 = vmul.f32 %v5347, %v5354
        %v5356 = vlaneseq
        %v5357 = vshrl.u32 %v5356, 7
        %v5358 = vsub.s32 0, %v5357
        %v5359 = vrot.slane %v5341, %v5358
        %v5360 = vmul.f32 %v5355, %v5359
        %v5361 = vlaneseq
        %v5362 = vshrl.u32 %v5361, 7
        %v5363 = vsub.s32 0, %v5362
        %v5364 = vrot.slane %v5342, %v5363
        %v5365 = vadd.f32 %v5360, %v5364
        %s5366 = scalar_lea.vmem %s45, 16
        %v5367 = vld [vmem:[%s5366] sm:$0xf]
        %v5368 = vld [vmem:[%s5366 + $0x4] sm:$0xf]
        %v5369 = vld [vmem:[%s5366 + $0x8] sm:$0xf]
        %v5370 = vld [vmem:[%s5366 + $0xc] sm:$0xf]
        %v5371 = vpack.c.bf16 %v5365, %v5365
        %s5372 = scalar_lea.vmem %s47, 1
        %v5373 = vld [vmem:[%s5372] sm:$0x1]
        %v5375 = vlaneseq
        %v5376 = vshrl.u32 %v5375, 7
        %v5377 = vsub.s32 0, %v5376
        %v5378 = vrot.slane %v5373, %v5377
        %v5384 = vunpack.c.l.b16 %v5367
        %v5385 = vunpack.c.l.b16 %v5368
        %v5386 = vunpack.c.l.b16 %v5369
        %v5387 = vunpack.c.l.b16 %v5370
        %v5388 = vpack.c.b16 %v5385, %v5384
        %v5389 = vpack.c.b16 %v5387, %v5386
        %v5393 = vsel %vm1056, %v5371, 0
        %5395 = vmatprep.subr.bf16.mxu0 0
        %5396 = vmatpush1.bf16.msra.mxu0 0
        %5397 = vmatprep.subr.bf16.mxu0 0
        %5398 = vmatpush1.bf16.msra.mxu0 0
        %5399 = vmatprep.subr.bf16.mxu0 0
        %5400 = vmatpush1.bf16.msra.mxu0 0
        %5401 = vmatprep.subr.bf16.mxu0 0
        %5402 = vmatpush1.bf16.msra.mxu0 0
        %5403 = vmatprep.subr.bf16.mxu0 0
        %5404 = vmatpush1.bf16.msra.mxu0 0
        %5405 = vmatprep.subr.bf16.mxu0 0
        %5406 = vmatpush1.bf16.msra.mxu0 0
        %5407 = vmatprep.subr.bf16.mxu0 0
        %5408 = vmatpush1.bf16.msra.mxu0 %v5389
        %5409 = vmatprep.subr.bf16.mxu0 0
        %5410 = vmatpush1.bf16.msra.mxu0 %v5388
        %5411 = vmatprep.subr.bf16.mxu0 0
        %5412 = vmatpush2.bf16.msra.mxu0 0
        %5413 = vmatprep.subr.bf16.mxu0 0
        %5414 = vmatpush2.bf16.msra.mxu0 0
        %5415 = vmatprep.subr.bf16.mxu0 0
        %5416 = vmatpush2.bf16.msra.mxu0 0
        %5417 = vmatprep.subr.bf16.mxu0 0
        %5418 = vmatpush2.bf16.msra.mxu0 0
        %5419 = vmatprep.subr.bf16.mxu0 0
        %5420 = vmatpush2.bf16.msra.mxu0 0
        %5421 = vmatprep.subr.bf16.mxu0 0
        %5422 = vmatpush2.bf16.msra.mxu0 0
        %5423 = vmatprep.subr.bf16.mxu0 0
        %5424 = vmatpush2.bf16.msra.mxu0 0
        %5425 = vmatprep.subr.bf16.mxu0 0
        %5426 = vmatpush2.bf16.msra.mxu0 0
        %5427 = vmatprep.mubr.bf16.mxu0 0
        %5428 = vmatmul.mubr.bf16.gmra.mxu0 %v5393
        %v5429 = vpop.f32.mrf.mxu0
        %v5430 = vadd.f32 %v5378, %v5429
        %v5431 = vpop.f32.mrf.mxu0
        %v5432 = vpop.f32.mrf.mxu0
        %v5433 = vpop.f32.mrf.mxu0
        %5434 = vdwg.mxu0
        %v5435 = vmax.f32 %v5430, 0.0
        %s5436 = scalar_lea.vmem %s49, 32
        %v5437 = vld [vmem:[%s5436] sm:$0xf]
        %v5438 = vld [vmem:[%s5436 + $0x4] sm:$0xf]
        %v5439 = vld [vmem:[%s5436 + $0x8] sm:$0xf]
        %v5440 = vld [vmem:[%s5436 + $0xc] sm:$0xf]
        %v5441 = vld [vmem:[%s5436 + $0x10] sm:$0xf]
        %v5442 = vld [vmem:[%s5436 + $0x14] sm:$0xf]
        %v5443 = vld [vmem:[%s5436 + $0x18] sm:$0xf]
        %v5444 = vld [vmem:[%s5436 + $0x1c] sm:$0xf]
        %v5445 = vpack.c.bf16 %v5435, %v5435
        %s5446 = scalar_lea.vmem %s51, 1
        %v5447 = vld [vmem:[%s5446] sm:$0x1]
        %v5449 = vlaneseq
        %v5450 = vshrl.u32 %v5449, 7
        %v5451 = vsub.s32 0, %v5450
        %v5452 = vrot.slane %v5447, %v5451
        %v5462 = vunpack.c.l.b16 %v5437
        %v5463 = vunpack.c.l.b16 %v5438
        %v5464 = vunpack.c.l.b16 %v5439
        %v5465 = vunpack.c.l.b16 %v5440
        %v5466 = vunpack.c.l.b16 %v5441
        %v5467 = vunpack.c.l.b16 %v5442
        %v5468 = vunpack.c.l.b16 %v5443
        %v5469 = vunpack.c.l.b16 %v5444
        %v5470 = vpack.c.b16 %v5463, %v5462
        %v5471 = vpack.c.b16 %v5465, %v5464
        %v5472 = vpack.c.b16 %v5467, %v5466
        %v5473 = vpack.c.b16 %v5469, %v5468
        %v5479 = vsel %vm1769, %v5445, 0
        %5481 = vmatprep.subr.bf16.mxu0 0
        %5482 = vmatpush1.bf16.msra.mxu0 0
        %5483 = vmatprep.subr.bf16.mxu0 0
        %5484 = vmatpush1.bf16.msra.mxu0 0
        %5485 = vmatprep.subr.bf16.mxu0 0
        %5486 = vmatpush1.bf16.msra.mxu0 0
        %5487 = vmatprep.subr.bf16.mxu0 0
        %5488 = vmatpush1.bf16.msra.mxu0 0
        %5489 = vmatprep.subr.bf16.mxu0 0
        %5490 = vmatpush1.bf16.msra.mxu0 %v5473
        %5491 = vmatprep.subr.bf16.mxu0 0
        %5492 = vmatpush1.bf16.msra.mxu0 %v5472
        %5493 = vmatprep.subr.bf16.mxu0 0
        %5494 = vmatpush1.bf16.msra.mxu0 %v5471
        %5495 = vmatprep.subr.bf16.mxu0 0
        %5496 = vmatpush1.bf16.msra.mxu0 %v5470
        %5497 = vmatprep.subr.bf16.mxu0 0
        %5498 = vmatpush2.bf16.msra.mxu0 0
        %5499 = vmatprep.subr.bf16.mxu0 0
        %5500 = vmatpush2.bf16.msra.mxu0 0
        %5501 = vmatprep.subr.bf16.mxu0 0
        %5502 = vmatpush2.bf16.msra.mxu0 0
        %5503 = vmatprep.subr.bf16.mxu0 0
        %5504 = vmatpush2.bf16.msra.mxu0 0
        %5505 = vmatprep.subr.bf16.mxu0 0
        %5506 = vmatpush2.bf16.msra.mxu0 0
        %5507 = vmatprep.subr.bf16.mxu0 0
        %5508 = vmatpush2.bf16.msra.mxu0 0
        %5509 = vmatprep.subr.bf16.mxu0 0
        %5510 = vmatpush2.bf16.msra.mxu0 0
        %5511 = vmatprep.subr.bf16.mxu0 0
        %5512 = vmatpush2.bf16.msra.mxu0 0
        %5513 = vmatprep.mubr.bf16.mxu0 0
        %5514 = vmatmul.mubr.bf16.gmra.mxu0 %v5479
        %v5515 = vpop.f32.mrf.mxu0
        %v5516 = vadd.f32 %v5452, %v5515
        %v5517 = vpop.f32.mrf.mxu0
        %v5518 = vpop.f32.mrf.mxu0
        %v5519 = vpop.f32.mrf.mxu0
        %5520 = vdwg.mxu0
        %v5521 = vadd.f32 %v5365, %v5516
        %v5522 = vld [vmem:[%s4681 + $0x4] sm:$0x1]
        %v5523 = vld [vmem:[%s4681 + $0x5] sm:$0x1]
        %v5524 = vsel %vm1056, %v5521, 0.0
        %5525 = vadd.xlane.f32.xlu0 %v5524
        %v5526 = vpop.xlane.xlu0 %5525
        %v5527 = vmul.f32 %v5526, %v1640
        %v5528 = vsub.f32 %v5521, %v5527
        %v5529 = vmul.f32 %v5528, %v5528
        %v5530 = vsel %vm1056, %v5529, 0.0
        %5531 = vadd.xlane.f32.xlu0 %v5530
        %v5532 = vpop.xlane.xlu0 %5531
        %v5533 = vmul.f32 %v5532, %v1640
        %v5534 = vadd.f32 %v5533, 1e-05
        %v5535 = vrsqrt.pop %v5534
        %v5536 = vmul.f32 %v5528, %v5535
        %v5537 = vlaneseq
        %v5538 = vshrl.u32 %v5537, 7
        %v5539 = vsub.s32 0, %v5538
        %v5540 = vrot.slane %v5522, %v5539
        %v5541 = vmul.f32 %v5536, %v5540
        %v5542 = vlaneseq
        %v5543 = vshrl.u32 %v5542, 7
        %v5544 = vsub.s32 0, %v5543
        %v5545 = vrot.slane %v5523, %v5544
        %v5546 = vadd.f32 %v5541, %v5545
        %v5547 = vld [vmem:[%s55] sm:$0xf]
        %v5548 = vld [vmem:[%s55 + $0x4] sm:$0xf]
        %v5549 = vld [vmem:[%s55 + $0x8] sm:$0xf]
        %v5550 = vld [vmem:[%s55 + $0xc] sm:$0xf]
        %v5551 = vpack.c.bf16 %v5546, %v5546
        %v5552 = vld [vmem:[%s57] sm:$0x1]
        %v5554 = vlaneseq
        %v5555 = vshrl.u32 %v5554, 7
        %v5556 = vsub.s32 0, %v5555
        %v5557 = vrot.slane %v5552, %v5556
        %v5563 = vunpack.c.l.b16 %v5547
        %v5564 = vunpack.c.l.b16 %v5548
        %v5565 = vunpack.c.l.b16 %v5549
        %v5566 = vunpack.c.l.b16 %v5550
        %v5567 = vpack.c.b16 %v5564, %v5563
        %v5568 = vpack.c.b16 %v5566, %v5565
        %v5572 = vsel %vm1056, %v5551, 0
        %5574 = vmatprep.subr.bf16.mxu0 0
        %5575 = vmatpush1.bf16.msra.mxu0 0
        %5576 = vmatprep.subr.bf16.mxu0 0
        %5577 = vmatpush1.bf16.msra.mxu0 0
        %5578 = vmatprep.subr.bf16.mxu0 0
        %5579 = vmatpush1.bf16.msra.mxu0 0
        %5580 = vmatprep.subr.bf16.mxu0 0
        %5581 = vmatpush1.bf16.msra.mxu0 0
        %5582 = vmatprep.subr.bf16.mxu0 0
        %5583 = vmatpush1.bf16.msra.mxu0 0
        %5584 = vmatprep.subr.bf16.mxu0 0
        %5585 = vmatpush1.bf16.msra.mxu0 0
        %5586 = vmatprep.subr.bf16.mxu0 0
        %5587 = vmatpush1.bf16.msra.mxu0 %v5568
        %5588 = vmatprep.subr.bf16.mxu0 0
        %5589 = vmatpush1.bf16.msra.mxu0 %v5567
        %5590 = vmatprep.subr.bf16.mxu0 0
        %5591 = vmatpush2.bf16.msra.mxu0 0
        %5592 = vmatprep.subr.bf16.mxu0 0
        %5593 = vmatpush2.bf16.msra.mxu0 0
        %5594 = vmatprep.subr.bf16.mxu0 0
        %5595 = vmatpush2.bf16.msra.mxu0 0
        %5596 = vmatprep.subr.bf16.mxu0 0
        %5597 = vmatpush2.bf16.msra.mxu0 0
        %5598 = vmatprep.subr.bf16.mxu0 0
        %5599 = vmatpush2.bf16.msra.mxu0 0
        %5600 = vmatprep.subr.bf16.mxu0 0
        %5601 = vmatpush2.bf16.msra.mxu0 0
        %5602 = vmatprep.subr.bf16.mxu0 0
        %5603 = vmatpush2.bf16.msra.mxu0 0
        %5604 = vmatprep.subr.bf16.mxu0 0
        %5605 = vmatpush2.bf16.msra.mxu0 0
        %5606 = vmatprep.mubr.bf16.mxu0 0
        %5607 = vmatmul.mubr.bf16.gmra.mxu0 %v5572
        %v5608 = vpop.f32.mrf.mxu0
        %v5609 = vadd.f32 %v5557, %v5608
        %v5610 = vpop.f32.mrf.mxu0
        %v5611 = vpop.f32.mrf.mxu0
        %v5612 = vpop.f32.mrf.mxu0
        %5613 = vdwg.mxu0
        %5614 = vmax.xlane.f32.xlu0 %v5609
        %v5615 = vpop.xlane.xlu0 %5614
        %v5616 = vsub.f32 %v5609, %v5615
        %v5617 = vmul.f32 %v5616, 1.442695
        %v5618 = vpow.pop %v5617
        %5619 = vadd.xlane.f32.xlu0 %v5618
        %v5620 = vpop.xlane.xlu0 %5619
        %v5621 = vlog2.pop %v5620
        %v5622 = vmul.f32 %v5621, 0.6931472
        %v5623 = vsub.f32 %v5616, %v5622
        %5624 = vst [vmem:[%s984] sm:$0xff] %v5623
        %s5625 = sand.u32 %s721, 1
        %s5626 = scalar_lea.sflag [#allocation3], %s5625
        %s5627 = sand.u32 %s721, 1
        %s5628 = smul.addr %s5627, 8
        %s5629 = scalar_lea.vmem [#allocation2], %s5628
        %s5630 = sand.u32 %s747, 1
        %s5631 = scalar_lea.sflag [#allocation5], %s5630
        %s5632 = sand.u32 %s747, 1
        %s5633 = smul.addr %s5632, 8
        %s5634 = scalar_lea.vmem [#allocation4], %s5633
        // Predicated region
        $region137: #{transformer_forward.1} parent=135 // pred_check
          %p5635 = pneg %p731
        $region138: #{transformer_forward.1} parent=135 // pred_check_branch
          %5637 = sbr.rel (%p5635) target = $region140
        $region139: #{transformer_forward.1} parent=135 // pred_region
          %s5639 = ssub.s32 128, 128
          %5640 = vsyncadd %s5626, %s5639
          %s5641 = smul.addr %s79, 128
          %s5642 = scalar_lea.hbm %s59, %s5641
          %s5644 = sshll.u32 %s5629, 4
          %s5645 = int_to_ptr.vmem [resolvable:$true] %s5644
          %5647 = dma.vmem_to_hbm [thread:$0]  %s5645, 128, %s5642, %s5626
        $region140: #{transformer_forward.1} parent=135 // pred_fallthru
          _
        // Predicated region
        $region141: #{transformer_forward.1} parent=135 // pred_check
          %p5648 = pneg %p757
        $region142: #{transformer_forward.1} parent=135 // pred_check_branch
          %5650 = sbr.rel (%p5648) target = $region144
        $region143: #{transformer_forward.1} parent=135 // pred_region
          %s5652 = ssub.s32 128, 128
          %5653 = vsyncadd %s5631, %s5652
          %s5654 = smul.addr %s79, 128
          %s5655 = scalar_lea.hbm %s61, %s5654
          %s5657 = sshll.u32 %s5634, 4
          %s5658 = int_to_ptr.vmem [resolvable:$true] %s5657
          %5660 = dma.vmem_to_hbm [thread:$0]  %s5658, 128, %s5655, %s5631
        $region144: #{transformer_forward.1} parent=135 // pred_fallthru
          _
      $region136: #{transformer_forward.1} parent=5 // pred_fallthru
        _
      %p5661 = scmp.le.s32.totalorder 2, %s74
      // Predicated region
      $region145: #{transformer_forward.1} parent=5 // pred_check
        %p5662 = pneg %p5661
      $region146: #{transformer_forward.1} parent=5 // pred_check_branch
        %5664 = sbr.rel (%p5662) target = $region148
      $region147: #{transformer_forward.1} parent=5 // pred_region
        %s5665 = ssub.s32 %s74, 2
        // Predicated region
        $region149: #{transformer_forward.1} parent=147 // pred_check
          %p5666 = pneg %p737
        $region150: #{transformer_forward.1} parent=147 // pred_check_branch
          %5668 = sbr.rel (%p5666) target = $region152
        $region151: #{transformer_forward.1} parent=147 // pred_region
          %s5669 = sand.u32 %s722, 1
          %s5670 = scalar_lea.sflag [#allocation3], %s5669
          %s5671 = sand.u32 %s722, 1
          %s5672 = smul.addr %s5671, 8
          %s5673 = scalar_lea.vmem [#allocation2], %s5672
          %5674 = dma.done %s5670, 128
        $region152: #{transformer_forward.1} parent=147 // pred_fallthru
          _
        // Predicated region
        $region153: #{transformer_forward.1} parent=147 // pred_check
          %p5675 = pneg %p763
        $region154: #{transformer_forward.1} parent=147 // pred_check_branch
          %5677 = sbr.rel (%p5675) target = $region156
        $region155: #{transformer_forward.1} parent=147 // pred_region
          %s5678 = sand.u32 %s748, 1
          %s5679 = scalar_lea.sflag [#allocation5], %s5678
          %s5680 = sand.u32 %s748, 1
          %s5681 = smul.addr %s5680, 8
          %s5682 = scalar_lea.vmem [#allocation4], %s5681
          %5683 = dma.done %s5679, 128
        $region156: #{transformer_forward.1} parent=147 // pred_fallthru
          _
      $region148: #{transformer_forward.1} parent=5 // pred_fallthru
        _
    $region6: #{transformer_forward.1} parent=1 // loop_footer
      %s78 = sadd.s32 1, %s74
    $region7: #{transformer_forward.1} parent=1 // loop_footer_branch
      %73 = sbr.rel target = $region3
    $region8: #{transformer_forward.1} parent=1 // loop_exit
      _
    %5684 = vsyncpa [#allocation3], 1
    %s5685 = scalar_lea.sflag [#allocation3], 1
    %5686 = vsyncpa %s5685, 1
    %5687 = vsyncpa [#allocation5], 1
    %s5688 = scalar_lea.sflag [#allocation5], 1
    %5689 = vsyncpa %s5688, 1

</llo_original>
